<compile_context>
chip_gen: v7x
topology: tpu7x:2x2x1
jax: 0.10.0
libtpu: 0.0.40
codegen_flags: <defaults>
</compile_context>

<pallas_src>
import functools

import jax
import jax.numpy as jnp
import numpy as np
from jax.experimental import pallas as pl
from jax.experimental.pallas import tpu as pltpu


FEATURE_KEYS = ("layer1", "layer2", "layer3", "layer4")


def _round_up(n, m):
    return ((n + m - 1) // m) * m


def _default_vmem_limit():
    # ~3/4 of the detected per-core VMEM (v5e/v6e: 128 MiB -> 96 MiB, v7x: 64 MiB -> 48 MiB).
    try:
        cap = pltpu.get_tpu_info().vmem_capacity_bytes
    except Exception:  # pragma: no cover - conservative fallback
        cap = 64 * 1024 * 1024
    return int(min(96 * 1024 * 1024, (cap * 3) // 4))


VMEM_LIMIT = _default_vmem_limit()


# --------------------------- Pallas kernel bodies ---------------------------

def _matmul_kernel(*refs, relu, has_add):
    """(TM, K) @ (K, N) + bias [+ f32 residual add] [+ ReLU], f32 accumulation."""
    if has_add:
        x_ref, w_ref, b_ref, a_ref, o_ref = refs
    else:
        x_ref, w_ref, b_ref, o_ref = refs
        a_ref = None
    acc = jnp.dot(x_ref[...], w_ref[...], preferred_element_type=jnp.float32)
    acc = acc + b_ref[...]
    if a_ref is not None:
        acc = acc + a_ref[...]                      # top-down residual, stays f32
    if relu:
        acc = jnp.maximum(acc, 0.0)
    o_ref[...] = acc.astype(o_ref.dtype)


def _conv3x3_pool_kernel(x_ref, w_ref, b_ref, o_ref, stat_ref, *, H, W, C, inv_count):
    """Fused 3x3/stride-1/pad-1 conv + global average pool for one image.

    Each tap's window sum equals (global sum) - (excluded border row) - (excluded
    border column) + (doubly-excluded corner); zero padding contributes nothing.
    Those 9 stat rows are packed into a (1, 9C) lhs and contracted in ONE dot with a
    pre-combined (9C, N) weight (see `_pool_stat_weight`).

    x_ref: (1, H, W, C).  w_ref: (9C, N).  b_ref: (1, N).  o_ref: (1, 1, N).
    stat_ref: VMEM scratch (1, 9C) f32.
    """
    xf = x_ref[0].astype(jnp.float32)                 # (H, W, C)
    col = jnp.sum(xf, axis=0)                         # (W, C): per-column sums (over rows)
    row = jnp.sum(xf, axis=1)                         # (H, C): per-row sums (over cols)
    tot = jnp.sum(col, axis=0, keepdims=True)         # (1, C): global sum

    stats = (
        tot,                       # pairs with sum of all 9 taps
        row[H - 1:H, :],           # bottom row   (excluded when ky == 0)
        row[0:1, :],               # top row      (excluded when ky == 2)
        col[W - 1:W, :],           # right column (excluded when kx == 0)
        col[0:1, :],               # left column  (excluded when kx == 2)
        xf[H - 1, W - 1:W, :],     # corner for tap (ky=0, kx=0)
        xf[H - 1, 0:1, :],         # corner for tap (ky=0, kx=2)
        xf[0, W - 1:W, :],         # corner for tap (ky=2, kx=0)
        xf[0, 0:1, :],             # corner for tap (ky=2, kx=2)
    )
    for k, s in enumerate(stats):                      # static lane-slice stores
        stat_ref[:, k * C:(k + 1) * C] = s

    pooled = jnp.dot(stat_ref[...], w_ref[...],
                     preferred_element_type=jnp.float32)   # (1, N), single dot, K = 9C
    o_ref[0] = pooled * inv_count + b_ref[...]


# ------------------------------ kernel wrappers ------------------------------

def _pick_row_tile(M):
    """Row tile: >=2 grid steps when practical (v7x has 2 TensorCores), tiles <= 1024
    rows (fits v7x VMEM comfortably, amortizes per-step overhead on v5e/v6e), and
    multiples of 16 (bf16 sublane pack).  Tiny M uses a single full-extent block
    (full array dims are always layout-legal)."""
    if M < 128:
        return M, M
    tm = min(1024, _round_up(pl.cdiv(M, 2), 16))
    return tm, _round_up(M, tm)


def matmul_fused(x2d, w, b, add=None, relu=False, out_dtype=jnp.bfloat16):
    """M-tiled, pipelined matmul + bias (+f32 add) (+ReLU).  x2d: (M, K), w: (K, N)."""
    M, K = x2d.shape
    N = w.shape[1]
    TM, Mp = _pick_row_tile(M)

    x2d = x2d.astype(jnp.bfloat16)
    if Mp != M:
        x2d = jnp.pad(x2d, ((0, Mp - M), (0, 0)))

    in_specs = [
        pl.BlockSpec((TM, K), lambda i: (i, 0)),   # activations, tiled over M
        pl.BlockSpec((K, N), lambda i: (0, 0)),    # weights resident across the grid
        pl.BlockSpec((1, N), lambda i: (0, 0)),    # bias row (f32)
    ]
    args = [x2d, w.astype(jnp.bfloat16), b.reshape(1, N).astype(jnp.float32)]
    if add is not None:
        add = add.astype(jnp.float32)              # keep top-down residual in f32
        if Mp != M:
            add = jnp.pad(add, ((0, Mp - M), (0, 0)))
        in_specs.append(pl.BlockSpec((TM, N), lambda i: (i, 0)))
        args.append(add)

    out = pl.pallas_call(
        functools.partial(_matmul_kernel, relu=relu, has_add=add is not None),
        grid=(Mp // TM,),
        in_specs=in_specs,
        out_specs=pl.BlockSpec((TM, N), lambda i: (i, 0)),
        out_shape=jax.ShapeDtypeStruct((Mp, N), out_dtype),
        compiler_params=pltpu.CompilerParams(
            dimension_semantics=("parallel",),
            vmem_limit_bytes=VMEM_LIMIT),
    )(*args)
    if Mp != M:
        out = out[:M]
    return out


def conv3x3_pool(x_nhwc, w_stat, b):
    """Fused 3x3 conv (pad=1) + global average pool -> (B, N) f32.

    w_stat is the pre-combined (9C, N) stat-weight matrix (see _pool_stat_weight)."""
    B, H, W, C = x_nhwc.shape
    N = w_stat.shape[-1]
    kern = functools.partial(_conv3x3_pool_kernel, H=H, W=W, C=C,
                             inv_count=1.0 / float(H * W))
    out = pl.pallas_call(
        kern,
        grid=(B,),
        in_specs=[
            pl.BlockSpec((1, H, W, C), lambda i: (i, 0, 0, 0)),
            pl.BlockSpec((9 * C, N), lambda i: (0, 0)),
            pl.BlockSpec((1, N), lambda i: (0, 0)),
        ],
        out_specs=pl.BlockSpec((1, 1, N), lambda i: (i, 0, 0)),
        out_shape=jax.ShapeDtypeStruct((B, 1, N), jnp.float32),
        scratch_shapes=[pltpu.VMEM((1, 9 * C), jnp.float32)],
        compiler_params=pltpu.CompilerParams(
            dimension_semantics=("parallel",),
            vmem_limit_bytes=VMEM_LIMIT),
    )(x_nhwc, w_stat.astype(jnp.float32), b.reshape(1, N).astype(jnp.float32))
    return out[:, 0, :]


# ------------------------------ parameter init -------------------------------

def _init_patchify(key, c_in, c_out):
    """2x2/stride-2 'patchify' conv == space-to-depth + (4*c_in, c_out) matmul."""
    kw, kb = jax.random.split(key)
    fan_in = 4 * c_in
    w = jax.random.normal(kw, (4, c_in, c_out), jnp.float32) / jnp.sqrt(float(fan_in))
    b = 0.01 * jax.random.normal(kb, (c_out,), jnp.float32)
    return w.reshape(4 * c_in, c_out).astype(jnp.bfloat16), b


def _init_lateral(key, c_in, c_out):
    kw, kb = jax.random.split(key)
    w = jax.random.normal(kw, (c_in, c_out), jnp.float32) / jnp.sqrt(float(c_in))
    b = 0.01 * jax.random.normal(kb, (c_out,), jnp.float32)
    return w.astype(jnp.bfloat16), b


def _init_conv3x3(key, c_in, c_out):
    kw, kb = jax.random.split(key)
    fan_in = 9 * c_in
    w9 = jax.random.normal(kw, (9, c_in, c_out), jnp.float32) / jnp.sqrt(float(fan_in))
    b = 0.01 * jax.random.normal(kb, (c_out,), jnp.float32)
    return w9, b


def _pool_stat_weight(w9):
    """Combine the 9 tap weights (tap index = 3*ky + kx) into the (9C, N) matrix that
    pairs with the in-kernel stat rows [total, bottom-row, top-row, right-col,
    left-col, corner(0,0), corner(0,2), corner(2,0), corner(2,2)]."""
    w_sum = jnp.sum(w9, axis=0)
    w_ky0 = w9[0] + w9[1] + w9[2]      # taps that exclude the bottom row
    w_ky2 = w9[6] + w9[7] + w9[8]      # taps that exclude the top row
    w_kx0 = w9[0] + w9[3] + w9[6]      # taps that exclude the right column
    w_kx2 = w9[2] + w9[5] + w9[8]      # taps that exclude the left column
    rows = [w_sum, -w_ky0, -w_ky2, -w_kx0, -w_kx2, w9[0], w9[2], w9[6], w9[8]]
    return jnp.concatenate(rows, axis=0).astype(jnp.float32)      # (9C, N)


def _space_to_depth(x):
    # TODO(synk): stays as XLA layout glue (runs on un-padded, small-channel maps).
    B, H, W, C = x.shape
    x = x.reshape(B, H // 2, 2, W // 2, 2, C)
    x = x.transpose(0, 1, 3, 2, 4, 5)
    return x.reshape(B, H // 2, W // 2, 4 * C)


# ---------------------------------- model ------------------------------------

class FPNBackbonePallas:
    """Pallas version of FPNBackbone (synthetic body + FPN + global 'avg' pooling)."""

    FEATURE_KEYS = FEATURE_KEYS

    def __init__(self, key, in_channels=3, out_channels=32):
        self.in_channels = in_channels
        self.out_channels = out_channels
        body_channels = [16, 32, 64, 128]   # scaled-down resnet50 [256, 512, 1024, 2048]
        stem_channels = 8
        keys = iter(jax.random.split(key, 1 + 3 * len(body_channels)))

        params = {}
        params["stem"] = _init_patchify(next(keys), in_channels, stem_channels)
        body = []
        cin = stem_channels
        for c in body_channels:
            body.append(_init_patchify(next(keys), cin, c))
            cin = c
        params["body"] = body
        params["lateral"] = [_init_lateral(next(keys), c, out_channels)
                             for c in body_channels]
        outputs = []
        for _ in body_channels:
            w9, b9 = _init_conv3x3(next(keys), out_channels, out_channels)
            outputs.append((w9, _pool_stat_weight(w9), b9))
        params["output"] = outputs
        self.params = params
        self._forward = jax.jit(self._forward_impl)

    def _forward_impl(self, params, x_nchw):
        x = jnp.transpose(x_nchw, (0, 2, 3, 1))              # NCHW -> NHWC, real channels

        # ---- synthetic body: stem + 4 strided stages -> strides 4/8/16/32 (bf16) ----
        h = x
        feats = []
        stages = [params["stem"]] + list(params["body"])
        for idx, (w, b) in enumerate(stages):
            hs = _space_to_depth(h)                          # stride-2 patchify layout glue
            Bh, Hh, Wh, Kh = hs.shape
            y = matmul_fused(hs.reshape(Bh * Hh * Wh, Kh), w, b,
                             relu=True, out_dtype=jnp.bfloat16)
            h = y.reshape(Bh, Hh, Wh, w.shape[1])
            if idx > 0:
                feats.append(h)                              # layer1..layer4 features

        # ---- FPN top-down (lateral 1x1 + fused f32 add; fused 3x3 conv + avg pool) ----
        pooled = [None] * 4
        last = None
        for l in range(3, -1, -1):
            f = feats[l]
            Bf, Hf, Wf, Cf = f.shape
            w_lat, b_lat = params["lateral"][l]
            add = None
            if last is not None:
                # TODO(synk): nearest 2x upsample of the coarser merged map stays XLA glue.
                up = jnp.repeat(jnp.repeat(last, 2, axis=1), 2, axis=2)
                add = up.reshape(Bf * Hf * Wf, self.out_channels)
            li = matmul_fused(f.reshape(Bf * Hf * Wf, Cf), w_lat, b_lat,
                              add=add, relu=False, out_dtype=jnp.float32)
            li = li.reshape(Bf, Hf, Wf, self.out_channels)   # merged map kept in f32
            _, w_stat, b_out = params["output"][l]
            pooled[l] = conv3x3_pool(li, w_stat, b_out)
            last = li

        return {k: v for k, v in zip(FEATURE_KEYS, pooled)}

    def __call__(self, x_nchw, return_dict=True):
        if x_nchw.shape[-3] != self.in_channels:
            raise ValueError(
                f"Expected input shape to be of shape ({self.in_channels}, H, W), "
                f"but got ({x_nchw.shape[-3]}, H, W)")
        H, W = x_nchw.shape[-2], x_nchw.shape[-1]
        if H % 32 != 0 or W % 32 != 0:
            raise ValueError("Spatial dims must be divisible by 32 for the exact-2x "
                             "pyramid (nearest upsample alignment).")
        out = self._forward(self.params, x_nchw)
        if not return_dict:
            return jnp.stack([out[k] for k in FEATURE_KEYS], axis=1)
        return out


# ------------------------- pure-JAX reference forward ------------------------

def _reference_forward(params, x_nchw, out_channels):
    """XLA-only reference with the same synthetic weights & dtype policy."""
    x = jnp.transpose(x_nchw, (0, 2, 3, 1))
    h = x
    feats = []
    stages = [params["stem"]] + list(params["body"])
    for idx, (w, b) in enumerate(stages):
        hs = _space_to_depth(h)
        B_, H_, W_, K_ = hs.shape
        y = hs.reshape(-1, K_).astype(jnp.bfloat16).astype(jnp.float32) @ \
            w.astype(jnp.float32) + b
        y = jnp.maximum(y, 0.0).astype(jnp.bfloat16)
        h = y.reshape(B_, H_, W_, w.shape[1])
        if idx > 0:
            feats.append(h)

    pooled = [None] * 4
    last = None
    for l in range(3, -1, -1):
        f = feats[l].astype(jnp.float32)
        B_, H_, W_, C_ = f.shape
        w_lat, b_lat = params["lateral"][l]
        li = f.reshape(-1, C_) @ w_lat.astype(jnp.float32) + b_lat
        li = li.reshape(B_, H_, W_, out_channels)
        if last is not None:
            li = li + jnp.repeat(jnp.repeat(last, 2, axis=1), 2, axis=2)
        w9, b9 = params["output"][l][0], params["output"][l][2]
        xp = jnp.pad(li, ((0, 0), (1, 1), (1, 1), (0, 0)))
        acc = jnp.zeros((B_, out_channels), jnp.float32)
        for ky in range(3):
            for kx in range(3):
                acc = acc + jnp.einsum(
                    "bhwc,cn->bn", xp[:, ky:ky + H_, kx:kx + W_, :], w9[3 * ky + kx],
                    precision=jax.lax.Precision.HIGHEST)
        pooled[l] = acc / float(H_ * W_) + b9
        last = li
    return {k: v for k, v in zip(FEATURE_KEYS, pooled)}


# ----------------------------------- main ------------------------------------

if __name__ == "__main__":
    root = jax.random.PRNGKey(0)
    k_params, k_input = jax.random.split(root)

    model = FPNBackbonePallas(k_params, in_channels=3, out_channels=32)
    x = jax.random.normal(k_input, (2, 3, 64, 64), jnp.float32)   # NCHW, like PyTorch

    out = model(x, return_dict=True)
    out = jax.tree_util.tree_map(jax.block_until_ready, out)

    # sanity: dict of layer1..layer4, each globally pooled to (B, out_channels)
    assert sorted(out.keys()) == sorted(FEATURE_KEYS)
    for k, v in out.items():
        assert v.shape == (2, 32), (k, v.shape)
        assert v.dtype == jnp.float32

    stacked = jax.block_until_ready(model(x, return_dict=False))
    assert stacked.shape == (2, 4, 32), stacked.shape

    # numerics vs pure-JAX reference (same weights, same dtype policy)
    ref = _reference_forward(model.params, x, model.out_channels)
    for k in FEATURE_KEYS:
        np.testing.assert_allclose(np.asarray(out[k]), np.asarray(ref[k]),
                                   rtol=3e-2, atol=3e-2)

    print("KERNEL_OK")
</pallas_src>

<mosaic_0001>
module attributes {stable_mosaic.version = 11 : i64} {
  func.func @_matmul_kernel(%arg0: i32, %arg1: memref<1024x12xbf16, #tpu.memory_space<vmem>>, %arg2: memref<12x8xbf16, #tpu.memory_space<vmem>>, %arg3: memref<1x8xf32, #tpu.memory_space<vmem>>, %arg4: memref<1024x8xbf16, #tpu.memory_space<vmem>>) attributes {dimension_semantics = [#tpu.dimension_semantics<parallel>], iteration_bounds = array<i64: 2>, scalar_prefetch = 0 : i64, scratch_operands = 0 : i64, tpu.core_type = #tpu.core_type<tc>, window_params = [{transform_indices = @transform_0, window_bounds = array<i64: 1024, 12>}, {pipeline_mode = #tpu.pipeline_mode<synchronous>, transform_indices = @transform_1, window_bounds = array<i64: 12, 8>}, {pipeline_mode = #tpu.pipeline_mode<synchronous>, transform_indices = @transform_2, window_bounds = array<i64: 1, 8>}, {transform_indices = @transform_3, window_bounds = array<i64: 1024, 8>}]} {
    %c0 = arith.constant 0 : index
    %c0_0 = arith.constant 0 : index
    %0 = vector.load %arg1[%c0, %c0_0] : memref<1024x12xbf16, #tpu.memory_space<vmem>>, vector<1024x12xbf16>
    %c0_1 = arith.constant 0 : index
    %c0_2 = arith.constant 0 : index
    %1 = vector.load %arg2[%c0_1, %c0_2] : memref<12x8xbf16, #tpu.memory_space<vmem>>, vector<12x8xbf16>
    %cst = arith.constant dense<0.000000e+00> : vector<1024x8xf32>
    %2 = tpu.matmul %0, %1, %cst {dimension_numbers = #tpu.dot_dimension_numbers<[1], [0], [0], [1], [0, 0, 1, 1], [], []>} : vector<1024x12xbf16>, vector<12x8xbf16>, vector<1024x8xf32> -> vector<1024x8xf32>
    %c0_3 = arith.constant 0 : index
    %c0_4 = arith.constant 0 : index
    %3 = vector.load %arg3[%c0_3, %c0_4] : memref<1x8xf32, #tpu.memory_space<vmem>>, vector<1x8xf32>
    %4 = vector.broadcast %3 : vector<1x8xf32> to vector<1024x8xf32>
    %5 = arith.addf %2, %4 : vector<1024x8xf32>
    %cst_5 = arith.constant 0.000000e+00 : f32
    %6 = vector.broadcast %cst_5 : f32 to vector<1024x8xf32>
    %7 = arith.maximumf %5, %6 : vector<1024x8xf32>
    %8 = arith.truncf %7 : vector<1024x8xf32> to vector<1024x8xbf16>
    %c0_6 = arith.constant 0 : index
    %c0_7 = arith.constant 0 : index
    %9 = vector.load %arg4[%c0_6, %c0_7] : memref<1024x8xbf16, #tpu.memory_space<vmem>>, vector<1024x8xbf16>
    tpu.vector_store %arg4[%c0_6, %c0_7], %8 {strides = array<i32>} : memref<1024x8xbf16, #tpu.memory_space<vmem>>, vector<1024x8xbf16>,
    return
  }
  func.func @transform_0(%arg0: i32) -> (i32, i32) {
    %c0_i32 = arith.constant 0 : i32
    %c0_i32_0 = arith.constant 0 : i32
    return %arg0, %c0_i32 : i32, i32
  }
  func.func @transform_1(%arg0: i32) -> (i32, i32) {
    %c0_i32 = arith.constant 0 : i32
    %c0_i32_0 = arith.constant 0 : i32
    %c0_i32_1 = arith.constant 0 : i32
    return %c0_i32, %c0_i32_0 : i32, i32
  }
  func.func @transform_2(%arg0: i32) -> (i32, i32) {
    %c0_i32 = arith.constant 0 : i32
    %c0_i32_0 = arith.constant 0 : i32
    %c0_i32_1 = arith.constant 0 : i32
    return %c0_i32, %c0_i32_0 : i32, i32
  }
  func.func @transform_3(%arg0: i32) -> (i32, i32) {
    %c0_i32 = arith.constant 0 : i32
    %c0_i32_0 = arith.constant 0 : i32
    return %arg0, %c0_i32 : i32, i32
  }
}

module attributes {stable_mosaic.version = 11 : i64} {
  func.func @_matmul_kernel(%arg0: i32, %arg1: memref<256x32xbf16, #tpu.memory_space<vmem>>, %arg2: memref<32x16xbf16, #tpu.memory_space<vmem>>, %arg3: memref<1x16xf32, #tpu.memory_space<vmem>>, %arg4: memref<256x16xbf16, #tpu.memory_space<vmem>>) attributes {dimension_semantics = [#tpu.dimension_semantics<parallel>], iteration_bounds = array<i64: 2>, scalar_prefetch = 0 : i64, scratch_operands = 0 : i64, tpu.core_type = #tpu.core_type<tc>, window_params = [{transform_indices = @transform_0, window_bounds = array<i64: 256, 32>}, {pipeline_mode = #tpu.pipeline_mode<synchronous>, transform_indices = @transform_1, window_bounds = array<i64: 32, 16>}, {pipeline_mode = #tpu.pipeline_mode<synchronous>, transform_indices = @transform_2, window_bounds = array<i64: 1, 16>}, {transform_indices = @transform_3, window_bounds = array<i64: 256, 16>}]} {
    %c0 = arith.constant 0 : index
    %c0_0 = arith.constant 0 : index
    %0 = vector.load %arg1[%c0, %c0_0] : memref<256x32xbf16, #tpu.memory_space<vmem>>, vector<256x32xbf16>
    %c0_1 = arith.constant 0 : index
    %c0_2 = arith.constant 0 : index
    %1 = vector.load %arg2[%c0_1, %c0_2] : memref<32x16xbf16, #tpu.memory_space<vmem>>, vector<32x16xbf16>
    %cst = arith.constant dense<0.000000e+00> : vector<256x16xf32>
    %2 = tpu.matmul %0, %1, %cst {dimension_numbers = #tpu.dot_dimension_numbers<[1], [0], [0], [1], [0, 0, 1, 1], [], []>} : vector<256x32xbf16>, vector<32x16xbf16>, vector<256x16xf32> -> vector<256x16xf32>
    %c0_3 = arith.constant 0 : index
    %c0_4 = arith.constant 0 : index
    %3 = vector.load %arg3[%c0_3, %c0_4] : memref<1x16xf32, #tpu.memory_space<vmem>>, vector<1x16xf32>
    %4 = vector.broadcast %3 : vector<1x16xf32> to vector<256x16xf32>
    %5 = arith.addf %2, %4 : vector<256x16xf32>
    %cst_5 = arith.constant 0.000000e+00 : f32
    %6 = vector.broadcast %cst_5 : f32 to vector<256x16xf32>
    %7 = arith.maximumf %5, %6 : vector<256x16xf32>
    %8 = arith.truncf %7 : vector<256x16xf32> to vector<256x16xbf16>
    %c0_6 = arith.constant 0 : index
    %c0_7 = arith.constant 0 : index
    %9 = vector.load %arg4[%c0_6, %c0_7] : memref<256x16xbf16, #tpu.memory_space<vmem>>, vector<256x16xbf16>
    tpu.vector_store %arg4[%c0_6, %c0_7], %8 {strides = array<i32>} : memref<256x16xbf16, #tpu.memory_space<vmem>>, vector<256x16xbf16>,
    return
  }
  func.func @transform_0(%arg0: i32) -> (i32, i32) {
    %c0_i32 = arith.constant 0 : i32
    %c0_i32_0 = arith.constant 0 : i32
    return %arg0, %c0_i32 : i32, i32
  }
  func.func @transform_1(%arg0: i32) -> (i32, i32) {
    %c0_i32 = arith.constant 0 : i32
    %c0_i32_0 = arith.constant 0 : i32
    %c0_i32_1 = arith.constant 0 : i32
    return %c0_i32, %c0_i32_0 : i32, i32
  }
  func.func @transform_2(%arg0: i32) -> (i32, i32) {
    %c0_i32 = arith.constant 0 : i32
    %c0_i32_0 = arith.constant 0 : i32
    %c0_i32_1 = arith.constant 0 : i32
    return %c0_i32, %c0_i32_0 : i32, i32
  }
  func.func @transform_3(%arg0: i32) -> (i32, i32) {
    %c0_i32 = arith.constant 0 : i32
    %c0_i32_0 = arith.constant 0 : i32
    return %arg0, %c0_i32 : i32, i32
  }
}

module attributes {stable_mosaic.version = 11 : i64} {
  func.func @_matmul_kernel(%arg0: i32, %arg1: memref<64x64xbf16, #tpu.memory_space<vmem>>, %arg2: memref<64x32xbf16, #tpu.memory_space<vmem>>, %arg3: memref<1x32xf32, #tpu.memory_space<vmem>>, %arg4: memref<64x32xbf16, #tpu.memory_space<vmem>>) attributes {dimension_semantics = [#tpu.dimension_semantics<parallel>], iteration_bounds = array<i64: 2>, scalar_prefetch = 0 : i64, scratch_operands = 0 : i64, tpu.core_type = #tpu.core_type<tc>, window_params = [{transform_indices = @transform_0, window_bounds = array<i64: 64, 64>}, {pipeline_mode = #tpu.pipeline_mode<synchronous>, transform_indices = @transform_1, window_bounds = array<i64: 64, 32>}, {pipeline_mode = #tpu.pipeline_mode<synchronous>, transform_indices = @transform_2, window_bounds = array<i64: 1, 32>}, {transform_indices = @transform_3, window_bounds = array<i64: 64, 32>}]} {
    %c0 = arith.constant 0 : index
    %c0_0 = arith.constant 0 : index
    %0 = vector.load %arg1[%c0, %c0_0] : memref<64x64xbf16, #tpu.memory_space<vmem>>, vector<64x64xbf16>
    %c0_1 = arith.constant 0 : index
    %c0_2 = arith.constant 0 : index
    %1 = vector.load %arg2[%c0_1, %c0_2] : memref<64x32xbf16, #tpu.memory_space<vmem>>, vector<64x32xbf16>
    %cst = arith.constant dense<0.000000e+00> : vector<64x32xf32>
    %2 = tpu.matmul %0, %1, %cst {dimension_numbers = #tpu.dot_dimension_numbers<[1], [0], [0], [1], [0, 0, 1, 1], [], []>} : vector<64x64xbf16>, vector<64x32xbf16>, vector<64x32xf32> -> vector<64x32xf32>
    %c0_3 = arith.constant 0 : index
    %c0_4 = arith.constant 0 : index
    %3 = vector.load %arg3[%c0_3, %c0_4] : memref<1x32xf32, #tpu.memory_space<vmem>>, vector<1x32xf32>
    %4 = vector.broadcast %3 : vector<1x32xf32> to vector<64x32xf32>
    %5 = arith.addf %2, %4 : vector<64x32xf32>
    %cst_5 = arith.constant 0.000000e+00 : f32
    %6 = vector.broadcast %cst_5 : f32 to vector<64x32xf32>
    %7 = arith.maximumf %5, %6 : vector<64x32xf32>
    %8 = arith.truncf %7 : vector<64x32xf32> to vector<64x32xbf16>
    %c0_6 = arith.constant 0 : index
    %c0_7 = arith.constant 0 : index
    %9 = vector.load %arg4[%c0_6, %c0_7] : memref<64x32xbf16, #tpu.memory_space<vmem>>, vector<64x32xbf16>
    tpu.vector_store %arg4[%c0_6, %c0_7], %8 {strides = array<i32>} : memref<64x32xbf16, #tpu.memory_space<vmem>>, vector<64x32xbf16>,
    return
  }
  func.func @transform_0(%arg0: i32) -> (i32, i32) {
    %c0_i32 = arith.constant 0 : i32
    %c0_i32_0 = arith.constant 0 : i32
    return %arg0, %c0_i32 : i32, i32
  }
  func.func @transform_1(%arg0: i32) -> (i32, i32) {
    %c0_i32 = arith.constant 0 : i32
    %c0_i32_0 = arith.constant 0 : i32
    %c0_i32_1 = arith.constant 0 : i32
    return %c0_i32, %c0_i32_0 : i32, i32
  }
  func.func @transform_2(%arg0: i32) -> (i32, i32) {
    %c0_i32 = arith.constant 0 : i32
    %c0_i32_0 = arith.constant 0 : i32
    %c0_i32_1 = arith.constant 0 : i32
    return %c0_i32, %c0_i32_0 : i32, i32
  }
  func.func @transform_3(%arg0: i32) -> (i32, i32) {
    %c0_i32 = arith.constant 0 : i32
    %c0_i32_0 = arith.constant 0 : i32
    return %arg0, %c0_i32 : i32, i32
  }
}

module attributes {stable_mosaic.version = 11 : i64} {
  func.func @_matmul_kernel(%arg0: i32, %arg1: memref<32x128xbf16, #tpu.memory_space<vmem>>, %arg2: memref<128x64xbf16, #tpu.memory_space<vmem>>, %arg3: memref<1x64xf32, #tpu.memory_space<vmem>>, %arg4: memref<32x64xbf16, #tpu.memory_space<vmem>>) attributes {dimension_semantics = [#tpu.dimension_semantics<parallel>], iteration_bounds = array<i64: 1>, scalar_prefetch = 0 : i64, scratch_operands = 0 : i64, tpu.core_type = #tpu.core_type<tc>, window_params = [{transform_indices = @transform_0, window_bounds = array<i64: 32, 128>}, {pipeline_mode = #tpu.pipeline_mode<synchronous>, transform_indices = @transform_1, window_bounds = array<i64: 128, 64>}, {pipeline_mode = #tpu.pipeline_mode<synchronous>, transform_indices = @transform_2, window_bounds = array<i64: 1, 64>}, {transform_indices = @transform_3, window_bounds = array<i64: 32, 64>}]} {
    %c0 = arith.constant 0 : index
    %c0_0 = arith.constant 0 : index
    %0 = vector.load %arg1[%c0, %c0_0] : memref<32x128xbf16, #tpu.memory_space<vmem>>, vector<32x128xbf16>
    %c0_1 = arith.constant 0 : index
    %c0_2 = arith.constant 0 : index
    %1 = vector.load %arg2[%c0_1, %c0_2] : memref<128x64xbf16, #tpu.memory_space<vmem>>, vector<128x64xbf16>
    %cst = arith.constant dense<0.000000e+00> : vector<32x64xf32>
    %2 = tpu.matmul %0, %1, %cst {dimension_numbers = #tpu.dot_dimension_numbers<[1], [0], [0], [1], [0, 0, 1, 1], [], []>} : vector<32x128xbf16>, vector<128x64xbf16>, vector<32x64xf32> -> vector<32x64xf32>
    %c0_3 = arith.constant 0 : index
    %c0_4 = arith.constant 0 : index
    %3 = vector.load %arg3[%c0_3, %c0_4] : memref<1x64xf32, #tpu.memory_space<vmem>>, vector<1x64xf32>
    %4 = vector.broadcast %3 : vector<1x64xf32> to vector<32x64xf32>
    %5 = arith.addf %2, %4 : vector<32x64xf32>
    %cst_5 = arith.constant 0.000000e+00 : f32
    %6 = vector.broadcast %cst_5 : f32 to vector<32x64xf32>
    %7 = arith.maximumf %5, %6 : vector<32x64xf32>
    %8 = arith.truncf %7 : vector<32x64xf32> to vector<32x64xbf16>
    %c0_6 = arith.constant 0 : index
    %c0_7 = arith.constant 0 : index
    %9 = vector.load %arg4[%c0_6, %c0_7] : memref<32x64xbf16, #tpu.memory_space<vmem>>, vector<32x64xbf16>
    tpu.vector_store %arg4[%c0_6, %c0_7], %8 {strides = array<i32>} : memref<32x64xbf16, #tpu.memory_space<vmem>>, vector<32x64xbf16>,
    return
  }
  func.func @transform_0(%arg0: i32) -> (i32, i32) {
    %c0_i32 = arith.constant 0 : i32
    %c0_i32_0 = arith.constant 0 : i32
    return %arg0, %c0_i32 : i32, i32
  }
  func.func @transform_1(%arg0: i32) -> (i32, i32) {
    %c0_i32 = arith.constant 0 : i32
    %c0_i32_0 = arith.constant 0 : i32
    %c0_i32_1 = arith.constant 0 : i32
    return %c0_i32, %c0_i32_0 : i32, i32
  }
  func.func @transform_2(%arg0: i32) -> (i32, i32) {
    %c0_i32 = arith.constant 0 : i32
    %c0_i32_0 = arith.constant 0 : i32
    %c0_i32_1 = arith.constant 0 : i32
    return %c0_i32, %c0_i32_0 : i32, i32
  }
  func.func @transform_3(%arg0: i32) -> (i32, i32) {
    %c0_i32 = arith.constant 0 : i32
    %c0_i32_0 = arith.constant 0 : i32
    return %arg0, %c0_i32 : i32, i32
  }
}

module attributes {stable_mosaic.version = 11 : i64} {
  func.func @_matmul_kernel(%arg0: i32, %arg1: memref<8x256xbf16, #tpu.memory_space<vmem>>, %arg2: memref<256x128xbf16, #tpu.memory_space<vmem>>, %arg3: memref<1x128xf32, #tpu.memory_space<vmem>>, %arg4: memref<8x128xbf16, #tpu.memory_space<vmem>>) attributes {dimension_semantics = [#tpu.dimension_semantics<parallel>], iteration_bounds = array<i64: 1>, scalar_prefetch = 0 : i64, scratch_operands = 0 : i64, tpu.core_type = #tpu.core_type<tc>, window_params = [{transform_indices = @transform_0, window_bounds = array<i64: 8, 256>}, {pipeline_mode = #tpu.pipeline_mode<synchronous>, transform_indices = @transform_1, window_bounds = array<i64: 256, 128>}, {pipeline_mode = #tpu.pipeline_mode<synchronous>, transform_indices = @transform_2, window_bounds = array<i64: 1, 128>}, {transform_indices = @transform_3, window_bounds = array<i64: 8, 128>}]} {
    %c0 = arith.constant 0 : index
    %c0_0 = arith.constant 0 : index
    %0 = vector.load %arg1[%c0, %c0_0] : memref<8x256xbf16, #tpu.memory_space<vmem>>, vector<8x256xbf16>
    %c0_1 = arith.constant 0 : index
    %c0_2 = arith.constant 0 : index
    %1 = vector.load %arg2[%c0_1, %c0_2] : memref<256x128xbf16, #tpu.memory_space<vmem>>, vector<256x128xbf16>
    %cst = arith.constant dense<0.000000e+00> : vector<8x128xf32>
    %2 = tpu.matmul %0, %1, %cst {dimension_numbers = #tpu.dot_dimension_numbers<[1], [0], [0], [1], [0, 0, 1, 1], [], []>} : vector<8x256xbf16>, vector<256x128xbf16>, vector<8x128xf32> -> vector<8x128xf32>
    %c0_3 = arith.constant 0 : index
    %c0_4 = arith.constant 0 : index
    %3 = vector.load %arg3[%c0_3, %c0_4] : memref<1x128xf32, #tpu.memory_space<vmem>>, vector<1x128xf32>
    %4 = vector.broadcast %3 : vector<1x128xf32> to vector<8x128xf32>
    %5 = arith.addf %2, %4 : vector<8x128xf32>
    %cst_5 = arith.constant 0.000000e+00 : f32
    %6 = vector.broadcast %cst_5 : f32 to vector<8x128xf32>
    %7 = arith.maximumf %5, %6 : vector<8x128xf32>
    %8 = arith.truncf %7 : vector<8x128xf32> to vector<8x128xbf16>
    %c0_6 = arith.constant 0 : index
    %c0_7 = arith.constant 0 : index
    %9 = vector.load %arg4[%c0_6, %c0_7] : memref<8x128xbf16, #tpu.memory_space<vmem>>, vector<8x128xbf16>
    tpu.vector_store %arg4[%c0_6, %c0_7], %8 {strides = array<i32>} : memref<8x128xbf16, #tpu.memory_space<vmem>>, vector<8x128xbf16>,
    return
  }
  func.func @transform_0(%arg0: i32) -> (i32, i32) {
    %c0_i32 = arith.constant 0 : i32
    %c0_i32_0 = arith.constant 0 : i32
    return %arg0, %c0_i32 : i32, i32
  }
  func.func @transform_1(%arg0: i32) -> (i32, i32) {
    %c0_i32 = arith.constant 0 : i32
    %c0_i32_0 = arith.constant 0 : i32
    %c0_i32_1 = arith.constant 0 : i32
    return %c0_i32, %c0_i32_0 : i32, i32
  }
  func.func @transform_2(%arg0: i32) -> (i32, i32) {
    %c0_i32 = arith.constant 0 : i32
    %c0_i32_0 = arith.constant 0 : i32
    %c0_i32_1 = arith.constant 0 : i32
    return %c0_i32, %c0_i32_0 : i32, i32
  }
  func.func @transform_3(%arg0: i32) -> (i32, i32) {
    %c0_i32 = arith.constant 0 : i32
    %c0_i32_0 = arith.constant 0 : i32
    return %arg0, %c0_i32 : i32, i32
  }
}

module attributes {stable_mosaic.version = 11 : i64} {
  func.func @_matmul_kernel(%arg0: i32, %arg1: memref<8x128xbf16, #tpu.memory_space<vmem>>, %arg2: memref<128x32xbf16, #tpu.memory_space<vmem>>, %arg3: memref<1x32xf32, #tpu.memory_space<vmem>>, %arg4: memref<8x32xf32, #tpu.memory_space<vmem>>) attributes {dimension_semantics = [#tpu.dimension_semantics<parallel>], iteration_bounds = array<i64: 1>, scalar_prefetch = 0 : i64, scratch_operands = 0 : i64, tpu.core_type = #tpu.core_type<tc>, window_params = [{transform_indices = @transform_0, window_bounds = array<i64: 8, 128>}, {pipeline_mode = #tpu.pipeline_mode<synchronous>, transform_indices = @transform_1, window_bounds = array<i64: 128, 32>}, {pipeline_mode = #tpu.pipeline_mode<synchronous>, transform_indices = @transform_2, window_bounds = array<i64: 1, 32>}, {transform_indices = @transform_3, window_bounds = array<i64: 8, 32>}]} {
    %c0 = arith.constant 0 : index
    %c0_0 = arith.constant 0 : index
    %0 = vector.load %arg1[%c0, %c0_0] : memref<8x128xbf16, #tpu.memory_space<vmem>>, vector<8x128xbf16>
    %c0_1 = arith.constant 0 : index
    %c0_2 = arith.constant 0 : index
    %1 = vector.load %arg2[%c0_1, %c0_2] : memref<128x32xbf16, #tpu.memory_space<vmem>>, vector<128x32xbf16>
    %cst = arith.constant dense<0.000000e+00> : vector<8x32xf32>
    %2 = tpu.matmul %0, %1, %cst {dimension_numbers = #tpu.dot_dimension_numbers<[1], [0], [0], [1], [0, 0, 1, 1], [], []>} : vector<8x128xbf16>, vector<128x32xbf16>, vector<8x32xf32> -> vector<8x32xf32>
    %c0_3 = arith.constant 0 : index
    %c0_4 = arith.constant 0 : index
    %3 = vector.load %arg3[%c0_3, %c0_4] : memref<1x32xf32, #tpu.memory_space<vmem>>, vector<1x32xf32>
    %4 = vector.broadcast %3 : vector<1x32xf32> to vector<8x32xf32>
    %5 = arith.addf %2, %4 : vector<8x32xf32>
    %c0_5 = arith.constant 0 : index
    %c0_6 = arith.constant 0 : index
    %6 = vector.load %arg4[%c0_5, %c0_6] : memref<8x32xf32, #tpu.memory_space<vmem>>, vector<8x32xf32>
    tpu.vector_store %arg4[%c0_5, %c0_6], %5 {strides = array<i32>} : memref<8x32xf32, #tpu.memory_space<vmem>>, vector<8x32xf32>,
    return
  }
  func.func @transform_0(%arg0: i32) -> (i32, i32) {
    %c0_i32 = arith.constant 0 : i32
    %c0_i32_0 = arith.constant 0 : i32
    return %arg0, %c0_i32 : i32, i32
  }
  func.func @transform_1(%arg0: i32) -> (i32, i32) {
    %c0_i32 = arith.constant 0 : i32
    %c0_i32_0 = arith.constant 0 : i32
    %c0_i32_1 = arith.constant 0 : i32
    return %c0_i32, %c0_i32_0 : i32, i32
  }
  func.func @transform_2(%arg0: i32) -> (i32, i32) {
    %c0_i32 = arith.constant 0 : i32
    %c0_i32_0 = arith.constant 0 : i32
    %c0_i32_1 = arith.constant 0 : i32
    return %c0_i32, %c0_i32_0 : i32, i32
  }
  func.func @transform_3(%arg0: i32) -> (i32, i32) {
    %c0_i32 = arith.constant 0 : i32
    %c0_i32_0 = arith.constant 0 : i32
    return %arg0, %c0_i32 : i32, i32
  }
}

module attributes {stable_mosaic.version = 11 : i64} {
  func.func @_matmul_kernel(%arg0: i32, %arg1: memref<32x64xbf16, #tpu.memory_space<vmem>>, %arg2: memref<64x32xbf16, #tpu.memory_space<vmem>>, %arg3: memref<1x32xf32, #tpu.memory_space<vmem>>, %arg4: memref<32x32xf32, #tpu.memory_space<vmem>>, %arg5: memref<32x32xf32, #tpu.memory_space<vmem>>) attributes {dimension_semantics = [#tpu.dimension_semantics<parallel>], iteration_bounds = array<i64: 1>, scalar_prefetch = 0 : i64, scratch_operands = 0 : i64, tpu.core_type = #tpu.core_type<tc>, window_params = [{transform_indices = @transform_0, window_bounds = array<i64: 32, 64>}, {pipeline_mode = #tpu.pipeline_mode<synchronous>, transform_indices = @transform_1, window_bounds = array<i64: 64, 32>}, {pipeline_mode = #tpu.pipeline_mode<synchronous>, transform_indices = @transform_2, window_bounds = array<i64: 1, 32>}, {transform_indices = @transform_3, window_bounds = array<i64: 32, 32>}, {transform_indices = @transform_4, window_bounds = array<i64: 32, 32>}]} {
    %c0 = arith.constant 0 : index
    %c0_0 = arith.constant 0 : index
    %0 = vector.load %arg1[%c0, %c0_0] : memref<32x64xbf16, #tpu.memory_space<vmem>>, vector<32x64xbf16>
    %c0_1 = arith.constant 0 : index
    %c0_2 = arith.constant 0 : index
    %1 = vector.load %arg2[%c0_1, %c0_2] : memref<64x32xbf16, #tpu.memory_space<vmem>>, vector<64x32xbf16>
    %cst = arith.constant dense<0.000000e+00> : vector<32x32xf32>
    %2 = tpu.matmul %0, %1, %cst {dimension_numbers = #tpu.dot_dimension_numbers<[1], [0], [0], [1], [0, 0, 1, 1], [], []>} : vector<32x64xbf16>, vector<64x32xbf16>, vector<32x32xf32> -> vector<32x32xf32>
    %c0_3 = arith.constant 0 : index
    %c0_4 = arith.constant 0 : index
    %3 = vector.load %arg3[%c0_3, %c0_4] : memref<1x32xf32, #tpu.memory_space<vmem>>, vector<1x32xf32>
    %4 = vector.broadcast %3 : vector<1x32xf32> to vector<32x32xf32>
    %5 = arith.addf %2, %4 : vector<32x32xf32>
    %c0_5 = arith.constant 0 : index
    %c0_6 = arith.constant 0 : index
    %6 = vector.load %arg4[%c0_5, %c0_6] : memref<32x32xf32, #tpu.memory_space<vmem>>, vector<32x32xf32>
    %7 = arith.addf %5, %6 : vector<32x32xf32>
    %c0_7 = arith.constant 0 : index
    %c0_8 = arith.constant 0 : index
    %8 = vector.load %arg5[%c0_7, %c0_8] : memref<32x32xf32, #tpu.memory_space<vmem>>, vector<32x32xf32>
    tpu.vector_store %arg5[%c0_7, %c0_8], %7 {strides = array<i32>} : memref<32x32xf32, #tpu.memory_space<vmem>>, vector<32x32xf32>,
    return
  }
  func.func @transform_0(%arg0: i32) -> (i32, i32) {
    %c0_i32 = arith.constant 0 : i32
    %c0_i32_0 = arith.constant 0 : i32
    return %arg0, %c0_i32 : i32, i32
  }
  func.func @transform_1(%arg0: i32) -> (i32, i32) {
    %c0_i32 = arith.constant 0 : i32
    %c0_i32_0 = arith.constant 0 : i32
    %c0_i32_1 = arith.constant 0 : i32
    return %c0_i32, %c0_i32_0 : i32, i32
  }
  func.func @transform_2(%arg0: i32) -> (i32, i32) {
    %c0_i32 = arith.constant 0 : i32
    %c0_i32_0 = arith.constant 0 : i32
    %c0_i32_1 = arith.constant 0 : i32
    return %c0_i32, %c0_i32_0 : i32, i32
  }
  func.func @transform_3(%arg0: i32) -> (i32, i32) {
    %c0_i32 = arith.constant 0 : i32
    %c0_i32_0 = arith.constant 0 : i32
    return %arg0, %c0_i32 : i32, i32
  }
  func.func @transform_4(%arg0: i32) -> (i32, i32) {
    %c0_i32 = arith.constant 0 : i32
    %c0_i32_0 = arith.constant 0 : i32
    return %arg0, %c0_i32 : i32, i32
  }
}

module attributes {stable_mosaic.version = 11 : i64} {
  func.func @_matmul_kernel(%arg0: i32, %arg1: memref<64x32xbf16, #tpu.memory_space<vmem>>, %arg2: memref<32x32xbf16, #tpu.memory_space<vmem>>, %arg3: memref<1x32xf32, #tpu.memory_space<vmem>>, %arg4: memref<64x32xf32, #tpu.memory_space<vmem>>, %arg5: memref<64x32xf32, #tpu.memory_space<vmem>>) attributes {dimension_semantics = [#tpu.dimension_semantics<parallel>], iteration_bounds = array<i64: 2>, scalar_prefetch = 0 : i64, scratch_operands = 0 : i64, tpu.core_type = #tpu.core_type<tc>, window_params = [{transform_indices = @transform_0, window_bounds = array<i64: 64, 32>}, {pipeline_mode = #tpu.pipeline_mode<synchronous>, transform_indices = @transform_1, window_bounds = array<i64: 32, 32>}, {pipeline_mode = #tpu.pipeline_mode<synchronous>, transform_indices = @transform_2, window_bounds = array<i64: 1, 32>}, {transform_indices = @transform_3, window_bounds = array<i64: 64, 32>}, {transform_indices = @transform_4, window_bounds = array<i64: 64, 32>}]} {
    %c0 = arith.constant 0 : index
    %c0_0 = arith.constant 0 : index
    %0 = vector.load %arg1[%c0, %c0_0] : memref<64x32xbf16, #tpu.memory_space<vmem>>, vector<64x32xbf16>
    %c0_1 = arith.constant 0 : index
    %c0_2 = arith.constant 0 : index
    %1 = vector.load %arg2[%c0_1, %c0_2] : memref<32x32xbf16, #tpu.memory_space<vmem>>, vector<32x32xbf16>
    %cst = arith.constant dense<0.000000e+00> : vector<64x32xf32>
    %2 = tpu.matmul %0, %1, %cst {dimension_numbers = #tpu.dot_dimension_numbers<[1], [0], [0], [1], [0, 0, 1, 1], [], []>} : vector<64x32xbf16>, vector<32x32xbf16>, vector<64x32xf32> -> vector<64x32xf32>
    %c0_3 = arith.constant 0 : index
    %c0_4 = arith.constant 0 : index
    %3 = vector.load %arg3[%c0_3, %c0_4] : memref<1x32xf32, #tpu.memory_space<vmem>>, vector<1x32xf32>
    %4 = vector.broadcast %3 : vector<1x32xf32> to vector<64x32xf32>
    %5 = arith.addf %2, %4 : vector<64x32xf32>
    %c0_5 = arith.constant 0 : index
    %c0_6 = arith.constant 0 : index
    %6 = vector.load %arg4[%c0_5, %c0_6] : memref<64x32xf32, #tpu.memory_space<vmem>>, vector<64x32xf32>
    %7 = arith.addf %5, %6 : vector<64x32xf32>
    %c0_7 = arith.constant 0 : index
    %c0_8 = arith.constant 0 : index
    %8 = vector.load %arg5[%c0_7, %c0_8] : memref<64x32xf32, #tpu.memory_space<vmem>>, vector<64x32xf32>
    tpu.vector_store %arg5[%c0_7, %c0_8], %7 {strides = array<i32>} : memref<64x32xf32, #tpu.memory_space<vmem>>, vector<64x32xf32>,
    return
  }
  func.func @transform_0(%arg0: i32) -> (i32, i32) {
    %c0_i32 = arith.constant 0 : i32
    %c0_i32_0 = arith.constant 0 : i32
    return %arg0, %c0_i32 : i32, i32
  }
  func.func @transform_1(%arg0: i32) -> (i32, i32) {
    %c0_i32 = arith.constant 0 : i32
    %c0_i32_0 = arith.constant 0 : i32
    %c0_i32_1 = arith.constant 0 : i32
    return %c0_i32, %c0_i32_0 : i32, i32
  }
  func.func @transform_2(%arg0: i32) -> (i32, i32) {
    %c0_i32 = arith.constant 0 : i32
    %c0_i32_0 = arith.constant 0 : i32
    %c0_i32_1 = arith.constant 0 : i32
    return %c0_i32, %c0_i32_0 : i32, i32
  }
  func.func @transform_3(%arg0: i32) -> (i32, i32) {
    %c0_i32 = arith.constant 0 : i32
    %c0_i32_0 = arith.constant 0 : i32
    return %arg0, %c0_i32 : i32, i32
  }
  func.func @transform_4(%arg0: i32) -> (i32, i32) {
    %c0_i32 = arith.constant 0 : i32
    %c0_i32_0 = arith.constant 0 : i32
    return %arg0, %c0_i32 : i32, i32
  }
}

module attributes {stable_mosaic.version = 11 : i64} {
  func.func @_matmul_kernel(%arg0: i32, %arg1: memref<256x16xbf16, #tpu.memory_space<vmem>>, %arg2: memref<16x32xbf16, #tpu.memory_space<vmem>>, %arg3: memref<1x32xf32, #tpu.memory_space<vmem>>, %arg4: memref<256x32xf32, #tpu.memory_space<vmem>>, %arg5: memref<256x32xf32, #tpu.memory_space<vmem>>) attributes {dimension_semantics = [#tpu.dimension_semantics<parallel>], iteration_bounds = array<i64: 2>, scalar_prefetch = 0 : i64, scratch_operands = 0 : i64, tpu.core_type = #tpu.core_type<tc>, window_params = [{transform_indices = @transform_0, window_bounds = array<i64: 256, 16>}, {pipeline_mode = #tpu.pipeline_mode<synchronous>, transform_indices = @transform_1, window_bounds = array<i64: 16, 32>}, {pipeline_mode = #tpu.pipeline_mode<synchronous>, transform_indices = @transform_2, window_bounds = array<i64: 1, 32>}, {transform_indices = @transform_3, window_bounds = array<i64: 256, 32>}, {transform_indices = @transform_4, window_bounds = array<i64: 256, 32>}]} {
    %c0 = arith.constant 0 : index
    %c0_0 = arith.constant 0 : index
    %0 = vector.load %arg1[%c0, %c0_0] : memref<256x16xbf16, #tpu.memory_space<vmem>>, vector<256x16xbf16>
    %c0_1 = arith.constant 0 : index
    %c0_2 = arith.constant 0 : index
    %1 = vector.load %arg2[%c0_1, %c0_2] : memref<16x32xbf16, #tpu.memory_space<vmem>>, vector<16x32xbf16>
    %cst = arith.constant dense<0.000000e+00> : vector<256x32xf32>
    %2 = tpu.matmul %0, %1, %cst {dimension_numbers = #tpu.dot_dimension_numbers<[1], [0], [0], [1], [0, 0, 1, 1], [], []>} : vector<256x16xbf16>, vector<16x32xbf16>, vector<256x32xf32> -> vector<256x32xf32>
    %c0_3 = arith.constant 0 : index
    %c0_4 = arith.constant 0 : index
    %3 = vector.load %arg3[%c0_3, %c0_4] : memref<1x32xf32, #tpu.memory_space<vmem>>, vector<1x32xf32>
    %4 = vector.broadcast %3 : vector<1x32xf32> to vector<256x32xf32>
    %5 = arith.addf %2, %4 : vector<256x32xf32>
    %c0_5 = arith.constant 0 : index
    %c0_6 = arith.constant 0 : index
    %6 = vector.load %arg4[%c0_5, %c0_6] : memref<256x32xf32, #tpu.memory_space<vmem>>, vector<256x32xf32>
    %7 = arith.addf %5, %6 : vector<256x32xf32>
    %c0_7 = arith.constant 0 : index
    %c0_8 = arith.constant 0 : index
    %8 = vector.load %arg5[%c0_7, %c0_8] : memref<256x32xf32, #tpu.memory_space<vmem>>, vector<256x32xf32>
    tpu.vector_store %arg5[%c0_7, %c0_8], %7 {strides = array<i32>} : memref<256x32xf32, #tpu.memory_space<vmem>>, vector<256x32xf32>,
    return
  }
  func.func @transform_0(%arg0: i32) -> (i32, i32) {
    %c0_i32 = arith.constant 0 : i32
    %c0_i32_0 = arith.constant 0 : i32
    return %arg0, %c0_i32 : i32, i32
  }
  func.func @transform_1(%arg0: i32) -> (i32, i32) {
    %c0_i32 = arith.constant 0 : i32
    %c0_i32_0 = arith.constant 0 : i32
    %c0_i32_1 = arith.constant 0 : i32
    return %c0_i32, %c0_i32_0 : i32, i32
  }
  func.func @transform_2(%arg0: i32) -> (i32, i32) {
    %c0_i32 = arith.constant 0 : i32
    %c0_i32_0 = arith.constant 0 : i32
    %c0_i32_1 = arith.constant 0 : i32
    return %c0_i32, %c0_i32_0 : i32, i32
  }
  func.func @transform_3(%arg0: i32) -> (i32, i32) {
    %c0_i32 = arith.constant 0 : i32
    %c0_i32_0 = arith.constant 0 : i32
    return %arg0, %c0_i32 : i32, i32
  }
  func.func @transform_4(%arg0: i32) -> (i32, i32) {
    %c0_i32 = arith.constant 0 : i32
    %c0_i32_0 = arith.constant 0 : i32
    return %arg0, %c0_i32 : i32, i32
  }
}

module attributes {stable_mosaic.version = 11 : i64} {
  func.func @_conv3x3_pool_kernel(%arg0: i32, %arg1: memref<1x8x8x32xf32, #tpu.memory_space<vmem>>, %arg2: memref<288x32xf32, #tpu.memory_space<vmem>>, %arg3: memref<1x32xf32, #tpu.memory_space<vmem>>, %arg4: memref<1x1x32xf32, #tpu.memory_space<vmem>>, %arg5: memref<1x288xf32, #tpu.memory_space<vmem>>) attributes {dimension_semantics = [#tpu.dimension_semantics<parallel>], iteration_bounds = array<i64: 2>, scalar_prefetch = 0 : i64, scratch_operands = 1 : i64, tpu.core_type = #tpu.core_type<tc>, window_params = [{transform_indices = @transform_0, window_bounds = array<i64: 1, 8, 8, 32>}, {pipeline_mode = #tpu.pipeline_mode<synchronous>, transform_indices = @transform_1, window_bounds = array<i64: 288, 32>}, {pipeline_mode = #tpu.pipeline_mode<synchronous>, transform_indices = @transform_2, window_bounds = array<i64: 1, 32>}, {transform_indices = @transform_3, window_bounds = array<i64: 1, 1, 32>}]} {
    %c0 = arith.constant 0 : index
    %c0_0 = arith.constant 0 : index
    %c0_1 = arith.constant 0 : index
    %c0_2 = arith.constant 0 : index
    %0 = vector.load %arg1[%c0, %c0_0, %c0_1, %c0_2] : memref<1x8x8x32xf32, #tpu.memory_space<vmem>>, vector<1x8x8x32xf32>
    %1 = vector.shape_cast %0 : vector<1x8x8x32xf32> to vector<8x8x32xf32>
    %cst = arith.constant dense<0.000000e+00> : vector<8x32xf32>
    %2 = vector.multi_reduction <add>, %1, %cst [0] : vector<8x8x32xf32> to vector<8x32xf32>
    %cst_3 = arith.constant dense<0.000000e+00> : vector<8x32xf32>
    %3 = vector.multi_reduction <add>, %1, %cst_3 [1] : vector<8x8x32xf32> to vector<8x32xf32>
    %cst_4 = arith.constant dense<0.000000e+00> : vector<32xf32>
    %4 = vector.multi_reduction <add>, %2, %cst_4 [0] : vector<8x32xf32> to vector<32xf32>
    %5 = vector.shape_cast %4 : vector<32xf32> to vector<1x32xf32>
    %6 = vector.extract_strided_slice %3 {offsets = [7, 0], sizes = [1, 32], strides = [1, 1]} : vector<8x32xf32> to vector<1x32xf32>
    %7 = vector.extract_strided_slice %3 {offsets = [0, 0], sizes = [1, 32], strides = [1, 1]} : vector<8x32xf32> to vector<1x32xf32>
    %8 = vector.extract_strided_slice %2 {offsets = [7, 0], sizes = [1, 32], strides = [1, 1]} : vector<8x32xf32> to vector<1x32xf32>
    %9 = vector.extract_strided_slice %2 {offsets = [0, 0], sizes = [1, 32], strides = [1, 1]} : vector<8x32xf32> to vector<1x32xf32>
    %10 = vector.extract_strided_slice %1 {offsets = [7, 7, 0], sizes = [1, 1, 32], strides = [1, 1, 1]} : vector<8x8x32xf32> to vector<1x1x32xf32>
    %11 = vector.shape_cast %10 : vector<1x1x32xf32> to vector<1x32xf32>
    %12 = vector.extract_strided_slice %1 {offsets = [7, 0, 0], sizes = [1, 1, 32], strides = [1, 1, 1]} : vector<8x8x32xf32> to vector<1x1x32xf32>
    %13 = vector.shape_cast %12 : vector<1x1x32xf32> to vector<1x32xf32>
    %14 = vector.extract_strided_slice %1 {offsets = [0, 7, 0], sizes = [1, 1, 32], strides = [1, 1, 1]} : vector<8x8x32xf32> to vector<1x1x32xf32>
    %15 = vector.shape_cast %14 : vector<1x1x32xf32> to vector<1x32xf32>
    %16 = vector.extract_strided_slice %1 {offsets = [0, 0, 0], sizes = [1, 1, 32], strides = [1, 1, 1]} : vector<8x8x32xf32> to vector<1x1x32xf32>
    %17 = vector.shape_cast %16 : vector<1x1x32xf32> to vector<1x32xf32>
    %c0_5 = arith.constant 0 : index
    %c0_6 = arith.constant 0 : index
    %18 = vector.load %arg5[%c0_5, %c0_6] : memref<1x288xf32, #tpu.memory_space<vmem>>, vector<1x32xf32>
    tpu.vector_store %arg5[%c0_5, %c0_6], %5 {strides = array<i32>} : memref<1x288xf32, #tpu.memory_space<vmem>>, vector<1x32xf32>,
    %c0_7 = arith.constant 0 : index
    %c32 = arith.constant 32 : index
    %19 = vector.load %arg5[%c0_7, %c32] : memref<1x288xf32, #tpu.memory_space<vmem>>, vector<1x32xf32>
    tpu.vector_store %arg5[%c0_7, %c32], %6 {strides = array<i32>} : memref<1x288xf32, #tpu.memory_space<vmem>>, vector<1x32xf32>,
    %c0_8 = arith.constant 0 : index
    %c64 = arith.constant 64 : index
    %20 = vector.load %arg5[%c0_8, %c64] : memref<1x288xf32, #tpu.memory_space<vmem>>, vector<1x32xf32>
    tpu.vector_store %arg5[%c0_8, %c64], %7 {strides = array<i32>} : memref<1x288xf32, #tpu.memory_space<vmem>>, vector<1x32xf32>,
    %c0_9 = arith.constant 0 : index
    %c96 = arith.constant 96 : index
    %21 = vector.load %arg5[%c0_9, %c96] : memref<1x288xf32, #tpu.memory_space<vmem>>, vector<1x32xf32>
    tpu.vector_store %arg5[%c0_9, %c96], %8 {strides = array<i32>} : memref<1x288xf32, #tpu.memory_space<vmem>>, vector<1x32xf32>,
    %c0_10 = arith.constant 0 : index
    %c128 = arith.constant 128 : index
    %22 = vector.load %arg5[%c0_10, %c128] : memref<1x288xf32, #tpu.memory_space<vmem>>, vector<1x32xf32>
    tpu.vector_store %arg5[%c0_10, %c128], %9 {strides = array<i32>} : memref<1x288xf32, #tpu.memory_space<vmem>>, vector<1x32xf32>,
    %c0_11 = arith.constant 0 : index
    %c160 = arith.constant 160 : index
    %23 = vector.load %arg5[%c0_11, %c160] : memref<1x288xf32, #tpu.memory_space<vmem>>, vector<1x32xf32>
    tpu.vector_store %arg5[%c0_11, %c160], %11 {strides = array<i32>} : memref<1x288xf32, #tpu.memory_space<vmem>>, vector<1x32xf32>,
    %c0_12 = arith.constant 0 : index
    %c192 = arith.constant 192 : index
    %24 = vector.load %arg5[%c0_12, %c192] : memref<1x288xf32, #tpu.memory_space<vmem>>, vector<1x32xf32>
    tpu.vector_store %arg5[%c0_12, %c192], %13 {strides = array<i32>} : memref<1x288xf32, #tpu.memory_space<vmem>>, vector<1x32xf32>,
    %c0_13 = arith.constant 0 : index
    %c224 = arith.constant 224 : index
    %25 = vector.load %arg5[%c0_13, %c224] : memref<1x288xf32, #tpu.memory_space<vmem>>, vector<1x32xf32>
    tpu.vector_store %arg5[%c0_13, %c224], %15 {strides = array<i32>} : memref<1x288xf32, #tpu.memory_space<vmem>>, vector<1x32xf32>,
    %c0_14 = arith.constant 0 : index
    %c256 = arith.constant 256 : index
    %26 = vector.load %arg5[%c0_14, %c256] : memref<1x288xf32, #tpu.memory_space<vmem>>, vector<1x32xf32>
    tpu.vector_store %arg5[%c0_14, %c256], %17 {strides = array<i32>} : memref<1x288xf32, #tpu.memory_space<vmem>>, vector<1x32xf32>,
    %c0_15 = arith.constant 0 : index
    %c0_16 = arith.constant 0 : index
    %27 = vector.load %arg5[%c0_15, %c0_16] : memref<1x288xf32, #tpu.memory_space<vmem>>, vector<1x288xf32>
    %c0_17 = arith.constant 0 : index
    %c0_18 = arith.constant 0 : index
    %28 = vector.load %arg2[%c0_17, %c0_18] : memref<288x32xf32, #tpu.memory_space<vmem>>, vector<288x32xf32>
    %cst_19 = arith.constant dense<0.000000e+00> : vector<1x32xf32>
    %29 = tpu.matmul %27, %28, %cst_19 {dimension_numbers = #tpu.dot_dimension_numbers<[1], [0], [0], [1], [0, 0, 1, 1], [], []>} : vector<1x288xf32>, vector<288x32xf32>, vector<1x32xf32> -> vector<1x32xf32>
    %cst_20 = arith.constant 1.562500e-02 : f32
    %30 = vector.broadcast %cst_20 : f32 to vector<1x32xf32>
    %31 = arith.mulf %29, %30 : vector<1x32xf32>
    %c0_21 = arith.constant 0 : index
    %c0_22 = arith.constant 0 : index
    %32 = vector.load %arg3[%c0_21, %c0_22] : memref<1x32xf32, #tpu.memory_space<vmem>>, vector<1x32xf32>
    %33 = arith.addf %31, %32 : vector<1x32xf32>
    %c0_23 = arith.constant 0 : index
    %c0_24 = arith.constant 0 : index
    %c0_25 = arith.constant 0 : index
    %34 = vector.load %arg4[%c0_23, %c0_24, %c0_25] : memref<1x1x32xf32, #tpu.memory_space<vmem>>, vector<1x1x32xf32>
    %35 = vector.shape_cast %34 : vector<1x1x32xf32> to vector<1x32xf32>
    %36 = vector.shape_cast %33 : vector<1x32xf32> to vector<1x1x32xf32>
    tpu.vector_store %arg4[%c0_23, %c0_24, %c0_25], %36 {strides = array<i32>} : memref<1x1x32xf32, #tpu.memory_space<vmem>>, vector<1x1x32xf32>,
    return
  }
  func.func @transform_0(%arg0: i32) -> (i32, i32, i32, i32) {
    %c0_i32 = arith.constant 0 : i32
    %c0_i32_0 = arith.constant 0 : i32
    %c0_i32_1 = arith.constant 0 : i32
    %c0_i32_2 = arith.constant 0 : i32
    return %arg0, %c0_i32, %c0_i32_0, %c0_i32_1 : i32, i32, i32, i32
  }
  func.func @transform_1(%arg0: i32) -> (i32, i32) {
    %c0_i32 = arith.constant 0 : i32
    %c0_i32_0 = arith.constant 0 : i32
    %c0_i32_1 = arith.constant 0 : i32
    return %c0_i32, %c0_i32_0 : i32, i32
  }
  func.func @transform_2(%arg0: i32) -> (i32, i32) {
    %c0_i32 = arith.constant 0 : i32
    %c0_i32_0 = arith.constant 0 : i32
    %c0_i32_1 = arith.constant 0 : i32
    return %c0_i32, %c0_i32_0 : i32, i32
  }
  func.func @transform_3(%arg0: i32) -> (i32, i32, i32) {
    %c0_i32 = arith.constant 0 : i32
    %c0_i32_0 = arith.constant 0 : i32
    %c0_i32_1 = arith.constant 0 : i32
    return %arg0, %c0_i32, %c0_i32_0 : i32, i32, i32
  }
}

module attributes {stable_mosaic.version = 11 : i64} {
  func.func @_conv3x3_pool_kernel(%arg0: i32, %arg1: memref<1x16x16x32xf32, #tpu.memory_space<vmem>>, %arg2: memref<288x32xf32, #tpu.memory_space<vmem>>, %arg3: memref<1x32xf32, #tpu.memory_space<vmem>>, %arg4: memref<1x1x32xf32, #tpu.memory_space<vmem>>, %arg5: memref<1x288xf32, #tpu.memory_space<vmem>>) attributes {dimension_semantics = [#tpu.dimension_semantics<parallel>], iteration_bounds = array<i64: 2>, scalar_prefetch = 0 : i64, scratch_operands = 1 : i64, tpu.core_type = #tpu.core_type<tc>, window_params = [{transform_indices = @transform_0, window_bounds = array<i64: 1, 16, 16, 32>}, {pipeline_mode = #tpu.pipeline_mode<synchronous>, transform_indices = @transform_1, window_bounds = array<i64: 288, 32>}, {pipeline_mode = #tpu.pipeline_mode<synchronous>, transform_indices = @transform_2, window_bounds = array<i64: 1, 32>}, {transform_indices = @transform_3, window_bounds = array<i64: 1, 1, 32>}]} {
    %c0 = arith.constant 0 : index
    %c0_0 = arith.constant 0 : index
    %c0_1 = arith.constant 0 : index
    %c0_2 = arith.constant 0 : index
    %0 = vector.load %arg1[%c0, %c0_0, %c0_1, %c0_2] : memref<1x16x16x32xf32, #tpu.memory_space<vmem>>, vector<1x16x16x32xf32>
    %1 = vector.shape_cast %0 : vector<1x16x16x32xf32> to vector<16x16x32xf32>
    %cst = arith.constant dense<0.000000e+00> : vector<16x32xf32>
    %2 = vector.multi_reduction <add>, %1, %cst [0] : vector<16x16x32xf32> to vector<16x32xf32>
    %cst_3 = arith.constant dense<0.000000e+00> : vector<16x32xf32>
    %3 = vector.multi_reduction <add>, %1, %cst_3 [1] : vector<16x16x32xf32> to vector<16x32xf32>
    %cst_4 = arith.constant dense<0.000000e+00> : vector<32xf32>
    %4 = vector.multi_reduction <add>, %2, %cst_4 [0] : vector<16x32xf32> to vector<32xf32>
    %5 = vector.shape_cast %4 : vector<32xf32> to vector<1x32xf32>
    %6 = vector.extract_strided_slice %3 {offsets = [15, 0], sizes = [1, 32], strides = [1, 1]} : vector<16x32xf32> to vector<1x32xf32>
    %7 = vector.extract_strided_slice %3 {offsets = [0, 0], sizes = [1, 32], strides = [1, 1]} : vector<16x32xf32> to vector<1x32xf32>
    %8 = vector.extract_strided_slice %2 {offsets = [15, 0], sizes = [1, 32], strides = [1, 1]} : vector<16x32xf32> to vector<1x32xf32>
    %9 = vector.extract_strided_slice %2 {offsets = [0, 0], sizes = [1, 32], strides = [1, 1]} : vector<16x32xf32> to vector<1x32xf32>
    %10 = vector.extract_strided_slice %1 {offsets = [15, 15, 0], sizes = [1, 1, 32], strides = [1, 1, 1]} : vector<16x16x32xf32> to vector<1x1x32xf32>
    %11 = vector.shape_cast %10 : vector<1x1x32xf32> to vector<1x32xf32>
    %12 = vector.extract_strided_slice %1 {offsets = [15, 0, 0], sizes = [1, 1, 32], strides = [1, 1, 1]} : vector<16x16x32xf32> to vector<1x1x32xf32>
    %13 = vector.shape_cast %12 : vector<1x1x32xf32> to vector<1x32xf32>
    %14 = vector.extract_strided_slice %1 {offsets = [0, 15, 0], sizes = [1, 1, 32], strides = [1, 1, 1]} : vector<16x16x32xf32> to vector<1x1x32xf32>
    %15 = vector.shape_cast %14 : vector<1x1x32xf32> to vector<1x32xf32>
    %16 = vector.extract_strided_slice %1 {offsets = [0, 0, 0], sizes = [1, 1, 32], strides = [1, 1, 1]} : vector<16x16x32xf32> to vector<1x1x32xf32>
    %17 = vector.shape_cast %16 : vector<1x1x32xf32> to vector<1x32xf32>
    %c0_5 = arith.constant 0 : index
    %c0_6 = arith.constant 0 : index
    %18 = vector.load %arg5[%c0_5, %c0_6] : memref<1x288xf32, #tpu.memory_space<vmem>>, vector<1x32xf32>
    tpu.vector_store %arg5[%c0_5, %c0_6], %5 {strides = array<i32>} : memref<1x288xf32, #tpu.memory_space<vmem>>, vector<1x32xf32>,
    %c0_7 = arith.constant 0 : index
    %c32 = arith.constant 32 : index
    %19 = vector.load %arg5[%c0_7, %c32] : memref<1x288xf32, #tpu.memory_space<vmem>>, vector<1x32xf32>
    tpu.vector_store %arg5[%c0_7, %c32], %6 {strides = array<i32>} : memref<1x288xf32, #tpu.memory_space<vmem>>, vector<1x32xf32>,
    %c0_8 = arith.constant 0 : index
    %c64 = arith.constant 64 : index
    %20 = vector.load %arg5[%c0_8, %c64] : memref<1x288xf32, #tpu.memory_space<vmem>>, vector<1x32xf32>
    tpu.vector_store %arg5[%c0_8, %c64], %7 {strides = array<i32>} : memref<1x288xf32, #tpu.memory_space<vmem>>, vector<1x32xf32>,
    %c0_9 = arith.constant 0 : index
    %c96 = arith.constant 96 : index
    %21 = vector.load %arg5[%c0_9, %c96] : memref<1x288xf32, #tpu.memory_space<vmem>>, vector<1x32xf32>
    tpu.vector_store %arg5[%c0_9, %c96], %8 {strides = array<i32>} : memref<1x288xf32, #tpu.memory_space<vmem>>, vector<1x32xf32>,
    %c0_10 = arith.constant 0 : index
    %c128 = arith.constant 128 : index
    %22 = vector.load %arg5[%c0_10, %c128] : memref<1x288xf32, #tpu.memory_space<vmem>>, vector<1x32xf32>
    tpu.vector_store %arg5[%c0_10, %c128], %9 {strides = array<i32>} : memref<1x288xf32, #tpu.memory_space<vmem>>, vector<1x32xf32>,
    %c0_11 = arith.constant 0 : index
    %c160 = arith.constant 160 : index
    %23 = vector.load %arg5[%c0_11, %c160] : memref<1x288xf32, #tpu.memory_space<vmem>>, vector<1x32xf32>
    tpu.vector_store %arg5[%c0_11, %c160], %11 {strides = array<i32>} : memref<1x288xf32, #tpu.memory_space<vmem>>, vector<1x32xf32>,
    %c0_12 = arith.constant 0 : index
    %c192 = arith.constant 192 : index
    %24 = vector.load %arg5[%c0_12, %c192] : memref<1x288xf32, #tpu.memory_space<vmem>>, vector<1x32xf32>
    tpu.vector_store %arg5[%c0_12, %c192], %13 {strides = array<i32>} : memref<1x288xf32, #tpu.memory_space<vmem>>, vector<1x32xf32>,
    %c0_13 = arith.constant 0 : index
    %c224 = arith.constant 224 : index
    %25 = vector.load %arg5[%c0_13, %c224] : memref<1x288xf32, #tpu.memory_space<vmem>>, vector<1x32xf32>
    tpu.vector_store %arg5[%c0_13, %c224], %15 {strides = array<i32>} : memref<1x288xf32, #tpu.memory_space<vmem>>, vector<1x32xf32>,
    %c0_14 = arith.constant 0 : index
    %c256 = arith.constant 256 : index
    %26 = vector.load %arg5[%c0_14, %c256] : memref<1x288xf32, #tpu.memory_space<vmem>>, vector<1x32xf32>
    tpu.vector_store %arg5[%c0_14, %c256], %17 {strides = array<i32>} : memref<1x288xf32, #tpu.memory_space<vmem>>, vector<1x32xf32>,
    %c0_15 = arith.constant 0 : index
    %c0_16 = arith.constant 0 : index
    %27 = vector.load %arg5[%c0_15, %c0_16] : memref<1x288xf32, #tpu.memory_space<vmem>>, vector<1x288xf32>
    %c0_17 = arith.constant 0 : index
    %c0_18 = arith.constant 0 : index
    %28 = vector.load %arg2[%c0_17, %c0_18] : memref<288x32xf32, #tpu.memory_space<vmem>>, vector<288x32xf32>
    %cst_19 = arith.constant dense<0.000000e+00> : vector<1x32xf32>
    %29 = tpu.matmul %27, %28, %cst_19 {dimension_numbers = #tpu.dot_dimension_numbers<[1], [0], [0], [1], [0, 0, 1, 1], [], []>} : vector<1x288xf32>, vector<288x32xf32>, vector<1x32xf32> -> vector<1x32xf32>
    %cst_20 = arith.constant 3.906250e-03 : f32
    %30 = vector.broadcast %cst_20 : f32 to vector<1x32xf32>
    %31 = arith.mulf %29, %30 : vector<1x32xf32>
    %c0_21 = arith.constant 0 : index
    %c0_22 = arith.constant 0 : index
    %32 = vector.load %arg3[%c0_21, %c0_22] : memref<1x32xf32, #tpu.memory_space<vmem>>, vector<1x32xf32>
    %33 = arith.addf %31, %32 : vector<1x32xf32>
    %c0_23 = arith.constant 0 : index
    %c0_24 = arith.constant 0 : index
    %c0_25 = arith.constant 0 : index
    %34 = vector.load %arg4[%c0_23, %c0_24, %c0_25] : memref<1x1x32xf32, #tpu.memory_space<vmem>>, vector<1x1x32xf32>
    %35 = vector.shape_cast %34 : vector<1x1x32xf32> to vector<1x32xf32>
    %36 = vector.shape_cast %33 : vector<1x32xf32> to vector<1x1x32xf32>
    tpu.vector_store %arg4[%c0_23, %c0_24, %c0_25], %36 {strides = array<i32>} : memref<1x1x32xf32, #tpu.memory_space<vmem>>, vector<1x1x32xf32>,
    return
  }
  func.func @transform_0(%arg0: i32) -> (i32, i32, i32, i32) {
    %c0_i32 = arith.constant 0 : i32
    %c0_i32_0 = arith.constant 0 : i32
    %c0_i32_1 = arith.constant 0 : i32
    %c0_i32_2 = arith.constant 0 : i32
    return %arg0, %c0_i32, %c0_i32_0, %c0_i32_1 : i32, i32, i32, i32
  }
  func.func @transform_1(%arg0: i32) -> (i32, i32) {
    %c0_i32 = arith.constant 0 : i32
    %c0_i32_0 = arith.constant 0 : i32
    %c0_i32_1 = arith.constant 0 : i32
    return %c0_i32, %c0_i32_0 : i32, i32
  }
  func.func @transform_2(%arg0: i32) -> (i32, i32) {
    %c0_i32 = arith.constant 0 : i32
    %c0_i32_0 = arith.constant 0 : i32
    %c0_i32_1 = arith.constant 0 : i32
    return %c0_i32, %c0_i32_0 : i32, i32
  }
  func.func @transform_3(%arg0: i32) -> (i32, i32, i32) {
    %c0_i32 = arith.constant 0 : i32
    %c0_i32_0 = arith.constant 0 : i32
    %c0_i32_1 = arith.constant 0 : i32
    return %arg0, %c0_i32, %c0_i32_0 : i32, i32, i32
  }
}

module attributes {stable_mosaic.version = 11 : i64} {
  func.func @_conv3x3_pool_kernel(%arg0: i32, %arg1: memref<1x4x4x32xf32, #tpu.memory_space<vmem>>, %arg2: memref<288x32xf32, #tpu.memory_space<vmem>>, %arg3: memref<1x32xf32, #tpu.memory_space<vmem>>, %arg4: memref<1x1x32xf32, #tpu.memory_space<vmem>>, %arg5: memref<1x288xf32, #tpu.memory_space<vmem>>) attributes {dimension_semantics = [#tpu.dimension_semantics<parallel>], iteration_bounds = array<i64: 2>, scalar_prefetch = 0 : i64, scratch_operands = 1 : i64, tpu.core_type = #tpu.core_type<tc>, window_params = [{transform_indices = @transform_0, window_bounds = array<i64: 1, 4, 4, 32>}, {pipeline_mode = #tpu.pipeline_mode<synchronous>, transform_indices = @transform_1, window_bounds = array<i64: 288, 32>}, {pipeline_mode = #tpu.pipeline_mode<synchronous>, transform_indices = @transform_2, window_bounds = array<i64: 1, 32>}, {transform_indices = @transform_3, window_bounds = array<i64: 1, 1, 32>}]} {
    %c0 = arith.constant 0 : index
    %c0_0 = arith.constant 0 : index
    %c0_1 = arith.constant 0 : index
    %c0_2 = arith.constant 0 : index
    %0 = vector.load %arg1[%c0, %c0_0, %c0_1, %c0_2] : memref<1x4x4x32xf32, #tpu.memory_space<vmem>>, vector<1x4x4x32xf32>
    %1 = vector.shape_cast %0 : vector<1x4x4x32xf32> to vector<4x4x32xf32>
    %cst = arith.constant dense<0.000000e+00> : vector<4x32xf32>
    %2 = vector.multi_reduction <add>, %1, %cst [0] : vector<4x4x32xf32> to vector<4x32xf32>
    %cst_3 = arith.constant dense<0.000000e+00> : vector<4x32xf32>
    %3 = vector.multi_reduction <add>, %1, %cst_3 [1] : vector<4x4x32xf32> to vector<4x32xf32>
    %cst_4 = arith.constant dense<0.000000e+00> : vector<32xf32>
    %4 = vector.multi_reduction <add>, %2, %cst_4 [0] : vector<4x32xf32> to vector<32xf32>
    %5 = vector.shape_cast %4 : vector<32xf32> to vector<1x32xf32>
    %6 = vector.extract_strided_slice %3 {offsets = [3, 0], sizes = [1, 32], strides = [1, 1]} : vector<4x32xf32> to vector<1x32xf32>
    %7 = vector.extract_strided_slice %3 {offsets = [0, 0], sizes = [1, 32], strides = [1, 1]} : vector<4x32xf32> to vector<1x32xf32>
    %8 = vector.extract_strided_slice %2 {offsets = [3, 0], sizes = [1, 32], strides = [1, 1]} : vector<4x32xf32> to vector<1x32xf32>
    %9 = vector.extract_strided_slice %2 {offsets = [0, 0], sizes = [1, 32], strides = [1, 1]} : vector<4x32xf32> to vector<1x32xf32>
    %10 = vector.extract_strided_slice %1 {offsets = [3, 3, 0], sizes = [1, 1, 32], strides = [1, 1, 1]} : vector<4x4x32xf32> to vector<1x1x32xf32>
    %11 = vector.shape_cast %10 : vector<1x1x32xf32> to vector<1x32xf32>
    %12 = vector.extract_strided_slice %1 {offsets = [3, 0, 0], sizes = [1, 1, 32], strides = [1, 1, 1]} : vector<4x4x32xf32> to vector<1x1x32xf32>
    %13 = vector.shape_cast %12 : vector<1x1x32xf32> to vector<1x32xf32>
    %14 = vector.extract_strided_slice %1 {offsets = [0, 3, 0], sizes = [1, 1, 32], strides = [1, 1, 1]} : vector<4x4x32xf32> to vector<1x1x32xf32>
    %15 = vector.shape_cast %14 : vector<1x1x32xf32> to vector<1x32xf32>
    %16 = vector.extract_strided_slice %1 {offsets = [0, 0, 0], sizes = [1, 1, 32], strides = [1, 1, 1]} : vector<4x4x32xf32> to vector<1x1x32xf32>
    %17 = vector.shape_cast %16 : vector<1x1x32xf32> to vector<1x32xf32>
    %c0_5 = arith.constant 0 : index
    %c0_6 = arith.constant 0 : index
    %18 = vector.load %arg5[%c0_5, %c0_6] : memref<1x288xf32, #tpu.memory_space<vmem>>, vector<1x32xf32>
    tpu.vector_store %arg5[%c0_5, %c0_6], %5 {strides = array<i32>} : memref<1x288xf32, #tpu.memory_space<vmem>>, vector<1x32xf32>,
    %c0_7 = arith.constant 0 : index
    %c32 = arith.constant 32 : index
    %19 = vector.load %arg5[%c0_7, %c32] : memref<1x288xf32, #tpu.memory_space<vmem>>, vector<1x32xf32>
    tpu.vector_store %arg5[%c0_7, %c32], %6 {strides = array<i32>} : memref<1x288xf32, #tpu.memory_space<vmem>>, vector<1x32xf32>,
    %c0_8 = arith.constant 0 : index
    %c64 = arith.constant 64 : index
    %20 = vector.load %arg5[%c0_8, %c64] : memref<1x288xf32, #tpu.memory_space<vmem>>, vector<1x32xf32>
    tpu.vector_store %arg5[%c0_8, %c64], %7 {strides = array<i32>} : memref<1x288xf32, #tpu.memory_space<vmem>>, vector<1x32xf32>,
    %c0_9 = arith.constant 0 : index
    %c96 = arith.constant 96 : index
    %21 = vector.load %arg5[%c0_9, %c96] : memref<1x288xf32, #tpu.memory_space<vmem>>, vector<1x32xf32>
    tpu.vector_store %arg5[%c0_9, %c96], %8 {strides = array<i32>} : memref<1x288xf32, #tpu.memory_space<vmem>>, vector<1x32xf32>,
    %c0_10 = arith.constant 0 : index
    %c128 = arith.constant 128 : index
    %22 = vector.load %arg5[%c0_10, %c128] : memref<1x288xf32, #tpu.memory_space<vmem>>, vector<1x32xf32>
    tpu.vector_store %arg5[%c0_10, %c128], %9 {strides = array<i32>} : memref<1x288xf32, #tpu.memory_space<vmem>>, vector<1x32xf32>,
    %c0_11 = arith.constant 0 : index
    %c160 = arith.constant 160 : index
    %23 = vector.load %arg5[%c0_11, %c160] : memref<1x288xf32, #tpu.memory_space<vmem>>, vector<1x32xf32>
    tpu.vector_store %arg5[%c0_11, %c160], %11 {strides = array<i32>} : memref<1x288xf32, #tpu.memory_space<vmem>>, vector<1x32xf32>,
    %c0_12 = arith.constant 0 : index
    %c192 = arith.constant 192 : index
    %24 = vector.load %arg5[%c0_12, %c192] : memref<1x288xf32, #tpu.memory_space<vmem>>, vector<1x32xf32>
    tpu.vector_store %arg5[%c0_12, %c192], %13 {strides = array<i32>} : memref<1x288xf32, #tpu.memory_space<vmem>>, vector<1x32xf32>,
    %c0_13 = arith.constant 0 : index
    %c224 = arith.constant 224 : index
    %25 = vector.load %arg5[%c0_13, %c224] : memref<1x288xf32, #tpu.memory_space<vmem>>, vector<1x32xf32>
    tpu.vector_store %arg5[%c0_13, %c224], %15 {strides = array<i32>} : memref<1x288xf32, #tpu.memory_space<vmem>>, vector<1x32xf32>,
    %c0_14 = arith.constant 0 : index
    %c256 = arith.constant 256 : index
    %26 = vector.load %arg5[%c0_14, %c256] : memref<1x288xf32, #tpu.memory_space<vmem>>, vector<1x32xf32>
    tpu.vector_store %arg5[%c0_14, %c256], %17 {strides = array<i32>} : memref<1x288xf32, #tpu.memory_space<vmem>>, vector<1x32xf32>,
    %c0_15 = arith.constant 0 : index
    %c0_16 = arith.constant 0 : index
    %27 = vector.load %arg5[%c0_15, %c0_16] : memref<1x288xf32, #tpu.memory_space<vmem>>, vector<1x288xf32>
    %c0_17 = arith.constant 0 : index
    %c0_18 = arith.constant 0 : index
    %28 = vector.load %arg2[%c0_17, %c0_18] : memref<288x32xf32, #tpu.memory_space<vmem>>, vector<288x32xf32>
    %cst_19 = arith.constant dense<0.000000e+00> : vector<1x32xf32>
    %29 = tpu.matmul %27, %28, %cst_19 {dimension_numbers = #tpu.dot_dimension_numbers<[1], [0], [0], [1], [0, 0, 1, 1], [], []>} : vector<1x288xf32>, vector<288x32xf32>, vector<1x32xf32> -> vector<1x32xf32>
    %cst_20 = arith.constant 6.250000e-02 : f32
    %30 = vector.broadcast %cst_20 : f32 to vector<1x32xf32>
    %31 = arith.mulf %29, %30 : vector<1x32xf32>
    %c0_21 = arith.constant 0 : index
    %c0_22 = arith.constant 0 : index
    %32 = vector.load %arg3[%c0_21, %c0_22] : memref<1x32xf32, #tpu.memory_space<vmem>>, vector<1x32xf32>
    %33 = arith.addf %31, %32 : vector<1x32xf32>
    %c0_23 = arith.constant 0 : index
    %c0_24 = arith.constant 0 : index
    %c0_25 = arith.constant 0 : index
    %34 = vector.load %arg4[%c0_23, %c0_24, %c0_25] : memref<1x1x32xf32, #tpu.memory_space<vmem>>, vector<1x1x32xf32>
    %35 = vector.shape_cast %34 : vector<1x1x32xf32> to vector<1x32xf32>
    %36 = vector.shape_cast %33 : vector<1x32xf32> to vector<1x1x32xf32>
    tpu.vector_store %arg4[%c0_23, %c0_24, %c0_25], %36 {strides = array<i32>} : memref<1x1x32xf32, #tpu.memory_space<vmem>>, vector<1x1x32xf32>,
    return
  }
  func.func @transform_0(%arg0: i32) -> (i32, i32, i32, i32) {
    %c0_i32 = arith.constant 0 : i32
    %c0_i32_0 = arith.constant 0 : i32
    %c0_i32_1 = arith.constant 0 : i32
    %c0_i32_2 = arith.constant 0 : i32
    return %arg0, %c0_i32, %c0_i32_0, %c0_i32_1 : i32, i32, i32, i32
  }
  func.func @transform_1(%arg0: i32) -> (i32, i32) {
    %c0_i32 = arith.constant 0 : i32
    %c0_i32_0 = arith.constant 0 : i32
    %c0_i32_1 = arith.constant 0 : i32
    return %c0_i32, %c0_i32_0 : i32, i32
  }
  func.func @transform_2(%arg0: i32) -> (i32, i32) {
    %c0_i32 = arith.constant 0 : i32
    %c0_i32_0 = arith.constant 0 : i32
    %c0_i32_1 = arith.constant 0 : i32
    return %c0_i32, %c0_i32_0 : i32, i32
  }
  func.func @transform_3(%arg0: i32) -> (i32, i32, i32) {
    %c0_i32 = arith.constant 0 : i32
    %c0_i32_0 = arith.constant 0 : i32
    %c0_i32_1 = arith.constant 0 : i32
    return %arg0, %c0_i32, %c0_i32_0 : i32, i32, i32
  }
}

module attributes {stable_mosaic.version = 11 : i64} {
  func.func @_conv3x3_pool_kernel(%arg0: i32, %arg1: memref<1x2x2x32xf32, #tpu.memory_space<vmem>>, %arg2: memref<288x32xf32, #tpu.memory_space<vmem>>, %arg3: memref<1x32xf32, #tpu.memory_space<vmem>>, %arg4: memref<1x1x32xf32, #tpu.memory_space<vmem>>, %arg5: memref<1x288xf32, #tpu.memory_space<vmem>>) attributes {dimension_semantics = [#tpu.dimension_semantics<parallel>], iteration_bounds = array<i64: 2>, scalar_prefetch = 0 : i64, scratch_operands = 1 : i64, tpu.core_type = #tpu.core_type<tc>, window_params = [{transform_indices = @transform_0, window_bounds = array<i64: 1, 2, 2, 32>}, {pipeline_mode = #tpu.pipeline_mode<synchronous>, transform_indices = @transform_1, window_bounds = array<i64: 288, 32>}, {pipeline_mode = #tpu.pipeline_mode<synchronous>, transform_indices = @transform_2, window_bounds = array<i64: 1, 32>}, {transform_indices = @transform_3, window_bounds = array<i64: 1, 1, 32>}]} {
    %c0 = arith.constant 0 : index
    %c0_0 = arith.constant 0 : index
    %c0_1 = arith.constant 0 : index
    %c0_2 = arith.constant 0 : index
    %0 = vector.load %arg1[%c0, %c0_0, %c0_1, %c0_2] : memref<1x2x2x32xf32, #tpu.memory_space<vmem>>, vector<1x2x2x32xf32>
    %1 = vector.shape_cast %0 : vector<1x2x2x32xf32> to vector<2x2x32xf32>
    %cst = arith.constant dense<0.000000e+00> : vector<2x32xf32>
    %2 = vector.multi_reduction <add>, %1, %cst [0] : vector<2x2x32xf32> to vector<2x32xf32>
    %cst_3 = arith.constant dense<0.000000e+00> : vector<2x32xf32>
    %3 = vector.multi_reduction <add>, %1, %cst_3 [1] : vector<2x2x32xf32> to vector<2x32xf32>
    %cst_4 = arith.constant dense<0.000000e+00> : vector<32xf32>
    %4 = vector.multi_reduction <add>, %2, %cst_4 [0] : vector<2x32xf32> to vector<32xf32>
    %5 = vector.shape_cast %4 : vector<32xf32> to vector<1x32xf32>
    %6 = vector.extract_strided_slice %3 {offsets = [1, 0], sizes = [1, 32], strides = [1, 1]} : vector<2x32xf32> to vector<1x32xf32>
    %7 = vector.extract_strided_slice %3 {offsets = [0, 0], sizes = [1, 32], strides = [1, 1]} : vector<2x32xf32> to vector<1x32xf32>
    %8 = vector.extract_strided_slice %2 {offsets = [1, 0], sizes = [1, 32], strides = [1, 1]} : vector<2x32xf32> to vector<1x32xf32>
    %9 = vector.extract_strided_slice %2 {offsets = [0, 0], sizes = [1, 32], strides = [1, 1]} : vector<2x32xf32> to vector<1x32xf32>
    %10 = vector.extract_strided_slice %1 {offsets = [1, 1, 0], sizes = [1, 1, 32], strides = [1, 1, 1]} : vector<2x2x32xf32> to vector<1x1x32xf32>
    %11 = vector.shape_cast %10 : vector<1x1x32xf32> to vector<1x32xf32>
    %12 = vector.extract_strided_slice %1 {offsets = [1, 0, 0], sizes = [1, 1, 32], strides = [1, 1, 1]} : vector<2x2x32xf32> to vector<1x1x32xf32>
    %13 = vector.shape_cast %12 : vector<1x1x32xf32> to vector<1x32xf32>
    %14 = vector.extract_strided_slice %1 {offsets = [0, 1, 0], sizes = [1, 1, 32], strides = [1, 1, 1]} : vector<2x2x32xf32> to vector<1x1x32xf32>
    %15 = vector.shape_cast %14 : vector<1x1x32xf32> to vector<1x32xf32>
    %16 = vector.extract_strided_slice %1 {offsets = [0, 0, 0], sizes = [1, 1, 32], strides = [1, 1, 1]} : vector<2x2x32xf32> to vector<1x1x32xf32>
    %17 = vector.shape_cast %16 : vector<1x1x32xf32> to vector<1x32xf32>
    %c0_5 = arith.constant 0 : index
    %c0_6 = arith.constant 0 : index
    %18 = vector.load %arg5[%c0_5, %c0_6] : memref<1x288xf32, #tpu.memory_space<vmem>>, vector<1x32xf32>
    tpu.vector_store %arg5[%c0_5, %c0_6], %5 {strides = array<i32>} : memref<1x288xf32, #tpu.memory_space<vmem>>, vector<1x32xf32>,
    %c0_7 = arith.constant 0 : index
    %c32 = arith.constant 32 : index
    %19 = vector.load %arg5[%c0_7, %c32] : memref<1x288xf32, #tpu.memory_space<vmem>>, vector<1x32xf32>
    tpu.vector_store %arg5[%c0_7, %c32], %6 {strides = array<i32>} : memref<1x288xf32, #tpu.memory_space<vmem>>, vector<1x32xf32>,
    %c0_8 = arith.constant 0 : index
    %c64 = arith.constant 64 : index
    %20 = vector.load %arg5[%c0_8, %c64] : memref<1x288xf32, #tpu.memory_space<vmem>>, vector<1x32xf32>
    tpu.vector_store %arg5[%c0_8, %c64], %7 {strides = array<i32>} : memref<1x288xf32, #tpu.memory_space<vmem>>, vector<1x32xf32>,
    %c0_9 = arith.constant 0 : index
    %c96 = arith.constant 96 : index
    %21 = vector.load %arg5[%c0_9, %c96] : memref<1x288xf32, #tpu.memory_space<vmem>>, vector<1x32xf32>
    tpu.vector_store %arg5[%c0_9, %c96], %8 {strides = array<i32>} : memref<1x288xf32, #tpu.memory_space<vmem>>, vector<1x32xf32>,
    %c0_10 = arith.constant 0 : index
    %c128 = arith.constant 128 : index
    %22 = vector.load %arg5[%c0_10, %c128] : memref<1x288xf32, #tpu.memory_space<vmem>>, vector<1x32xf32>
    tpu.vector_store %arg5[%c0_10, %c128], %9 {strides = array<i32>} : memref<1x288xf32, #tpu.memory_space<vmem>>, vector<1x32xf32>,
    %c0_11 = arith.constant 0 : index
    %c160 = arith.constant 160 : index
    %23 = vector.load %arg5[%c0_11, %c160] : memref<1x288xf32, #tpu.memory_space<vmem>>, vector<1x32xf32>
    tpu.vector_store %arg5[%c0_11, %c160], %11 {strides = array<i32>} : memref<1x288xf32, #tpu.memory_space<vmem>>, vector<1x32xf32>,
    %c0_12 = arith.constant 0 : index
    %c192 = arith.constant 192 : index
    %24 = vector.load %arg5[%c0_12, %c192] : memref<1x288xf32, #tpu.memory_space<vmem>>, vector<1x32xf32>
    tpu.vector_store %arg5[%c0_12, %c192], %13 {strides = array<i32>} : memref<1x288xf32, #tpu.memory_space<vmem>>, vector<1x32xf32>,
    %c0_13 = arith.constant 0 : index
    %c224 = arith.constant 224 : index
    %25 = vector.load %arg5[%c0_13, %c224] : memref<1x288xf32, #tpu.memory_space<vmem>>, vector<1x32xf32>
    tpu.vector_store %arg5[%c0_13, %c224], %15 {strides = array<i32>} : memref<1x288xf32, #tpu.memory_space<vmem>>, vector<1x32xf32>,
    %c0_14 = arith.constant 0 : index
    %c256 = arith.constant 256 : index
    %26 = vector.load %arg5[%c0_14, %c256] : memref<1x288xf32, #tpu.memory_space<vmem>>, vector<1x32xf32>
    tpu.vector_store %arg5[%c0_14, %c256], %17 {strides = array<i32>} : memref<1x288xf32, #tpu.memory_space<vmem>>, vector<1x32xf32>,
    %c0_15 = arith.constant 0 : index
    %c0_16 = arith.constant 0 : index
    %27 = vector.load %arg5[%c0_15, %c0_16] : memref<1x288xf32, #tpu.memory_space<vmem>>, vector<1x288xf32>
    %c0_17 = arith.constant 0 : index
    %c0_18 = arith.constant 0 : index
    %28 = vector.load %arg2[%c0_17, %c0_18] : memref<288x32xf32, #tpu.memory_space<vmem>>, vector<288x32xf32>
    %cst_19 = arith.constant dense<0.000000e+00> : vector<1x32xf32>
    %29 = tpu.matmul %27, %28, %cst_19 {dimension_numbers = #tpu.dot_dimension_numbers<[1], [0], [0], [1], [0, 0, 1, 1], [], []>} : vector<1x288xf32>, vector<288x32xf32>, vector<1x32xf32> -> vector<1x32xf32>
    %cst_20 = arith.constant 2.500000e-01 : f32
    %30 = vector.broadcast %cst_20 : f32 to vector<1x32xf32>
    %31 = arith.mulf %29, %30 : vector<1x32xf32>
    %c0_21 = arith.constant 0 : index
    %c0_22 = arith.constant 0 : index
    %32 = vector.load %arg3[%c0_21, %c0_22] : memref<1x32xf32, #tpu.memory_space<vmem>>, vector<1x32xf32>
    %33 = arith.addf %31, %32 : vector<1x32xf32>
    %c0_23 = arith.constant 0 : index
    %c0_24 = arith.constant 0 : index
    %c0_25 = arith.constant 0 : index
    %34 = vector.load %arg4[%c0_23, %c0_24, %c0_25] : memref<1x1x32xf32, #tpu.memory_space<vmem>>, vector<1x1x32xf32>
    %35 = vector.shape_cast %34 : vector<1x1x32xf32> to vector<1x32xf32>
    %36 = vector.shape_cast %33 : vector<1x32xf32> to vector<1x1x32xf32>
    tpu.vector_store %arg4[%c0_23, %c0_24, %c0_25], %36 {strides = array<i32>} : memref<1x1x32xf32, #tpu.memory_space<vmem>>, vector<1x1x32xf32>,
    return
  }
  func.func @transform_0(%arg0: i32) -> (i32, i32, i32, i32) {
    %c0_i32 = arith.constant 0 : i32
    %c0_i32_0 = arith.constant 0 : i32
    %c0_i32_1 = arith.constant 0 : i32
    %c0_i32_2 = arith.constant 0 : i32
    return %arg0, %c0_i32, %c0_i32_0, %c0_i32_1 : i32, i32, i32, i32
  }
  func.func @transform_1(%arg0: i32) -> (i32, i32) {
    %c0_i32 = arith.constant 0 : i32
    %c0_i32_0 = arith.constant 0 : i32
    %c0_i32_1 = arith.constant 0 : i32
    return %c0_i32, %c0_i32_0 : i32, i32
  }
  func.func @transform_2(%arg0: i32) -> (i32, i32) {
    %c0_i32 = arith.constant 0 : i32
    %c0_i32_0 = arith.constant 0 : i32
    %c0_i32_1 = arith.constant 0 : i32
    return %c0_i32, %c0_i32_0 : i32, i32
  }
  func.func @transform_3(%arg0: i32) -> (i32, i32, i32) {
    %c0_i32 = arith.constant 0 : i32
    %c0_i32_0 = arith.constant 0 : i32
    %c0_i32_1 = arith.constant 0 : i32
    return %arg0, %c0_i32, %c0_i32_0 : i32, i32, i32
  }
}

</mosaic_0001>

<llo_original>
// kernel: _forward_impl.13
$region0: #{_forward_impl.13}
  #allocation0 [shape = 'u32[]', space=smem, size = 0x4, offset = 0x4, fixed_abs, tag = 'smem constant byte address 0x4 - core index']
  #allocation1 [shape = 'u32[144,128]{1,0:T(1,128)}', space=vmem, size = 0x12000, scoped, tag = 'internal scratch']
  %s0 = inlined_call_operand.vmem [shape: bf16[2048,12], index: 0, kind: input, shape index: {}]
  %s1 = inlined_call_operand.vmem [shape: bf16[12,8], index: 1, kind: input, shape index: {}]
  %s2 = inlined_call_operand.vmem [shape: f32[1,8], index: 2, kind: input, shape index: {}]
  %s3 = inlined_call_operand.vmem [shape: bf16[2048,8], index: 3, kind: output, shape index: {}]
  %s4 = sld [smem:[#allocation0]]
  $region45: #{_forward_impl.13} parent=0
    _
  %s6 = ssub.s32 1, %s4
  %s7 = scalar_select 0, %s6, %s4
  loop: start=0, step=1, limit=4
  $region2: #{_forward_impl.13} parent=0 // loop_pre_header
    _
  $region3: #{_forward_impl.13} parent=0 // loop_header
    %s9 = sphi 0, %s13
    %p10 = scmp.ge.s32.totalorder %s9, 4
    %s19 = sphi 0, %s21
    %s22 = sphi 0, %s19
    %s23 = sphi 0, %s22
    %s39 = sphi 0, %s23
    %s43 = sphi 0, %s43
    %s45 = sphi 0, %s43
    %s46 = sphi 0, %s45
    %s60 = sphi 0, %s46
    %s64 = sphi 0, %s64
    %s66 = sphi 0, %s64
    %s67 = sphi 0, %s66
    %s81 = sphi 0, %s67
    %s87 = sphi 0, %s89
    %s90 = sphi 0, %s87
    %s91 = sphi 0, %s90
    %s107 = sphi 0, %s91
  $region4: #{_forward_impl.13} parent=0 // loop_header_branch
    %12 = sbr.rel (%p10) target = $region8
  $region5: #{_forward_impl.13} parent=0 // loop_body
    %s14 = ssub.s32 %s9, 1
    %s15 = ssub.s32 %s9, 2
    %s16 = sadd.s32 %s9, 1
    %s17 = ssub.s32 %s9, %s16
    %p18 = scmp.eq.s32.totalorder %s17, 0
    %s20 = sadd.s32 %s19, 1
    %s21 = scalar_select %p18, %s19, %s20
    %p24 = pneg %p18
    %p25 = scmp.eq.s32.totalorder %s9, 1
    %p26 = por %p24, %p25
    %p27 = scmp.ne.s32.totalorder %s19, %s22
    %p28 = scmp.eq.s32.totalorder %s9, 0
    %p29 = por %p27, %p28
    %p30 = scmp.ne.s32.totalorder %s19, %s22
    %p31 = scmp.eq.s32.totalorder %s14, 1
    %p32 = por %p30, %p31
    %p33 = scmp.ne.s32.totalorder %s22, %s23
    %p34 = scmp.eq.s32.totalorder %s14, 0
    %p35 = por %p33, %p34
    %p36 = scmp.ne.s32.totalorder %s22, %s23
    %p37 = scmp.eq.s32.totalorder %s15, 1
    %p38 = por %p36, %p37
    %p40 = scmp.ne.s32.totalorder %s23, %s39
    %p41 = scmp.eq.s32.totalorder %s15, 0
    %p42 = por %p40, %p41
    %s44 = sadd.s32 %s43, 1
    %p47 = scmp.eq.s32.totalorder %s9, 1
    %p48 = scmp.ne.s32.totalorder %s43, %s45
    %p49 = scmp.eq.s32.totalorder %s9, 0
    %p50 = por %p48, %p49
    %p51 = scmp.ne.s32.totalorder %s43, %s45
    %p52 = scmp.eq.s32.totalorder %s14, 1
    %p53 = por %p51, %p52
    %p54 = scmp.ne.s32.totalorder %s45, %s46
    %p55 = scmp.eq.s32.totalorder %s14, 0
    %p56 = por %p54, %p55
    %p57 = scmp.ne.s32.totalorder %s45, %s46
    %p58 = scmp.eq.s32.totalorder %s15, 1
    %p59 = por %p57, %p58
    %p61 = scmp.ne.s32.totalorder %s46, %s60
    %p62 = scmp.eq.s32.totalorder %s15, 0
    %p63 = por %p61, %p62
    %s65 = sadd.s32 %s64, 1
    %p68 = scmp.eq.s32.totalorder %s9, 1
    %p69 = scmp.ne.s32.totalorder %s64, %s66
    %p70 = scmp.eq.s32.totalorder %s9, 0
    %p71 = por %p69, %p70
    %p72 = scmp.ne.s32.totalorder %s64, %s66
    %p73 = scmp.eq.s32.totalorder %s14, 1
    %p74 = por %p72, %p73
    %p75 = scmp.ne.s32.totalorder %s66, %s67
    %p76 = scmp.eq.s32.totalorder %s14, 0
    %p77 = por %p75, %p76
    %p78 = scmp.ne.s32.totalorder %s66, %s67
    %p79 = scmp.eq.s32.totalorder %s15, 1
    %p80 = por %p78, %p79
    %p82 = scmp.ne.s32.totalorder %s67, %s81
    %p83 = scmp.eq.s32.totalorder %s15, 0
    %p84 = por %p82, %p83
    %s85 = ssub.s32 %s9, %s16
    %p86 = scmp.eq.s32.totalorder %s85, 0
    %s88 = sadd.s32 %s87, 1
    %s89 = scalar_select %p86, %s87, %s88
    %p92 = pneg %p86
    %p93 = scmp.eq.s32.totalorder %s9, 1
    %p94 = por %p92, %p93
    %p95 = scmp.ne.s32.totalorder %s87, %s90
    %p96 = scmp.eq.s32.totalorder %s9, 0
    %p97 = por %p95, %p96
    %p98 = scmp.ne.s32.totalorder %s87, %s90
    %p99 = scmp.eq.s32.totalorder %s14, 1
    %p100 = por %p98, %p99
    %p101 = scmp.ne.s32.totalorder %s90, %s91
    %p102 = scmp.eq.s32.totalorder %s14, 0
    %p103 = por %p101, %p102
    %p104 = scmp.ne.s32.totalorder %s90, %s91
    %p105 = scmp.eq.s32.totalorder %s15, 1
    %p106 = por %p104, %p105
    %p108 = scmp.ne.s32.totalorder %s91, %s107
    %p109 = scmp.eq.s32.totalorder %s15, 0
    %p110 = por %p108, %p109
    %p111 = scmp.le.s32.totalorder 1, %s9
    %p112 = scmp.lt.s32.totalorder %s9, 3
    %p113 = pnand %p111, %p112
    %p114 = pneg %p113
    // Predicated region
    $region9: #{_forward_impl.13} parent=5 // pred_check
      _
    $region10: #{_forward_impl.13} parent=5 // pred_check_branch
      %116 = sbr.rel (%p113) target = $region12
    $region11: #{_forward_impl.13} parent=5 // pred_region
      %s117 = ssub.s32 %s9, 1
      // Predicated region
      $region13: #{_forward_impl.13} parent=11 // pred_check
        %p118 = pneg %p56
      $region14: #{_forward_impl.13} parent=11 // pred_check_branch
        %120 = sbr.rel (%p118) target = $region16
      $region15: #{_forward_impl.13} parent=11 // pred_region
        _
      $region16: #{_forward_impl.13} parent=11 // pred_fallthru
        _
      // Predicated region
      $region17: #{_forward_impl.13} parent=11 // pred_check
        %p121 = pneg %p77
      $region18: #{_forward_impl.13} parent=11 // pred_check_branch
        %123 = sbr.rel (%p121) target = $region20
      $region19: #{_forward_impl.13} parent=11 // pred_region
        _
      $region20: #{_forward_impl.13} parent=11 // pred_fallthru
        _
    $region12: #{_forward_impl.13} parent=5 // pred_fallthru
      _
    %p124 = scmp.lt.s32.totalorder %s9, 2
    // Predicated region
    $region21: #{_forward_impl.13} parent=5 // pred_check
      %p125 = pneg %p124
    $region22: #{_forward_impl.13} parent=5 // pred_check_branch
      %127 = sbr.rel (%p125) target = $region24
    $region23: #{_forward_impl.13} parent=5 // pred_region
      // Predicated region
      $region25: #{_forward_impl.13} parent=23 // pred_check
        %p128 = pneg %p29
      $region26: #{_forward_impl.13} parent=23 // pred_check_branch
        %130 = sbr.rel (%p128) target = $region28
      $region27: #{_forward_impl.13} parent=23 // pred_region
        %s131 = smul.u32 128, %s9
        %p132 = scmp.lt.s32.totalorder %s131, 255
        %s133 = scalar_select %p132, %s131, 255
        %s134 = smul.addr %s133, 4
        %s135 = scalar_lea.vmem %s0, %s134
        %s136 = smul.u32 128, %s9
      $region28: #{_forward_impl.13} parent=23 // pred_fallthru
        _
    $region24: #{_forward_impl.13} parent=5 // pred_fallthru
      _
    %p137 = scmp.le.s32.totalorder 1, %s9
    %p138 = scmp.lt.s32.totalorder %s9, 3
    %p139 = pnand %p137, %p138
    %p140 = pneg %p139
    // Predicated region
    $region29: #{_forward_impl.13} parent=5 // pred_check
      _
    $region30: #{_forward_impl.13} parent=5 // pred_check_branch
      %142 = sbr.rel (%p139) target = $region32
    $region31: #{_forward_impl.13} parent=5 // pred_region
      %s143 = ssub.s32 %s9, 1
      %s144 = smul.u32 128, %s14
      %p145 = scmp.lt.s32.totalorder %s144, 255
      %s146 = scalar_select %p145, %s144, 255
      %s147 = smul.addr %s146, 4
      %s148 = scalar_lea.vmem %s0, %s147
      %p149 = pneg %p35
      %p150 = pneg %p32
      %p151 = pneg %p56
      %p152 = pneg %p53
      %p153 = pneg %p77
      %p154 = pneg %p74
      %p155 = pneg %p103
      %p156 = pneg %p100
      %s157 = smul.u32 128, %s14
      %p158 = scmp.lt.s32.totalorder %s157, 255
      %s159 = scalar_select %p158, %s157, 255
      %s160 = smul.addr %s159, 4
      %s161 = scalar_lea.vmem %s3, %s160
      %s162 = smul.u32 128, %s14
      %p163 = scmp.lt.s32.totalorder %s162, 255
      %s164 = scalar_select %p163, %s162, 255
      %s165 = smul.addr %s164, 4
      %s166 = scalar_lea.vmem %s0, %s165
      %s167 = smul.u32 128, %s14
      %s168 = smul.u32 128, %s14
      %p169 = scmp.lt.s32.totalorder %s168, 255
      %s170 = scalar_select %p169, %s168, 255
      %s171 = smul.addr %s170, 4
      %s172 = scalar_lea.vmem %s3, %s171
      %s173 = smul.u32 128, %s14
      %v175 = vld [vmem:[%s166] sm:$0xf]
      %v176 = vld [vmem:[%s166 + $0x4] sm:$0xf]
      %v177 = vld [vmem:[%s166 + $0x8] sm:$0xf]
      %v178 = vld [vmem:[%s166 + $0xc] sm:$0xf]
      %v179 = vld [vmem:[%s166 + $0x10] sm:$0xf]
      %v180 = vld [vmem:[%s166 + $0x14] sm:$0xf]
      %v181 = vld [vmem:[%s166 + $0x18] sm:$0xf]
      %v182 = vld [vmem:[%s166 + $0x1c] sm:$0xf]
      %v183 = vld [vmem:[%s166 + $0x20] sm:$0xf]
      %v184 = vld [vmem:[%s166 + $0x24] sm:$0xf]
      %v185 = vld [vmem:[%s166 + $0x28] sm:$0xf]
      %v186 = vld [vmem:[%s166 + $0x2c] sm:$0xf]
      %v187 = vld [vmem:[%s166 + $0x30] sm:$0xf]
      %v188 = vld [vmem:[%s166 + $0x34] sm:$0xf]
      %v189 = vld [vmem:[%s166 + $0x38] sm:$0xf]
      %v190 = vld [vmem:[%s166 + $0x3c] sm:$0xf]
      %v191 = vld [vmem:[%s166 + $0x40] sm:$0xf]
      %v192 = vld [vmem:[%s166 + $0x44] sm:$0xf]
      %v193 = vld [vmem:[%s166 + $0x48] sm:$0xf]
      %v194 = vld [vmem:[%s166 + $0x4c] sm:$0xf]
      %v195 = vld [vmem:[%s166 + $0x50] sm:$0xf]
      %v196 = vld [vmem:[%s166 + $0x54] sm:$0xf]
      %v197 = vld [vmem:[%s166 + $0x58] sm:$0xf]
      %v198 = vld [vmem:[%s166 + $0x5c] sm:$0xf]
      %v199 = vld [vmem:[%s166 + $0x60] sm:$0xf]
      %v200 = vld [vmem:[%s166 + $0x64] sm:$0xf]
      %v201 = vld [vmem:[%s166 + $0x68] sm:$0xf]
      %v202 = vld [vmem:[%s166 + $0x6c] sm:$0xf]
      %v203 = vld [vmem:[%s166 + $0x70] sm:$0xf]
      %v204 = vld [vmem:[%s166 + $0x74] sm:$0xf]
      %v205 = vld [vmem:[%s166 + $0x78] sm:$0xf]
      %v206 = vld [vmem:[%s166 + $0x7c] sm:$0xf]
      %v207 = vld [vmem:[%s166 + $0x80] sm:$0xf]
      %v208 = vld [vmem:[%s166 + $0x84] sm:$0xf]
      %v209 = vld [vmem:[%s166 + $0x88] sm:$0xf]
      %v210 = vld [vmem:[%s166 + $0x8c] sm:$0xf]
      %v211 = vld [vmem:[%s166 + $0x90] sm:$0xf]
      %v212 = vld [vmem:[%s166 + $0x94] sm:$0xf]
      %v213 = vld [vmem:[%s166 + $0x98] sm:$0xf]
      %v214 = vld [vmem:[%s166 + $0x9c] sm:$0xf]
      %v215 = vld [vmem:[%s166 + $0xa0] sm:$0xf]
      %v216 = vld [vmem:[%s166 + $0xa4] sm:$0xf]
      %v217 = vld [vmem:[%s166 + $0xa8] sm:$0xf]
      %v218 = vld [vmem:[%s166 + $0xac] sm:$0xf]
      %v219 = vld [vmem:[%s166 + $0xb0] sm:$0xf]
      %v220 = vld [vmem:[%s166 + $0xb4] sm:$0xf]
      %v221 = vld [vmem:[%s166 + $0xb8] sm:$0xf]
      %v222 = vld [vmem:[%s166 + $0xbc] sm:$0xf]
      %v223 = vld [vmem:[%s166 + $0xc0] sm:$0xf]
      %v224 = vld [vmem:[%s166 + $0xc4] sm:$0xf]
      %v225 = vld [vmem:[%s166 + $0xc8] sm:$0xf]
      %v226 = vld [vmem:[%s166 + $0xcc] sm:$0xf]
      %v227 = vld [vmem:[%s166 + $0xd0] sm:$0xf]
      %v228 = vld [vmem:[%s166 + $0xd4] sm:$0xf]
      %v229 = vld [vmem:[%s166 + $0xd8] sm:$0xf]
      %v230 = vld [vmem:[%s166 + $0xdc] sm:$0xf]
      %v231 = vld [vmem:[%s166 + $0xe0] sm:$0xf]
      %v232 = vld [vmem:[%s166 + $0xe4] sm:$0xf]
      %v233 = vld [vmem:[%s166 + $0xe8] sm:$0xf]
      %v234 = vld [vmem:[%s166 + $0xec] sm:$0xf]
      %v235 = vld [vmem:[%s166 + $0xf0] sm:$0xf]
      %v236 = vld [vmem:[%s166 + $0xf4] sm:$0xf]
      %v237 = vld [vmem:[%s166 + $0xf8] sm:$0xf]
      %v238 = vld [vmem:[%s166 + $0xfc] sm:$0xf]
      %v239 = vld [vmem:[%s166 + $0x100] sm:$0xf]
      %v240 = vld [vmem:[%s166 + $0x104] sm:$0xf]
      %v241 = vld [vmem:[%s166 + $0x108] sm:$0xf]
      %v242 = vld [vmem:[%s166 + $0x10c] sm:$0xf]
      %v243 = vld [vmem:[%s166 + $0x110] sm:$0xf]
      %v244 = vld [vmem:[%s166 + $0x114] sm:$0xf]
      %v245 = vld [vmem:[%s166 + $0x118] sm:$0xf]
      %v246 = vld [vmem:[%s166 + $0x11c] sm:$0xf]
      %v247 = vld [vmem:[%s166 + $0x120] sm:$0xf]
      %v248 = vld [vmem:[%s166 + $0x124] sm:$0xf]
      %v249 = vld [vmem:[%s166 + $0x128] sm:$0xf]
      %v250 = vld [vmem:[%s166 + $0x12c] sm:$0xf]
      %v251 = vld [vmem:[%s166 + $0x130] sm:$0xf]
      %v252 = vld [vmem:[%s166 + $0x134] sm:$0xf]
      %v253 = vld [vmem:[%s166 + $0x138] sm:$0xf]
      %v254 = vld [vmem:[%s166 + $0x13c] sm:$0xf]
      %v255 = vld [vmem:[%s166 + $0x140] sm:$0xf]
      %v256 = vld [vmem:[%s166 + $0x144] sm:$0xf]
      %v257 = vld [vmem:[%s166 + $0x148] sm:$0xf]
      %v258 = vld [vmem:[%s166 + $0x14c] sm:$0xf]
      %v259 = vld [vmem:[%s166 + $0x150] sm:$0xf]
      %v260 = vld [vmem:[%s166 + $0x154] sm:$0xf]
      %v261 = vld [vmem:[%s166 + $0x158] sm:$0xf]
      %v262 = vld [vmem:[%s166 + $0x15c] sm:$0xf]
      %v263 = vld [vmem:[%s166 + $0x160] sm:$0xf]
      %v264 = vld [vmem:[%s166 + $0x164] sm:$0xf]
      %v265 = vld [vmem:[%s166 + $0x168] sm:$0xf]
      %v266 = vld [vmem:[%s166 + $0x16c] sm:$0xf]
      %v267 = vld [vmem:[%s166 + $0x170] sm:$0xf]
      %v268 = vld [vmem:[%s166 + $0x174] sm:$0xf]
      %v269 = vld [vmem:[%s166 + $0x178] sm:$0xf]
      %v270 = vld [vmem:[%s166 + $0x17c] sm:$0xf]
      %v271 = vld [vmem:[%s166 + $0x180] sm:$0xf]
      %v272 = vld [vmem:[%s166 + $0x184] sm:$0xf]
      %v273 = vld [vmem:[%s166 + $0x188] sm:$0xf]
      %v274 = vld [vmem:[%s166 + $0x18c] sm:$0xf]
      %v275 = vld [vmem:[%s166 + $0x190] sm:$0xf]
      %v276 = vld [vmem:[%s166 + $0x194] sm:$0xf]
      %v277 = vld [vmem:[%s166 + $0x198] sm:$0xf]
      %v278 = vld [vmem:[%s166 + $0x19c] sm:$0xf]
      %v279 = vld [vmem:[%s166 + $0x1a0] sm:$0xf]
      %v280 = vld [vmem:[%s166 + $0x1a4] sm:$0xf]
      %v281 = vld [vmem:[%s166 + $0x1a8] sm:$0xf]
      %v282 = vld [vmem:[%s166 + $0x1ac] sm:$0xf]
      %v283 = vld [vmem:[%s166 + $0x1b0] sm:$0xf]
      %v284 = vld [vmem:[%s166 + $0x1b4] sm:$0xf]
      %v285 = vld [vmem:[%s166 + $0x1b8] sm:$0xf]
      %v286 = vld [vmem:[%s166 + $0x1bc] sm:$0xf]
      %v287 = vld [vmem:[%s166 + $0x1c0] sm:$0xf]
      %v288 = vld [vmem:[%s166 + $0x1c4] sm:$0xf]
      %v289 = vld [vmem:[%s166 + $0x1c8] sm:$0xf]
      %v290 = vld [vmem:[%s166 + $0x1cc] sm:$0xf]
      %v291 = vld [vmem:[%s166 + $0x1d0] sm:$0xf]
      %v292 = vld [vmem:[%s166 + $0x1d4] sm:$0xf]
      %v293 = vld [vmem:[%s166 + $0x1d8] sm:$0xf]
      %v294 = vld [vmem:[%s166 + $0x1dc] sm:$0xf]
      %v295 = vld [vmem:[%s166 + $0x1e0] sm:$0xf]
      %v296 = vld [vmem:[%s166 + $0x1e4] sm:$0xf]
      %v297 = vld [vmem:[%s166 + $0x1e8] sm:$0xf]
      %v298 = vld [vmem:[%s166 + $0x1ec] sm:$0xf]
      %v299 = vld [vmem:[%s166 + $0x1f0] sm:$0xf]
      %v300 = vld [vmem:[%s166 + $0x1f4] sm:$0xf]
      %v301 = vld [vmem:[%s166 + $0x1f8] sm:$0xf]
      %v302 = vld [vmem:[%s166 + $0x1fc] sm:$0xf]
      %v303 = vld [vmem:[%s1] sm:$0xf]
      %v304 = vld [vmem:[%s1 + $0x4] sm:$0x3]
      %v305 = vld [vmem:[%s2] sm:$0x1]
      %v307 = vlaneseq
      %v308 = vshrl.u32 %v307, 7
      %v309 = vsub.s32 0, %v308
      %v310 = vrot.slane %v305, %v309
      %v440 = vunpack.c.l.b16 %v175
      %v441 = vunpack.c.l.b16 %v176
      %v442 = vunpack.c.l.b16 %v177
      %v443 = vunpack.c.l.b16 %v178
      %v444 = vunpack.c.l.b16 %v179
      %v445 = vunpack.c.l.b16 %v180
      %v446 = vunpack.c.l.b16 %v181
      %v447 = vunpack.c.l.b16 %v182
      %v448 = vunpack.c.l.b16 %v183
      %v449 = vunpack.c.l.b16 %v184
      %v450 = vunpack.c.l.b16 %v185
      %v451 = vunpack.c.l.b16 %v186
      %v452 = vunpack.c.l.b16 %v187
      %v453 = vunpack.c.l.b16 %v188
      %v454 = vunpack.c.l.b16 %v189
      %v455 = vunpack.c.l.b16 %v190
      %v456 = vunpack.c.l.b16 %v191
      %v457 = vunpack.c.l.b16 %v192
      %v458 = vunpack.c.l.b16 %v193
      %v459 = vunpack.c.l.b16 %v194
      %v460 = vunpack.c.l.b16 %v195
      %v461 = vunpack.c.l.b16 %v196
      %v462 = vunpack.c.l.b16 %v197
      %v463 = vunpack.c.l.b16 %v198
      %v464 = vunpack.c.l.b16 %v199
      %v465 = vunpack.c.l.b16 %v200
      %v466 = vunpack.c.l.b16 %v201
      %v467 = vunpack.c.l.b16 %v202
      %v468 = vunpack.c.l.b16 %v203
      %v469 = vunpack.c.l.b16 %v204
      %v470 = vunpack.c.l.b16 %v205
      %v471 = vunpack.c.l.b16 %v206
      %v472 = vunpack.c.l.b16 %v207
      %v473 = vunpack.c.l.b16 %v208
      %v474 = vunpack.c.l.b16 %v209
      %v475 = vunpack.c.l.b16 %v210
      %v476 = vunpack.c.l.b16 %v211
      %v477 = vunpack.c.l.b16 %v212
      %v478 = vunpack.c.l.b16 %v213
      %v479 = vunpack.c.l.b16 %v214
      %v480 = vunpack.c.l.b16 %v215
      %v481 = vunpack.c.l.b16 %v216
      %v482 = vunpack.c.l.b16 %v217
      %v483 = vunpack.c.l.b16 %v218
      %v484 = vunpack.c.l.b16 %v219
      %v485 = vunpack.c.l.b16 %v220
      %v486 = vunpack.c.l.b16 %v221
      %v487 = vunpack.c.l.b16 %v222
      %v488 = vunpack.c.l.b16 %v223
      %v489 = vunpack.c.l.b16 %v224
      %v490 = vunpack.c.l.b16 %v225
      %v491 = vunpack.c.l.b16 %v226
      %v492 = vunpack.c.l.b16 %v227
      %v493 = vunpack.c.l.b16 %v228
      %v494 = vunpack.c.l.b16 %v229
      %v495 = vunpack.c.l.b16 %v230
      %v496 = vunpack.c.l.b16 %v231
      %v497 = vunpack.c.l.b16 %v232
      %v498 = vunpack.c.l.b16 %v233
      %v499 = vunpack.c.l.b16 %v234
      %v500 = vunpack.c.l.b16 %v235
      %v501 = vunpack.c.l.b16 %v236
      %v502 = vunpack.c.l.b16 %v237
      %v503 = vunpack.c.l.b16 %v238
      %v504 = vunpack.c.l.b16 %v239
      %v505 = vunpack.c.l.b16 %v240
      %v506 = vunpack.c.l.b16 %v241
      %v507 = vunpack.c.l.b16 %v242
      %v508 = vunpack.c.l.b16 %v243
      %v509 = vunpack.c.l.b16 %v244
      %v510 = vunpack.c.l.b16 %v245
      %v511 = vunpack.c.l.b16 %v246
      %v512 = vunpack.c.l.b16 %v247
      %v513 = vunpack.c.l.b16 %v248
      %v514 = vunpack.c.l.b16 %v249
      %v515 = vunpack.c.l.b16 %v250
      %v516 = vunpack.c.l.b16 %v251
      %v517 = vunpack.c.l.b16 %v252
      %v518 = vunpack.c.l.b16 %v253
      %v519 = vunpack.c.l.b16 %v254
      %v520 = vunpack.c.l.b16 %v255
      %v521 = vunpack.c.l.b16 %v256
      %v522 = vunpack.c.l.b16 %v257
      %v523 = vunpack.c.l.b16 %v258
      %v524 = vunpack.c.l.b16 %v259
      %v525 = vunpack.c.l.b16 %v260
      %v526 = vunpack.c.l.b16 %v261
      %v527 = vunpack.c.l.b16 %v262
      %v528 = vunpack.c.l.b16 %v263
      %v529 = vunpack.c.l.b16 %v264
      %v530 = vunpack.c.l.b16 %v265
      %v531 = vunpack.c.l.b16 %v266
      %v532 = vunpack.c.l.b16 %v267
      %v533 = vunpack.c.l.b16 %v268
      %v534 = vunpack.c.l.b16 %v269
      %v535 = vunpack.c.l.b16 %v270
      %v536 = vunpack.c.l.b16 %v271
      %v537 = vunpack.c.l.b16 %v272
      %v538 = vunpack.c.l.b16 %v273
      %v539 = vunpack.c.l.b16 %v274
      %v540 = vunpack.c.l.b16 %v275
      %v541 = vunpack.c.l.b16 %v276
      %v542 = vunpack.c.l.b16 %v277
      %v543 = vunpack.c.l.b16 %v278
      %v544 = vunpack.c.l.b16 %v279
      %v545 = vunpack.c.l.b16 %v280
      %v546 = vunpack.c.l.b16 %v281
      %v547 = vunpack.c.l.b16 %v282
      %v548 = vunpack.c.l.b16 %v283
      %v549 = vunpack.c.l.b16 %v284
      %v550 = vunpack.c.l.b16 %v285
      %v551 = vunpack.c.l.b16 %v286
      %v552 = vunpack.c.l.b16 %v287
      %v553 = vunpack.c.l.b16 %v288
      %v554 = vunpack.c.l.b16 %v289
      %v555 = vunpack.c.l.b16 %v290
      %v556 = vunpack.c.l.b16 %v291
      %v557 = vunpack.c.l.b16 %v292
      %v558 = vunpack.c.l.b16 %v293
      %v559 = vunpack.c.l.b16 %v294
      %v560 = vunpack.c.l.b16 %v295
      %v561 = vunpack.c.l.b16 %v296
      %v562 = vunpack.c.l.b16 %v297
      %v563 = vunpack.c.l.b16 %v298
      %v564 = vunpack.c.l.b16 %v299
      %v565 = vunpack.c.l.b16 %v300
      %v566 = vunpack.c.l.b16 %v301
      %v567 = vunpack.c.l.b16 %v302
      %v568 = vpack.c.b16 %v441, %v440
      %v569 = vpack.c.b16 %v443, %v442
      %v570 = vpack.c.b16 %v445, %v444
      %v571 = vpack.c.b16 %v447, %v446
      %v572 = vpack.c.b16 %v449, %v448
      %v573 = vpack.c.b16 %v451, %v450
      %v574 = vpack.c.b16 %v453, %v452
      %v575 = vpack.c.b16 %v455, %v454
      %v576 = vpack.c.b16 %v457, %v456
      %v577 = vpack.c.b16 %v459, %v458
      %v578 = vpack.c.b16 %v461, %v460
      %v579 = vpack.c.b16 %v463, %v462
      %v580 = vpack.c.b16 %v465, %v464
      %v581 = vpack.c.b16 %v467, %v466
      %v582 = vpack.c.b16 %v469, %v468
      %v583 = vpack.c.b16 %v471, %v470
      %v584 = vpack.c.b16 %v473, %v472
      %v585 = vpack.c.b16 %v475, %v474
      %v586 = vpack.c.b16 %v477, %v476
      %v587 = vpack.c.b16 %v479, %v478
      %v588 = vpack.c.b16 %v481, %v480
      %v589 = vpack.c.b16 %v483, %v482
      %v590 = vpack.c.b16 %v485, %v484
      %v591 = vpack.c.b16 %v487, %v486
      %v592 = vpack.c.b16 %v489, %v488
      %v593 = vpack.c.b16 %v491, %v490
      %v594 = vpack.c.b16 %v493, %v492
      %v595 = vpack.c.b16 %v495, %v494
      %v596 = vpack.c.b16 %v497, %v496
      %v597 = vpack.c.b16 %v499, %v498
      %v598 = vpack.c.b16 %v501, %v500
      %v599 = vpack.c.b16 %v503, %v502
      %v600 = vpack.c.b16 %v505, %v504
      %v601 = vpack.c.b16 %v507, %v506
      %v602 = vpack.c.b16 %v509, %v508
      %v603 = vpack.c.b16 %v511, %v510
      %v604 = vpack.c.b16 %v513, %v512
      %v605 = vpack.c.b16 %v515, %v514
      %v606 = vpack.c.b16 %v517, %v516
      %v607 = vpack.c.b16 %v519, %v518
      %v608 = vpack.c.b16 %v521, %v520
      %v609 = vpack.c.b16 %v523, %v522
      %v610 = vpack.c.b16 %v525, %v524
      %v611 = vpack.c.b16 %v527, %v526
      %v612 = vpack.c.b16 %v529, %v528
      %v613 = vpack.c.b16 %v531, %v530
      %v614 = vpack.c.b16 %v533, %v532
      %v615 = vpack.c.b16 %v535, %v534
      %v616 = vpack.c.b16 %v537, %v536
      %v617 = vpack.c.b16 %v539, %v538
      %v618 = vpack.c.b16 %v541, %v540
      %v619 = vpack.c.b16 %v543, %v542
      %v620 = vpack.c.b16 %v545, %v544
      %v621 = vpack.c.b16 %v547, %v546
      %v622 = vpack.c.b16 %v549, %v548
      %v623 = vpack.c.b16 %v551, %v550
      %v624 = vpack.c.b16 %v553, %v552
      %v625 = vpack.c.b16 %v555, %v554
      %v626 = vpack.c.b16 %v557, %v556
      %v627 = vpack.c.b16 %v559, %v558
      %v628 = vpack.c.b16 %v561, %v560
      %v629 = vpack.c.b16 %v563, %v562
      %v630 = vpack.c.b16 %v565, %v564
      %v631 = vpack.c.b16 %v567, %v566
      %v634 = vunpack.c.l.b16 %v303
      %v635 = vunpack.c.l.b16 %v304
      %v636 = vpack.c.b16 %v635, %v634
      %vm637 = vcmask 97280
      %v639 = vsel %vm637, %v568, 0
      %v642 = vsel %vm637, %v569, 0
      %v645 = vsel %vm637, %v570, 0
      %v648 = vsel %vm637, %v571, 0
      %v651 = vsel %vm637, %v572, 0
      %v654 = vsel %vm637, %v573, 0
      %v657 = vsel %vm637, %v574, 0
      %v660 = vsel %vm637, %v575, 0
      %v663 = vsel %vm637, %v576, 0
      %v666 = vsel %vm637, %v577, 0
      %v669 = vsel %vm637, %v578, 0
      %v672 = vsel %vm637, %v579, 0
      %v675 = vsel %vm637, %v580, 0
      %v678 = vsel %vm637, %v581, 0
      %v681 = vsel %vm637, %v582, 0
      %v684 = vsel %vm637, %v583, 0
      %v687 = vsel %vm637, %v584, 0
      %v690 = vsel %vm637, %v585, 0
      %v693 = vsel %vm637, %v586, 0
      %v696 = vsel %vm637, %v587, 0
      %v699 = vsel %vm637, %v588, 0
      %v702 = vsel %vm637, %v589, 0
      %v705 = vsel %vm637, %v590, 0
      %v708 = vsel %vm637, %v591, 0
      %v711 = vsel %vm637, %v592, 0
      %v714 = vsel %vm637, %v593, 0
      %v717 = vsel %vm637, %v594, 0
      %v720 = vsel %vm637, %v595, 0
      %v723 = vsel %vm637, %v596, 0
      %v726 = vsel %vm637, %v597, 0
      %v729 = vsel %vm637, %v598, 0
      %v732 = vsel %vm637, %v599, 0
      %v735 = vsel %vm637, %v600, 0
      %v738 = vsel %vm637, %v601, 0
      %v741 = vsel %vm637, %v602, 0
      %v744 = vsel %vm637, %v603, 0
      %v747 = vsel %vm637, %v604, 0
      %v750 = vsel %vm637, %v605, 0
      %v753 = vsel %vm637, %v606, 0
      %v756 = vsel %vm637, %v607, 0
      %v759 = vsel %vm637, %v608, 0
      %v762 = vsel %vm637, %v609, 0
      %v765 = vsel %vm637, %v610, 0
      %v768 = vsel %vm637, %v611, 0
      %v771 = vsel %vm637, %v612, 0
      %v774 = vsel %vm637, %v613, 0
      %v777 = vsel %vm637, %v614, 0
      %v780 = vsel %vm637, %v615, 0
      %v783 = vsel %vm637, %v616, 0
      %v786 = vsel %vm637, %v617, 0
      %v789 = vsel %vm637, %v618, 0
      %v792 = vsel %vm637, %v619, 0
      %v795 = vsel %vm637, %v620, 0
      %v798 = vsel %vm637, %v621, 0
      %v801 = vsel %vm637, %v622, 0
      %v804 = vsel %vm637, %v623, 0
      %v807 = vsel %vm637, %v624, 0
      %v810 = vsel %vm637, %v625, 0
      %v813 = vsel %vm637, %v626, 0
      %v816 = vsel %vm637, %v627, 0
      %v819 = vsel %vm637, %v628, 0
      %v822 = vsel %vm637, %v629, 0
      %v825 = vsel %vm637, %v630, 0
      %v828 = vsel %vm637, %v631, 0
      %vm830 = vcmask 1045504
      %v832 = vsel %vm830, %v636, 0
      %834 = vmatprep.subr.bf16.mxu0 0
      %835 = vmatpush1.bf16.msra.mxu0 %v832
      %836 = vmatprep.subr.bf16.mxu0 0
      %837 = vmatpush1.bf16.msra.mxu0 0
      %838 = vmatprep.subr.bf16.mxu0 0
      %839 = vmatpush1.bf16.msra.mxu0 0
      %840 = vmatprep.subr.bf16.mxu0 0
      %841 = vmatpush1.bf16.msra.mxu0 0
      %842 = vmatprep.subr.bf16.mxu0 0
      %843 = vmatpush1.bf16.msra.mxu0 0
      %844 = vmatprep.subr.bf16.mxu0 0
      %845 = vmatpush1.bf16.msra.mxu0 0
      %846 = vmatprep.subr.bf16.mxu0 0
      %847 = vmatpush1.bf16.msra.mxu0 0
      %848 = vmatprep.subr.bf16.mxu0 0
      %849 = vmatpush1.bf16.msra.mxu0 0
      %850 = vmatprep.subr.bf16.mxu0 0
      %851 = vmatpush1.bf16.msra.mxu0 0
      %852 = vmatprep.subr.bf16.mxu0 0
      %853 = vmatpush1.bf16.msra.mxu0 0
      %854 = vmatprep.subr.bf16.mxu0 0
      %855 = vmatpush1.bf16.msra.mxu0 0
      %856 = vmatprep.subr.bf16.mxu0 0
      %857 = vmatpush1.bf16.msra.mxu0 0
      %858 = vmatprep.subr.bf16.mxu0 0
      %859 = vmatpush1.bf16.msra.mxu0 0
      %860 = vmatprep.subr.bf16.mxu0 0
      %861 = vmatpush1.bf16.msra.mxu0 0
      %862 = vmatprep.subr.bf16.mxu0 0
      %863 = vmatpush1.bf16.msra.mxu0 0
      %864 = vmatprep.subr.bf16.mxu0 0
      %865 = vmatpush1.bf16.msra.mxu0 0
      %866 = vmatprep.mubr.bf16.mxu0 0
      %867 = vmatmul.mubr.bf16.gmra.mrb[0].mxu0 %v639
      %v868 = vpop.f32.mrb[0].mxu0
      %v869 = vadd.f32 %v310, %v868
      %v870 = vpop.f32.mrb[0].mxu0
      %v871 = vpop.f32.mrb[0].mxu0
      %v872 = vadd.f32 %v310, %v871
      %v873 = vpop.f32.mrb[0].mxu0
      %874 = vmatprep.mubr.bf16.mxu0 0
      %875 = vmatmul.mubr.bf16.gmra.mrb[0].mxu0 %v642
      %v876 = vpop.f32.mrb[0].mxu0
      %v877 = vadd.f32 %v310, %v876
      %v878 = vpop.f32.mrb[0].mxu0
      %v879 = vpop.f32.mrb[0].mxu0
      %v880 = vadd.f32 %v310, %v879
      %v881 = vpop.f32.mrb[0].mxu0
      %882 = vmatprep.mubr.bf16.mxu0 0
      %883 = vmatmul.mubr.bf16.gmra.mrb[0].mxu0 %v645
      %v884 = vpop.f32.mrb[0].mxu0
      %v885 = vadd.f32 %v310, %v884
      %v886 = vpop.f32.mrb[0].mxu0
      %v887 = vpop.f32.mrb[0].mxu0
      %v888 = vadd.f32 %v310, %v887
      %v889 = vpop.f32.mrb[0].mxu0
      %890 = vmatprep.mubr.bf16.mxu0 0
      %891 = vmatmul.mubr.bf16.gmra.mrb[0].mxu0 %v648
      %v892 = vpop.f32.mrb[0].mxu0
      %v893 = vadd.f32 %v310, %v892
      %v894 = vpop.f32.mrb[0].mxu0
      %v895 = vpop.f32.mrb[0].mxu0
      %v896 = vadd.f32 %v310, %v895
      %v897 = vpop.f32.mrb[0].mxu0
      %898 = vmatprep.mubr.bf16.mxu0 0
      %899 = vmatmul.mubr.bf16.gmra.mrb[0].mxu0 %v651
      %v900 = vpop.f32.mrb[0].mxu0
      %v901 = vadd.f32 %v310, %v900
      %v902 = vpop.f32.mrb[0].mxu0
      %v903 = vpop.f32.mrb[0].mxu0
      %v904 = vadd.f32 %v310, %v903
      %v905 = vpop.f32.mrb[0].mxu0
      %906 = vmatprep.mubr.bf16.mxu0 0
      %907 = vmatmul.mubr.bf16.gmra.mrb[0].mxu0 %v654
      %v908 = vpop.f32.mrb[0].mxu0
      %v909 = vadd.f32 %v310, %v908
      %v910 = vpop.f32.mrb[0].mxu0
      %v911 = vpop.f32.mrb[0].mxu0
      %v912 = vadd.f32 %v310, %v911
      %v913 = vpop.f32.mrb[0].mxu0
      %914 = vmatprep.mubr.bf16.mxu0 0
      %915 = vmatmul.mubr.bf16.gmra.mrb[0].mxu0 %v657
      %v916 = vpop.f32.mrb[0].mxu0
      %v917 = vadd.f32 %v310, %v916
      %v918 = vpop.f32.mrb[0].mxu0
      %v919 = vpop.f32.mrb[0].mxu0
      %v920 = vadd.f32 %v310, %v919
      %v921 = vpop.f32.mrb[0].mxu0
      %922 = vmatprep.mubr.bf16.mxu0 0
      %923 = vmatmul.mubr.bf16.gmra.mrb[0].mxu0 %v660
      %v924 = vpop.f32.mrb[0].mxu0
      %v925 = vadd.f32 %v310, %v924
      %v926 = vpop.f32.mrb[0].mxu0
      %v927 = vpop.f32.mrb[0].mxu0
      %v928 = vadd.f32 %v310, %v927
      %v929 = vpop.f32.mrb[0].mxu0
      %930 = vmatprep.mubr.bf16.mxu0 0
      %931 = vmatmul.mubr.bf16.gmra.mrb[0].mxu0 %v663
      %v932 = vpop.f32.mrb[0].mxu0
      %v933 = vadd.f32 %v310, %v932
      %v934 = vpop.f32.mrb[0].mxu0
      %v935 = vpop.f32.mrb[0].mxu0
      %v936 = vadd.f32 %v310, %v935
      %v937 = vpop.f32.mrb[0].mxu0
      %938 = vmatprep.mubr.bf16.mxu0 0
      %939 = vmatmul.mubr.bf16.gmra.mrb[0].mxu0 %v666
      %v940 = vpop.f32.mrb[0].mxu0
      %v941 = vadd.f32 %v310, %v940
      %v942 = vpop.f32.mrb[0].mxu0
      %v943 = vpop.f32.mrb[0].mxu0
      %v944 = vadd.f32 %v310, %v943
      %v945 = vpop.f32.mrb[0].mxu0
      %946 = vmatprep.mubr.bf16.mxu0 0
      %947 = vmatmul.mubr.bf16.gmra.mrb[0].mxu0 %v669
      %v948 = vpop.f32.mrb[0].mxu0
      %v949 = vadd.f32 %v310, %v948
      %v950 = vpop.f32.mrb[0].mxu0
      %v951 = vpop.f32.mrb[0].mxu0
      %v952 = vadd.f32 %v310, %v951
      %v953 = vpop.f32.mrb[0].mxu0
      %954 = vmatprep.mubr.bf16.mxu0 0
      %955 = vmatmul.mubr.bf16.gmra.mrb[0].mxu0 %v672
      %v956 = vpop.f32.mrb[0].mxu0
      %v957 = vadd.f32 %v310, %v956
      %v958 = vpop.f32.mrb[0].mxu0
      %v959 = vpop.f32.mrb[0].mxu0
      %v960 = vadd.f32 %v310, %v959
      %v961 = vpop.f32.mrb[0].mxu0
      %962 = vmatprep.mubr.bf16.mxu0 0
      %963 = vmatmul.mubr.bf16.gmra.mrb[0].mxu0 %v675
      %v964 = vpop.f32.mrb[0].mxu0
      %v965 = vadd.f32 %v310, %v964
      %v966 = vpop.f32.mrb[0].mxu0
      %v967 = vpop.f32.mrb[0].mxu0
      %v968 = vadd.f32 %v310, %v967
      %v969 = vpop.f32.mrb[0].mxu0
      %970 = vmatprep.mubr.bf16.mxu0 0
      %971 = vmatmul.mubr.bf16.gmra.mrb[0].mxu0 %v678
      %v972 = vpop.f32.mrb[0].mxu0
      %v973 = vadd.f32 %v310, %v972
      %v974 = vpop.f32.mrb[0].mxu0
      %v975 = vpop.f32.mrb[0].mxu0
      %v976 = vadd.f32 %v310, %v975
      %v977 = vpop.f32.mrb[0].mxu0
      %978 = vmatprep.mubr.bf16.mxu0 0
      %979 = vmatmul.mubr.bf16.gmra.mrb[0].mxu0 %v681
      %v980 = vpop.f32.mrb[0].mxu0
      %v981 = vadd.f32 %v310, %v980
      %v982 = vpop.f32.mrb[0].mxu0
      %v983 = vpop.f32.mrb[0].mxu0
      %v984 = vadd.f32 %v310, %v983
      %v985 = vpop.f32.mrb[0].mxu0
      %986 = vmatprep.mubr.bf16.mxu0 0
      %987 = vmatmul.mubr.bf16.gmra.mrb[0].mxu0 %v684
      %v988 = vpop.f32.mrb[0].mxu0
      %v989 = vadd.f32 %v310, %v988
      %v990 = vpop.f32.mrb[0].mxu0
      %v991 = vpop.f32.mrb[0].mxu0
      %v992 = vadd.f32 %v310, %v991
      %v993 = vpop.f32.mrb[0].mxu0
      %994 = vmatprep.mubr.bf16.mxu0 0
      %995 = vmatmul.mubr.bf16.gmra.mrb[0].mxu0 %v687
      %v996 = vpop.f32.mrb[0].mxu0
      %v997 = vadd.f32 %v310, %v996
      %v998 = vpop.f32.mrb[0].mxu0
      %v999 = vpop.f32.mrb[0].mxu0
      %v1000 = vadd.f32 %v310, %v999
      %v1001 = vpop.f32.mrb[0].mxu0
      %1002 = vmatprep.mubr.bf16.mxu0 0
      %1003 = vmatmul.mubr.bf16.gmra.mrb[0].mxu0 %v690
      %v1004 = vpop.f32.mrb[0].mxu0
      %v1005 = vadd.f32 %v310, %v1004
      %v1006 = vpop.f32.mrb[0].mxu0
      %v1007 = vpop.f32.mrb[0].mxu0
      %v1008 = vadd.f32 %v310, %v1007
      %v1009 = vpop.f32.mrb[0].mxu0
      %1010 = vmatprep.mubr.bf16.mxu0 0
      %1011 = vmatmul.mubr.bf16.gmra.mrb[0].mxu0 %v693
      %v1012 = vpop.f32.mrb[0].mxu0
      %v1013 = vadd.f32 %v310, %v1012
      %v1014 = vpop.f32.mrb[0].mxu0
      %v1015 = vpop.f32.mrb[0].mxu0
      %v1016 = vadd.f32 %v310, %v1015
      %v1017 = vpop.f32.mrb[0].mxu0
      %1018 = vmatprep.mubr.bf16.mxu0 0
      %1019 = vmatmul.mubr.bf16.gmra.mrb[0].mxu0 %v696
      %v1020 = vpop.f32.mrb[0].mxu0
      %v1021 = vadd.f32 %v310, %v1020
      %v1022 = vpop.f32.mrb[0].mxu0
      %v1023 = vpop.f32.mrb[0].mxu0
      %v1024 = vadd.f32 %v310, %v1023
      %v1025 = vpop.f32.mrb[0].mxu0
      %1026 = vmatprep.mubr.bf16.mxu0 0
      %1027 = vmatmul.mubr.bf16.gmra.mrb[0].mxu0 %v699
      %v1028 = vpop.f32.mrb[0].mxu0
      %v1029 = vadd.f32 %v310, %v1028
      %v1030 = vpop.f32.mrb[0].mxu0
      %v1031 = vpop.f32.mrb[0].mxu0
      %v1032 = vadd.f32 %v310, %v1031
      %v1033 = vpop.f32.mrb[0].mxu0
      %1034 = vmatprep.mubr.bf16.mxu0 0
      %1035 = vmatmul.mubr.bf16.gmra.mrb[0].mxu0 %v702
      %v1036 = vpop.f32.mrb[0].mxu0
      %v1037 = vadd.f32 %v310, %v1036
      %v1038 = vpop.f32.mrb[0].mxu0
      %v1039 = vpop.f32.mrb[0].mxu0
      %v1040 = vadd.f32 %v310, %v1039
      %v1041 = vpop.f32.mrb[0].mxu0
      %1042 = vmatprep.mubr.bf16.mxu0 0
      %1043 = vmatmul.mubr.bf16.gmra.mrb[0].mxu0 %v705
      %v1044 = vpop.f32.mrb[0].mxu0
      %v1045 = vadd.f32 %v310, %v1044
      %v1046 = vpop.f32.mrb[0].mxu0
      %v1047 = vpop.f32.mrb[0].mxu0
      %v1048 = vadd.f32 %v310, %v1047
      %v1049 = vpop.f32.mrb[0].mxu0
      %1050 = vmatprep.mubr.bf16.mxu0 0
      %1051 = vmatmul.mubr.bf16.gmra.mrb[0].mxu0 %v708
      %v1052 = vpop.f32.mrb[0].mxu0
      %v1053 = vadd.f32 %v310, %v1052
      %v1054 = vpop.f32.mrb[0].mxu0
      %v1055 = vpop.f32.mrb[0].mxu0
      %v1056 = vadd.f32 %v310, %v1055
      %v1057 = vpop.f32.mrb[0].mxu0
      %1058 = vmatprep.mubr.bf16.mxu0 0
      %1059 = vmatmul.mubr.bf16.gmra.mrb[0].mxu0 %v711
      %v1060 = vpop.f32.mrb[0].mxu0
      %v1061 = vadd.f32 %v310, %v1060
      %v1062 = vpop.f32.mrb[0].mxu0
      %v1063 = vpop.f32.mrb[0].mxu0
      %v1064 = vadd.f32 %v310, %v1063
      %v1065 = vpop.f32.mrb[0].mxu0
      %1066 = vmatprep.mubr.bf16.mxu0 0
      %1067 = vmatmul.mubr.bf16.gmra.mrb[0].mxu0 %v714
      %v1068 = vpop.f32.mrb[0].mxu0
      %v1069 = vadd.f32 %v310, %v1068
      %v1070 = vpop.f32.mrb[0].mxu0
      %v1071 = vpop.f32.mrb[0].mxu0
      %v1072 = vadd.f32 %v310, %v1071
      %v1073 = vpop.f32.mrb[0].mxu0
      %1074 = vmatprep.mubr.bf16.mxu0 0
      %1075 = vmatmul.mubr.bf16.gmra.mrb[0].mxu0 %v717
      %v1076 = vpop.f32.mrb[0].mxu0
      %v1077 = vadd.f32 %v310, %v1076
      %v1078 = vpop.f32.mrb[0].mxu0
      %v1079 = vpop.f32.mrb[0].mxu0
      %v1080 = vadd.f32 %v310, %v1079
      %v1081 = vpop.f32.mrb[0].mxu0
      %1082 = vmatprep.mubr.bf16.mxu0 0
      %1083 = vmatmul.mubr.bf16.gmra.mrb[0].mxu0 %v720
      %v1084 = vpop.f32.mrb[0].mxu0
      %v1085 = vadd.f32 %v310, %v1084
      %v1086 = vpop.f32.mrb[0].mxu0
      %v1087 = vpop.f32.mrb[0].mxu0
      %v1088 = vadd.f32 %v310, %v1087
      %v1089 = vpop.f32.mrb[0].mxu0
      %1090 = vmatprep.mubr.bf16.mxu0 0
      %1091 = vmatmul.mubr.bf16.gmra.mrb[0].mxu0 %v723
      %v1092 = vpop.f32.mrb[0].mxu0
      %v1093 = vadd.f32 %v310, %v1092
      %v1094 = vpop.f32.mrb[0].mxu0
      %v1095 = vpop.f32.mrb[0].mxu0
      %v1096 = vadd.f32 %v310, %v1095
      %v1097 = vpop.f32.mrb[0].mxu0
      %1098 = vmatprep.mubr.bf16.mxu0 0
      %1099 = vmatmul.mubr.bf16.gmra.mrb[0].mxu0 %v726
      %v1100 = vpop.f32.mrb[0].mxu0
      %v1101 = vadd.f32 %v310, %v1100
      %v1102 = vpop.f32.mrb[0].mxu0
      %v1103 = vpop.f32.mrb[0].mxu0
      %v1104 = vadd.f32 %v310, %v1103
      %v1105 = vpop.f32.mrb[0].mxu0
      %1106 = vmatprep.mubr.bf16.mxu0 0
      %1107 = vmatmul.mubr.bf16.gmra.mrb[0].mxu0 %v729
      %v1108 = vpop.f32.mrb[0].mxu0
      %v1109 = vadd.f32 %v310, %v1108
      %v1110 = vpop.f32.mrb[0].mxu0
      %v1111 = vpop.f32.mrb[0].mxu0
      %v1112 = vadd.f32 %v310, %v1111
      %v1113 = vpop.f32.mrb[0].mxu0
      %1114 = vmatprep.mubr.bf16.mxu0 0
      %1115 = vmatmul.mubr.bf16.gmra.mrb[0].mxu0 %v732
      %v1116 = vpop.f32.mrb[0].mxu0
      %v1117 = vadd.f32 %v310, %v1116
      %v1118 = vpop.f32.mrb[0].mxu0
      %v1119 = vpop.f32.mrb[0].mxu0
      %v1120 = vadd.f32 %v310, %v1119
      %v1121 = vpop.f32.mrb[0].mxu0
      %1122 = vmatprep.mubr.bf16.mxu0 0
      %1123 = vmatmul.mubr.bf16.gmra.mrb[0].mxu0 %v735
      %v1124 = vpop.f32.mrb[0].mxu0
      %v1125 = vadd.f32 %v310, %v1124
      %v1126 = vpop.f32.mrb[0].mxu0
      %v1127 = vpop.f32.mrb[0].mxu0
      %v1128 = vadd.f32 %v310, %v1127
      %v1129 = vpop.f32.mrb[0].mxu0
      %1130 = vmatprep.mubr.bf16.mxu0 0
      %1131 = vmatmul.mubr.bf16.gmra.mrb[0].mxu0 %v738
      %v1132 = vpop.f32.mrb[0].mxu0
      %v1133 = vadd.f32 %v310, %v1132
      %v1134 = vpop.f32.mrb[0].mxu0
      %v1135 = vpop.f32.mrb[0].mxu0
      %v1136 = vadd.f32 %v310, %v1135
      %v1137 = vpop.f32.mrb[0].mxu0
      %1138 = vmatprep.mubr.bf16.mxu0 0
      %1139 = vmatmul.mubr.bf16.gmra.mrb[0].mxu0 %v741
      %v1140 = vpop.f32.mrb[0].mxu0
      %v1141 = vadd.f32 %v310, %v1140
      %v1142 = vpop.f32.mrb[0].mxu0
      %v1143 = vpop.f32.mrb[0].mxu0
      %v1144 = vadd.f32 %v310, %v1143
      %v1145 = vpop.f32.mrb[0].mxu0
      %1146 = vmatprep.mubr.bf16.mxu0 0
      %1147 = vmatmul.mubr.bf16.gmra.mrb[0].mxu0 %v744
      %v1148 = vpop.f32.mrb[0].mxu0
      %v1149 = vadd.f32 %v310, %v1148
      %v1150 = vpop.f32.mrb[0].mxu0
      %v1151 = vpop.f32.mrb[0].mxu0
      %v1152 = vadd.f32 %v310, %v1151
      %v1153 = vpop.f32.mrb[0].mxu0
      %1154 = vmatprep.mubr.bf16.mxu0 0
      %1155 = vmatmul.mubr.bf16.gmra.mrb[0].mxu0 %v747
      %v1156 = vpop.f32.mrb[0].mxu0
      %v1157 = vadd.f32 %v310, %v1156
      %v1158 = vpop.f32.mrb[0].mxu0
      %v1159 = vpop.f32.mrb[0].mxu0
      %v1160 = vadd.f32 %v310, %v1159
      %v1161 = vpop.f32.mrb[0].mxu0
      %1162 = vmatprep.mubr.bf16.mxu0 0
      %1163 = vmatmul.mubr.bf16.gmra.mrb[0].mxu0 %v750
      %v1164 = vpop.f32.mrb[0].mxu0
      %v1165 = vadd.f32 %v310, %v1164
      %v1166 = vpop.f32.mrb[0].mxu0
      %v1167 = vpop.f32.mrb[0].mxu0
      %v1168 = vadd.f32 %v310, %v1167
      %v1169 = vpop.f32.mrb[0].mxu0
      %1170 = vmatprep.mubr.bf16.mxu0 0
      %1171 = vmatmul.mubr.bf16.gmra.mrb[0].mxu0 %v753
      %v1172 = vpop.f32.mrb[0].mxu0
      %v1173 = vadd.f32 %v310, %v1172
      %v1174 = vpop.f32.mrb[0].mxu0
      %v1175 = vpop.f32.mrb[0].mxu0
      %v1176 = vadd.f32 %v310, %v1175
      %v1177 = vpop.f32.mrb[0].mxu0
      %1178 = vmatprep.mubr.bf16.mxu0 0
      %1179 = vmatmul.mubr.bf16.gmra.mrb[0].mxu0 %v756
      %v1180 = vpop.f32.mrb[0].mxu0
      %v1181 = vadd.f32 %v310, %v1180
      %v1182 = vpop.f32.mrb[0].mxu0
      %v1183 = vpop.f32.mrb[0].mxu0
      %v1184 = vadd.f32 %v310, %v1183
      %v1185 = vpop.f32.mrb[0].mxu0
      %1186 = vmatprep.mubr.bf16.mxu0 0
      %1187 = vmatmul.mubr.bf16.gmra.mrb[0].mxu0 %v759
      %v1188 = vpop.f32.mrb[0].mxu0
      %v1189 = vadd.f32 %v310, %v1188
      %v1190 = vpop.f32.mrb[0].mxu0
      %v1191 = vpop.f32.mrb[0].mxu0
      %v1192 = vadd.f32 %v310, %v1191
      %v1193 = vpop.f32.mrb[0].mxu0
      %1194 = vmatprep.mubr.bf16.mxu0 0
      %1195 = vmatmul.mubr.bf16.gmra.mrb[0].mxu0 %v762
      %v1196 = vpop.f32.mrb[0].mxu0
      %v1197 = vadd.f32 %v310, %v1196
      %v1198 = vpop.f32.mrb[0].mxu0
      %v1199 = vpop.f32.mrb[0].mxu0
      %v1200 = vadd.f32 %v310, %v1199
      %v1201 = vpop.f32.mrb[0].mxu0
      %1202 = vmatprep.mubr.bf16.mxu0 0
      %1203 = vmatmul.mubr.bf16.gmra.mrb[0].mxu0 %v765
      %v1204 = vpop.f32.mrb[0].mxu0
      %v1205 = vadd.f32 %v310, %v1204
      %v1206 = vpop.f32.mrb[0].mxu0
      %v1207 = vpop.f32.mrb[0].mxu0
      %v1208 = vadd.f32 %v310, %v1207
      %v1209 = vpop.f32.mrb[0].mxu0
      %1210 = vmatprep.mubr.bf16.mxu0 0
      %1211 = vmatmul.mubr.bf16.gmra.mrb[0].mxu0 %v768
      %v1212 = vpop.f32.mrb[0].mxu0
      %v1213 = vadd.f32 %v310, %v1212
      %v1214 = vpop.f32.mrb[0].mxu0
      %v1215 = vpop.f32.mrb[0].mxu0
      %v1216 = vadd.f32 %v310, %v1215
      %v1217 = vpop.f32.mrb[0].mxu0
      %1218 = vmatprep.mubr.bf16.mxu0 0
      %1219 = vmatmul.mubr.bf16.gmra.mrb[0].mxu0 %v771
      %v1220 = vpop.f32.mrb[0].mxu0
      %v1221 = vadd.f32 %v310, %v1220
      %v1222 = vpop.f32.mrb[0].mxu0
      %v1223 = vpop.f32.mrb[0].mxu0
      %v1224 = vadd.f32 %v310, %v1223
      %v1225 = vpop.f32.mrb[0].mxu0
      %1226 = vmatprep.mubr.bf16.mxu0 0
      %1227 = vmatmul.mubr.bf16.gmra.mrb[0].mxu0 %v774
      %v1228 = vpop.f32.mrb[0].mxu0
      %v1229 = vadd.f32 %v310, %v1228
      %v1230 = vpop.f32.mrb[0].mxu0
      %v1231 = vpop.f32.mrb[0].mxu0
      %v1232 = vadd.f32 %v310, %v1231
      %v1233 = vpop.f32.mrb[0].mxu0
      %1234 = vmatprep.mubr.bf16.mxu0 0
      %1235 = vmatmul.mubr.bf16.gmra.mrb[0].mxu0 %v777
      %v1236 = vpop.f32.mrb[0].mxu0
      %v1237 = vadd.f32 %v310, %v1236
      %v1238 = vpop.f32.mrb[0].mxu0
      %v1239 = vpop.f32.mrb[0].mxu0
      %v1240 = vadd.f32 %v310, %v1239
      %v1241 = vpop.f32.mrb[0].mxu0
      %1242 = vmatprep.mubr.bf16.mxu0 0
      %1243 = vmatmul.mubr.bf16.gmra.mrb[0].mxu0 %v780
      %v1244 = vpop.f32.mrb[0].mxu0
      %v1245 = vadd.f32 %v310, %v1244
      %v1246 = vpop.f32.mrb[0].mxu0
      %v1247 = vpop.f32.mrb[0].mxu0
      %v1248 = vadd.f32 %v310, %v1247
      %v1249 = vpop.f32.mrb[0].mxu0
      %1250 = vmatprep.mubr.bf16.mxu0 0
      %1251 = vmatmul.mubr.bf16.gmra.mrb[0].mxu0 %v783
      %v1252 = vpop.f32.mrb[0].mxu0
      %v1253 = vadd.f32 %v310, %v1252
      %v1254 = vpop.f32.mrb[0].mxu0
      %v1255 = vpop.f32.mrb[0].mxu0
      %v1256 = vadd.f32 %v310, %v1255
      %v1257 = vpop.f32.mrb[0].mxu0
      %1258 = vmatprep.mubr.bf16.mxu0 0
      %1259 = vmatmul.mubr.bf16.gmra.mrb[0].mxu0 %v786
      %v1260 = vpop.f32.mrb[0].mxu0
      %v1261 = vadd.f32 %v310, %v1260
      %v1262 = vpop.f32.mrb[0].mxu0
      %v1263 = vpop.f32.mrb[0].mxu0
      %v1264 = vadd.f32 %v310, %v1263
      %v1265 = vpop.f32.mrb[0].mxu0
      %1266 = vmatprep.mubr.bf16.mxu0 0
      %1267 = vmatmul.mubr.bf16.gmra.mrb[0].mxu0 %v789
      %v1268 = vpop.f32.mrb[0].mxu0
      %v1269 = vadd.f32 %v310, %v1268
      %v1270 = vpop.f32.mrb[0].mxu0
      %v1271 = vpop.f32.mrb[0].mxu0
      %v1272 = vadd.f32 %v310, %v1271
      %v1273 = vpop.f32.mrb[0].mxu0
      %1274 = vmatprep.mubr.bf16.mxu0 0
      %1275 = vmatmul.mubr.bf16.gmra.mrb[0].mxu0 %v792
      %v1276 = vpop.f32.mrb[0].mxu0
      %v1277 = vadd.f32 %v310, %v1276
      %v1278 = vpop.f32.mrb[0].mxu0
      %v1279 = vpop.f32.mrb[0].mxu0
      %v1280 = vadd.f32 %v310, %v1279
      %v1281 = vpop.f32.mrb[0].mxu0
      %1282 = vmatprep.mubr.bf16.mxu0 0
      %1283 = vmatmul.mubr.bf16.gmra.mrb[0].mxu0 %v795
      %v1284 = vpop.f32.mrb[0].mxu0
      %v1285 = vadd.f32 %v310, %v1284
      %v1286 = vpop.f32.mrb[0].mxu0
      %v1287 = vpop.f32.mrb[0].mxu0
      %v1288 = vadd.f32 %v310, %v1287
      %v1289 = vpop.f32.mrb[0].mxu0
      %1290 = vmatprep.mubr.bf16.mxu0 0
      %1291 = vmatmul.mubr.bf16.gmra.mrb[0].mxu0 %v798
      %v1292 = vpop.f32.mrb[0].mxu0
      %v1293 = vadd.f32 %v310, %v1292
      %v1294 = vpop.f32.mrb[0].mxu0
      %v1295 = vpop.f32.mrb[0].mxu0
      %v1296 = vadd.f32 %v310, %v1295
      %v1297 = vpop.f32.mrb[0].mxu0
      %1298 = vmatprep.mubr.bf16.mxu0 0
      %1299 = vmatmul.mubr.bf16.gmra.mrb[0].mxu0 %v801
      %v1300 = vpop.f32.mrb[0].mxu0
      %v1301 = vadd.f32 %v310, %v1300
      %v1302 = vpop.f32.mrb[0].mxu0
      %v1303 = vpop.f32.mrb[0].mxu0
      %v1304 = vadd.f32 %v310, %v1303
      %v1305 = vpop.f32.mrb[0].mxu0
      %1306 = vmatprep.mubr.bf16.mxu0 0
      %1307 = vmatmul.mubr.bf16.gmra.mrb[0].mxu0 %v804
      %v1308 = vpop.f32.mrb[0].mxu0
      %v1309 = vadd.f32 %v310, %v1308
      %v1310 = vpop.f32.mrb[0].mxu0
      %v1311 = vpop.f32.mrb[0].mxu0
      %v1312 = vadd.f32 %v310, %v1311
      %v1313 = vpop.f32.mrb[0].mxu0
      %1314 = vmatprep.mubr.bf16.mxu0 0
      %1315 = vmatmul.mubr.bf16.gmra.mrb[0].mxu0 %v807
      %v1316 = vpop.f32.mrb[0].mxu0
      %v1317 = vadd.f32 %v310, %v1316
      %v1318 = vpop.f32.mrb[0].mxu0
      %v1319 = vpop.f32.mrb[0].mxu0
      %v1320 = vadd.f32 %v310, %v1319
      %v1321 = vpop.f32.mrb[0].mxu0
      %1322 = vmatprep.mubr.bf16.mxu0 0
      %1323 = vmatmul.mubr.bf16.gmra.mrb[0].mxu0 %v810
      %v1324 = vpop.f32.mrb[0].mxu0
      %v1325 = vadd.f32 %v310, %v1324
      %v1326 = vpop.f32.mrb[0].mxu0
      %v1327 = vpop.f32.mrb[0].mxu0
      %v1328 = vadd.f32 %v310, %v1327
      %v1329 = vpop.f32.mrb[0].mxu0
      %1330 = vmatprep.mubr.bf16.mxu0 0
      %1331 = vmatmul.mubr.bf16.gmra.mrb[0].mxu0 %v813
      %v1332 = vpop.f32.mrb[0].mxu0
      %v1333 = vadd.f32 %v310, %v1332
      %v1334 = vpop.f32.mrb[0].mxu0
      %v1335 = vpop.f32.mrb[0].mxu0
      %v1336 = vadd.f32 %v310, %v1335
      %v1337 = vpop.f32.mrb[0].mxu0
      %1338 = vmatprep.mubr.bf16.mxu0 0
      %1339 = vmatmul.mubr.bf16.gmra.mrb[0].mxu0 %v816
      %v1340 = vpop.f32.mrb[0].mxu0
      %v1341 = vadd.f32 %v310, %v1340
      %v1342 = vpop.f32.mrb[0].mxu0
      %v1343 = vpop.f32.mrb[0].mxu0
      %v1344 = vadd.f32 %v310, %v1343
      %v1345 = vpop.f32.mrb[0].mxu0
      %1346 = vmatprep.mubr.bf16.mxu0 0
      %1347 = vmatmul.mubr.bf16.gmra.mrb[0].mxu0 %v819
      %v1348 = vpop.f32.mrb[0].mxu0
      %v1349 = vadd.f32 %v310, %v1348
      %v1350 = vpop.f32.mrb[0].mxu0
      %v1351 = vpop.f32.mrb[0].mxu0
      %v1352 = vadd.f32 %v310, %v1351
      %v1353 = vpop.f32.mrb[0].mxu0
      %1354 = vmatprep.mubr.bf16.mxu0 0
      %1355 = vmatmul.mubr.bf16.gmra.mrb[0].mxu0 %v822
      %v1356 = vpop.f32.mrb[0].mxu0
      %v1357 = vadd.f32 %v310, %v1356
      %v1358 = vpop.f32.mrb[0].mxu0
      %v1359 = vpop.f32.mrb[0].mxu0
      %v1360 = vadd.f32 %v310, %v1359
      %v1361 = vpop.f32.mrb[0].mxu0
      %1362 = vmatprep.mubr.bf16.mxu0 0
      %1363 = vmatmul.mubr.bf16.gmra.mrb[0].mxu0 %v825
      %v1364 = vpop.f32.mrb[0].mxu0
      %v1365 = vadd.f32 %v310, %v1364
      %v1366 = vpop.f32.mrb[0].mxu0
      %v1367 = vpop.f32.mrb[0].mxu0
      %v1368 = vadd.f32 %v310, %v1367
      %v1369 = vpop.f32.mrb[0].mxu0
      %1370 = vmatprep.mubr.bf16.mxu0 0
      %1371 = vmatmul.mubr.bf16.gmra.mrb[0].mxu0 %v828
      %v1372 = vpop.f32.mrb[0].mxu0
      %v1373 = vadd.f32 %v310, %v1372
      %v1374 = vpop.f32.mrb[0].mxu0
      %v1375 = vpop.f32.mrb[0].mxu0
      %v1376 = vadd.f32 %v310, %v1375
      %v1377 = vpop.f32.mrb[0].mxu0
      %1378 = vdwg.mxu0
      %v1379 = vmax.f32 %v869, 0.0
      %v1380 = vmax.f32 %v872, 0.0
      %v1381 = vmax.f32 %v877, 0.0
      %v1382 = vmax.f32 %v880, 0.0
      %v1383 = vmax.f32 %v885, 0.0
      %v1384 = vmax.f32 %v888, 0.0
      %v1385 = vmax.f32 %v893, 0.0
      %v1386 = vmax.f32 %v896, 0.0
      %v1387 = vmax.f32 %v901, 0.0
      %v1388 = vmax.f32 %v904, 0.0
      %v1389 = vmax.f32 %v909, 0.0
      %v1390 = vmax.f32 %v912, 0.0
      %v1391 = vmax.f32 %v917, 0.0
      %v1392 = vmax.f32 %v920, 0.0
      %v1393 = vmax.f32 %v925, 0.0
      %v1394 = vmax.f32 %v928, 0.0
      %v1395 = vmax.f32 %v933, 0.0
      %v1396 = vmax.f32 %v936, 0.0
      %v1397 = vmax.f32 %v941, 0.0
      %v1398 = vmax.f32 %v944, 0.0
      %v1399 = vmax.f32 %v949, 0.0
      %v1400 = vmax.f32 %v952, 0.0
      %v1401 = vmax.f32 %v957, 0.0
      %v1402 = vmax.f32 %v960, 0.0
      %v1403 = vmax.f32 %v965, 0.0
      %v1404 = vmax.f32 %v968, 0.0
      %v1405 = vmax.f32 %v973, 0.0
      %v1406 = vmax.f32 %v976, 0.0
      %v1407 = vmax.f32 %v981, 0.0
      %v1408 = vmax.f32 %v984, 0.0
      %v1409 = vmax.f32 %v989, 0.0
      %v1410 = vmax.f32 %v992, 0.0
      %v1411 = vmax.f32 %v997, 0.0
      %v1412 = vmax.f32 %v1000, 0.0
      %v1413 = vmax.f32 %v1005, 0.0
      %v1414 = vmax.f32 %v1008, 0.0
      %v1415 = vmax.f32 %v1013, 0.0
      %v1416 = vmax.f32 %v1016, 0.0
      %v1417 = vmax.f32 %v1021, 0.0
      %v1418 = vmax.f32 %v1024, 0.0
      %v1419 = vmax.f32 %v1029, 0.0
      %v1420 = vmax.f32 %v1032, 0.0
      %v1421 = vmax.f32 %v1037, 0.0
      %v1422 = vmax.f32 %v1040, 0.0
      %v1423 = vmax.f32 %v1045, 0.0
      %v1424 = vmax.f32 %v1048, 0.0
      %v1425 = vmax.f32 %v1053, 0.0
      %v1426 = vmax.f32 %v1056, 0.0
      %v1427 = vmax.f32 %v1061, 0.0
      %v1428 = vmax.f32 %v1064, 0.0
      %v1429 = vmax.f32 %v1069, 0.0
      %v1430 = vmax.f32 %v1072, 0.0
      %v1431 = vmax.f32 %v1077, 0.0
      %v1432 = vmax.f32 %v1080, 0.0
      %v1433 = vmax.f32 %v1085, 0.0
      %v1434 = vmax.f32 %v1088, 0.0
      %v1435 = vmax.f32 %v1093, 0.0
      %v1436 = vmax.f32 %v1096, 0.0
      %v1437 = vmax.f32 %v1101, 0.0
      %v1438 = vmax.f32 %v1104, 0.0
      %v1439 = vmax.f32 %v1109, 0.0
      %v1440 = vmax.f32 %v1112, 0.0
      %v1441 = vmax.f32 %v1117, 0.0
      %v1442 = vmax.f32 %v1120, 0.0
      %v1443 = vmax.f32 %v1125, 0.0
      %v1444 = vmax.f32 %v1128, 0.0
      %v1445 = vmax.f32 %v1133, 0.0
      %v1446 = vmax.f32 %v1136, 0.0
      %v1447 = vmax.f32 %v1141, 0.0
      %v1448 = vmax.f32 %v1144, 0.0
      %v1449 = vmax.f32 %v1149, 0.0
      %v1450 = vmax.f32 %v1152, 0.0
      %v1451 = vmax.f32 %v1157, 0.0
      %v1452 = vmax.f32 %v1160, 0.0
      %v1453 = vmax.f32 %v1165, 0.0
      %v1454 = vmax.f32 %v1168, 0.0
      %v1455 = vmax.f32 %v1173, 0.0
      %v1456 = vmax.f32 %v1176, 0.0
      %v1457 = vmax.f32 %v1181, 0.0
      %v1458 = vmax.f32 %v1184, 0.0
      %v1459 = vmax.f32 %v1189, 0.0
      %v1460 = vmax.f32 %v1192, 0.0
      %v1461 = vmax.f32 %v1197, 0.0
      %v1462 = vmax.f32 %v1200, 0.0
      %v1463 = vmax.f32 %v1205, 0.0
      %v1464 = vmax.f32 %v1208, 0.0
      %v1465 = vmax.f32 %v1213, 0.0
      %v1466 = vmax.f32 %v1216, 0.0
      %v1467 = vmax.f32 %v1221, 0.0
      %v1468 = vmax.f32 %v1224, 0.0
      %v1469 = vmax.f32 %v1229, 0.0
      %v1470 = vmax.f32 %v1232, 0.0
      %v1471 = vmax.f32 %v1237, 0.0
      %v1472 = vmax.f32 %v1240, 0.0
      %v1473 = vmax.f32 %v1245, 0.0
      %v1474 = vmax.f32 %v1248, 0.0
      %v1475 = vmax.f32 %v1253, 0.0
      %v1476 = vmax.f32 %v1256, 0.0
      %v1477 = vmax.f32 %v1261, 0.0
      %v1478 = vmax.f32 %v1264, 0.0
      %v1479 = vmax.f32 %v1269, 0.0
      %v1480 = vmax.f32 %v1272, 0.0
      %v1481 = vmax.f32 %v1277, 0.0
      %v1482 = vmax.f32 %v1280, 0.0
      %v1483 = vmax.f32 %v1285, 0.0
      %v1484 = vmax.f32 %v1288, 0.0
      %v1485 = vmax.f32 %v1293, 0.0
      %v1486 = vmax.f32 %v1296, 0.0
      %v1487 = vmax.f32 %v1301, 0.0
      %v1488 = vmax.f32 %v1304, 0.0
      %v1489 = vmax.f32 %v1309, 0.0
      %v1490 = vmax.f32 %v1312, 0.0
      %v1491 = vmax.f32 %v1317, 0.0
      %v1492 = vmax.f32 %v1320, 0.0
      %v1493 = vmax.f32 %v1325, 0.0
      %v1494 = vmax.f32 %v1328, 0.0
      %v1495 = vmax.f32 %v1333, 0.0
      %v1496 = vmax.f32 %v1336, 0.0
      %v1497 = vmax.f32 %v1341, 0.0
      %v1498 = vmax.f32 %v1344, 0.0
      %v1499 = vmax.f32 %v1349, 0.0
      %v1500 = vmax.f32 %v1352, 0.0
      %v1501 = vmax.f32 %v1357, 0.0
      %v1502 = vmax.f32 %v1360, 0.0
      %v1503 = vmax.f32 %v1365, 0.0
      %v1504 = vmax.f32 %v1368, 0.0
      %v1505 = vmax.f32 %v1373, 0.0
      %v1506 = vmax.f32 %v1376, 0.0
      %v1507 = vpack.c.bf16 %v1380, %v1379
      %v1508 = vpack.c.bf16 %v1382, %v1381
      %v1509 = vpack.c.bf16 %v1384, %v1383
      %v1510 = vpack.c.bf16 %v1386, %v1385
      %v1511 = vpack.c.bf16 %v1388, %v1387
      %v1512 = vpack.c.bf16 %v1390, %v1389
      %v1513 = vpack.c.bf16 %v1392, %v1391
      %v1514 = vpack.c.bf16 %v1394, %v1393
      %v1515 = vpack.c.bf16 %v1396, %v1395
      %v1516 = vpack.c.bf16 %v1398, %v1397
      %v1517 = vpack.c.bf16 %v1400, %v1399
      %v1518 = vpack.c.bf16 %v1402, %v1401
      %v1519 = vpack.c.bf16 %v1404, %v1403
      %v1520 = vpack.c.bf16 %v1406, %v1405
      %v1521 = vpack.c.bf16 %v1408, %v1407
      %v1522 = vpack.c.bf16 %v1410, %v1409
      %v1523 = vpack.c.bf16 %v1412, %v1411
      %v1524 = vpack.c.bf16 %v1414, %v1413
      %v1525 = vpack.c.bf16 %v1416, %v1415
      %v1526 = vpack.c.bf16 %v1418, %v1417
      %v1527 = vpack.c.bf16 %v1420, %v1419
      %v1528 = vpack.c.bf16 %v1422, %v1421
      %v1529 = vpack.c.bf16 %v1424, %v1423
      %v1530 = vpack.c.bf16 %v1426, %v1425
      %v1531 = vpack.c.bf16 %v1428, %v1427
      %v1532 = vpack.c.bf16 %v1430, %v1429
      %v1533 = vpack.c.bf16 %v1432, %v1431
      %v1534 = vpack.c.bf16 %v1434, %v1433
      %v1535 = vpack.c.bf16 %v1436, %v1435
      %v1536 = vpack.c.bf16 %v1438, %v1437
      %v1537 = vpack.c.bf16 %v1440, %v1439
      %v1538 = vpack.c.bf16 %v1442, %v1441
      %v1539 = vpack.c.bf16 %v1444, %v1443
      %v1540 = vpack.c.bf16 %v1446, %v1445
      %v1541 = vpack.c.bf16 %v1448, %v1447
      %v1542 = vpack.c.bf16 %v1450, %v1449
      %v1543 = vpack.c.bf16 %v1452, %v1451
      %v1544 = vpack.c.bf16 %v1454, %v1453
      %v1545 = vpack.c.bf16 %v1456, %v1455
      %v1546 = vpack.c.bf16 %v1458, %v1457
      %v1547 = vpack.c.bf16 %v1460, %v1459
      %v1548 = vpack.c.bf16 %v1462, %v1461
      %v1549 = vpack.c.bf16 %v1464, %v1463
      %v1550 = vpack.c.bf16 %v1466, %v1465
      %v1551 = vpack.c.bf16 %v1468, %v1467
      %v1552 = vpack.c.bf16 %v1470, %v1469
      %v1553 = vpack.c.bf16 %v1472, %v1471
      %v1554 = vpack.c.bf16 %v1474, %v1473
      %v1555 = vpack.c.bf16 %v1476, %v1475
      %v1556 = vpack.c.bf16 %v1478, %v1477
      %v1557 = vpack.c.bf16 %v1480, %v1479
      %v1558 = vpack.c.bf16 %v1482, %v1481
      %v1559 = vpack.c.bf16 %v1484, %v1483
      %v1560 = vpack.c.bf16 %v1486, %v1485
      %v1561 = vpack.c.bf16 %v1488, %v1487
      %v1562 = vpack.c.bf16 %v1490, %v1489
      %v1563 = vpack.c.bf16 %v1492, %v1491
      %v1564 = vpack.c.bf16 %v1494, %v1493
      %v1565 = vpack.c.bf16 %v1496, %v1495
      %v1566 = vpack.c.bf16 %v1498, %v1497
      %v1567 = vpack.c.bf16 %v1500, %v1499
      %v1568 = vpack.c.bf16 %v1502, %v1501
      %v1569 = vpack.c.bf16 %v1504, %v1503
      %v1570 = vpack.c.bf16 %v1506, %v1505
      %v1635 = vunpack.c.l.b16 %v1507
      %v1636 = vunpack.c.h.b16 %v1507
      %v1637 = vunpack.c.l.b16 %v1508
      %v1638 = vunpack.c.h.b16 %v1508
      %v1639 = vunpack.c.l.b16 %v1509
      %v1640 = vunpack.c.h.b16 %v1509
      %v1641 = vunpack.c.l.b16 %v1510
      %v1642 = vunpack.c.h.b16 %v1510
      %v1643 = vunpack.c.l.b16 %v1511
      %v1644 = vunpack.c.h.b16 %v1511
      %v1645 = vunpack.c.l.b16 %v1512
      %v1646 = vunpack.c.h.b16 %v1512
      %v1647 = vunpack.c.l.b16 %v1513
      %v1648 = vunpack.c.h.b16 %v1513
      %v1649 = vunpack.c.l.b16 %v1514
      %v1650 = vunpack.c.h.b16 %v1514
      %v1651 = vunpack.c.l.b16 %v1515
      %v1652 = vunpack.c.h.b16 %v1515
      %v1653 = vunpack.c.l.b16 %v1516
      %v1654 = vunpack.c.h.b16 %v1516
      %v1655 = vunpack.c.l.b16 %v1517
      %v1656 = vunpack.c.h.b16 %v1517
      %v1657 = vunpack.c.l.b16 %v1518
      %v1658 = vunpack.c.h.b16 %v1518
      %v1659 = vunpack.c.l.b16 %v1519
      %v1660 = vunpack.c.h.b16 %v1519
      %v1661 = vunpack.c.l.b16 %v1520
      %v1662 = vunpack.c.h.b16 %v1520
      %v1663 = vunpack.c.l.b16 %v1521
      %v1664 = vunpack.c.h.b16 %v1521
      %v1665 = vunpack.c.l.b16 %v1522
      %v1666 = vunpack.c.h.b16 %v1522
      %v1667 = vunpack.c.l.b16 %v1523
      %v1668 = vunpack.c.h.b16 %v1523
      %v1669 = vunpack.c.l.b16 %v1524
      %v1670 = vunpack.c.h.b16 %v1524
      %v1671 = vunpack.c.l.b16 %v1525
      %v1672 = vunpack.c.h.b16 %v1525
      %v1673 = vunpack.c.l.b16 %v1526
      %v1674 = vunpack.c.h.b16 %v1526
      %v1675 = vunpack.c.l.b16 %v1527
      %v1676 = vunpack.c.h.b16 %v1527
      %v1677 = vunpack.c.l.b16 %v1528
      %v1678 = vunpack.c.h.b16 %v1528
      %v1679 = vunpack.c.l.b16 %v1529
      %v1680 = vunpack.c.h.b16 %v1529
      %v1681 = vunpack.c.l.b16 %v1530
      %v1682 = vunpack.c.h.b16 %v1530
      %v1683 = vunpack.c.l.b16 %v1531
      %v1684 = vunpack.c.h.b16 %v1531
      %v1685 = vunpack.c.l.b16 %v1532
      %v1686 = vunpack.c.h.b16 %v1532
      %v1687 = vunpack.c.l.b16 %v1533
      %v1688 = vunpack.c.h.b16 %v1533
      %v1689 = vunpack.c.l.b16 %v1534
      %v1690 = vunpack.c.h.b16 %v1534
      %v1691 = vunpack.c.l.b16 %v1535
      %v1692 = vunpack.c.h.b16 %v1535
      %v1693 = vunpack.c.l.b16 %v1536
      %v1694 = vunpack.c.h.b16 %v1536
      %v1695 = vunpack.c.l.b16 %v1537
      %v1696 = vunpack.c.h.b16 %v1537
      %v1697 = vunpack.c.l.b16 %v1538
      %v1698 = vunpack.c.h.b16 %v1538
      %v1699 = vunpack.c.l.b16 %v1539
      %v1700 = vunpack.c.h.b16 %v1539
      %v1701 = vunpack.c.l.b16 %v1540
      %v1702 = vunpack.c.h.b16 %v1540
      %v1703 = vunpack.c.l.b16 %v1541
      %v1704 = vunpack.c.h.b16 %v1541
      %v1705 = vunpack.c.l.b16 %v1542
      %v1706 = vunpack.c.h.b16 %v1542
      %v1707 = vunpack.c.l.b16 %v1543
      %v1708 = vunpack.c.h.b16 %v1543
      %v1709 = vunpack.c.l.b16 %v1544
      %v1710 = vunpack.c.h.b16 %v1544
      %v1711 = vunpack.c.l.b16 %v1545
      %v1712 = vunpack.c.h.b16 %v1545
      %v1713 = vunpack.c.l.b16 %v1546
      %v1714 = vunpack.c.h.b16 %v1546
      %v1715 = vunpack.c.l.b16 %v1547
      %v1716 = vunpack.c.h.b16 %v1547
      %v1717 = vunpack.c.l.b16 %v1548
      %v1718 = vunpack.c.h.b16 %v1548
      %v1719 = vunpack.c.l.b16 %v1549
      %v1720 = vunpack.c.h.b16 %v1549
      %v1721 = vunpack.c.l.b16 %v1550
      %v1722 = vunpack.c.h.b16 %v1550
      %v1723 = vunpack.c.l.b16 %v1551
      %v1724 = vunpack.c.h.b16 %v1551
      %v1725 = vunpack.c.l.b16 %v1552
      %v1726 = vunpack.c.h.b16 %v1552
      %v1727 = vunpack.c.l.b16 %v1553
      %v1728 = vunpack.c.h.b16 %v1553
      %v1729 = vunpack.c.l.b16 %v1554
      %v1730 = vunpack.c.h.b16 %v1554
      %v1731 = vunpack.c.l.b16 %v1555
      %v1732 = vunpack.c.h.b16 %v1555
      %v1733 = vunpack.c.l.b16 %v1556
      %v1734 = vunpack.c.h.b16 %v1556
      %v1735 = vunpack.c.l.b16 %v1557
      %v1736 = vunpack.c.h.b16 %v1557
      %v1737 = vunpack.c.l.b16 %v1558
      %v1738 = vunpack.c.h.b16 %v1558
      %v1739 = vunpack.c.l.b16 %v1559
      %v1740 = vunpack.c.h.b16 %v1559
      %v1741 = vunpack.c.l.b16 %v1560
      %v1742 = vunpack.c.h.b16 %v1560
      %v1743 = vunpack.c.l.b16 %v1561
      %v1744 = vunpack.c.h.b16 %v1561
      %v1745 = vunpack.c.l.b16 %v1562
      %v1746 = vunpack.c.h.b16 %v1562
      %v1747 = vunpack.c.l.b16 %v1563
      %v1748 = vunpack.c.h.b16 %v1563
      %v1749 = vunpack.c.l.b16 %v1564
      %v1750 = vunpack.c.h.b16 %v1564
      %v1751 = vunpack.c.l.b16 %v1565
      %v1752 = vunpack.c.h.b16 %v1565
      %v1753 = vunpack.c.l.b16 %v1566
      %v1754 = vunpack.c.h.b16 %v1566
      %v1755 = vunpack.c.l.b16 %v1567
      %v1756 = vunpack.c.h.b16 %v1567
      %v1757 = vunpack.c.l.b16 %v1568
      %v1758 = vunpack.c.h.b16 %v1568
      %v1759 = vunpack.c.l.b16 %v1569
      %v1760 = vunpack.c.h.b16 %v1569
      %v1761 = vunpack.c.l.b16 %v1570
      %v1762 = vunpack.c.h.b16 %v1570
      %v1763 = vpack.c.b16 %v1635, %v1635
      %v1764 = vpack.c.b16 %v1636, %v1636
      %v1765 = vpack.c.b16 %v1637, %v1637
      %v1766 = vpack.c.b16 %v1638, %v1638
      %v1767 = vpack.c.b16 %v1639, %v1639
      %v1768 = vpack.c.b16 %v1640, %v1640
      %v1769 = vpack.c.b16 %v1641, %v1641
      %v1770 = vpack.c.b16 %v1642, %v1642
      %v1771 = vpack.c.b16 %v1643, %v1643
      %v1772 = vpack.c.b16 %v1644, %v1644
      %v1773 = vpack.c.b16 %v1645, %v1645
      %v1774 = vpack.c.b16 %v1646, %v1646
      %v1775 = vpack.c.b16 %v1647, %v1647
      %v1776 = vpack.c.b16 %v1648, %v1648
      %v1777 = vpack.c.b16 %v1649, %v1649
      %v1778 = vpack.c.b16 %v1650, %v1650
      %v1779 = vpack.c.b16 %v1651, %v1651
      %v1780 = vpack.c.b16 %v1652, %v1652
      %v1781 = vpack.c.b16 %v1653, %v1653
      %v1782 = vpack.c.b16 %v1654, %v1654
      %v1783 = vpack.c.b16 %v1655, %v1655
      %v1784 = vpack.c.b16 %v1656, %v1656
      %v1785 = vpack.c.b16 %v1657, %v1657
      %v1786 = vpack.c.b16 %v1658, %v1658
      %v1787 = vpack.c.b16 %v1659, %v1659
      %v1788 = vpack.c.b16 %v1660, %v1660
      %v1789 = vpack.c.b16 %v1661, %v1661
      %v1790 = vpack.c.b16 %v1662, %v1662
      %v1791 = vpack.c.b16 %v1663, %v1663
      %v1792 = vpack.c.b16 %v1664, %v1664
      %v1793 = vpack.c.b16 %v1665, %v1665
      %v1794 = vpack.c.b16 %v1666, %v1666
      %v1795 = vpack.c.b16 %v1667, %v1667
      %v1796 = vpack.c.b16 %v1668, %v1668
      %v1797 = vpack.c.b16 %v1669, %v1669
      %v1798 = vpack.c.b16 %v1670, %v1670
      %v1799 = vpack.c.b16 %v1671, %v1671
      %v1800 = vpack.c.b16 %v1672, %v1672
      %v1801 = vpack.c.b16 %v1673, %v1673
      %v1802 = vpack.c.b16 %v1674, %v1674
      %v1803 = vpack.c.b16 %v1675, %v1675
      %v1804 = vpack.c.b16 %v1676, %v1676
      %v1805 = vpack.c.b16 %v1677, %v1677
      %v1806 = vpack.c.b16 %v1678, %v1678
      %v1807 = vpack.c.b16 %v1679, %v1679
      %v1808 = vpack.c.b16 %v1680, %v1680
      %v1809 = vpack.c.b16 %v1681, %v1681
      %v1810 = vpack.c.b16 %v1682, %v1682
      %v1811 = vpack.c.b16 %v1683, %v1683
      %v1812 = vpack.c.b16 %v1684, %v1684
      %v1813 = vpack.c.b16 %v1685, %v1685
      %v1814 = vpack.c.b16 %v1686, %v1686
      %v1815 = vpack.c.b16 %v1687, %v1687
      %v1816 = vpack.c.b16 %v1688, %v1688
      %v1817 = vpack.c.b16 %v1689, %v1689
      %v1818 = vpack.c.b16 %v1690, %v1690
      %v1819 = vpack.c.b16 %v1691, %v1691
      %v1820 = vpack.c.b16 %v1692, %v1692
      %v1821 = vpack.c.b16 %v1693, %v1693
      %v1822 = vpack.c.b16 %v1694, %v1694
      %v1823 = vpack.c.b16 %v1695, %v1695
      %v1824 = vpack.c.b16 %v1696, %v1696
      %v1825 = vpack.c.b16 %v1697, %v1697
      %v1826 = vpack.c.b16 %v1698, %v1698
      %v1827 = vpack.c.b16 %v1699, %v1699
      %v1828 = vpack.c.b16 %v1700, %v1700
      %v1829 = vpack.c.b16 %v1701, %v1701
      %v1830 = vpack.c.b16 %v1702, %v1702
      %v1831 = vpack.c.b16 %v1703, %v1703
      %v1832 = vpack.c.b16 %v1704, %v1704
      %v1833 = vpack.c.b16 %v1705, %v1705
      %v1834 = vpack.c.b16 %v1706, %v1706
      %v1835 = vpack.c.b16 %v1707, %v1707
      %v1836 = vpack.c.b16 %v1708, %v1708
      %v1837 = vpack.c.b16 %v1709, %v1709
      %v1838 = vpack.c.b16 %v1710, %v1710
      %v1839 = vpack.c.b16 %v1711, %v1711
      %v1840 = vpack.c.b16 %v1712, %v1712
      %v1841 = vpack.c.b16 %v1713, %v1713
      %v1842 = vpack.c.b16 %v1714, %v1714
      %v1843 = vpack.c.b16 %v1715, %v1715
      %v1844 = vpack.c.b16 %v1716, %v1716
      %v1845 = vpack.c.b16 %v1717, %v1717
      %v1846 = vpack.c.b16 %v1718, %v1718
      %v1847 = vpack.c.b16 %v1719, %v1719
      %v1848 = vpack.c.b16 %v1720, %v1720
      %v1849 = vpack.c.b16 %v1721, %v1721
      %v1850 = vpack.c.b16 %v1722, %v1722
      %v1851 = vpack.c.b16 %v1723, %v1723
      %v1852 = vpack.c.b16 %v1724, %v1724
      %v1853 = vpack.c.b16 %v1725, %v1725
      %v1854 = vpack.c.b16 %v1726, %v1726
      %v1855 = vpack.c.b16 %v1727, %v1727
      %v1856 = vpack.c.b16 %v1728, %v1728
      %v1857 = vpack.c.b16 %v1729, %v1729
      %v1858 = vpack.c.b16 %v1730, %v1730
      %v1859 = vpack.c.b16 %v1731, %v1731
      %v1860 = vpack.c.b16 %v1732, %v1732
      %v1861 = vpack.c.b16 %v1733, %v1733
      %v1862 = vpack.c.b16 %v1734, %v1734
      %v1863 = vpack.c.b16 %v1735, %v1735
      %v1864 = vpack.c.b16 %v1736, %v1736
      %v1865 = vpack.c.b16 %v1737, %v1737
      %v1866 = vpack.c.b16 %v1738, %v1738
      %v1867 = vpack.c.b16 %v1739, %v1739
      %v1868 = vpack.c.b16 %v1740, %v1740
      %v1869 = vpack.c.b16 %v1741, %v1741
      %v1870 = vpack.c.b16 %v1742, %v1742
      %v1871 = vpack.c.b16 %v1743, %v1743
      %v1872 = vpack.c.b16 %v1744, %v1744
      %v1873 = vpack.c.b16 %v1745, %v1745
      %v1874 = vpack.c.b16 %v1746, %v1746
      %v1875 = vpack.c.b16 %v1747, %v1747
      %v1876 = vpack.c.b16 %v1748, %v1748
      %v1877 = vpack.c.b16 %v1749, %v1749
      %v1878 = vpack.c.b16 %v1750, %v1750
      %v1879 = vpack.c.b16 %v1751, %v1751
      %v1880 = vpack.c.b16 %v1752, %v1752
      %v1881 = vpack.c.b16 %v1753, %v1753
      %v1882 = vpack.c.b16 %v1754, %v1754
      %v1883 = vpack.c.b16 %v1755, %v1755
      %v1884 = vpack.c.b16 %v1756, %v1756
      %v1885 = vpack.c.b16 %v1757, %v1757
      %v1886 = vpack.c.b16 %v1758, %v1758
      %v1887 = vpack.c.b16 %v1759, %v1759
      %v1888 = vpack.c.b16 %v1760, %v1760
      %v1889 = vpack.c.b16 %v1761, %v1761
      %v1890 = vpack.c.b16 %v1762, %v1762
      %vm2019 = vcmask 60416
      %2020 = vst.msk [vmem:[%s172] sm:$0xf] %vm2019, %v1763
      %2021 = vst.msk [vmem:[%s172 + $0x4] sm:$0xf] %vm2019, %v1764
      %2022 = vst.msk [vmem:[%s172 + $0x8] sm:$0xf] %vm2019, %v1765
      %2023 = vst.msk [vmem:[%s172 + $0xc] sm:$0xf] %vm2019, %v1766
      %2024 = vst.msk [vmem:[%s172 + $0x10] sm:$0xf] %vm2019, %v1767
      %2025 = vst.msk [vmem:[%s172 + $0x14] sm:$0xf] %vm2019, %v1768
      %2026 = vst.msk [vmem:[%s172 + $0x18] sm:$0xf] %vm2019, %v1769
      %2027 = vst.msk [vmem:[%s172 + $0x1c] sm:$0xf] %vm2019, %v1770
      %2028 = vst.msk [vmem:[%s172 + $0x20] sm:$0xf] %vm2019, %v1771
      %2029 = vst.msk [vmem:[%s172 + $0x24] sm:$0xf] %vm2019, %v1772
      %2030 = vst.msk [vmem:[%s172 + $0x28] sm:$0xf] %vm2019, %v1773
      %2031 = vst.msk [vmem:[%s172 + $0x2c] sm:$0xf] %vm2019, %v1774
      %2032 = vst.msk [vmem:[%s172 + $0x30] sm:$0xf] %vm2019, %v1775
      %2033 = vst.msk [vmem:[%s172 + $0x34] sm:$0xf] %vm2019, %v1776
      %2034 = vst.msk [vmem:[%s172 + $0x38] sm:$0xf] %vm2019, %v1777
      %2035 = vst.msk [vmem:[%s172 + $0x3c] sm:$0xf] %vm2019, %v1778
      %2036 = vst.msk [vmem:[%s172 + $0x40] sm:$0xf] %vm2019, %v1779
      %2037 = vst.msk [vmem:[%s172 + $0x44] sm:$0xf] %vm2019, %v1780
      %2038 = vst.msk [vmem:[%s172 + $0x48] sm:$0xf] %vm2019, %v1781
      %2039 = vst.msk [vmem:[%s172 + $0x4c] sm:$0xf] %vm2019, %v1782
      %2040 = vst.msk [vmem:[%s172 + $0x50] sm:$0xf] %vm2019, %v1783
      %2041 = vst.msk [vmem:[%s172 + $0x54] sm:$0xf] %vm2019, %v1784
      %2042 = vst.msk [vmem:[%s172 + $0x58] sm:$0xf] %vm2019, %v1785
      %2043 = vst.msk [vmem:[%s172 + $0x5c] sm:$0xf] %vm2019, %v1786
      %2044 = vst.msk [vmem:[%s172 + $0x60] sm:$0xf] %vm2019, %v1787
      %2045 = vst.msk [vmem:[%s172 + $0x64] sm:$0xf] %vm2019, %v1788
      %2046 = vst.msk [vmem:[%s172 + $0x68] sm:$0xf] %vm2019, %v1789
      %2047 = vst.msk [vmem:[%s172 + $0x6c] sm:$0xf] %vm2019, %v1790
      %2048 = vst.msk [vmem:[%s172 + $0x70] sm:$0xf] %vm2019, %v1791
      %2049 = vst.msk [vmem:[%s172 + $0x74] sm:$0xf] %vm2019, %v1792
      %2050 = vst.msk [vmem:[%s172 + $0x78] sm:$0xf] %vm2019, %v1793
      %2051 = vst.msk [vmem:[%s172 + $0x7c] sm:$0xf] %vm2019, %v1794
      %2052 = vst.msk [vmem:[%s172 + $0x80] sm:$0xf] %vm2019, %v1795
      %2053 = vst.msk [vmem:[%s172 + $0x84] sm:$0xf] %vm2019, %v1796
      %2054 = vst.msk [vmem:[%s172 + $0x88] sm:$0xf] %vm2019, %v1797
      %2055 = vst.msk [vmem:[%s172 + $0x8c] sm:$0xf] %vm2019, %v1798
      %2056 = vst.msk [vmem:[%s172 + $0x90] sm:$0xf] %vm2019, %v1799
      %2057 = vst.msk [vmem:[%s172 + $0x94] sm:$0xf] %vm2019, %v1800
      %2058 = vst.msk [vmem:[%s172 + $0x98] sm:$0xf] %vm2019, %v1801
      %2059 = vst.msk [vmem:[%s172 + $0x9c] sm:$0xf] %vm2019, %v1802
      %2060 = vst.msk [vmem:[%s172 + $0xa0] sm:$0xf] %vm2019, %v1803
      %2061 = vst.msk [vmem:[%s172 + $0xa4] sm:$0xf] %vm2019, %v1804
      %2062 = vst.msk [vmem:[%s172 + $0xa8] sm:$0xf] %vm2019, %v1805
      %2063 = vst.msk [vmem:[%s172 + $0xac] sm:$0xf] %vm2019, %v1806
      %2064 = vst.msk [vmem:[%s172 + $0xb0] sm:$0xf] %vm2019, %v1807
      %2065 = vst.msk [vmem:[%s172 + $0xb4] sm:$0xf] %vm2019, %v1808
      %2066 = vst.msk [vmem:[%s172 + $0xb8] sm:$0xf] %vm2019, %v1809
      %2067 = vst.msk [vmem:[%s172 + $0xbc] sm:$0xf] %vm2019, %v1810
      %2068 = vst.msk [vmem:[%s172 + $0xc0] sm:$0xf] %vm2019, %v1811
      %2069 = vst.msk [vmem:[%s172 + $0xc4] sm:$0xf] %vm2019, %v1812
      %2070 = vst.msk [vmem:[%s172 + $0xc8] sm:$0xf] %vm2019, %v1813
      %2071 = vst.msk [vmem:[%s172 + $0xcc] sm:$0xf] %vm2019, %v1814
      %2072 = vst.msk [vmem:[%s172 + $0xd0] sm:$0xf] %vm2019, %v1815
      %2073 = vst.msk [vmem:[%s172 + $0xd4] sm:$0xf] %vm2019, %v1816
      %2074 = vst.msk [vmem:[%s172 + $0xd8] sm:$0xf] %vm2019, %v1817
      %2075 = vst.msk [vmem:[%s172 + $0xdc] sm:$0xf] %vm2019, %v1818
      %2076 = vst.msk [vmem:[%s172 + $0xe0] sm:$0xf] %vm2019, %v1819
      %2077 = vst.msk [vmem:[%s172 + $0xe4] sm:$0xf] %vm2019, %v1820
      %2078 = vst.msk [vmem:[%s172 + $0xe8] sm:$0xf] %vm2019, %v1821
      %2079 = vst.msk [vmem:[%s172 + $0xec] sm:$0xf] %vm2019, %v1822
      %2080 = vst.msk [vmem:[%s172 + $0xf0] sm:$0xf] %vm2019, %v1823
      %2081 = vst.msk [vmem:[%s172 + $0xf4] sm:$0xf] %vm2019, %v1824
      %2082 = vst.msk [vmem:[%s172 + $0xf8] sm:$0xf] %vm2019, %v1825
      %2083 = vst.msk [vmem:[%s172 + $0xfc] sm:$0xf] %vm2019, %v1826
      %2084 = vst.msk [vmem:[%s172 + $0x100] sm:$0xf] %vm2019, %v1827
      %2085 = vst.msk [vmem:[%s172 + $0x104] sm:$0xf] %vm2019, %v1828
      %2086 = vst.msk [vmem:[%s172 + $0x108] sm:$0xf] %vm2019, %v1829
      %2087 = vst.msk [vmem:[%s172 + $0x10c] sm:$0xf] %vm2019, %v1830
      %2088 = vst.msk [vmem:[%s172 + $0x110] sm:$0xf] %vm2019, %v1831
      %2089 = vst.msk [vmem:[%s172 + $0x114] sm:$0xf] %vm2019, %v1832
      %2090 = vst.msk [vmem:[%s172 + $0x118] sm:$0xf] %vm2019, %v1833
      %2091 = vst.msk [vmem:[%s172 + $0x11c] sm:$0xf] %vm2019, %v1834
      %2092 = vst.msk [vmem:[%s172 + $0x120] sm:$0xf] %vm2019, %v1835
      %2093 = vst.msk [vmem:[%s172 + $0x124] sm:$0xf] %vm2019, %v1836
      %2094 = vst.msk [vmem:[%s172 + $0x128] sm:$0xf] %vm2019, %v1837
      %2095 = vst.msk [vmem:[%s172 + $0x12c] sm:$0xf] %vm2019, %v1838
      %2096 = vst.msk [vmem:[%s172 + $0x130] sm:$0xf] %vm2019, %v1839
      %2097 = vst.msk [vmem:[%s172 + $0x134] sm:$0xf] %vm2019, %v1840
      %2098 = vst.msk [vmem:[%s172 + $0x138] sm:$0xf] %vm2019, %v1841
      %2099 = vst.msk [vmem:[%s172 + $0x13c] sm:$0xf] %vm2019, %v1842
      %2100 = vst.msk [vmem:[%s172 + $0x140] sm:$0xf] %vm2019, %v1843
      %2101 = vst.msk [vmem:[%s172 + $0x144] sm:$0xf] %vm2019, %v1844
      %2102 = vst.msk [vmem:[%s172 + $0x148] sm:$0xf] %vm2019, %v1845
      %2103 = vst.msk [vmem:[%s172 + $0x14c] sm:$0xf] %vm2019, %v1846
      %2104 = vst.msk [vmem:[%s172 + $0x150] sm:$0xf] %vm2019, %v1847
      %2105 = vst.msk [vmem:[%s172 + $0x154] sm:$0xf] %vm2019, %v1848
      %2106 = vst.msk [vmem:[%s172 + $0x158] sm:$0xf] %vm2019, %v1849
      %2107 = vst.msk [vmem:[%s172 + $0x15c] sm:$0xf] %vm2019, %v1850
      %2108 = vst.msk [vmem:[%s172 + $0x160] sm:$0xf] %vm2019, %v1851
      %2109 = vst.msk [vmem:[%s172 + $0x164] sm:$0xf] %vm2019, %v1852
      %2110 = vst.msk [vmem:[%s172 + $0x168] sm:$0xf] %vm2019, %v1853
      %2111 = vst.msk [vmem:[%s172 + $0x16c] sm:$0xf] %vm2019, %v1854
      %2112 = vst.msk [vmem:[%s172 + $0x170] sm:$0xf] %vm2019, %v1855
      %2113 = vst.msk [vmem:[%s172 + $0x174] sm:$0xf] %vm2019, %v1856
      %2114 = vst.msk [vmem:[%s172 + $0x178] sm:$0xf] %vm2019, %v1857
      %2115 = vst.msk [vmem:[%s172 + $0x17c] sm:$0xf] %vm2019, %v1858
      %2116 = vst.msk [vmem:[%s172 + $0x180] sm:$0xf] %vm2019, %v1859
      %2117 = vst.msk [vmem:[%s172 + $0x184] sm:$0xf] %vm2019, %v1860
      %2118 = vst.msk [vmem:[%s172 + $0x188] sm:$0xf] %vm2019, %v1861
      %2119 = vst.msk [vmem:[%s172 + $0x18c] sm:$0xf] %vm2019, %v1862
      %2120 = vst.msk [vmem:[%s172 + $0x190] sm:$0xf] %vm2019, %v1863
      %2121 = vst.msk [vmem:[%s172 + $0x194] sm:$0xf] %vm2019, %v1864
      %2122 = vst.msk [vmem:[%s172 + $0x198] sm:$0xf] %vm2019, %v1865
      %2123 = vst.msk [vmem:[%s172 + $0x19c] sm:$0xf] %vm2019, %v1866
      %2124 = vst.msk [vmem:[%s172 + $0x1a0] sm:$0xf] %vm2019, %v1867
      %2125 = vst.msk [vmem:[%s172 + $0x1a4] sm:$0xf] %vm2019, %v1868
      %2126 = vst.msk [vmem:[%s172 + $0x1a8] sm:$0xf] %vm2019, %v1869
      %2127 = vst.msk [vmem:[%s172 + $0x1ac] sm:$0xf] %vm2019, %v1870
      %2128 = vst.msk [vmem:[%s172 + $0x1b0] sm:$0xf] %vm2019, %v1871
      %2129 = vst.msk [vmem:[%s172 + $0x1b4] sm:$0xf] %vm2019, %v1872
      %2130 = vst.msk [vmem:[%s172 + $0x1b8] sm:$0xf] %vm2019, %v1873
      %2131 = vst.msk [vmem:[%s172 + $0x1bc] sm:$0xf] %vm2019, %v1874
      %2132 = vst.msk [vmem:[%s172 + $0x1c0] sm:$0xf] %vm2019, %v1875
      %2133 = vst.msk [vmem:[%s172 + $0x1c4] sm:$0xf] %vm2019, %v1876
      %2134 = vst.msk [vmem:[%s172 + $0x1c8] sm:$0xf] %vm2019, %v1877
      %2135 = vst.msk [vmem:[%s172 + $0x1cc] sm:$0xf] %vm2019, %v1878
      %2136 = vst.msk [vmem:[%s172 + $0x1d0] sm:$0xf] %vm2019, %v1879
      %2137 = vst.msk [vmem:[%s172 + $0x1d4] sm:$0xf] %vm2019, %v1880
      %2138 = vst.msk [vmem:[%s172 + $0x1d8] sm:$0xf] %vm2019, %v1881
      %2139 = vst.msk [vmem:[%s172 + $0x1dc] sm:$0xf] %vm2019, %v1882
      %2140 = vst.msk [vmem:[%s172 + $0x1e0] sm:$0xf] %vm2019, %v1883
      %2141 = vst.msk [vmem:[%s172 + $0x1e4] sm:$0xf] %vm2019, %v1884
      %2142 = vst.msk [vmem:[%s172 + $0x1e8] sm:$0xf] %vm2019, %v1885
      %2143 = vst.msk [vmem:[%s172 + $0x1ec] sm:$0xf] %vm2019, %v1886
      %2144 = vst.msk [vmem:[%s172 + $0x1f0] sm:$0xf] %vm2019, %v1887
      %2145 = vst.msk [vmem:[%s172 + $0x1f4] sm:$0xf] %vm2019, %v1888
      %2146 = vst.msk [vmem:[%s172 + $0x1f8] sm:$0xf] %vm2019, %v1889
      %2147 = vst.msk [vmem:[%s172 + $0x1fc] sm:$0xf] %vm2019, %v1890
      %s2148 = smul.u32 128, %s14
      %p2149 = scmp.lt.s32.totalorder %s2148, 255
      %s2150 = scalar_select %p2149, %s2148, 255
      %s2151 = smul.addr %s2150, 4
      %s2152 = scalar_lea.vmem %s3, %s2151
      // Predicated region
      $region33: #{_forward_impl.13} parent=31 // pred_check
        %p2153 = pneg %p100
      $region34: #{_forward_impl.13} parent=31 // pred_check_branch
        %2155 = sbr.rel (%p2153) target = $region36
      $region35: #{_forward_impl.13} parent=31 // pred_region
        %s2156 = smul.u32 128, %s14
      $region36: #{_forward_impl.13} parent=31 // pred_fallthru
        _
    $region32: #{_forward_impl.13} parent=5 // pred_fallthru
      _
    %p2157 = scmp.le.s32.totalorder 2, %s9
    // Predicated region
    $region37: #{_forward_impl.13} parent=5 // pred_check
      %p2158 = pneg %p2157
    $region38: #{_forward_impl.13} parent=5 // pred_check_branch
      %2160 = sbr.rel (%p2158) target = $region40
    $region39: #{_forward_impl.13} parent=5 // pred_region
      %s2161 = ssub.s32 %s9, 2
      // Predicated region
      $region41: #{_forward_impl.13} parent=39 // pred_check
        %p2162 = pneg %p106
      $region42: #{_forward_impl.13} parent=39 // pred_check_branch
        %2164 = sbr.rel (%p2162) target = $region44
      $region43: #{_forward_impl.13} parent=39 // pred_region
        %s2165 = smul.u32 128, %s15
        %p2166 = scmp.lt.s32.totalorder %s2165, 255
        %s2167 = scalar_select %p2166, %s2165, 255
        %s2168 = smul.addr %s2167, 4
        %s2169 = scalar_lea.vmem %s3, %s2168
      $region44: #{_forward_impl.13} parent=39 // pred_fallthru
        _
    $region40: #{_forward_impl.13} parent=5 // pred_fallthru
      _
  $region6: #{_forward_impl.13} parent=0 // loop_footer
    %s13 = sadd.s32 1, %s9
  $region7: #{_forward_impl.13} parent=0 // loop_footer_branch
    %8 = sbr.rel target = $region3
  $region8: #{_forward_impl.13} parent=0 // loop_exit
    _

// kernel: _forward_impl.14
$region0: #{_forward_impl.14}
  #allocation0 [shape = 'u32[]', space=smem, size = 0x4, offset = 0x4, fixed_abs, tag = 'smem constant byte address 0x4 - core index']
  #allocation1 [shape = 'u32[144,128]{1,0:T(1,128)}', space=vmem, size = 0x12000, scoped, tag = 'internal scratch']
  %s0 = inlined_call_operand.vmem [shape: bf16[512,32], index: 0, kind: input, shape index: {}]
  %s1 = inlined_call_operand.vmem [shape: bf16[32,16], index: 1, kind: input, shape index: {}]
  %s2 = inlined_call_operand.vmem [shape: f32[1,16], index: 2, kind: input, shape index: {}]
  %s3 = inlined_call_operand.vmem [shape: bf16[512,16], index: 3, kind: output, shape index: {}]
  %s4 = sld [smem:[#allocation0]]
  $region45: #{_forward_impl.14} parent=0
    _
  %s6 = ssub.s32 1, %s4
  %s7 = scalar_select 0, %s6, %s4
  loop: start=0, step=1, limit=4
  $region2: #{_forward_impl.14} parent=0 // loop_pre_header
    _
  $region3: #{_forward_impl.14} parent=0 // loop_header
    %s9 = sphi 0, %s13
    %p10 = scmp.ge.s32.totalorder %s9, 4
    %s19 = sphi 0, %s21
    %s22 = sphi 0, %s19
    %s23 = sphi 0, %s22
    %s39 = sphi 0, %s23
    %s43 = sphi 0, %s43
    %s45 = sphi 0, %s43
    %s46 = sphi 0, %s45
    %s60 = sphi 0, %s46
    %s64 = sphi 0, %s64
    %s66 = sphi 0, %s64
    %s67 = sphi 0, %s66
    %s81 = sphi 0, %s67
    %s87 = sphi 0, %s89
    %s90 = sphi 0, %s87
    %s91 = sphi 0, %s90
    %s107 = sphi 0, %s91
  $region4: #{_forward_impl.14} parent=0 // loop_header_branch
    %12 = sbr.rel (%p10) target = $region8
  $region5: #{_forward_impl.14} parent=0 // loop_body
    %s14 = ssub.s32 %s9, 1
    %s15 = ssub.s32 %s9, 2
    %s16 = sadd.s32 %s9, 1
    %s17 = ssub.s32 %s9, %s16
    %p18 = scmp.eq.s32.totalorder %s17, 0
    %s20 = sadd.s32 %s19, 1
    %s21 = scalar_select %p18, %s19, %s20
    %p24 = pneg %p18
    %p25 = scmp.eq.s32.totalorder %s9, 1
    %p26 = por %p24, %p25
    %p27 = scmp.ne.s32.totalorder %s19, %s22
    %p28 = scmp.eq.s32.totalorder %s9, 0
    %p29 = por %p27, %p28
    %p30 = scmp.ne.s32.totalorder %s19, %s22
    %p31 = scmp.eq.s32.totalorder %s14, 1
    %p32 = por %p30, %p31
    %p33 = scmp.ne.s32.totalorder %s22, %s23
    %p34 = scmp.eq.s32.totalorder %s14, 0
    %p35 = por %p33, %p34
    %p36 = scmp.ne.s32.totalorder %s22, %s23
    %p37 = scmp.eq.s32.totalorder %s15, 1
    %p38 = por %p36, %p37
    %p40 = scmp.ne.s32.totalorder %s23, %s39
    %p41 = scmp.eq.s32.totalorder %s15, 0
    %p42 = por %p40, %p41
    %s44 = sadd.s32 %s43, 1
    %p47 = scmp.eq.s32.totalorder %s9, 1
    %p48 = scmp.ne.s32.totalorder %s43, %s45
    %p49 = scmp.eq.s32.totalorder %s9, 0
    %p50 = por %p48, %p49
    %p51 = scmp.ne.s32.totalorder %s43, %s45
    %p52 = scmp.eq.s32.totalorder %s14, 1
    %p53 = por %p51, %p52
    %p54 = scmp.ne.s32.totalorder %s45, %s46
    %p55 = scmp.eq.s32.totalorder %s14, 0
    %p56 = por %p54, %p55
    %p57 = scmp.ne.s32.totalorder %s45, %s46
    %p58 = scmp.eq.s32.totalorder %s15, 1
    %p59 = por %p57, %p58
    %p61 = scmp.ne.s32.totalorder %s46, %s60
    %p62 = scmp.eq.s32.totalorder %s15, 0
    %p63 = por %p61, %p62
    %s65 = sadd.s32 %s64, 1
    %p68 = scmp.eq.s32.totalorder %s9, 1
    %p69 = scmp.ne.s32.totalorder %s64, %s66
    %p70 = scmp.eq.s32.totalorder %s9, 0
    %p71 = por %p69, %p70
    %p72 = scmp.ne.s32.totalorder %s64, %s66
    %p73 = scmp.eq.s32.totalorder %s14, 1
    %p74 = por %p72, %p73
    %p75 = scmp.ne.s32.totalorder %s66, %s67
    %p76 = scmp.eq.s32.totalorder %s14, 0
    %p77 = por %p75, %p76
    %p78 = scmp.ne.s32.totalorder %s66, %s67
    %p79 = scmp.eq.s32.totalorder %s15, 1
    %p80 = por %p78, %p79
    %p82 = scmp.ne.s32.totalorder %s67, %s81
    %p83 = scmp.eq.s32.totalorder %s15, 0
    %p84 = por %p82, %p83
    %s85 = ssub.s32 %s9, %s16
    %p86 = scmp.eq.s32.totalorder %s85, 0
    %s88 = sadd.s32 %s87, 1
    %s89 = scalar_select %p86, %s87, %s88
    %p92 = pneg %p86
    %p93 = scmp.eq.s32.totalorder %s9, 1
    %p94 = por %p92, %p93
    %p95 = scmp.ne.s32.totalorder %s87, %s90
    %p96 = scmp.eq.s32.totalorder %s9, 0
    %p97 = por %p95, %p96
    %p98 = scmp.ne.s32.totalorder %s87, %s90
    %p99 = scmp.eq.s32.totalorder %s14, 1
    %p100 = por %p98, %p99
    %p101 = scmp.ne.s32.totalorder %s90, %s91
    %p102 = scmp.eq.s32.totalorder %s14, 0
    %p103 = por %p101, %p102
    %p104 = scmp.ne.s32.totalorder %s90, %s91
    %p105 = scmp.eq.s32.totalorder %s15, 1
    %p106 = por %p104, %p105
    %p108 = scmp.ne.s32.totalorder %s91, %s107
    %p109 = scmp.eq.s32.totalorder %s15, 0
    %p110 = por %p108, %p109
    %p111 = scmp.le.s32.totalorder 1, %s9
    %p112 = scmp.lt.s32.totalorder %s9, 3
    %p113 = pnand %p111, %p112
    %p114 = pneg %p113
    // Predicated region
    $region9: #{_forward_impl.14} parent=5 // pred_check
      _
    $region10: #{_forward_impl.14} parent=5 // pred_check_branch
      %116 = sbr.rel (%p113) target = $region12
    $region11: #{_forward_impl.14} parent=5 // pred_region
      %s117 = ssub.s32 %s9, 1
      // Predicated region
      $region13: #{_forward_impl.14} parent=11 // pred_check
        %p118 = pneg %p56
      $region14: #{_forward_impl.14} parent=11 // pred_check_branch
        %120 = sbr.rel (%p118) target = $region16
      $region15: #{_forward_impl.14} parent=11 // pred_region
        _
      $region16: #{_forward_impl.14} parent=11 // pred_fallthru
        _
      // Predicated region
      $region17: #{_forward_impl.14} parent=11 // pred_check
        %p121 = pneg %p77
      $region18: #{_forward_impl.14} parent=11 // pred_check_branch
        %123 = sbr.rel (%p121) target = $region20
      $region19: #{_forward_impl.14} parent=11 // pred_region
        _
      $region20: #{_forward_impl.14} parent=11 // pred_fallthru
        _
    $region12: #{_forward_impl.14} parent=5 // pred_fallthru
      _
    %p124 = scmp.lt.s32.totalorder %s9, 2
    // Predicated region
    $region21: #{_forward_impl.14} parent=5 // pred_check
      %p125 = pneg %p124
    $region22: #{_forward_impl.14} parent=5 // pred_check_branch
      %127 = sbr.rel (%p125) target = $region24
    $region23: #{_forward_impl.14} parent=5 // pred_region
      // Predicated region
      $region25: #{_forward_impl.14} parent=23 // pred_check
        %p128 = pneg %p29
      $region26: #{_forward_impl.14} parent=23 // pred_check_branch
        %130 = sbr.rel (%p128) target = $region28
      $region27: #{_forward_impl.14} parent=23 // pred_region
        %s131 = smul.u32 32, %s9
        %p132 = scmp.lt.s32.totalorder %s131, 63
        %s133 = scalar_select %p132, %s131, 63
        %s134 = smul.addr %s133, 4
        %s135 = scalar_lea.vmem %s0, %s134
        %s136 = smul.u32 32, %s9
      $region28: #{_forward_impl.14} parent=23 // pred_fallthru
        _
    $region24: #{_forward_impl.14} parent=5 // pred_fallthru
      _
    %p137 = scmp.le.s32.totalorder 1, %s9
    %p138 = scmp.lt.s32.totalorder %s9, 3
    %p139 = pnand %p137, %p138
    %p140 = pneg %p139
    // Predicated region
    $region29: #{_forward_impl.14} parent=5 // pred_check
      _
    $region30: #{_forward_impl.14} parent=5 // pred_check_branch
      %142 = sbr.rel (%p139) target = $region32
    $region31: #{_forward_impl.14} parent=5 // pred_region
      %s143 = ssub.s32 %s9, 1
      %s144 = smul.u32 32, %s14
      %p145 = scmp.lt.s32.totalorder %s144, 63
      %s146 = scalar_select %p145, %s144, 63
      %s147 = smul.addr %s146, 4
      %s148 = scalar_lea.vmem %s0, %s147
      %p149 = pneg %p35
      %p150 = pneg %p32
      %p151 = pneg %p56
      %p152 = pneg %p53
      %p153 = pneg %p77
      %p154 = pneg %p74
      %p155 = pneg %p103
      %p156 = pneg %p100
      %s157 = smul.u32 32, %s14
      %p158 = scmp.lt.s32.totalorder %s157, 63
      %s159 = scalar_select %p158, %s157, 63
      %s160 = smul.addr %s159, 4
      %s161 = scalar_lea.vmem %s3, %s160
      %s162 = smul.u32 32, %s14
      %p163 = scmp.lt.s32.totalorder %s162, 63
      %s164 = scalar_select %p163, %s162, 63
      %s165 = smul.addr %s164, 4
      %s166 = scalar_lea.vmem %s0, %s165
      %s167 = smul.u32 32, %s14
      %s168 = smul.u32 32, %s14
      %p169 = scmp.lt.s32.totalorder %s168, 63
      %s170 = scalar_select %p169, %s168, 63
      %s171 = smul.addr %s170, 4
      %s172 = scalar_lea.vmem %s3, %s171
      %s173 = smul.u32 32, %s14
      %v175 = vld [vmem:[%s166] sm:$0xf]
      %v176 = vld [vmem:[%s166 + $0x4] sm:$0xf]
      %v177 = vld [vmem:[%s166 + $0x8] sm:$0xf]
      %v178 = vld [vmem:[%s166 + $0xc] sm:$0xf]
      %v179 = vld [vmem:[%s166 + $0x10] sm:$0xf]
      %v180 = vld [vmem:[%s166 + $0x14] sm:$0xf]
      %v181 = vld [vmem:[%s166 + $0x18] sm:$0xf]
      %v182 = vld [vmem:[%s166 + $0x1c] sm:$0xf]
      %v183 = vld [vmem:[%s166 + $0x20] sm:$0xf]
      %v184 = vld [vmem:[%s166 + $0x24] sm:$0xf]
      %v185 = vld [vmem:[%s166 + $0x28] sm:$0xf]
      %v186 = vld [vmem:[%s166 + $0x2c] sm:$0xf]
      %v187 = vld [vmem:[%s166 + $0x30] sm:$0xf]
      %v188 = vld [vmem:[%s166 + $0x34] sm:$0xf]
      %v189 = vld [vmem:[%s166 + $0x38] sm:$0xf]
      %v190 = vld [vmem:[%s166 + $0x3c] sm:$0xf]
      %v191 = vld [vmem:[%s166 + $0x40] sm:$0xf]
      %v192 = vld [vmem:[%s166 + $0x44] sm:$0xf]
      %v193 = vld [vmem:[%s166 + $0x48] sm:$0xf]
      %v194 = vld [vmem:[%s166 + $0x4c] sm:$0xf]
      %v195 = vld [vmem:[%s166 + $0x50] sm:$0xf]
      %v196 = vld [vmem:[%s166 + $0x54] sm:$0xf]
      %v197 = vld [vmem:[%s166 + $0x58] sm:$0xf]
      %v198 = vld [vmem:[%s166 + $0x5c] sm:$0xf]
      %v199 = vld [vmem:[%s166 + $0x60] sm:$0xf]
      %v200 = vld [vmem:[%s166 + $0x64] sm:$0xf]
      %v201 = vld [vmem:[%s166 + $0x68] sm:$0xf]
      %v202 = vld [vmem:[%s166 + $0x6c] sm:$0xf]
      %v203 = vld [vmem:[%s166 + $0x70] sm:$0xf]
      %v204 = vld [vmem:[%s166 + $0x74] sm:$0xf]
      %v205 = vld [vmem:[%s166 + $0x78] sm:$0xf]
      %v206 = vld [vmem:[%s166 + $0x7c] sm:$0xf]
      %v207 = vld [vmem:[%s1] sm:$0xf]
      %v208 = vld [vmem:[%s1 + $0x4] sm:$0xf]
      %v209 = vld [vmem:[%s1 + $0x8] sm:$0xf]
      %v210 = vld [vmem:[%s1 + $0xc] sm:$0xf]
      %v211 = vld [vmem:[%s2] sm:$0x1]
      %v213 = vlaneseq
      %v214 = vshrl.u32 %v213, 7
      %v215 = vsub.s32 0, %v214
      %v216 = vrot.slane %v211, %v215
      %v250 = vunpack.c.l.b16 %v175
      %v251 = vunpack.c.l.b16 %v176
      %v252 = vunpack.c.l.b16 %v177
      %v253 = vunpack.c.l.b16 %v178
      %v254 = vunpack.c.l.b16 %v179
      %v255 = vunpack.c.l.b16 %v180
      %v256 = vunpack.c.l.b16 %v181
      %v257 = vunpack.c.l.b16 %v182
      %v258 = vunpack.c.l.b16 %v183
      %v259 = vunpack.c.l.b16 %v184
      %v260 = vunpack.c.l.b16 %v185
      %v261 = vunpack.c.l.b16 %v186
      %v262 = vunpack.c.l.b16 %v187
      %v263 = vunpack.c.l.b16 %v188
      %v264 = vunpack.c.l.b16 %v189
      %v265 = vunpack.c.l.b16 %v190
      %v266 = vunpack.c.l.b16 %v191
      %v267 = vunpack.c.l.b16 %v192
      %v268 = vunpack.c.l.b16 %v193
      %v269 = vunpack.c.l.b16 %v194
      %v270 = vunpack.c.l.b16 %v195
      %v271 = vunpack.c.l.b16 %v196
      %v272 = vunpack.c.l.b16 %v197
      %v273 = vunpack.c.l.b16 %v198
      %v274 = vunpack.c.l.b16 %v199
      %v275 = vunpack.c.l.b16 %v200
      %v276 = vunpack.c.l.b16 %v201
      %v277 = vunpack.c.l.b16 %v202
      %v278 = vunpack.c.l.b16 %v203
      %v279 = vunpack.c.l.b16 %v204
      %v280 = vunpack.c.l.b16 %v205
      %v281 = vunpack.c.l.b16 %v206
      %v282 = vpack.c.b16 %v251, %v250
      %v283 = vpack.c.b16 %v253, %v252
      %v284 = vpack.c.b16 %v255, %v254
      %v285 = vpack.c.b16 %v257, %v256
      %v286 = vpack.c.b16 %v259, %v258
      %v287 = vpack.c.b16 %v261, %v260
      %v288 = vpack.c.b16 %v263, %v262
      %v289 = vpack.c.b16 %v265, %v264
      %v290 = vpack.c.b16 %v267, %v266
      %v291 = vpack.c.b16 %v269, %v268
      %v292 = vpack.c.b16 %v271, %v270
      %v293 = vpack.c.b16 %v273, %v272
      %v294 = vpack.c.b16 %v275, %v274
      %v295 = vpack.c.b16 %v277, %v276
      %v296 = vpack.c.b16 %v279, %v278
      %v297 = vpack.c.b16 %v281, %v280
      %v302 = vunpack.c.l.b16 %v207
      %v303 = vunpack.c.l.b16 %v208
      %v304 = vunpack.c.l.b16 %v209
      %v305 = vunpack.c.l.b16 %v210
      %v306 = vpack.c.b16 %v303, %v302
      %v307 = vpack.c.b16 %v305, %v304
      %vm310 = vcmask 261120
      %v312 = vsel %vm310, %v282, 0
      %v315 = vsel %vm310, %v283, 0
      %v318 = vsel %vm310, %v284, 0
      %v321 = vsel %vm310, %v285, 0
      %v324 = vsel %vm310, %v286, 0
      %v327 = vsel %vm310, %v287, 0
      %v330 = vsel %vm310, %v288, 0
      %v333 = vsel %vm310, %v289, 0
      %v336 = vsel %vm310, %v290, 0
      %v339 = vsel %vm310, %v291, 0
      %v342 = vsel %vm310, %v292, 0
      %v345 = vsel %vm310, %v293, 0
      %v348 = vsel %vm310, %v294, 0
      %v351 = vsel %vm310, %v295, 0
      %v354 = vsel %vm310, %v296, 0
      %v357 = vsel %vm310, %v297, 0
      %359 = vmatprep.subr.bf16.mxu0 0
      %360 = vmatpush1.bf16.msra.mxu0 %v306
      %361 = vmatprep.subr.bf16.mxu0 0
      %362 = vmatpush1.bf16.msra.mxu0 %v307
      %363 = vmatprep.subr.bf16.mxu0 0
      %364 = vmatpush1.bf16.msra.mxu0 0
      %365 = vmatprep.subr.bf16.mxu0 0
      %366 = vmatpush1.bf16.msra.mxu0 0
      %367 = vmatprep.subr.bf16.mxu0 0
      %368 = vmatpush1.bf16.msra.mxu0 0
      %369 = vmatprep.subr.bf16.mxu0 0
      %370 = vmatpush1.bf16.msra.mxu0 0
      %371 = vmatprep.subr.bf16.mxu0 0
      %372 = vmatpush1.bf16.msra.mxu0 0
      %373 = vmatprep.subr.bf16.mxu0 0
      %374 = vmatpush1.bf16.msra.mxu0 0
      %375 = vmatprep.subr.bf16.mxu0 0
      %376 = vmatpush1.bf16.msra.mxu0 0
      %377 = vmatprep.subr.bf16.mxu0 0
      %378 = vmatpush1.bf16.msra.mxu0 0
      %379 = vmatprep.subr.bf16.mxu0 0
      %380 = vmatpush1.bf16.msra.mxu0 0
      %381 = vmatprep.subr.bf16.mxu0 0
      %382 = vmatpush1.bf16.msra.mxu0 0
      %383 = vmatprep.subr.bf16.mxu0 0
      %384 = vmatpush1.bf16.msra.mxu0 0
      %385 = vmatprep.subr.bf16.mxu0 0
      %386 = vmatpush1.bf16.msra.mxu0 0
      %387 = vmatprep.subr.bf16.mxu0 0
      %388 = vmatpush1.bf16.msra.mxu0 0
      %389 = vmatprep.subr.bf16.mxu0 0
      %390 = vmatpush1.bf16.msra.mxu0 0
      %391 = vmatprep.mubr.bf16.mxu0 0
      %392 = vmatmul.mubr.bf16.gmra.mrb[0].mxu0 %v312
      %v393 = vpop.f32.mrb[0].mxu0
      %v394 = vadd.f32 %v216, %v393
      %v395 = vpop.f32.mrb[0].mxu0
      %v396 = vpop.f32.mrb[0].mxu0
      %v397 = vadd.f32 %v216, %v396
      %v398 = vpop.f32.mrb[0].mxu0
      %399 = vmatprep.mubr.bf16.mxu0 0
      %400 = vmatmul.mubr.bf16.gmra.mrb[0].mxu0 %v315
      %v401 = vpop.f32.mrb[0].mxu0
      %v402 = vadd.f32 %v216, %v401
      %v403 = vpop.f32.mrb[0].mxu0
      %v404 = vpop.f32.mrb[0].mxu0
      %v405 = vadd.f32 %v216, %v404
      %v406 = vpop.f32.mrb[0].mxu0
      %407 = vmatprep.mubr.bf16.mxu0 0
      %408 = vmatmul.mubr.bf16.gmra.mrb[0].mxu0 %v318
      %v409 = vpop.f32.mrb[0].mxu0
      %v410 = vadd.f32 %v216, %v409
      %v411 = vpop.f32.mrb[0].mxu0
      %v412 = vpop.f32.mrb[0].mxu0
      %v413 = vadd.f32 %v216, %v412
      %v414 = vpop.f32.mrb[0].mxu0
      %415 = vmatprep.mubr.bf16.mxu0 0
      %416 = vmatmul.mubr.bf16.gmra.mrb[0].mxu0 %v321
      %v417 = vpop.f32.mrb[0].mxu0
      %v418 = vadd.f32 %v216, %v417
      %v419 = vpop.f32.mrb[0].mxu0
      %v420 = vpop.f32.mrb[0].mxu0
      %v421 = vadd.f32 %v216, %v420
      %v422 = vpop.f32.mrb[0].mxu0
      %423 = vmatprep.mubr.bf16.mxu0 0
      %424 = vmatmul.mubr.bf16.gmra.mrb[0].mxu0 %v324
      %v425 = vpop.f32.mrb[0].mxu0
      %v426 = vadd.f32 %v216, %v425
      %v427 = vpop.f32.mrb[0].mxu0
      %v428 = vpop.f32.mrb[0].mxu0
      %v429 = vadd.f32 %v216, %v428
      %v430 = vpop.f32.mrb[0].mxu0
      %431 = vmatprep.mubr.bf16.mxu0 0
      %432 = vmatmul.mubr.bf16.gmra.mrb[0].mxu0 %v327
      %v433 = vpop.f32.mrb[0].mxu0
      %v434 = vadd.f32 %v216, %v433
      %v435 = vpop.f32.mrb[0].mxu0
      %v436 = vpop.f32.mrb[0].mxu0
      %v437 = vadd.f32 %v216, %v436
      %v438 = vpop.f32.mrb[0].mxu0
      %439 = vmatprep.mubr.bf16.mxu0 0
      %440 = vmatmul.mubr.bf16.gmra.mrb[0].mxu0 %v330
      %v441 = vpop.f32.mrb[0].mxu0
      %v442 = vadd.f32 %v216, %v441
      %v443 = vpop.f32.mrb[0].mxu0
      %v444 = vpop.f32.mrb[0].mxu0
      %v445 = vadd.f32 %v216, %v444
      %v446 = vpop.f32.mrb[0].mxu0
      %447 = vmatprep.mubr.bf16.mxu0 0
      %448 = vmatmul.mubr.bf16.gmra.mrb[0].mxu0 %v333
      %v449 = vpop.f32.mrb[0].mxu0
      %v450 = vadd.f32 %v216, %v449
      %v451 = vpop.f32.mrb[0].mxu0
      %v452 = vpop.f32.mrb[0].mxu0
      %v453 = vadd.f32 %v216, %v452
      %v454 = vpop.f32.mrb[0].mxu0
      %455 = vmatprep.mubr.bf16.mxu0 0
      %456 = vmatmul.mubr.bf16.gmra.mrb[0].mxu0 %v336
      %v457 = vpop.f32.mrb[0].mxu0
      %v458 = vadd.f32 %v216, %v457
      %v459 = vpop.f32.mrb[0].mxu0
      %v460 = vpop.f32.mrb[0].mxu0
      %v461 = vadd.f32 %v216, %v460
      %v462 = vpop.f32.mrb[0].mxu0
      %463 = vmatprep.mubr.bf16.mxu0 0
      %464 = vmatmul.mubr.bf16.gmra.mrb[0].mxu0 %v339
      %v465 = vpop.f32.mrb[0].mxu0
      %v466 = vadd.f32 %v216, %v465
      %v467 = vpop.f32.mrb[0].mxu0
      %v468 = vpop.f32.mrb[0].mxu0
      %v469 = vadd.f32 %v216, %v468
      %v470 = vpop.f32.mrb[0].mxu0
      %471 = vmatprep.mubr.bf16.mxu0 0
      %472 = vmatmul.mubr.bf16.gmra.mrb[0].mxu0 %v342
      %v473 = vpop.f32.mrb[0].mxu0
      %v474 = vadd.f32 %v216, %v473
      %v475 = vpop.f32.mrb[0].mxu0
      %v476 = vpop.f32.mrb[0].mxu0
      %v477 = vadd.f32 %v216, %v476
      %v478 = vpop.f32.mrb[0].mxu0
      %479 = vmatprep.mubr.bf16.mxu0 0
      %480 = vmatmul.mubr.bf16.gmra.mrb[0].mxu0 %v345
      %v481 = vpop.f32.mrb[0].mxu0
      %v482 = vadd.f32 %v216, %v481
      %v483 = vpop.f32.mrb[0].mxu0
      %v484 = vpop.f32.mrb[0].mxu0
      %v485 = vadd.f32 %v216, %v484
      %v486 = vpop.f32.mrb[0].mxu0
      %487 = vmatprep.mubr.bf16.mxu0 0
      %488 = vmatmul.mubr.bf16.gmra.mrb[0].mxu0 %v348
      %v489 = vpop.f32.mrb[0].mxu0
      %v490 = vadd.f32 %v216, %v489
      %v491 = vpop.f32.mrb[0].mxu0
      %v492 = vpop.f32.mrb[0].mxu0
      %v493 = vadd.f32 %v216, %v492
      %v494 = vpop.f32.mrb[0].mxu0
      %495 = vmatprep.mubr.bf16.mxu0 0
      %496 = vmatmul.mubr.bf16.gmra.mrb[0].mxu0 %v351
      %v497 = vpop.f32.mrb[0].mxu0
      %v498 = vadd.f32 %v216, %v497
      %v499 = vpop.f32.mrb[0].mxu0
      %v500 = vpop.f32.mrb[0].mxu0
      %v501 = vadd.f32 %v216, %v500
      %v502 = vpop.f32.mrb[0].mxu0
      %503 = vmatprep.mubr.bf16.mxu0 0
      %504 = vmatmul.mubr.bf16.gmra.mrb[0].mxu0 %v354
      %v505 = vpop.f32.mrb[0].mxu0
      %v506 = vadd.f32 %v216, %v505
      %v507 = vpop.f32.mrb[0].mxu0
      %v508 = vpop.f32.mrb[0].mxu0
      %v509 = vadd.f32 %v216, %v508
      %v510 = vpop.f32.mrb[0].mxu0
      %511 = vmatprep.mubr.bf16.mxu0 0
      %512 = vmatmul.mubr.bf16.gmra.mrb[0].mxu0 %v357
      %v513 = vpop.f32.mrb[0].mxu0
      %v514 = vadd.f32 %v216, %v513
      %v515 = vpop.f32.mrb[0].mxu0
      %v516 = vpop.f32.mrb[0].mxu0
      %v517 = vadd.f32 %v216, %v516
      %v518 = vpop.f32.mrb[0].mxu0
      %519 = vdwg.mxu0
      %v520 = vmax.f32 %v394, 0.0
      %v521 = vmax.f32 %v397, 0.0
      %v522 = vmax.f32 %v402, 0.0
      %v523 = vmax.f32 %v405, 0.0
      %v524 = vmax.f32 %v410, 0.0
      %v525 = vmax.f32 %v413, 0.0
      %v526 = vmax.f32 %v418, 0.0
      %v527 = vmax.f32 %v421, 0.0
      %v528 = vmax.f32 %v426, 0.0
      %v529 = vmax.f32 %v429, 0.0
      %v530 = vmax.f32 %v434, 0.0
      %v531 = vmax.f32 %v437, 0.0
      %v532 = vmax.f32 %v442, 0.0
      %v533 = vmax.f32 %v445, 0.0
      %v534 = vmax.f32 %v450, 0.0
      %v535 = vmax.f32 %v453, 0.0
      %v536 = vmax.f32 %v458, 0.0
      %v537 = vmax.f32 %v461, 0.0
      %v538 = vmax.f32 %v466, 0.0
      %v539 = vmax.f32 %v469, 0.0
      %v540 = vmax.f32 %v474, 0.0
      %v541 = vmax.f32 %v477, 0.0
      %v542 = vmax.f32 %v482, 0.0
      %v543 = vmax.f32 %v485, 0.0
      %v544 = vmax.f32 %v490, 0.0
      %v545 = vmax.f32 %v493, 0.0
      %v546 = vmax.f32 %v498, 0.0
      %v547 = vmax.f32 %v501, 0.0
      %v548 = vmax.f32 %v506, 0.0
      %v549 = vmax.f32 %v509, 0.0
      %v550 = vmax.f32 %v514, 0.0
      %v551 = vmax.f32 %v517, 0.0
      %v552 = vpack.c.bf16 %v521, %v520
      %v553 = vpack.c.bf16 %v523, %v522
      %v554 = vpack.c.bf16 %v525, %v524
      %v555 = vpack.c.bf16 %v527, %v526
      %v556 = vpack.c.bf16 %v529, %v528
      %v557 = vpack.c.bf16 %v531, %v530
      %v558 = vpack.c.bf16 %v533, %v532
      %v559 = vpack.c.bf16 %v535, %v534
      %v560 = vpack.c.bf16 %v537, %v536
      %v561 = vpack.c.bf16 %v539, %v538
      %v562 = vpack.c.bf16 %v541, %v540
      %v563 = vpack.c.bf16 %v543, %v542
      %v564 = vpack.c.bf16 %v545, %v544
      %v565 = vpack.c.bf16 %v547, %v546
      %v566 = vpack.c.bf16 %v549, %v548
      %v567 = vpack.c.bf16 %v551, %v550
      %v584 = vunpack.c.l.b16 %v552
      %v585 = vunpack.c.h.b16 %v552
      %v586 = vunpack.c.l.b16 %v553
      %v587 = vunpack.c.h.b16 %v553
      %v588 = vunpack.c.l.b16 %v554
      %v589 = vunpack.c.h.b16 %v554
      %v590 = vunpack.c.l.b16 %v555
      %v591 = vunpack.c.h.b16 %v555
      %v592 = vunpack.c.l.b16 %v556
      %v593 = vunpack.c.h.b16 %v556
      %v594 = vunpack.c.l.b16 %v557
      %v595 = vunpack.c.h.b16 %v557
      %v596 = vunpack.c.l.b16 %v558
      %v597 = vunpack.c.h.b16 %v558
      %v598 = vunpack.c.l.b16 %v559
      %v599 = vunpack.c.h.b16 %v559
      %v600 = vunpack.c.l.b16 %v560
      %v601 = vunpack.c.h.b16 %v560
      %v602 = vunpack.c.l.b16 %v561
      %v603 = vunpack.c.h.b16 %v561
      %v604 = vunpack.c.l.b16 %v562
      %v605 = vunpack.c.h.b16 %v562
      %v606 = vunpack.c.l.b16 %v563
      %v607 = vunpack.c.h.b16 %v563
      %v608 = vunpack.c.l.b16 %v564
      %v609 = vunpack.c.h.b16 %v564
      %v610 = vunpack.c.l.b16 %v565
      %v611 = vunpack.c.h.b16 %v565
      %v612 = vunpack.c.l.b16 %v566
      %v613 = vunpack.c.h.b16 %v566
      %v614 = vunpack.c.l.b16 %v567
      %v615 = vunpack.c.h.b16 %v567
      %v616 = vpack.c.b16 %v584, %v584
      %v617 = vpack.c.b16 %v585, %v585
      %v618 = vpack.c.b16 %v586, %v586
      %v619 = vpack.c.b16 %v587, %v587
      %v620 = vpack.c.b16 %v588, %v588
      %v621 = vpack.c.b16 %v589, %v589
      %v622 = vpack.c.b16 %v590, %v590
      %v623 = vpack.c.b16 %v591, %v591
      %v624 = vpack.c.b16 %v592, %v592
      %v625 = vpack.c.b16 %v593, %v593
      %v626 = vpack.c.b16 %v594, %v594
      %v627 = vpack.c.b16 %v595, %v595
      %v628 = vpack.c.b16 %v596, %v596
      %v629 = vpack.c.b16 %v597, %v597
      %v630 = vpack.c.b16 %v598, %v598
      %v631 = vpack.c.b16 %v599, %v599
      %v632 = vpack.c.b16 %v600, %v600
      %v633 = vpack.c.b16 %v601, %v601
      %v634 = vpack.c.b16 %v602, %v602
      %v635 = vpack.c.b16 %v603, %v603
      %v636 = vpack.c.b16 %v604, %v604
      %v637 = vpack.c.b16 %v605, %v605
      %v638 = vpack.c.b16 %v606, %v606
      %v639 = vpack.c.b16 %v607, %v607
      %v640 = vpack.c.b16 %v608, %v608
      %v641 = vpack.c.b16 %v609, %v609
      %v642 = vpack.c.b16 %v610, %v610
      %v643 = vpack.c.b16 %v611, %v611
      %v644 = vpack.c.b16 %v612, %v612
      %v645 = vpack.c.b16 %v613, %v613
      %v646 = vpack.c.b16 %v614, %v614
      %v647 = vpack.c.b16 %v615, %v615
      %vm680 = vcmask 125952
      %681 = vst.msk [vmem:[%s172] sm:$0xf] %vm680, %v616
      %682 = vst.msk [vmem:[%s172 + $0x4] sm:$0xf] %vm680, %v617
      %683 = vst.msk [vmem:[%s172 + $0x8] sm:$0xf] %vm680, %v618
      %684 = vst.msk [vmem:[%s172 + $0xc] sm:$0xf] %vm680, %v619
      %685 = vst.msk [vmem:[%s172 + $0x10] sm:$0xf] %vm680, %v620
      %686 = vst.msk [vmem:[%s172 + $0x14] sm:$0xf] %vm680, %v621
      %687 = vst.msk [vmem:[%s172 + $0x18] sm:$0xf] %vm680, %v622
      %688 = vst.msk [vmem:[%s172 + $0x1c] sm:$0xf] %vm680, %v623
      %689 = vst.msk [vmem:[%s172 + $0x20] sm:$0xf] %vm680, %v624
      %690 = vst.msk [vmem:[%s172 + $0x24] sm:$0xf] %vm680, %v625
      %691 = vst.msk [vmem:[%s172 + $0x28] sm:$0xf] %vm680, %v626
      %692 = vst.msk [vmem:[%s172 + $0x2c] sm:$0xf] %vm680, %v627
      %693 = vst.msk [vmem:[%s172 + $0x30] sm:$0xf] %vm680, %v628
      %694 = vst.msk [vmem:[%s172 + $0x34] sm:$0xf] %vm680, %v629
      %695 = vst.msk [vmem:[%s172 + $0x38] sm:$0xf] %vm680, %v630
      %696 = vst.msk [vmem:[%s172 + $0x3c] sm:$0xf] %vm680, %v631
      %697 = vst.msk [vmem:[%s172 + $0x40] sm:$0xf] %vm680, %v632
      %698 = vst.msk [vmem:[%s172 + $0x44] sm:$0xf] %vm680, %v633
      %699 = vst.msk [vmem:[%s172 + $0x48] sm:$0xf] %vm680, %v634
      %700 = vst.msk [vmem:[%s172 + $0x4c] sm:$0xf] %vm680, %v635
      %701 = vst.msk [vmem:[%s172 + $0x50] sm:$0xf] %vm680, %v636
      %702 = vst.msk [vmem:[%s172 + $0x54] sm:$0xf] %vm680, %v637
      %703 = vst.msk [vmem:[%s172 + $0x58] sm:$0xf] %vm680, %v638
      %704 = vst.msk [vmem:[%s172 + $0x5c] sm:$0xf] %vm680, %v639
      %705 = vst.msk [vmem:[%s172 + $0x60] sm:$0xf] %vm680, %v640
      %706 = vst.msk [vmem:[%s172 + $0x64] sm:$0xf] %vm680, %v641
      %707 = vst.msk [vmem:[%s172 + $0x68] sm:$0xf] %vm680, %v642
      %708 = vst.msk [vmem:[%s172 + $0x6c] sm:$0xf] %vm680, %v643
      %709 = vst.msk [vmem:[%s172 + $0x70] sm:$0xf] %vm680, %v644
      %710 = vst.msk [vmem:[%s172 + $0x74] sm:$0xf] %vm680, %v645
      %711 = vst.msk [vmem:[%s172 + $0x78] sm:$0xf] %vm680, %v646
      %712 = vst.msk [vmem:[%s172 + $0x7c] sm:$0xf] %vm680, %v647
      %s713 = smul.u32 32, %s14
      %p714 = scmp.lt.s32.totalorder %s713, 63
      %s715 = scalar_select %p714, %s713, 63
      %s716 = smul.addr %s715, 4
      %s717 = scalar_lea.vmem %s3, %s716
      // Predicated region
      $region33: #{_forward_impl.14} parent=31 // pred_check
        %p718 = pneg %p100
      $region34: #{_forward_impl.14} parent=31 // pred_check_branch
        %720 = sbr.rel (%p718) target = $region36
      $region35: #{_forward_impl.14} parent=31 // pred_region
        %s721 = smul.u32 32, %s14
      $region36: #{_forward_impl.14} parent=31 // pred_fallthru
        _
    $region32: #{_forward_impl.14} parent=5 // pred_fallthru
      _
    %p722 = scmp.le.s32.totalorder 2, %s9
    // Predicated region
    $region37: #{_forward_impl.14} parent=5 // pred_check
      %p723 = pneg %p722
    $region38: #{_forward_impl.14} parent=5 // pred_check_branch
      %725 = sbr.rel (%p723) target = $region40
    $region39: #{_forward_impl.14} parent=5 // pred_region
      %s726 = ssub.s32 %s9, 2
      // Predicated region
      $region41: #{_forward_impl.14} parent=39 // pred_check
        %p727 = pneg %p106
      $region42: #{_forward_impl.14} parent=39 // pred_check_branch
        %729 = sbr.rel (%p727) target = $region44
      $region43: #{_forward_impl.14} parent=39 // pred_region
        %s730 = smul.u32 32, %s15
        %p731 = scmp.lt.s32.totalorder %s730, 63
        %s732 = scalar_select %p731, %s730, 63
        %s733 = smul.addr %s732, 4
        %s734 = scalar_lea.vmem %s3, %s733
      $region44: #{_forward_impl.14} parent=39 // pred_fallthru
        _
    $region40: #{_forward_impl.14} parent=5 // pred_fallthru
      _
  $region6: #{_forward_impl.14} parent=0 // loop_footer
    %s13 = sadd.s32 1, %s9
  $region7: #{_forward_impl.14} parent=0 // loop_footer_branch
    %8 = sbr.rel target = $region3
  $region8: #{_forward_impl.14} parent=0 // loop_exit
    _

// kernel: _forward_impl.15
$region0: #{_forward_impl.15}
  #allocation0 [shape = 'u32[]', space=smem, size = 0x4, offset = 0x4, fixed_abs, tag = 'smem constant byte address 0x4 - core index']
  #allocation1 [shape = 'u32[144,128]{1,0:T(1,128)}', space=vmem, size = 0x12000, scoped, tag = 'internal scratch']
  %s0 = inlined_call_operand.vmem [shape: bf16[128,64], index: 0, kind: input, shape index: {}]
  %s1 = inlined_call_operand.vmem [shape: bf16[64,32], index: 1, kind: input, shape index: {}]
  %s2 = inlined_call_operand.vmem [shape: f32[1,32], index: 2, kind: input, shape index: {}]
  %s3 = inlined_call_operand.vmem [shape: bf16[128,32], index: 3, kind: output, shape index: {}]
  %s4 = sld [smem:[#allocation0]]
  $region45: #{_forward_impl.15} parent=0
    _
  %s6 = ssub.s32 1, %s4
  %s7 = scalar_select 0, %s6, %s4
  loop: start=0, step=1, limit=4
  $region2: #{_forward_impl.15} parent=0 // loop_pre_header
    _
  $region3: #{_forward_impl.15} parent=0 // loop_header
    %s9 = sphi 0, %s13
    %p10 = scmp.ge.s32.totalorder %s9, 4
    %s19 = sphi 0, %s21
    %s22 = sphi 0, %s19
    %s23 = sphi 0, %s22
    %s39 = sphi 0, %s23
    %s43 = sphi 0, %s43
    %s45 = sphi 0, %s43
    %s46 = sphi 0, %s45
    %s60 = sphi 0, %s46
    %s64 = sphi 0, %s64
    %s66 = sphi 0, %s64
    %s67 = sphi 0, %s66
    %s81 = sphi 0, %s67
    %s87 = sphi 0, %s89
    %s90 = sphi 0, %s87
    %s91 = sphi 0, %s90
    %s107 = sphi 0, %s91
  $region4: #{_forward_impl.15} parent=0 // loop_header_branch
    %12 = sbr.rel (%p10) target = $region8
  $region5: #{_forward_impl.15} parent=0 // loop_body
    %s14 = ssub.s32 %s9, 1
    %s15 = ssub.s32 %s9, 2
    %s16 = sadd.s32 %s9, 1
    %s17 = ssub.s32 %s9, %s16
    %p18 = scmp.eq.s32.totalorder %s17, 0
    %s20 = sadd.s32 %s19, 1
    %s21 = scalar_select %p18, %s19, %s20
    %p24 = pneg %p18
    %p25 = scmp.eq.s32.totalorder %s9, 1
    %p26 = por %p24, %p25
    %p27 = scmp.ne.s32.totalorder %s19, %s22
    %p28 = scmp.eq.s32.totalorder %s9, 0
    %p29 = por %p27, %p28
    %p30 = scmp.ne.s32.totalorder %s19, %s22
    %p31 = scmp.eq.s32.totalorder %s14, 1
    %p32 = por %p30, %p31
    %p33 = scmp.ne.s32.totalorder %s22, %s23
    %p34 = scmp.eq.s32.totalorder %s14, 0
    %p35 = por %p33, %p34
    %p36 = scmp.ne.s32.totalorder %s22, %s23
    %p37 = scmp.eq.s32.totalorder %s15, 1
    %p38 = por %p36, %p37
    %p40 = scmp.ne.s32.totalorder %s23, %s39
    %p41 = scmp.eq.s32.totalorder %s15, 0
    %p42 = por %p40, %p41
    %s44 = sadd.s32 %s43, 1
    %p47 = scmp.eq.s32.totalorder %s9, 1
    %p48 = scmp.ne.s32.totalorder %s43, %s45
    %p49 = scmp.eq.s32.totalorder %s9, 0
    %p50 = por %p48, %p49
    %p51 = scmp.ne.s32.totalorder %s43, %s45
    %p52 = scmp.eq.s32.totalorder %s14, 1
    %p53 = por %p51, %p52
    %p54 = scmp.ne.s32.totalorder %s45, %s46
    %p55 = scmp.eq.s32.totalorder %s14, 0
    %p56 = por %p54, %p55
    %p57 = scmp.ne.s32.totalorder %s45, %s46
    %p58 = scmp.eq.s32.totalorder %s15, 1
    %p59 = por %p57, %p58
    %p61 = scmp.ne.s32.totalorder %s46, %s60
    %p62 = scmp.eq.s32.totalorder %s15, 0
    %p63 = por %p61, %p62
    %s65 = sadd.s32 %s64, 1
    %p68 = scmp.eq.s32.totalorder %s9, 1
    %p69 = scmp.ne.s32.totalorder %s64, %s66
    %p70 = scmp.eq.s32.totalorder %s9, 0
    %p71 = por %p69, %p70
    %p72 = scmp.ne.s32.totalorder %s64, %s66
    %p73 = scmp.eq.s32.totalorder %s14, 1
    %p74 = por %p72, %p73
    %p75 = scmp.ne.s32.totalorder %s66, %s67
    %p76 = scmp.eq.s32.totalorder %s14, 0
    %p77 = por %p75, %p76
    %p78 = scmp.ne.s32.totalorder %s66, %s67
    %p79 = scmp.eq.s32.totalorder %s15, 1
    %p80 = por %p78, %p79
    %p82 = scmp.ne.s32.totalorder %s67, %s81
    %p83 = scmp.eq.s32.totalorder %s15, 0
    %p84 = por %p82, %p83
    %s85 = ssub.s32 %s9, %s16
    %p86 = scmp.eq.s32.totalorder %s85, 0
    %s88 = sadd.s32 %s87, 1
    %s89 = scalar_select %p86, %s87, %s88
    %p92 = pneg %p86
    %p93 = scmp.eq.s32.totalorder %s9, 1
    %p94 = por %p92, %p93
    %p95 = scmp.ne.s32.totalorder %s87, %s90
    %p96 = scmp.eq.s32.totalorder %s9, 0
    %p97 = por %p95, %p96
    %p98 = scmp.ne.s32.totalorder %s87, %s90
    %p99 = scmp.eq.s32.totalorder %s14, 1
    %p100 = por %p98, %p99
    %p101 = scmp.ne.s32.totalorder %s90, %s91
    %p102 = scmp.eq.s32.totalorder %s14, 0
    %p103 = por %p101, %p102
    %p104 = scmp.ne.s32.totalorder %s90, %s91
    %p105 = scmp.eq.s32.totalorder %s15, 1
    %p106 = por %p104, %p105
    %p108 = scmp.ne.s32.totalorder %s91, %s107
    %p109 = scmp.eq.s32.totalorder %s15, 0
    %p110 = por %p108, %p109
    %p111 = scmp.le.s32.totalorder 1, %s9
    %p112 = scmp.lt.s32.totalorder %s9, 3
    %p113 = pnand %p111, %p112
    %p114 = pneg %p113
    // Predicated region
    $region9: #{_forward_impl.15} parent=5 // pred_check
      _
    $region10: #{_forward_impl.15} parent=5 // pred_check_branch
      %116 = sbr.rel (%p113) target = $region12
    $region11: #{_forward_impl.15} parent=5 // pred_region
      %s117 = ssub.s32 %s9, 1
      // Predicated region
      $region13: #{_forward_impl.15} parent=11 // pred_check
        %p118 = pneg %p56
      $region14: #{_forward_impl.15} parent=11 // pred_check_branch
        %120 = sbr.rel (%p118) target = $region16
      $region15: #{_forward_impl.15} parent=11 // pred_region
        _
      $region16: #{_forward_impl.15} parent=11 // pred_fallthru
        _
      // Predicated region
      $region17: #{_forward_impl.15} parent=11 // pred_check
        %p121 = pneg %p77
      $region18: #{_forward_impl.15} parent=11 // pred_check_branch
        %123 = sbr.rel (%p121) target = $region20
      $region19: #{_forward_impl.15} parent=11 // pred_region
        _
      $region20: #{_forward_impl.15} parent=11 // pred_fallthru
        _
    $region12: #{_forward_impl.15} parent=5 // pred_fallthru
      _
    %p124 = scmp.lt.s32.totalorder %s9, 2
    // Predicated region
    $region21: #{_forward_impl.15} parent=5 // pred_check
      %p125 = pneg %p124
    $region22: #{_forward_impl.15} parent=5 // pred_check_branch
      %127 = sbr.rel (%p125) target = $region24
    $region23: #{_forward_impl.15} parent=5 // pred_region
      // Predicated region
      $region25: #{_forward_impl.15} parent=23 // pred_check
        %p128 = pneg %p29
      $region26: #{_forward_impl.15} parent=23 // pred_check_branch
        %130 = sbr.rel (%p128) target = $region28
      $region27: #{_forward_impl.15} parent=23 // pred_region
        %s131 = smul.u32 8, %s9
        %p132 = scmp.lt.s32.totalorder %s131, 15
        %s133 = scalar_select %p132, %s131, 15
        %s134 = smul.addr %s133, 4
        %s135 = scalar_lea.vmem %s0, %s134
        %s136 = smul.u32 8, %s9
      $region28: #{_forward_impl.15} parent=23 // pred_fallthru
        _
    $region24: #{_forward_impl.15} parent=5 // pred_fallthru
      _
    %p137 = scmp.le.s32.totalorder 1, %s9
    %p138 = scmp.lt.s32.totalorder %s9, 3
    %p139 = pnand %p137, %p138
    %p140 = pneg %p139
    // Predicated region
    $region29: #{_forward_impl.15} parent=5 // pred_check
      _
    $region30: #{_forward_impl.15} parent=5 // pred_check_branch
      %142 = sbr.rel (%p139) target = $region32
    $region31: #{_forward_impl.15} parent=5 // pred_region
      %s143 = ssub.s32 %s9, 1
      %s144 = smul.u32 8, %s14
      %p145 = scmp.lt.s32.totalorder %s144, 15
      %s146 = scalar_select %p145, %s144, 15
      %s147 = smul.addr %s146, 4
      %s148 = scalar_lea.vmem %s0, %s147
      %p149 = pneg %p35
      %p150 = pneg %p32
      %p151 = pneg %p56
      %p152 = pneg %p53
      %p153 = pneg %p77
      %p154 = pneg %p74
      %p155 = pneg %p103
      %p156 = pneg %p100
      %s157 = smul.u32 8, %s14
      %p158 = scmp.lt.s32.totalorder %s157, 15
      %s159 = scalar_select %p158, %s157, 15
      %s160 = smul.addr %s159, 4
      %s161 = scalar_lea.vmem %s3, %s160
      %s162 = smul.u32 8, %s14
      %p163 = scmp.lt.s32.totalorder %s162, 15
      %s164 = scalar_select %p163, %s162, 15
      %s165 = smul.addr %s164, 4
      %s166 = scalar_lea.vmem %s0, %s165
      %s167 = smul.u32 8, %s14
      %s168 = smul.u32 8, %s14
      %p169 = scmp.lt.s32.totalorder %s168, 15
      %s170 = scalar_select %p169, %s168, 15
      %s171 = smul.addr %s170, 4
      %s172 = scalar_lea.vmem %s3, %s171
      %s173 = smul.u32 8, %s14
      %v175 = vld [vmem:[%s166] sm:$0xf]
      %v176 = vld [vmem:[%s166 + $0x4] sm:$0xf]
      %v177 = vld [vmem:[%s166 + $0x8] sm:$0xf]
      %v178 = vld [vmem:[%s166 + $0xc] sm:$0xf]
      %v179 = vld [vmem:[%s166 + $0x10] sm:$0xf]
      %v180 = vld [vmem:[%s166 + $0x14] sm:$0xf]
      %v181 = vld [vmem:[%s166 + $0x18] sm:$0xf]
      %v182 = vld [vmem:[%s166 + $0x1c] sm:$0xf]
      %v183 = vld [vmem:[%s1] sm:$0xf]
      %v184 = vld [vmem:[%s1 + $0x4] sm:$0xf]
      %v185 = vld [vmem:[%s1 + $0x8] sm:$0xf]
      %v186 = vld [vmem:[%s1 + $0xc] sm:$0xf]
      %v187 = vld [vmem:[%s1 + $0x10] sm:$0xf]
      %v188 = vld [vmem:[%s1 + $0x14] sm:$0xf]
      %v189 = vld [vmem:[%s1 + $0x18] sm:$0xf]
      %v190 = vld [vmem:[%s1 + $0x1c] sm:$0xf]
      %v191 = vld [vmem:[%s2] sm:$0x1]
      %v193 = vlaneseq
      %v194 = vshrl.u32 %v193, 7
      %v195 = vsub.s32 0, %v194
      %v196 = vrot.slane %v191, %v195
      %v206 = vunpack.c.l.b16 %v175
      %v207 = vunpack.c.l.b16 %v176
      %v208 = vunpack.c.l.b16 %v177
      %v209 = vunpack.c.l.b16 %v178
      %v210 = vunpack.c.l.b16 %v179
      %v211 = vunpack.c.l.b16 %v180
      %v212 = vunpack.c.l.b16 %v181
      %v213 = vunpack.c.l.b16 %v182
      %v214 = vpack.c.b16 %v207, %v206
      %v215 = vpack.c.b16 %v209, %v208
      %v216 = vpack.c.b16 %v211, %v210
      %v217 = vpack.c.b16 %v213, %v212
      %v226 = vunpack.c.l.b16 %v183
      %v227 = vunpack.c.l.b16 %v184
      %v228 = vunpack.c.l.b16 %v185
      %v229 = vunpack.c.l.b16 %v186
      %v230 = vunpack.c.l.b16 %v187
      %v231 = vunpack.c.l.b16 %v188
      %v232 = vunpack.c.l.b16 %v189
      %v233 = vunpack.c.l.b16 %v190
      %v234 = vpack.c.b16 %v227, %v226
      %v235 = vpack.c.b16 %v229, %v228
      %v236 = vpack.c.b16 %v231, %v230
      %v237 = vpack.c.b16 %v233, %v232
      %vm242 = vcmask 523264
      %v244 = vsel %vm242, %v214, 0
      %v247 = vsel %vm242, %v215, 0
      %v250 = vsel %vm242, %v216, 0
      %v253 = vsel %vm242, %v217, 0
      %255 = vmatprep.subr.bf16.mxu0 0
      %256 = vmatpush1.bf16.msra.mxu0 %v234
      %257 = vmatprep.subr.bf16.mxu0 0
      %258 = vmatpush1.bf16.msra.mxu0 %v235
      %259 = vmatprep.subr.bf16.mxu0 0
      %260 = vmatpush1.bf16.msra.mxu0 %v236
      %261 = vmatprep.subr.bf16.mxu0 0
      %262 = vmatpush1.bf16.msra.mxu0 %v237
      %263 = vmatprep.subr.bf16.mxu0 0
      %264 = vmatpush1.bf16.msra.mxu0 0
      %265 = vmatprep.subr.bf16.mxu0 0
      %266 = vmatpush1.bf16.msra.mxu0 0
      %267 = vmatprep.subr.bf16.mxu0 0
      %268 = vmatpush1.bf16.msra.mxu0 0
      %269 = vmatprep.subr.bf16.mxu0 0
      %270 = vmatpush1.bf16.msra.mxu0 0
      %271 = vmatprep.subr.bf16.mxu0 0
      %272 = vmatpush1.bf16.msra.mxu0 0
      %273 = vmatprep.subr.bf16.mxu0 0
      %274 = vmatpush1.bf16.msra.mxu0 0
      %275 = vmatprep.subr.bf16.mxu0 0
      %276 = vmatpush1.bf16.msra.mxu0 0
      %277 = vmatprep.subr.bf16.mxu0 0
      %278 = vmatpush1.bf16.msra.mxu0 0
      %279 = vmatprep.subr.bf16.mxu0 0
      %280 = vmatpush1.bf16.msra.mxu0 0
      %281 = vmatprep.subr.bf16.mxu0 0
      %282 = vmatpush1.bf16.msra.mxu0 0
      %283 = vmatprep.subr.bf16.mxu0 0
      %284 = vmatpush1.bf16.msra.mxu0 0
      %285 = vmatprep.subr.bf16.mxu0 0
      %286 = vmatpush1.bf16.msra.mxu0 0
      %287 = vmatprep.mubr.bf16.mxu0 0
      %288 = vmatmul.mubr.bf16.gmra.mrb[0].mxu0 %v244
      %v289 = vpop.f32.mrb[0].mxu0
      %v290 = vadd.f32 %v196, %v289
      %v291 = vpop.f32.mrb[0].mxu0
      %v292 = vpop.f32.mrb[0].mxu0
      %v293 = vadd.f32 %v196, %v292
      %v294 = vpop.f32.mrb[0].mxu0
      %295 = vmatprep.mubr.bf16.mxu0 0
      %296 = vmatmul.mubr.bf16.gmra.mrb[0].mxu0 %v247
      %v297 = vpop.f32.mrb[0].mxu0
      %v298 = vadd.f32 %v196, %v297
      %v299 = vpop.f32.mrb[0].mxu0
      %v300 = vpop.f32.mrb[0].mxu0
      %v301 = vadd.f32 %v196, %v300
      %v302 = vpop.f32.mrb[0].mxu0
      %303 = vmatprep.mubr.bf16.mxu0 0
      %304 = vmatmul.mubr.bf16.gmra.mrb[0].mxu0 %v250
      %v305 = vpop.f32.mrb[0].mxu0
      %v306 = vadd.f32 %v196, %v305
      %v307 = vpop.f32.mrb[0].mxu0
      %v308 = vpop.f32.mrb[0].mxu0
      %v309 = vadd.f32 %v196, %v308
      %v310 = vpop.f32.mrb[0].mxu0
      %311 = vmatprep.mubr.bf16.mxu0 0
      %312 = vmatmul.mubr.bf16.gmra.mrb[0].mxu0 %v253
      %v313 = vpop.f32.mrb[0].mxu0
      %v314 = vadd.f32 %v196, %v313
      %v315 = vpop.f32.mrb[0].mxu0
      %v316 = vpop.f32.mrb[0].mxu0
      %v317 = vadd.f32 %v196, %v316
      %v318 = vpop.f32.mrb[0].mxu0
      %319 = vdwg.mxu0
      %v320 = vmax.f32 %v290, 0.0
      %v321 = vmax.f32 %v293, 0.0
      %v322 = vmax.f32 %v298, 0.0
      %v323 = vmax.f32 %v301, 0.0
      %v324 = vmax.f32 %v306, 0.0
      %v325 = vmax.f32 %v309, 0.0
      %v326 = vmax.f32 %v314, 0.0
      %v327 = vmax.f32 %v317, 0.0
      %v328 = vpack.c.bf16 %v321, %v320
      %v329 = vpack.c.bf16 %v323, %v322
      %v330 = vpack.c.bf16 %v325, %v324
      %v331 = vpack.c.bf16 %v327, %v326
      %v336 = vunpack.c.l.b16 %v328
      %v337 = vunpack.c.h.b16 %v328
      %v338 = vunpack.c.l.b16 %v329
      %v339 = vunpack.c.h.b16 %v329
      %v340 = vunpack.c.l.b16 %v330
      %v341 = vunpack.c.h.b16 %v330
      %v342 = vunpack.c.l.b16 %v331
      %v343 = vunpack.c.h.b16 %v331
      %v344 = vpack.c.b16 %v336, %v336
      %v345 = vpack.c.b16 %v337, %v337
      %v346 = vpack.c.b16 %v338, %v338
      %v347 = vpack.c.b16 %v339, %v339
      %v348 = vpack.c.b16 %v340, %v340
      %v349 = vpack.c.b16 %v341, %v341
      %v350 = vpack.c.b16 %v342, %v342
      %v351 = vpack.c.b16 %v343, %v343
      %vm360 = vcmask 257024
      %361 = vst.msk [vmem:[%s172] sm:$0xf] %vm360, %v344
      %362 = vst.msk [vmem:[%s172 + $0x4] sm:$0xf] %vm360, %v345
      %363 = vst.msk [vmem:[%s172 + $0x8] sm:$0xf] %vm360, %v346
      %364 = vst.msk [vmem:[%s172 + $0xc] sm:$0xf] %vm360, %v347
      %365 = vst.msk [vmem:[%s172 + $0x10] sm:$0xf] %vm360, %v348
      %366 = vst.msk [vmem:[%s172 + $0x14] sm:$0xf] %vm360, %v349
      %367 = vst.msk [vmem:[%s172 + $0x18] sm:$0xf] %vm360, %v350
      %368 = vst.msk [vmem:[%s172 + $0x1c] sm:$0xf] %vm360, %v351
      %s369 = smul.u32 8, %s14
      %p370 = scmp.lt.s32.totalorder %s369, 15
      %s371 = scalar_select %p370, %s369, 15
      %s372 = smul.addr %s371, 4
      %s373 = scalar_lea.vmem %s3, %s372
      // Predicated region
      $region33: #{_forward_impl.15} parent=31 // pred_check
        %p374 = pneg %p100
      $region34: #{_forward_impl.15} parent=31 // pred_check_branch
        %376 = sbr.rel (%p374) target = $region36
      $region35: #{_forward_impl.15} parent=31 // pred_region
        %s377 = smul.u32 8, %s14
      $region36: #{_forward_impl.15} parent=31 // pred_fallthru
        _
    $region32: #{_forward_impl.15} parent=5 // pred_fallthru
      _
    %p378 = scmp.le.s32.totalorder 2, %s9
    // Predicated region
    $region37: #{_forward_impl.15} parent=5 // pred_check
      %p379 = pneg %p378
    $region38: #{_forward_impl.15} parent=5 // pred_check_branch
      %381 = sbr.rel (%p379) target = $region40
    $region39: #{_forward_impl.15} parent=5 // pred_region
      %s382 = ssub.s32 %s9, 2
      // Predicated region
      $region41: #{_forward_impl.15} parent=39 // pred_check
        %p383 = pneg %p106
      $region42: #{_forward_impl.15} parent=39 // pred_check_branch
        %385 = sbr.rel (%p383) target = $region44
      $region43: #{_forward_impl.15} parent=39 // pred_region
        %s386 = smul.u32 8, %s15
        %p387 = scmp.lt.s32.totalorder %s386, 15
        %s388 = scalar_select %p387, %s386, 15
        %s389 = smul.addr %s388, 4
        %s390 = scalar_lea.vmem %s3, %s389
      $region44: #{_forward_impl.15} parent=39 // pred_fallthru
        _
    $region40: #{_forward_impl.15} parent=5 // pred_fallthru
      _
  $region6: #{_forward_impl.15} parent=0 // loop_footer
    %s13 = sadd.s32 1, %s9
  $region7: #{_forward_impl.15} parent=0 // loop_footer_branch
    %8 = sbr.rel target = $region3
  $region8: #{_forward_impl.15} parent=0 // loop_exit
    _

// kernel: _forward_impl.16
$region0: #{_forward_impl.16}
  #allocation0 [shape = 'u32[]', space=smem, size = 0x4, offset = 0x4, fixed_abs, tag = 'smem constant byte address 0x4 - core index']
  #allocation1 [shape = 'u32[144,128]{1,0:T(1,128)}', space=vmem, size = 0x12000, scoped, tag = 'internal scratch']
  %s0 = inlined_call_operand.vmem [shape: bf16[32,128], index: 0, kind: input, shape index: {}]
  %s1 = inlined_call_operand.vmem [shape: bf16[128,64], index: 1, kind: input, shape index: {}]
  %s2 = inlined_call_operand.vmem [shape: f32[1,64], index: 2, kind: input, shape index: {}]
  %s3 = inlined_call_operand.vmem [shape: bf16[32,64], index: 3, kind: output, shape index: {}]
  %s4 = sld [smem:[#allocation0]]
  $region22: #{_forward_impl.16} parent=0
    _
  %s6 = ssub.s32 1, %s4
  %s7 = scalar_select 0, %s6, %s4
  // Predicated region
  $region2: #{_forward_impl.16} parent=0 // pred_check
    _
  $region3: #{_forward_impl.16} parent=0 // pred_check_branch
    %9 = sbr.rel (0) target = $region5
  $region4: #{_forward_impl.16} parent=0 // pred_region
    _
  $region5: #{_forward_impl.16} parent=0 // pred_fallthru
    _
  // Predicated region
  $region6: #{_forward_impl.16} parent=0 // pred_check
    _
  $region7: #{_forward_impl.16} parent=0 // pred_check_branch
    %11 = sbr.rel (0) target = $region9
  $region8: #{_forward_impl.16} parent=0 // pred_region
    _
  $region9: #{_forward_impl.16} parent=0 // pred_fallthru
    _
  // Predicated region
  $region10: #{_forward_impl.16} parent=0 // pred_check
    _
  $region11: #{_forward_impl.16} parent=0 // pred_check_branch
    %13 = sbr.rel (0) target = $region13
  $region12: #{_forward_impl.16} parent=0 // pred_region
    _
  $region13: #{_forward_impl.16} parent=0 // pred_fallthru
    _
  %v15 = vld [vmem:[%s0] sm:$0xf]
  %v16 = vld [vmem:[%s0 + $0x4] sm:$0xf]
  %v17 = vld [vmem:[%s0 + $0x8] sm:$0xf]
  %v18 = vld [vmem:[%s0 + $0xc] sm:$0xf]
  %v19 = vld [vmem:[%s1] sm:$0xf]
  %v20 = vld [vmem:[%s1 + $0x4] sm:$0xf]
  %v21 = vld [vmem:[%s1 + $0x8] sm:$0xf]
  %v22 = vld [vmem:[%s1 + $0xc] sm:$0xf]
  %v23 = vld [vmem:[%s1 + $0x10] sm:$0xf]
  %v24 = vld [vmem:[%s1 + $0x14] sm:$0xf]
  %v25 = vld [vmem:[%s1 + $0x18] sm:$0xf]
  %v26 = vld [vmem:[%s1 + $0x1c] sm:$0xf]
  %v27 = vld [vmem:[%s1 + $0x20] sm:$0xf]
  %v28 = vld [vmem:[%s1 + $0x24] sm:$0xf]
  %v29 = vld [vmem:[%s1 + $0x28] sm:$0xf]
  %v30 = vld [vmem:[%s1 + $0x2c] sm:$0xf]
  %v31 = vld [vmem:[%s1 + $0x30] sm:$0xf]
  %v32 = vld [vmem:[%s1 + $0x34] sm:$0xf]
  %v33 = vld [vmem:[%s1 + $0x38] sm:$0xf]
  %v34 = vld [vmem:[%s1 + $0x3c] sm:$0xf]
  %v35 = vld [vmem:[%s2] sm:$0x1]
  %v37 = vlaneseq
  %v38 = vshrl.u32 %v37, 7
  %v39 = vsub.s32 0, %v38
  %v40 = vrot.slane %v35, %v39
  %v46 = vunpack.c.l.b16 %v15
  %v47 = vunpack.c.l.b16 %v16
  %v48 = vunpack.c.l.b16 %v17
  %v49 = vunpack.c.l.b16 %v18
  %v50 = vpack.c.b16 %v47, %v46
  %v51 = vpack.c.b16 %v49, %v48
  %v70 = vunpack.c.l.b16 %v19
  %v71 = vunpack.c.l.b16 %v20
  %v72 = vunpack.c.l.b16 %v21
  %v73 = vunpack.c.l.b16 %v22
  %v74 = vunpack.c.l.b16 %v23
  %v75 = vunpack.c.l.b16 %v24
  %v76 = vunpack.c.l.b16 %v25
  %v77 = vunpack.c.l.b16 %v26
  %v78 = vunpack.c.l.b16 %v27
  %v79 = vunpack.c.l.b16 %v28
  %v80 = vunpack.c.l.b16 %v29
  %v81 = vunpack.c.l.b16 %v30
  %v82 = vunpack.c.l.b16 %v31
  %v83 = vunpack.c.l.b16 %v32
  %v84 = vunpack.c.l.b16 %v33
  %v85 = vunpack.c.l.b16 %v34
  %v86 = vpack.c.b16 %v71, %v70
  %v87 = vpack.c.b16 %v73, %v72
  %v88 = vpack.c.b16 %v75, %v74
  %v89 = vpack.c.b16 %v77, %v76
  %v90 = vpack.c.b16 %v79, %v78
  %v91 = vpack.c.b16 %v81, %v80
  %v92 = vpack.c.b16 %v83, %v82
  %v93 = vpack.c.b16 %v85, %v84
  %102 = vmatprep.subr.bf16.mxu0 0
  %103 = vmatpush1.bf16.msra.mxu0 %v86
  %104 = vmatprep.subr.bf16.mxu0 0
  %105 = vmatpush1.bf16.msra.mxu0 %v87
  %106 = vmatprep.subr.bf16.mxu0 0
  %107 = vmatpush1.bf16.msra.mxu0 %v88
  %108 = vmatprep.subr.bf16.mxu0 0
  %109 = vmatpush1.bf16.msra.mxu0 %v89
  %110 = vmatprep.subr.bf16.mxu0 0
  %111 = vmatpush1.bf16.msra.mxu0 %v90
  %112 = vmatprep.subr.bf16.mxu0 0
  %113 = vmatpush1.bf16.msra.mxu0 %v91
  %114 = vmatprep.subr.bf16.mxu0 0
  %115 = vmatpush1.bf16.msra.mxu0 %v92
  %116 = vmatprep.subr.bf16.mxu0 0
  %117 = vmatpush1.bf16.msra.mxu0 %v93
  %118 = vmatprep.subr.bf16.mxu0 0
  %119 = vmatpush1.bf16.msra.mxu0 0
  %120 = vmatprep.subr.bf16.mxu0 0
  %121 = vmatpush1.bf16.msra.mxu0 0
  %122 = vmatprep.subr.bf16.mxu0 0
  %123 = vmatpush1.bf16.msra.mxu0 0
  %124 = vmatprep.subr.bf16.mxu0 0
  %125 = vmatpush1.bf16.msra.mxu0 0
  %126 = vmatprep.subr.bf16.mxu0 0
  %127 = vmatpush1.bf16.msra.mxu0 0
  %128 = vmatprep.subr.bf16.mxu0 0
  %129 = vmatpush1.bf16.msra.mxu0 0
  %130 = vmatprep.subr.bf16.mxu0 0
  %131 = vmatpush1.bf16.msra.mxu0 0
  %132 = vmatprep.subr.bf16.mxu0 0
  %133 = vmatpush1.bf16.msra.mxu0 0
  %134 = vmatprep.mubr.bf16.mxu0 0
  %135 = vmatmul.mubr.bf16.gmra.mrb[0].mxu0 %v50
  %v136 = vpop.f32.mrb[0].mxu0
  %v137 = vadd.f32 %v40, %v136
  %v138 = vpop.f32.mrb[0].mxu0
  %v139 = vpop.f32.mrb[0].mxu0
  %v140 = vadd.f32 %v40, %v139
  %v141 = vpop.f32.mrb[0].mxu0
  %142 = vmatprep.mubr.bf16.mxu0 0
  %143 = vmatmul.mubr.bf16.gmra.mrb[0].mxu0 %v51
  %v144 = vpop.f32.mrb[0].mxu0
  %v145 = vadd.f32 %v40, %v144
  %v146 = vpop.f32.mrb[0].mxu0
  %v147 = vpop.f32.mrb[0].mxu0
  %v148 = vadd.f32 %v40, %v147
  %v149 = vpop.f32.mrb[0].mxu0
  %150 = vdwg.mxu0
  %v151 = vmax.f32 %v137, 0.0
  %v152 = vmax.f32 %v140, 0.0
  %v153 = vmax.f32 %v145, 0.0
  %v154 = vmax.f32 %v148, 0.0
  %v155 = vpack.c.bf16 %v152, %v151
  %v156 = vpack.c.bf16 %v154, %v153
  %v159 = vunpack.c.l.b16 %v155
  %v160 = vunpack.c.h.b16 %v155
  %v161 = vunpack.c.l.b16 %v156
  %v162 = vunpack.c.h.b16 %v156
  %v163 = vpack.c.b16 %v159, %v159
  %v164 = vpack.c.b16 %v160, %v160
  %v165 = vpack.c.b16 %v161, %v161
  %v166 = vpack.c.b16 %v162, %v162
  %vm171 = vcmask 519168
  %172 = vst.msk [vmem:[%s3] sm:$0xf] %vm171, %v163
  %173 = vst.msk [vmem:[%s3 + $0x4] sm:$0xf] %vm171, %v164
  %174 = vst.msk [vmem:[%s3 + $0x8] sm:$0xf] %vm171, %v165
  %175 = vst.msk [vmem:[%s3 + $0xc] sm:$0xf] %vm171, %v166
  // Predicated region
  $region14: #{_forward_impl.16} parent=0 // pred_check
    _
  $region15: #{_forward_impl.16} parent=0 // pred_check_branch
    %177 = sbr.rel (0) target = $region17
  $region16: #{_forward_impl.16} parent=0 // pred_region
    _
  $region17: #{_forward_impl.16} parent=0 // pred_fallthru
    _
  // Predicated region
  $region18: #{_forward_impl.16} parent=0 // pred_check
    _
  $region19: #{_forward_impl.16} parent=0 // pred_check_branch
    %179 = sbr.rel (0) target = $region21
  $region20: #{_forward_impl.16} parent=0 // pred_region
    _
  $region21: #{_forward_impl.16} parent=0 // pred_fallthru
    _

// kernel: _forward_impl.18
$region0: #{_forward_impl.18}
  #allocation0 [shape = 'u32[]', space=smem, size = 0x4, offset = 0x4, fixed_abs, tag = 'smem constant byte address 0x4 - core index']
  #allocation1 [shape = 'u32[144,128]{1,0:T(1,128)}', space=vmem, size = 0x12000, scoped, tag = 'internal scratch']
  %s0 = inlined_call_operand.vmem [shape: bf16[8,128], index: 0, kind: input, shape index: {}]
  %s1 = inlined_call_operand.vmem [shape: bf16[128,32], index: 1, kind: input, shape index: {}]
  %s2 = inlined_call_operand.vmem [shape: f32[1,32], index: 2, kind: input, shape index: {}]
  %s3 = inlined_call_operand.vmem [shape: f32[8,32], index: 3, kind: output, shape index: {}]
  %s4 = sld [smem:[#allocation0]]
  $region22: #{_forward_impl.18} parent=0
    _
  %s6 = ssub.s32 1, %s4
  %s7 = scalar_select 0, %s6, %s4
  // Predicated region
  $region2: #{_forward_impl.18} parent=0 // pred_check
    _
  $region3: #{_forward_impl.18} parent=0 // pred_check_branch
    %9 = sbr.rel (0) target = $region5
  $region4: #{_forward_impl.18} parent=0 // pred_region
    _
  $region5: #{_forward_impl.18} parent=0 // pred_fallthru
    _
  // Predicated region
  $region6: #{_forward_impl.18} parent=0 // pred_check
    _
  $region7: #{_forward_impl.18} parent=0 // pred_check_branch
    %11 = sbr.rel (0) target = $region9
  $region8: #{_forward_impl.18} parent=0 // pred_region
    _
  $region9: #{_forward_impl.18} parent=0 // pred_fallthru
    _
  // Predicated region
  $region10: #{_forward_impl.18} parent=0 // pred_check
    _
  $region11: #{_forward_impl.18} parent=0 // pred_check_branch
    %13 = sbr.rel (0) target = $region13
  $region12: #{_forward_impl.18} parent=0 // pred_region
    _
  $region13: #{_forward_impl.18} parent=0 // pred_fallthru
    _
  %v15 = vld [vmem:[%s0] sm:$0xf]
  %v16 = vld [vmem:[%s1] sm:$0xf]
  %v17 = vld [vmem:[%s1 + $0x4] sm:$0xf]
  %v18 = vld [vmem:[%s1 + $0x8] sm:$0xf]
  %v19 = vld [vmem:[%s1 + $0xc] sm:$0xf]
  %v20 = vld [vmem:[%s1 + $0x10] sm:$0xf]
  %v21 = vld [vmem:[%s1 + $0x14] sm:$0xf]
  %v22 = vld [vmem:[%s1 + $0x18] sm:$0xf]
  %v23 = vld [vmem:[%s1 + $0x1c] sm:$0xf]
  %v24 = vld [vmem:[%s1 + $0x20] sm:$0xf]
  %v25 = vld [vmem:[%s1 + $0x24] sm:$0xf]
  %v26 = vld [vmem:[%s1 + $0x28] sm:$0xf]
  %v27 = vld [vmem:[%s1 + $0x2c] sm:$0xf]
  %v28 = vld [vmem:[%s1 + $0x30] sm:$0xf]
  %v29 = vld [vmem:[%s1 + $0x34] sm:$0xf]
  %v30 = vld [vmem:[%s1 + $0x38] sm:$0xf]
  %v31 = vld [vmem:[%s1 + $0x3c] sm:$0xf]
  %v32 = vld [vmem:[%s2] sm:$0x1]
  %v34 = vlaneseq
  %v35 = vshrl.u32 %v34, 7
  %v36 = vsub.s32 0, %v35
  %v37 = vrot.slane %v32, %v36
  %v55 = vunpack.c.l.b16 %v16
  %v56 = vunpack.c.l.b16 %v17
  %v57 = vunpack.c.l.b16 %v18
  %v58 = vunpack.c.l.b16 %v19
  %v59 = vunpack.c.l.b16 %v20
  %v60 = vunpack.c.l.b16 %v21
  %v61 = vunpack.c.l.b16 %v22
  %v62 = vunpack.c.l.b16 %v23
  %v63 = vunpack.c.l.b16 %v24
  %v64 = vunpack.c.l.b16 %v25
  %v65 = vunpack.c.l.b16 %v26
  %v66 = vunpack.c.l.b16 %v27
  %v67 = vunpack.c.l.b16 %v28
  %v68 = vunpack.c.l.b16 %v29
  %v69 = vunpack.c.l.b16 %v30
  %v70 = vunpack.c.l.b16 %v31
  %v71 = vpack.c.b16 %v56, %v55
  %v72 = vpack.c.b16 %v58, %v57
  %v73 = vpack.c.b16 %v60, %v59
  %v74 = vpack.c.b16 %v62, %v61
  %v75 = vpack.c.b16 %v64, %v63
  %v76 = vpack.c.b16 %v66, %v65
  %v77 = vpack.c.b16 %v68, %v67
  %v78 = vpack.c.b16 %v70, %v69
  %87 = vmatprep.subr.bf16.mxu0 0
  %88 = vmatpush1.bf16.msra.mxu0 %v71
  %89 = vmatprep.subr.bf16.mxu0 0
  %90 = vmatpush1.bf16.msra.mxu0 %v72
  %91 = vmatprep.subr.bf16.mxu0 0
  %92 = vmatpush1.bf16.msra.mxu0 %v73
  %93 = vmatprep.subr.bf16.mxu0 0
  %94 = vmatpush1.bf16.msra.mxu0 %v74
  %95 = vmatprep.subr.bf16.mxu0 0
  %96 = vmatpush1.bf16.msra.mxu0 %v75
  %97 = vmatprep.subr.bf16.mxu0 0
  %98 = vmatpush1.bf16.msra.mxu0 %v76
  %99 = vmatprep.subr.bf16.mxu0 0
  %100 = vmatpush1.bf16.msra.mxu0 %v77
  %101 = vmatprep.subr.bf16.mxu0 0
  %102 = vmatpush1.bf16.msra.mxu0 %v78
  %103 = vmatprep.subr.bf16.mxu0 0
  %104 = vmatpush1.bf16.msra.mxu0 0
  %105 = vmatprep.subr.bf16.mxu0 0
  %106 = vmatpush1.bf16.msra.mxu0 0
  %107 = vmatprep.subr.bf16.mxu0 0
  %108 = vmatpush1.bf16.msra.mxu0 0
  %109 = vmatprep.subr.bf16.mxu0 0
  %110 = vmatpush1.bf16.msra.mxu0 0
  %111 = vmatprep.subr.bf16.mxu0 0
  %112 = vmatpush1.bf16.msra.mxu0 0
  %113 = vmatprep.subr.bf16.mxu0 0
  %114 = vmatpush1.bf16.msra.mxu0 0
  %115 = vmatprep.subr.bf16.mxu0 0
  %116 = vmatpush1.bf16.msra.mxu0 0
  %117 = vmatprep.subr.bf16.mxu0 0
  %118 = vmatpush1.bf16.msra.mxu0 0
  %119 = vmatprep.mubr.bf16.mxu0 0
  %120 = vmatmul.mubr.bf16.gmra.mrb[0].mxu0 %v15
  %v121 = vpop.f32.mrb[0].mxu0
  %v122 = vadd.f32 %v37, %v121
  %v123 = vpop.f32.mrb[0].mxu0
  %v124 = vpop.f32.mrb[0].mxu0
  %v125 = vpop.f32.mrb[0].mxu0
  %126 = vdwg.mxu0
  %vm127 = vcmask 261120
  %128 = vst.msk [vmem:[%s3] sm:$0xff] %vm127, %v122
  // Predicated region
  $region14: #{_forward_impl.18} parent=0 // pred_check
    _
  $region15: #{_forward_impl.18} parent=0 // pred_check_branch
    %130 = sbr.rel (0) target = $region17
  $region16: #{_forward_impl.18} parent=0 // pred_region
    _
  $region17: #{_forward_impl.18} parent=0 // pred_fallthru
    _
  // Predicated region
  $region18: #{_forward_impl.18} parent=0 // pred_check
    _
  $region19: #{_forward_impl.18} parent=0 // pred_check_branch
    %132 = sbr.rel (0) target = $region21
  $region20: #{_forward_impl.18} parent=0 // pred_region
    _
  $region21: #{_forward_impl.18} parent=0 // pred_fallthru
    _

// kernel: _forward_impl.17
$region0: #{_forward_impl.17}
  #allocation0 [shape = 'u32[]', space=smem, size = 0x4, offset = 0x4, fixed_abs, tag = 'smem constant byte address 0x4 - core index']
  #allocation1 [shape = 'u32[144,128]{1,0:T(1,128)}', space=vmem, size = 0x12000, scoped, tag = 'internal scratch']
  %s0 = inlined_call_operand.vmem [shape: bf16[8,256], index: 0, kind: input, shape index: {}]
  %s1 = inlined_call_operand.vmem [shape: bf16[256,128], index: 1, kind: input, shape index: {}]
  %s2 = inlined_call_operand.vmem [shape: f32[1,128], index: 2, kind: input, shape index: {}]
  %s3 = inlined_call_operand.vmem [shape: bf16[8,128], index: 3, kind: output, shape index: {}]
  %s4 = sld [smem:[#allocation0]]
  $region22: #{_forward_impl.17} parent=0
    _
  %s6 = ssub.s32 1, %s4
  %s7 = scalar_select 0, %s6, %s4
  // Predicated region
  $region2: #{_forward_impl.17} parent=0 // pred_check
    _
  $region3: #{_forward_impl.17} parent=0 // pred_check_branch
    %9 = sbr.rel (0) target = $region5
  $region4: #{_forward_impl.17} parent=0 // pred_region
    _
  $region5: #{_forward_impl.17} parent=0 // pred_fallthru
    _
  // Predicated region
  $region6: #{_forward_impl.17} parent=0 // pred_check
    _
  $region7: #{_forward_impl.17} parent=0 // pred_check_branch
    %11 = sbr.rel (0) target = $region9
  $region8: #{_forward_impl.17} parent=0 // pred_region
    _
  $region9: #{_forward_impl.17} parent=0 // pred_fallthru
    _
  // Predicated region
  $region10: #{_forward_impl.17} parent=0 // pred_check
    _
  $region11: #{_forward_impl.17} parent=0 // pred_check_branch
    %13 = sbr.rel (0) target = $region13
  $region12: #{_forward_impl.17} parent=0 // pred_region
    _
  $region13: #{_forward_impl.17} parent=0 // pred_fallthru
    _
  %v15 = vld [vmem:[%s0] sm:$0xff]
  %v16 = vld [vmem:[%s1] sm:$0xf]
  %v17 = vld [vmem:[%s1 + $0x4] sm:$0xf]
  %v18 = vld [vmem:[%s1 + $0x8] sm:$0xf]
  %v19 = vld [vmem:[%s1 + $0xc] sm:$0xf]
  %v20 = vld [vmem:[%s1 + $0x10] sm:$0xf]
  %v21 = vld [vmem:[%s1 + $0x14] sm:$0xf]
  %v22 = vld [vmem:[%s1 + $0x18] sm:$0xf]
  %v23 = vld [vmem:[%s1 + $0x1c] sm:$0xf]
  %v24 = vld [vmem:[%s1 + $0x20] sm:$0xf]
  %v25 = vld [vmem:[%s1 + $0x24] sm:$0xf]
  %v26 = vld [vmem:[%s1 + $0x28] sm:$0xf]
  %v27 = vld [vmem:[%s1 + $0x2c] sm:$0xf]
  %v28 = vld [vmem:[%s1 + $0x30] sm:$0xf]
  %v29 = vld [vmem:[%s1 + $0x34] sm:$0xf]
  %v30 = vld [vmem:[%s1 + $0x38] sm:$0xf]
  %v31 = vld [vmem:[%s1 + $0x3c] sm:$0xf]
  %v32 = vld [vmem:[%s1 + $0x40] sm:$0xf]
  %v33 = vld [vmem:[%s1 + $0x44] sm:$0xf]
  %v34 = vld [vmem:[%s1 + $0x48] sm:$0xf]
  %v35 = vld [vmem:[%s1 + $0x4c] sm:$0xf]
  %v36 = vld [vmem:[%s1 + $0x50] sm:$0xf]
  %v37 = vld [vmem:[%s1 + $0x54] sm:$0xf]
  %v38 = vld [vmem:[%s1 + $0x58] sm:$0xf]
  %v39 = vld [vmem:[%s1 + $0x5c] sm:$0xf]
  %v40 = vld [vmem:[%s1 + $0x60] sm:$0xf]
  %v41 = vld [vmem:[%s1 + $0x64] sm:$0xf]
  %v42 = vld [vmem:[%s1 + $0x68] sm:$0xf]
  %v43 = vld [vmem:[%s1 + $0x6c] sm:$0xf]
  %v44 = vld [vmem:[%s1 + $0x70] sm:$0xf]
  %v45 = vld [vmem:[%s1 + $0x74] sm:$0xf]
  %v46 = vld [vmem:[%s1 + $0x78] sm:$0xf]
  %v47 = vld [vmem:[%s1 + $0x7c] sm:$0xf]
  %v48 = vld [vmem:[%s2] sm:$0x1]
  %v50 = vlaneseq
  %v51 = vshrl.u32 %v50, 7
  %v52 = vsub.s32 0, %v51
  %v53 = vrot.slane %v48, %v52
  %v56 = vunpack.c.l.b16 %v15
  %v57 = vunpack.c.h.b16 %v15
  %v58 = vpack.c.b16 %v56, %v56
  %v59 = vpack.c.b16 %v57, %v57
  %v94 = vunpack.c.l.b16 %v16
  %v95 = vunpack.c.l.b16 %v17
  %v96 = vunpack.c.l.b16 %v18
  %v97 = vunpack.c.l.b16 %v19
  %v98 = vunpack.c.l.b16 %v20
  %v99 = vunpack.c.l.b16 %v21
  %v100 = vunpack.c.l.b16 %v22
  %v101 = vunpack.c.l.b16 %v23
  %v102 = vunpack.c.l.b16 %v24
  %v103 = vunpack.c.l.b16 %v25
  %v104 = vunpack.c.l.b16 %v26
  %v105 = vunpack.c.l.b16 %v27
  %v106 = vunpack.c.l.b16 %v28
  %v107 = vunpack.c.l.b16 %v29
  %v108 = vunpack.c.l.b16 %v30
  %v109 = vunpack.c.l.b16 %v31
  %v110 = vunpack.c.l.b16 %v32
  %v111 = vunpack.c.l.b16 %v33
  %v112 = vunpack.c.l.b16 %v34
  %v113 = vunpack.c.l.b16 %v35
  %v114 = vunpack.c.l.b16 %v36
  %v115 = vunpack.c.l.b16 %v37
  %v116 = vunpack.c.l.b16 %v38
  %v117 = vunpack.c.l.b16 %v39
  %v118 = vunpack.c.l.b16 %v40
  %v119 = vunpack.c.l.b16 %v41
  %v120 = vunpack.c.l.b16 %v42
  %v121 = vunpack.c.l.b16 %v43
  %v122 = vunpack.c.l.b16 %v44
  %v123 = vunpack.c.l.b16 %v45
  %v124 = vunpack.c.l.b16 %v46
  %v125 = vunpack.c.l.b16 %v47
  %v126 = vpack.c.b16 %v95, %v94
  %v127 = vpack.c.b16 %v97, %v96
  %v128 = vpack.c.b16 %v99, %v98
  %v129 = vpack.c.b16 %v101, %v100
  %v130 = vpack.c.b16 %v103, %v102
  %v131 = vpack.c.b16 %v105, %v104
  %v132 = vpack.c.b16 %v107, %v106
  %v133 = vpack.c.b16 %v109, %v108
  %v134 = vpack.c.b16 %v111, %v110
  %v135 = vpack.c.b16 %v113, %v112
  %v136 = vpack.c.b16 %v115, %v114
  %v137 = vpack.c.b16 %v117, %v116
  %v138 = vpack.c.b16 %v119, %v118
  %v139 = vpack.c.b16 %v121, %v120
  %v140 = vpack.c.b16 %v123, %v122
  %v141 = vpack.c.b16 %v125, %v124
  %158 = vmatprep.subr.bf16.mxu0 0
  %159 = vmatpush1.bf16.msra.mxu0 %v126
  %160 = vmatprep.subr.bf16.mxu0 0
  %161 = vmatpush1.bf16.msra.mxu0 %v127
  %162 = vmatprep.subr.bf16.mxu0 0
  %163 = vmatpush1.bf16.msra.mxu0 %v128
  %164 = vmatprep.subr.bf16.mxu0 0
  %165 = vmatpush1.bf16.msra.mxu0 %v129
  %166 = vmatprep.subr.bf16.mxu0 0
  %167 = vmatpush1.bf16.msra.mxu0 %v130
  %168 = vmatprep.subr.bf16.mxu0 0
  %169 = vmatpush1.bf16.msra.mxu0 %v131
  %170 = vmatprep.subr.bf16.mxu0 0
  %171 = vmatpush1.bf16.msra.mxu0 %v132
  %172 = vmatprep.subr.bf16.mxu0 0
  %173 = vmatpush1.bf16.msra.mxu0 %v133
  %174 = vmatprep.subr.bf16.mxu0 0
  %175 = vmatpush1.bf16.msra.mxu0 %v134
  %176 = vmatprep.subr.bf16.mxu0 0
  %177 = vmatpush1.bf16.msra.mxu0 %v135
  %178 = vmatprep.subr.bf16.mxu0 0
  %179 = vmatpush1.bf16.msra.mxu0 %v136
  %180 = vmatprep.subr.bf16.mxu0 0
  %181 = vmatpush1.bf16.msra.mxu0 %v137
  %182 = vmatprep.subr.bf16.mxu0 0
  %183 = vmatpush1.bf16.msra.mxu0 %v138
  %184 = vmatprep.subr.bf16.mxu0 0
  %185 = vmatpush1.bf16.msra.mxu0 %v139
  %186 = vmatprep.subr.bf16.mxu0 0
  %187 = vmatpush1.bf16.msra.mxu0 %v140
  %188 = vmatprep.subr.bf16.mxu0 0
  %189 = vmatpush1.bf16.msra.mxu0 %v141
  %190 = vmatprep.mubr.bf16.mxu0 %v59
  %191 = vmatmul.mubr.bf16.gmra.mrb[0].mxu0 %v58
  %v192 = vpop.f32.mrb[0].mxu0
  %v193 = vadd.f32 %v53, %v192
  %v194 = vpop.f32.mrb[0].mxu0
  %v195 = vpop.f32.mrb[0].mxu0
  %v196 = vpop.f32.mrb[0].mxu0
  %197 = vdwg.mxu0
  %v198 = vmax.f32 %v193, 0.0
  %v199 = vpack.c.bf16 %v198, %v198
  %200 = vst [vmem:[%s3] sm:$0xf] %v199
  // Predicated region
  $region14: #{_forward_impl.17} parent=0 // pred_check
    _
  $region15: #{_forward_impl.17} parent=0 // pred_check_branch
    %202 = sbr.rel (0) target = $region17
  $region16: #{_forward_impl.17} parent=0 // pred_region
    _
  $region17: #{_forward_impl.17} parent=0 // pred_fallthru
    _
  // Predicated region
  $region18: #{_forward_impl.17} parent=0 // pred_check
    _
  $region19: #{_forward_impl.17} parent=0 // pred_check_branch
    %204 = sbr.rel (0) target = $region21
  $region20: #{_forward_impl.17} parent=0 // pred_region
    _
  $region21: #{_forward_impl.17} parent=0 // pred_fallthru
    _

// kernel: _forward_impl.20
$region0: #{_forward_impl.20}
  #allocation0 [shape = 'u32[]', space=smem, size = 0x4, offset = 0x4, fixed_abs, tag = 'smem constant byte address 0x4 - core index']
  #allocation1 [shape = 'u32[144,128]{1,0:T(1,128)}', space=vmem, size = 0x12000, scoped, tag = 'internal scratch']
  %s0 = inlined_call_operand.vmem [shape: bf16[32,64], index: 0, kind: input, shape index: {}]
  %s1 = inlined_call_operand.vmem [shape: bf16[64,32], index: 1, kind: input, shape index: {}]
  %s2 = inlined_call_operand.vmem [shape: f32[1,32], index: 2, kind: input, shape index: {}]
  %s3 = inlined_call_operand.vmem [shape: f32[32,32], index: 3, kind: input, shape index: {}]
  %s4 = inlined_call_operand.vmem [shape: f32[32,32], index: 4, kind: output, shape index: {}]
  %s5 = sld [smem:[#allocation0]]
  $region26: #{_forward_impl.20} parent=0
    _
  %s7 = ssub.s32 1, %s5
  %s8 = scalar_select 0, %s7, %s5
  // Predicated region
  $region2: #{_forward_impl.20} parent=0 // pred_check
    _
  $region3: #{_forward_impl.20} parent=0 // pred_check_branch
    %10 = sbr.rel (0) target = $region5
  $region4: #{_forward_impl.20} parent=0 // pred_region
    _
  $region5: #{_forward_impl.20} parent=0 // pred_fallthru
    _
  // Predicated region
  $region6: #{_forward_impl.20} parent=0 // pred_check
    _
  $region7: #{_forward_impl.20} parent=0 // pred_check_branch
    %12 = sbr.rel (0) target = $region9
  $region8: #{_forward_impl.20} parent=0 // pred_region
    _
  $region9: #{_forward_impl.20} parent=0 // pred_fallthru
    _
  // Predicated region
  $region10: #{_forward_impl.20} parent=0 // pred_check
    _
  $region11: #{_forward_impl.20} parent=0 // pred_check_branch
    %14 = sbr.rel (0) target = $region13
  $region12: #{_forward_impl.20} parent=0 // pred_region
    _
  $region13: #{_forward_impl.20} parent=0 // pred_fallthru
    _
  // Predicated region
  $region14: #{_forward_impl.20} parent=0 // pred_check
    _
  $region15: #{_forward_impl.20} parent=0 // pred_check_branch
    %16 = sbr.rel (0) target = $region17
  $region16: #{_forward_impl.20} parent=0 // pred_region
    _
  $region17: #{_forward_impl.20} parent=0 // pred_fallthru
    _
  %v18 = vld [vmem:[%s0] sm:$0xf]
  %v19 = vld [vmem:[%s0 + $0x4] sm:$0xf]
  %v20 = vld [vmem:[%s0 + $0x8] sm:$0xf]
  %v21 = vld [vmem:[%s0 + $0xc] sm:$0xf]
  %v22 = vld [vmem:[%s1] sm:$0xf]
  %v23 = vld [vmem:[%s1 + $0x4] sm:$0xf]
  %v24 = vld [vmem:[%s1 + $0x8] sm:$0xf]
  %v25 = vld [vmem:[%s1 + $0xc] sm:$0xf]
  %v26 = vld [vmem:[%s1 + $0x10] sm:$0xf]
  %v27 = vld [vmem:[%s1 + $0x14] sm:$0xf]
  %v28 = vld [vmem:[%s1 + $0x18] sm:$0xf]
  %v29 = vld [vmem:[%s1 + $0x1c] sm:$0xf]
  %v30 = vld [vmem:[%s2] sm:$0x1]
  %v32 = vlaneseq
  %v33 = vshrl.u32 %v32, 7
  %v34 = vsub.s32 0, %v33
  %v35 = vrot.slane %v30, %v34
  %v41 = vunpack.c.l.b16 %v18
  %v42 = vunpack.c.l.b16 %v19
  %v43 = vunpack.c.l.b16 %v20
  %v44 = vunpack.c.l.b16 %v21
  %v45 = vpack.c.b16 %v42, %v41
  %v46 = vpack.c.b16 %v44, %v43
  %v55 = vunpack.c.l.b16 %v22
  %v56 = vunpack.c.l.b16 %v23
  %v57 = vunpack.c.l.b16 %v24
  %v58 = vunpack.c.l.b16 %v25
  %v59 = vunpack.c.l.b16 %v26
  %v60 = vunpack.c.l.b16 %v27
  %v61 = vunpack.c.l.b16 %v28
  %v62 = vunpack.c.l.b16 %v29
  %v63 = vpack.c.b16 %v56, %v55
  %v64 = vpack.c.b16 %v58, %v57
  %v65 = vpack.c.b16 %v60, %v59
  %v66 = vpack.c.b16 %v62, %v61
  %vm71 = vcmask 523264
  %v73 = vsel %vm71, %v45, 0
  %v76 = vsel %vm71, %v46, 0
  %78 = vmatprep.subr.bf16.mxu0 0
  %79 = vmatpush1.bf16.msra.mxu0 %v63
  %80 = vmatprep.subr.bf16.mxu0 0
  %81 = vmatpush1.bf16.msra.mxu0 %v64
  %82 = vmatprep.subr.bf16.mxu0 0
  %83 = vmatpush1.bf16.msra.mxu0 %v65
  %84 = vmatprep.subr.bf16.mxu0 0
  %85 = vmatpush1.bf16.msra.mxu0 %v66
  %86 = vmatprep.subr.bf16.mxu0 0
  %87 = vmatpush1.bf16.msra.mxu0 0
  %88 = vmatprep.subr.bf16.mxu0 0
  %89 = vmatpush1.bf16.msra.mxu0 0
  %90 = vmatprep.subr.bf16.mxu0 0
  %91 = vmatpush1.bf16.msra.mxu0 0
  %92 = vmatprep.subr.bf16.mxu0 0
  %93 = vmatpush1.bf16.msra.mxu0 0
  %94 = vmatprep.subr.bf16.mxu0 0
  %95 = vmatpush1.bf16.msra.mxu0 0
  %96 = vmatprep.subr.bf16.mxu0 0
  %97 = vmatpush1.bf16.msra.mxu0 0
  %98 = vmatprep.subr.bf16.mxu0 0
  %99 = vmatpush1.bf16.msra.mxu0 0
  %100 = vmatprep.subr.bf16.mxu0 0
  %101 = vmatpush1.bf16.msra.mxu0 0
  %102 = vmatprep.subr.bf16.mxu0 0
  %103 = vmatpush1.bf16.msra.mxu0 0
  %104 = vmatprep.subr.bf16.mxu0 0
  %105 = vmatpush1.bf16.msra.mxu0 0
  %106 = vmatprep.subr.bf16.mxu0 0
  %107 = vmatpush1.bf16.msra.mxu0 0
  %108 = vmatprep.subr.bf16.mxu0 0
  %109 = vmatpush1.bf16.msra.mxu0 0
  %110 = vmatprep.mubr.bf16.mxu0 0
  %111 = vmatmul.mubr.bf16.gmra.mrb[0].mxu0 %v73
  %v112 = vpop.f32.mrb[0].mxu0
  %v113 = vadd.f32 %v35, %v112
  %v114 = vpop.f32.mrb[0].mxu0
  %v115 = vpop.f32.mrb[0].mxu0
  %v116 = vadd.f32 %v35, %v115
  %v117 = vpop.f32.mrb[0].mxu0
  %118 = vmatprep.mubr.bf16.mxu0 0
  %119 = vmatmul.mubr.bf16.gmra.mrb[0].mxu0 %v76
  %v120 = vpop.f32.mrb[0].mxu0
  %v121 = vadd.f32 %v35, %v120
  %v122 = vpop.f32.mrb[0].mxu0
  %v123 = vpop.f32.mrb[0].mxu0
  %v124 = vadd.f32 %v35, %v123
  %v125 = vpop.f32.mrb[0].mxu0
  %126 = vdwg.mxu0
  %v127 = vld [vmem:[%s3] sm:$0xff]
  %v128 = vld [vmem:[%s3 + $0x8] sm:$0xff]
  %v129 = vld [vmem:[%s3 + $0x10] sm:$0xff]
  %v130 = vld [vmem:[%s3 + $0x18] sm:$0xff]
  %v131 = vadd.f32 %v113, %v127
  %v132 = vadd.f32 %v116, %v128
  %v133 = vadd.f32 %v121, %v129
  %v134 = vadd.f32 %v124, %v130
  %vm135 = vcmask 261120
  %136 = vst.msk [vmem:[%s4] sm:$0xff] %vm135, %v131
  %137 = vst.msk [vmem:[%s4 + $0x8] sm:$0xff] %vm135, %v132
  %138 = vst.msk [vmem:[%s4 + $0x10] sm:$0xff] %vm135, %v133
  %139 = vst.msk [vmem:[%s4 + $0x18] sm:$0xff] %vm135, %v134
  // Predicated region
  $region18: #{_forward_impl.20} parent=0 // pred_check
    _
  $region19: #{_forward_impl.20} parent=0 // pred_check_branch
    %141 = sbr.rel (0) target = $region21
  $region20: #{_forward_impl.20} parent=0 // pred_region
    _
  $region21: #{_forward_impl.20} parent=0 // pred_fallthru
    _
  // Predicated region
  $region22: #{_forward_impl.20} parent=0 // pred_check
    _
  $region23: #{_forward_impl.20} parent=0 // pred_check_branch
    %143 = sbr.rel (0) target = $region25
  $region24: #{_forward_impl.20} parent=0 // pred_region
    _
  $region25: #{_forward_impl.20} parent=0 // pred_fallthru
    _

// kernel: _forward_impl.22
$region0: #{_forward_impl.22}
  #allocation0 [shape = 'u32[]', space=smem, size = 0x4, offset = 0x4, fixed_abs, tag = 'smem constant byte address 0x4 - core index']
  #allocation1 [shape = 'u32[144,128]{1,0:T(1,128)}', space=vmem, size = 0x12000, scoped, tag = 'internal scratch']
  %s0 = inlined_call_operand.vmem [shape: bf16[128,32], index: 0, kind: input, shape index: {}]
  %s1 = inlined_call_operand.vmem [shape: bf16[32,32], index: 1, kind: input, shape index: {}]
  %s2 = inlined_call_operand.vmem [shape: f32[1,32], index: 2, kind: input, shape index: {}]
  %s3 = inlined_call_operand.vmem [shape: f32[128,32], index: 3, kind: input, shape index: {}]
  %s4 = inlined_call_operand.vmem [shape: f32[128,32], index: 4, kind: output, shape index: {}]
  %s5 = sld [smem:[#allocation0]]
  $region49: #{_forward_impl.22} parent=0
    _
  %s7 = ssub.s32 1, %s5
  %s8 = scalar_select 0, %s7, %s5
  loop: start=0, step=1, limit=4
  $region2: #{_forward_impl.22} parent=0 // loop_pre_header
    _
  $region3: #{_forward_impl.22} parent=0 // loop_header
    %s10 = sphi 0, %s14
    %p11 = scmp.ge.s32.totalorder %s10, 4
    %s20 = sphi 0, %s22
    %s23 = sphi 0, %s20
    %s24 = sphi 0, %s23
    %s40 = sphi 0, %s24
    %s44 = sphi 0, %s44
    %s46 = sphi 0, %s44
    %s47 = sphi 0, %s46
    %s61 = sphi 0, %s47
    %s65 = sphi 0, %s65
    %s67 = sphi 0, %s65
    %s68 = sphi 0, %s67
    %s82 = sphi 0, %s68
    %s88 = sphi 0, %s90
    %s91 = sphi 0, %s88
    %s92 = sphi 0, %s91
    %s108 = sphi 0, %s92
    %s114 = sphi 0, %s116
    %s117 = sphi 0, %s114
    %s118 = sphi 0, %s117
    %s134 = sphi 0, %s118
  $region4: #{_forward_impl.22} parent=0 // loop_header_branch
    %13 = sbr.rel (%p11) target = $region8
  $region5: #{_forward_impl.22} parent=0 // loop_body
    %s15 = ssub.s32 %s10, 1
    %s16 = ssub.s32 %s10, 2
    %s17 = sadd.s32 %s10, 1
    %s18 = ssub.s32 %s10, %s17
    %p19 = scmp.eq.s32.totalorder %s18, 0
    %s21 = sadd.s32 %s20, 1
    %s22 = scalar_select %p19, %s20, %s21
    %p25 = pneg %p19
    %p26 = scmp.eq.s32.totalorder %s10, 1
    %p27 = por %p25, %p26
    %p28 = scmp.ne.s32.totalorder %s20, %s23
    %p29 = scmp.eq.s32.totalorder %s10, 0
    %p30 = por %p28, %p29
    %p31 = scmp.ne.s32.totalorder %s20, %s23
    %p32 = scmp.eq.s32.totalorder %s15, 1
    %p33 = por %p31, %p32
    %p34 = scmp.ne.s32.totalorder %s23, %s24
    %p35 = scmp.eq.s32.totalorder %s15, 0
    %p36 = por %p34, %p35
    %p37 = scmp.ne.s32.totalorder %s23, %s24
    %p38 = scmp.eq.s32.totalorder %s16, 1
    %p39 = por %p37, %p38
    %p41 = scmp.ne.s32.totalorder %s24, %s40
    %p42 = scmp.eq.s32.totalorder %s16, 0
    %p43 = por %p41, %p42
    %s45 = sadd.s32 %s44, 1
    %p48 = scmp.eq.s32.totalorder %s10, 1
    %p49 = scmp.ne.s32.totalorder %s44, %s46
    %p50 = scmp.eq.s32.totalorder %s10, 0
    %p51 = por %p49, %p50
    %p52 = scmp.ne.s32.totalorder %s44, %s46
    %p53 = scmp.eq.s32.totalorder %s15, 1
    %p54 = por %p52, %p53
    %p55 = scmp.ne.s32.totalorder %s46, %s47
    %p56 = scmp.eq.s32.totalorder %s15, 0
    %p57 = por %p55, %p56
    %p58 = scmp.ne.s32.totalorder %s46, %s47
    %p59 = scmp.eq.s32.totalorder %s16, 1
    %p60 = por %p58, %p59
    %p62 = scmp.ne.s32.totalorder %s47, %s61
    %p63 = scmp.eq.s32.totalorder %s16, 0
    %p64 = por %p62, %p63
    %s66 = sadd.s32 %s65, 1
    %p69 = scmp.eq.s32.totalorder %s10, 1
    %p70 = scmp.ne.s32.totalorder %s65, %s67
    %p71 = scmp.eq.s32.totalorder %s10, 0
    %p72 = por %p70, %p71
    %p73 = scmp.ne.s32.totalorder %s65, %s67
    %p74 = scmp.eq.s32.totalorder %s15, 1
    %p75 = por %p73, %p74
    %p76 = scmp.ne.s32.totalorder %s67, %s68
    %p77 = scmp.eq.s32.totalorder %s15, 0
    %p78 = por %p76, %p77
    %p79 = scmp.ne.s32.totalorder %s67, %s68
    %p80 = scmp.eq.s32.totalorder %s16, 1
    %p81 = por %p79, %p80
    %p83 = scmp.ne.s32.totalorder %s68, %s82
    %p84 = scmp.eq.s32.totalorder %s16, 0
    %p85 = por %p83, %p84
    %s86 = ssub.s32 %s10, %s17
    %p87 = scmp.eq.s32.totalorder %s86, 0
    %s89 = sadd.s32 %s88, 1
    %s90 = scalar_select %p87, %s88, %s89
    %p93 = pneg %p87
    %p94 = scmp.eq.s32.totalorder %s10, 1
    %p95 = por %p93, %p94
    %p96 = scmp.ne.s32.totalorder %s88, %s91
    %p97 = scmp.eq.s32.totalorder %s10, 0
    %p98 = por %p96, %p97
    %p99 = scmp.ne.s32.totalorder %s88, %s91
    %p100 = scmp.eq.s32.totalorder %s15, 1
    %p101 = por %p99, %p100
    %p102 = scmp.ne.s32.totalorder %s91, %s92
    %p103 = scmp.eq.s32.totalorder %s15, 0
    %p104 = por %p102, %p103
    %p105 = scmp.ne.s32.totalorder %s91, %s92
    %p106 = scmp.eq.s32.totalorder %s16, 1
    %p107 = por %p105, %p106
    %p109 = scmp.ne.s32.totalorder %s92, %s108
    %p110 = scmp.eq.s32.totalorder %s16, 0
    %p111 = por %p109, %p110
    %s112 = ssub.s32 %s10, %s17
    %p113 = scmp.eq.s32.totalorder %s112, 0
    %s115 = sadd.s32 %s114, 1
    %s116 = scalar_select %p113, %s114, %s115
    %p119 = pneg %p113
    %p120 = scmp.eq.s32.totalorder %s10, 1
    %p121 = por %p119, %p120
    %p122 = scmp.ne.s32.totalorder %s114, %s117
    %p123 = scmp.eq.s32.totalorder %s10, 0
    %p124 = por %p122, %p123
    %p125 = scmp.ne.s32.totalorder %s114, %s117
    %p126 = scmp.eq.s32.totalorder %s15, 1
    %p127 = por %p125, %p126
    %p128 = scmp.ne.s32.totalorder %s117, %s118
    %p129 = scmp.eq.s32.totalorder %s15, 0
    %p130 = por %p128, %p129
    %p131 = scmp.ne.s32.totalorder %s117, %s118
    %p132 = scmp.eq.s32.totalorder %s16, 1
    %p133 = por %p131, %p132
    %p135 = scmp.ne.s32.totalorder %s118, %s134
    %p136 = scmp.eq.s32.totalorder %s16, 0
    %p137 = por %p135, %p136
    %p138 = scmp.le.s32.totalorder 1, %s10
    %p139 = scmp.lt.s32.totalorder %s10, 3
    %p140 = pnand %p138, %p139
    %p141 = pneg %p140
    // Predicated region
    $region9: #{_forward_impl.22} parent=5 // pred_check
      _
    $region10: #{_forward_impl.22} parent=5 // pred_check_branch
      %143 = sbr.rel (%p140) target = $region12
    $region11: #{_forward_impl.22} parent=5 // pred_region
      %s144 = ssub.s32 %s10, 1
      // Predicated region
      $region13: #{_forward_impl.22} parent=11 // pred_check
        %p145 = pneg %p57
      $region14: #{_forward_impl.22} parent=11 // pred_check_branch
        %147 = sbr.rel (%p145) target = $region16
      $region15: #{_forward_impl.22} parent=11 // pred_region
        _
      $region16: #{_forward_impl.22} parent=11 // pred_fallthru
        _
      // Predicated region
      $region17: #{_forward_impl.22} parent=11 // pred_check
        %p148 = pneg %p78
      $region18: #{_forward_impl.22} parent=11 // pred_check_branch
        %150 = sbr.rel (%p148) target = $region20
      $region19: #{_forward_impl.22} parent=11 // pred_region
        _
      $region20: #{_forward_impl.22} parent=11 // pred_fallthru
        _
    $region12: #{_forward_impl.22} parent=5 // pred_fallthru
      _
    %p151 = scmp.lt.s32.totalorder %s10, 2
    // Predicated region
    $region21: #{_forward_impl.22} parent=5 // pred_check
      %p152 = pneg %p151
    $region22: #{_forward_impl.22} parent=5 // pred_check_branch
      %154 = sbr.rel (%p152) target = $region24
    $region23: #{_forward_impl.22} parent=5 // pred_region
      // Predicated region
      $region25: #{_forward_impl.22} parent=23 // pred_check
        %p155 = pneg %p30
      $region26: #{_forward_impl.22} parent=23 // pred_check_branch
        %157 = sbr.rel (%p155) target = $region28
      $region27: #{_forward_impl.22} parent=23 // pred_region
        %s158 = smul.u32 8, %s10
        %p159 = scmp.lt.s32.totalorder %s158, 15
        %s160 = scalar_select %p159, %s158, 15
        %s161 = smul.addr %s160, 4
        %s162 = scalar_lea.vmem %s0, %s161
        %s163 = smul.u32 8, %s10
      $region28: #{_forward_impl.22} parent=23 // pred_fallthru
        _
      // Predicated region
      $region29: #{_forward_impl.22} parent=23 // pred_check
        %p164 = pneg %p98
      $region30: #{_forward_impl.22} parent=23 // pred_check_branch
        %166 = sbr.rel (%p164) target = $region32
      $region31: #{_forward_impl.22} parent=23 // pred_region
        %s167 = smul.u32 8, %s10
        %p168 = scmp.lt.s32.totalorder %s167, 15
        %s169 = scalar_select %p168, %s167, 15
        %s170 = smul.addr %s169, 8
        %s171 = scalar_lea.vmem %s3, %s170
        %s172 = smul.u32 8, %s10
      $region32: #{_forward_impl.22} parent=23 // pred_fallthru
        _
    $region24: #{_forward_impl.22} parent=5 // pred_fallthru
      _
    %p173 = scmp.le.s32.totalorder 1, %s10
    %p174 = scmp.lt.s32.totalorder %s10, 3
    %p175 = pnand %p173, %p174
    %p176 = pneg %p175
    // Predicated region
    $region33: #{_forward_impl.22} parent=5 // pred_check
      _
    $region34: #{_forward_impl.22} parent=5 // pred_check_branch
      %178 = sbr.rel (%p175) target = $region36
    $region35: #{_forward_impl.22} parent=5 // pred_region
      %s179 = ssub.s32 %s10, 1
      %s180 = smul.u32 8, %s15
      %p181 = scmp.lt.s32.totalorder %s180, 15
      %s182 = scalar_select %p181, %s180, 15
      %s183 = smul.addr %s182, 4
      %s184 = scalar_lea.vmem %s0, %s183
      %p185 = pneg %p36
      %p186 = pneg %p33
      %p187 = pneg %p57
      %p188 = pneg %p54
      %p189 = pneg %p78
      %p190 = pneg %p75
      %s191 = smul.u32 8, %s15
      %p192 = scmp.lt.s32.totalorder %s191, 15
      %s193 = scalar_select %p192, %s191, 15
      %s194 = smul.addr %s193, 8
      %s195 = scalar_lea.vmem %s3, %s194
      %p196 = pneg %p104
      %p197 = pneg %p101
      %p198 = pneg %p130
      %p199 = pneg %p127
      %s200 = smul.u32 8, %s15
      %p201 = scmp.lt.s32.totalorder %s200, 15
      %s202 = scalar_select %p201, %s200, 15
      %s203 = smul.addr %s202, 8
      %s204 = scalar_lea.vmem %s4, %s203
      %s205 = smul.u32 8, %s15
      %p206 = scmp.lt.s32.totalorder %s205, 15
      %s207 = scalar_select %p206, %s205, 15
      %s208 = smul.addr %s207, 4
      %s209 = scalar_lea.vmem %s0, %s208
      %s210 = smul.u32 8, %s15
      %s211 = smul.u32 8, %s15
      %p212 = scmp.lt.s32.totalorder %s211, 15
      %s213 = scalar_select %p212, %s211, 15
      %s214 = smul.addr %s213, 8
      %s215 = scalar_lea.vmem %s3, %s214
      %s216 = smul.u32 8, %s15
      %s217 = smul.u32 8, %s15
      %p218 = scmp.lt.s32.totalorder %s217, 15
      %s219 = scalar_select %p218, %s217, 15
      %s220 = smul.addr %s219, 8
      %s221 = scalar_lea.vmem %s4, %s220
      %s222 = smul.u32 8, %s15
      %v224 = vld [vmem:[%s209] sm:$0xf]
      %v225 = vld [vmem:[%s209 + $0x4] sm:$0xf]
      %v226 = vld [vmem:[%s209 + $0x8] sm:$0xf]
      %v227 = vld [vmem:[%s209 + $0xc] sm:$0xf]
      %v228 = vld [vmem:[%s209 + $0x10] sm:$0xf]
      %v229 = vld [vmem:[%s209 + $0x14] sm:$0xf]
      %v230 = vld [vmem:[%s209 + $0x18] sm:$0xf]
      %v231 = vld [vmem:[%s209 + $0x1c] sm:$0xf]
      %v232 = vld [vmem:[%s1] sm:$0xf]
      %v233 = vld [vmem:[%s1 + $0x4] sm:$0xf]
      %v234 = vld [vmem:[%s1 + $0x8] sm:$0xf]
      %v235 = vld [vmem:[%s1 + $0xc] sm:$0xf]
      %v236 = vld [vmem:[%s2] sm:$0x1]
      %v238 = vlaneseq
      %v239 = vshrl.u32 %v238, 7
      %v240 = vsub.s32 0, %v239
      %v241 = vrot.slane %v236, %v240
      %v251 = vunpack.c.l.b16 %v224
      %v252 = vunpack.c.l.b16 %v225
      %v253 = vunpack.c.l.b16 %v226
      %v254 = vunpack.c.l.b16 %v227
      %v255 = vunpack.c.l.b16 %v228
      %v256 = vunpack.c.l.b16 %v229
      %v257 = vunpack.c.l.b16 %v230
      %v258 = vunpack.c.l.b16 %v231
      %v259 = vpack.c.b16 %v252, %v251
      %v260 = vpack.c.b16 %v254, %v253
      %v261 = vpack.c.b16 %v256, %v255
      %v262 = vpack.c.b16 %v258, %v257
      %v267 = vunpack.c.l.b16 %v232
      %v268 = vunpack.c.l.b16 %v233
      %v269 = vunpack.c.l.b16 %v234
      %v270 = vunpack.c.l.b16 %v235
      %v271 = vpack.c.b16 %v268, %v267
      %v272 = vpack.c.b16 %v270, %v269
      %vm275 = vcmask 261120
      %v277 = vsel %vm275, %v259, 0
      %v280 = vsel %vm275, %v260, 0
      %v283 = vsel %vm275, %v261, 0
      %v286 = vsel %vm275, %v262, 0
      %288 = vmatprep.subr.bf16.mxu0 0
      %289 = vmatpush1.bf16.msra.mxu0 %v271
      %290 = vmatprep.subr.bf16.mxu0 0
      %291 = vmatpush1.bf16.msra.mxu0 %v272
      %292 = vmatprep.subr.bf16.mxu0 0
      %293 = vmatpush1.bf16.msra.mxu0 0
      %294 = vmatprep.subr.bf16.mxu0 0
      %295 = vmatpush1.bf16.msra.mxu0 0
      %296 = vmatprep.subr.bf16.mxu0 0
      %297 = vmatpush1.bf16.msra.mxu0 0
      %298 = vmatprep.subr.bf16.mxu0 0
      %299 = vmatpush1.bf16.msra.mxu0 0
      %300 = vmatprep.subr.bf16.mxu0 0
      %301 = vmatpush1.bf16.msra.mxu0 0
      %302 = vmatprep.subr.bf16.mxu0 0
      %303 = vmatpush1.bf16.msra.mxu0 0
      %304 = vmatprep.subr.bf16.mxu0 0
      %305 = vmatpush1.bf16.msra.mxu0 0
      %306 = vmatprep.subr.bf16.mxu0 0
      %307 = vmatpush1.bf16.msra.mxu0 0
      %308 = vmatprep.subr.bf16.mxu0 0
      %309 = vmatpush1.bf16.msra.mxu0 0
      %310 = vmatprep.subr.bf16.mxu0 0
      %311 = vmatpush1.bf16.msra.mxu0 0
      %312 = vmatprep.subr.bf16.mxu0 0
      %313 = vmatpush1.bf16.msra.mxu0 0
      %314 = vmatprep.subr.bf16.mxu0 0
      %315 = vmatpush1.bf16.msra.mxu0 0
      %316 = vmatprep.subr.bf16.mxu0 0
      %317 = vmatpush1.bf16.msra.mxu0 0
      %318 = vmatprep.subr.bf16.mxu0 0
      %319 = vmatpush1.bf16.msra.mxu0 0
      %320 = vmatprep.mubr.bf16.mxu0 0
      %321 = vmatmul.mubr.bf16.gmra.mrb[0].mxu0 %v277
      %v322 = vpop.f32.mrb[0].mxu0
      %v323 = vadd.f32 %v241, %v322
      %v324 = vpop.f32.mrb[0].mxu0
      %v325 = vpop.f32.mrb[0].mxu0
      %v326 = vadd.f32 %v241, %v325
      %v327 = vpop.f32.mrb[0].mxu0
      %328 = vmatprep.mubr.bf16.mxu0 0
      %329 = vmatmul.mubr.bf16.gmra.mrb[0].mxu0 %v280
      %v330 = vpop.f32.mrb[0].mxu0
      %v331 = vadd.f32 %v241, %v330
      %v332 = vpop.f32.mrb[0].mxu0
      %v333 = vpop.f32.mrb[0].mxu0
      %v334 = vadd.f32 %v241, %v333
      %v335 = vpop.f32.mrb[0].mxu0
      %336 = vmatprep.mubr.bf16.mxu0 0
      %337 = vmatmul.mubr.bf16.gmra.mrb[0].mxu0 %v283
      %v338 = vpop.f32.mrb[0].mxu0
      %v339 = vadd.f32 %v241, %v338
      %v340 = vpop.f32.mrb[0].mxu0
      %v341 = vpop.f32.mrb[0].mxu0
      %v342 = vadd.f32 %v241, %v341
      %v343 = vpop.f32.mrb[0].mxu0
      %344 = vmatprep.mubr.bf16.mxu0 0
      %345 = vmatmul.mubr.bf16.gmra.mrb[0].mxu0 %v286
      %v346 = vpop.f32.mrb[0].mxu0
      %v347 = vadd.f32 %v241, %v346
      %v348 = vpop.f32.mrb[0].mxu0
      %v349 = vpop.f32.mrb[0].mxu0
      %v350 = vadd.f32 %v241, %v349
      %v351 = vpop.f32.mrb[0].mxu0
      %352 = vdwg.mxu0
      %v353 = vld [vmem:[%s215] sm:$0xff]
      %v354 = vld [vmem:[%s215 + $0x8] sm:$0xff]
      %v355 = vld [vmem:[%s215 + $0x10] sm:$0xff]
      %v356 = vld [vmem:[%s215 + $0x18] sm:$0xff]
      %v357 = vld [vmem:[%s215 + $0x20] sm:$0xff]
      %v358 = vld [vmem:[%s215 + $0x28] sm:$0xff]
      %v359 = vld [vmem:[%s215 + $0x30] sm:$0xff]
      %v360 = vld [vmem:[%s215 + $0x38] sm:$0xff]
      %v361 = vadd.f32 %v323, %v353
      %v362 = vadd.f32 %v326, %v354
      %v363 = vadd.f32 %v331, %v355
      %v364 = vadd.f32 %v334, %v356
      %v365 = vadd.f32 %v339, %v357
      %v366 = vadd.f32 %v342, %v358
      %v367 = vadd.f32 %v347, %v359
      %v368 = vadd.f32 %v350, %v360
      %369 = vst.msk [vmem:[%s221] sm:$0xff] %vm275, %v361
      %370 = vst.msk [vmem:[%s221 + $0x8] sm:$0xff] %vm275, %v362
      %371 = vst.msk [vmem:[%s221 + $0x10] sm:$0xff] %vm275, %v363
      %372 = vst.msk [vmem:[%s221 + $0x18] sm:$0xff] %vm275, %v364
      %373 = vst.msk [vmem:[%s221 + $0x20] sm:$0xff] %vm275, %v365
      %374 = vst.msk [vmem:[%s221 + $0x28] sm:$0xff] %vm275, %v366
      %375 = vst.msk [vmem:[%s221 + $0x30] sm:$0xff] %vm275, %v367
      %376 = vst.msk [vmem:[%s221 + $0x38] sm:$0xff] %vm275, %v368
      %s377 = smul.u32 8, %s15
      %p378 = scmp.lt.s32.totalorder %s377, 15
      %s379 = scalar_select %p378, %s377, 15
      %s380 = smul.addr %s379, 8
      %s381 = scalar_lea.vmem %s4, %s380
      // Predicated region
      $region37: #{_forward_impl.22} parent=35 // pred_check
        %p382 = pneg %p127
      $region38: #{_forward_impl.22} parent=35 // pred_check_branch
        %384 = sbr.rel (%p382) target = $region40
      $region39: #{_forward_impl.22} parent=35 // pred_region
        %s385 = smul.u32 8, %s15
      $region40: #{_forward_impl.22} parent=35 // pred_fallthru
        _
    $region36: #{_forward_impl.22} parent=5 // pred_fallthru
      _
    %p386 = scmp.le.s32.totalorder 2, %s10
    // Predicated region
    $region41: #{_forward_impl.22} parent=5 // pred_check
      %p387 = pneg %p386
    $region42: #{_forward_impl.22} parent=5 // pred_check_branch
      %389 = sbr.rel (%p387) target = $region44
    $region43: #{_forward_impl.22} parent=5 // pred_region
      %s390 = ssub.s32 %s10, 2
      // Predicated region
      $region45: #{_forward_impl.22} parent=43 // pred_check
        %p391 = pneg %p133
      $region46: #{_forward_impl.22} parent=43 // pred_check_branch
        %393 = sbr.rel (%p391) target = $region48
      $region47: #{_forward_impl.22} parent=43 // pred_region
        %s394 = smul.u32 8, %s16
        %p395 = scmp.lt.s32.totalorder %s394, 15
        %s396 = scalar_select %p395, %s394, 15
        %s397 = smul.addr %s396, 8
        %s398 = scalar_lea.vmem %s4, %s397
      $region48: #{_forward_impl.22} parent=43 // pred_fallthru
        _
    $region44: #{_forward_impl.22} parent=5 // pred_fallthru
      _
  $region6: #{_forward_impl.22} parent=0 // loop_footer
    %s14 = sadd.s32 1, %s10
  $region7: #{_forward_impl.22} parent=0 // loop_footer_branch
    %9 = sbr.rel target = $region3
  $region8: #{_forward_impl.22} parent=0 // loop_exit
    _

// kernel: _forward_impl.24
$region0: #{_forward_impl.24}
  #allocation0 [shape = 'u32[]', space=smem, size = 0x4, offset = 0x4, fixed_abs, tag = 'smem constant byte address 0x4 - core index']
  #allocation1 [shape = 'u32[144,128]{1,0:T(1,128)}', space=vmem, size = 0x12000, scoped, tag = 'internal scratch']
  %s0 = inlined_call_operand.vmem [shape: bf16[512,16], index: 0, kind: input, shape index: {}]
  %s1 = inlined_call_operand.vmem [shape: bf16[16,32], index: 1, kind: input, shape index: {}]
  %s2 = inlined_call_operand.vmem [shape: f32[1,32], index: 2, kind: input, shape index: {}]
  %s3 = inlined_call_operand.vmem [shape: f32[512,32], index: 3, kind: input, shape index: {}]
  %s4 = inlined_call_operand.vmem [shape: f32[512,32], index: 4, kind: output, shape index: {}]
  %s5 = sld [smem:[#allocation0]]
  $region49: #{_forward_impl.24} parent=0
    _
  %s7 = ssub.s32 1, %s5
  %s8 = scalar_select 0, %s7, %s5
  loop: start=0, step=1, limit=4
  $region2: #{_forward_impl.24} parent=0 // loop_pre_header
    _
  $region3: #{_forward_impl.24} parent=0 // loop_header
    %s10 = sphi 0, %s14
    %p11 = scmp.ge.s32.totalorder %s10, 4
    %s20 = sphi 0, %s22
    %s23 = sphi 0, %s20
    %s24 = sphi 0, %s23
    %s40 = sphi 0, %s24
    %s44 = sphi 0, %s44
    %s46 = sphi 0, %s44
    %s47 = sphi 0, %s46
    %s61 = sphi 0, %s47
    %s65 = sphi 0, %s65
    %s67 = sphi 0, %s65
    %s68 = sphi 0, %s67
    %s82 = sphi 0, %s68
    %s88 = sphi 0, %s90
    %s91 = sphi 0, %s88
    %s92 = sphi 0, %s91
    %s108 = sphi 0, %s92
    %s114 = sphi 0, %s116
    %s117 = sphi 0, %s114
    %s118 = sphi 0, %s117
    %s134 = sphi 0, %s118
  $region4: #{_forward_impl.24} parent=0 // loop_header_branch
    %13 = sbr.rel (%p11) target = $region8
  $region5: #{_forward_impl.24} parent=0 // loop_body
    %s15 = ssub.s32 %s10, 1
    %s16 = ssub.s32 %s10, 2
    %s17 = sadd.s32 %s10, 1
    %s18 = ssub.s32 %s10, %s17
    %p19 = scmp.eq.s32.totalorder %s18, 0
    %s21 = sadd.s32 %s20, 1
    %s22 = scalar_select %p19, %s20, %s21
    %p25 = pneg %p19
    %p26 = scmp.eq.s32.totalorder %s10, 1
    %p27 = por %p25, %p26
    %p28 = scmp.ne.s32.totalorder %s20, %s23
    %p29 = scmp.eq.s32.totalorder %s10, 0
    %p30 = por %p28, %p29
    %p31 = scmp.ne.s32.totalorder %s20, %s23
    %p32 = scmp.eq.s32.totalorder %s15, 1
    %p33 = por %p31, %p32
    %p34 = scmp.ne.s32.totalorder %s23, %s24
    %p35 = scmp.eq.s32.totalorder %s15, 0
    %p36 = por %p34, %p35
    %p37 = scmp.ne.s32.totalorder %s23, %s24
    %p38 = scmp.eq.s32.totalorder %s16, 1
    %p39 = por %p37, %p38
    %p41 = scmp.ne.s32.totalorder %s24, %s40
    %p42 = scmp.eq.s32.totalorder %s16, 0
    %p43 = por %p41, %p42
    %s45 = sadd.s32 %s44, 1
    %p48 = scmp.eq.s32.totalorder %s10, 1
    %p49 = scmp.ne.s32.totalorder %s44, %s46
    %p50 = scmp.eq.s32.totalorder %s10, 0
    %p51 = por %p49, %p50
    %p52 = scmp.ne.s32.totalorder %s44, %s46
    %p53 = scmp.eq.s32.totalorder %s15, 1
    %p54 = por %p52, %p53
    %p55 = scmp.ne.s32.totalorder %s46, %s47
    %p56 = scmp.eq.s32.totalorder %s15, 0
    %p57 = por %p55, %p56
    %p58 = scmp.ne.s32.totalorder %s46, %s47
    %p59 = scmp.eq.s32.totalorder %s16, 1
    %p60 = por %p58, %p59
    %p62 = scmp.ne.s32.totalorder %s47, %s61
    %p63 = scmp.eq.s32.totalorder %s16, 0
    %p64 = por %p62, %p63
    %s66 = sadd.s32 %s65, 1
    %p69 = scmp.eq.s32.totalorder %s10, 1
    %p70 = scmp.ne.s32.totalorder %s65, %s67
    %p71 = scmp.eq.s32.totalorder %s10, 0
    %p72 = por %p70, %p71
    %p73 = scmp.ne.s32.totalorder %s65, %s67
    %p74 = scmp.eq.s32.totalorder %s15, 1
    %p75 = por %p73, %p74
    %p76 = scmp.ne.s32.totalorder %s67, %s68
    %p77 = scmp.eq.s32.totalorder %s15, 0
    %p78 = por %p76, %p77
    %p79 = scmp.ne.s32.totalorder %s67, %s68
    %p80 = scmp.eq.s32.totalorder %s16, 1
    %p81 = por %p79, %p80
    %p83 = scmp.ne.s32.totalorder %s68, %s82
    %p84 = scmp.eq.s32.totalorder %s16, 0
    %p85 = por %p83, %p84
    %s86 = ssub.s32 %s10, %s17
    %p87 = scmp.eq.s32.totalorder %s86, 0
    %s89 = sadd.s32 %s88, 1
    %s90 = scalar_select %p87, %s88, %s89
    %p93 = pneg %p87
    %p94 = scmp.eq.s32.totalorder %s10, 1
    %p95 = por %p93, %p94
    %p96 = scmp.ne.s32.totalorder %s88, %s91
    %p97 = scmp.eq.s32.totalorder %s10, 0
    %p98 = por %p96, %p97
    %p99 = scmp.ne.s32.totalorder %s88, %s91
    %p100 = scmp.eq.s32.totalorder %s15, 1
    %p101 = por %p99, %p100
    %p102 = scmp.ne.s32.totalorder %s91, %s92
    %p103 = scmp.eq.s32.totalorder %s15, 0
    %p104 = por %p102, %p103
    %p105 = scmp.ne.s32.totalorder %s91, %s92
    %p106 = scmp.eq.s32.totalorder %s16, 1
    %p107 = por %p105, %p106
    %p109 = scmp.ne.s32.totalorder %s92, %s108
    %p110 = scmp.eq.s32.totalorder %s16, 0
    %p111 = por %p109, %p110
    %s112 = ssub.s32 %s10, %s17
    %p113 = scmp.eq.s32.totalorder %s112, 0
    %s115 = sadd.s32 %s114, 1
    %s116 = scalar_select %p113, %s114, %s115
    %p119 = pneg %p113
    %p120 = scmp.eq.s32.totalorder %s10, 1
    %p121 = por %p119, %p120
    %p122 = scmp.ne.s32.totalorder %s114, %s117
    %p123 = scmp.eq.s32.totalorder %s10, 0
    %p124 = por %p122, %p123
    %p125 = scmp.ne.s32.totalorder %s114, %s117
    %p126 = scmp.eq.s32.totalorder %s15, 1
    %p127 = por %p125, %p126
    %p128 = scmp.ne.s32.totalorder %s117, %s118
    %p129 = scmp.eq.s32.totalorder %s15, 0
    %p130 = por %p128, %p129
    %p131 = scmp.ne.s32.totalorder %s117, %s118
    %p132 = scmp.eq.s32.totalorder %s16, 1
    %p133 = por %p131, %p132
    %p135 = scmp.ne.s32.totalorder %s118, %s134
    %p136 = scmp.eq.s32.totalorder %s16, 0
    %p137 = por %p135, %p136
    %p138 = scmp.le.s32.totalorder 1, %s10
    %p139 = scmp.lt.s32.totalorder %s10, 3
    %p140 = pnand %p138, %p139
    %p141 = pneg %p140
    // Predicated region
    $region9: #{_forward_impl.24} parent=5 // pred_check
      _
    $region10: #{_forward_impl.24} parent=5 // pred_check_branch
      %143 = sbr.rel (%p140) target = $region12
    $region11: #{_forward_impl.24} parent=5 // pred_region
      %s144 = ssub.s32 %s10, 1
      // Predicated region
      $region13: #{_forward_impl.24} parent=11 // pred_check
        %p145 = pneg %p57
      $region14: #{_forward_impl.24} parent=11 // pred_check_branch
        %147 = sbr.rel (%p145) target = $region16
      $region15: #{_forward_impl.24} parent=11 // pred_region
        _
      $region16: #{_forward_impl.24} parent=11 // pred_fallthru
        _
      // Predicated region
      $region17: #{_forward_impl.24} parent=11 // pred_check
        %p148 = pneg %p78
      $region18: #{_forward_impl.24} parent=11 // pred_check_branch
        %150 = sbr.rel (%p148) target = $region20
      $region19: #{_forward_impl.24} parent=11 // pred_region
        _
      $region20: #{_forward_impl.24} parent=11 // pred_fallthru
        _
    $region12: #{_forward_impl.24} parent=5 // pred_fallthru
      _
    %p151 = scmp.lt.s32.totalorder %s10, 2
    // Predicated region
    $region21: #{_forward_impl.24} parent=5 // pred_check
      %p152 = pneg %p151
    $region22: #{_forward_impl.24} parent=5 // pred_check_branch
      %154 = sbr.rel (%p152) target = $region24
    $region23: #{_forward_impl.24} parent=5 // pred_region
      // Predicated region
      $region25: #{_forward_impl.24} parent=23 // pred_check
        %p155 = pneg %p30
      $region26: #{_forward_impl.24} parent=23 // pred_check_branch
        %157 = sbr.rel (%p155) target = $region28
      $region27: #{_forward_impl.24} parent=23 // pred_region
        %s158 = smul.u32 32, %s10
        %p159 = scmp.lt.s32.totalorder %s158, 63
        %s160 = scalar_select %p159, %s158, 63
        %s161 = smul.addr %s160, 4
        %s162 = scalar_lea.vmem %s0, %s161
        %s163 = smul.u32 32, %s10
      $region28: #{_forward_impl.24} parent=23 // pred_fallthru
        _
      // Predicated region
      $region29: #{_forward_impl.24} parent=23 // pred_check
        %p164 = pneg %p98
      $region30: #{_forward_impl.24} parent=23 // pred_check_branch
        %166 = sbr.rel (%p164) target = $region32
      $region31: #{_forward_impl.24} parent=23 // pred_region
        %s167 = smul.u32 32, %s10
        %p168 = scmp.lt.s32.totalorder %s167, 63
        %s169 = scalar_select %p168, %s167, 63
        %s170 = smul.addr %s169, 8
        %s171 = scalar_lea.vmem %s3, %s170
        %s172 = smul.u32 32, %s10
      $region32: #{_forward_impl.24} parent=23 // pred_fallthru
        _
    $region24: #{_forward_impl.24} parent=5 // pred_fallthru
      _
    %p173 = scmp.le.s32.totalorder 1, %s10
    %p174 = scmp.lt.s32.totalorder %s10, 3
    %p175 = pnand %p173, %p174
    %p176 = pneg %p175
    // Predicated region
    $region33: #{_forward_impl.24} parent=5 // pred_check
      _
    $region34: #{_forward_impl.24} parent=5 // pred_check_branch
      %178 = sbr.rel (%p175) target = $region36
    $region35: #{_forward_impl.24} parent=5 // pred_region
      %s179 = ssub.s32 %s10, 1
      %s180 = smul.u32 32, %s15
      %p181 = scmp.lt.s32.totalorder %s180, 63
      %s182 = scalar_select %p181, %s180, 63
      %s183 = smul.addr %s182, 4
      %s184 = scalar_lea.vmem %s0, %s183
      %p185 = pneg %p36
      %p186 = pneg %p33
      %p187 = pneg %p57
      %p188 = pneg %p54
      %p189 = pneg %p78
      %p190 = pneg %p75
      %s191 = smul.u32 32, %s15
      %p192 = scmp.lt.s32.totalorder %s191, 63
      %s193 = scalar_select %p192, %s191, 63
      %s194 = smul.addr %s193, 8
      %s195 = scalar_lea.vmem %s3, %s194
      %p196 = pneg %p104
      %p197 = pneg %p101
      %p198 = pneg %p130
      %p199 = pneg %p127
      %s200 = smul.u32 32, %s15
      %p201 = scmp.lt.s32.totalorder %s200, 63
      %s202 = scalar_select %p201, %s200, 63
      %s203 = smul.addr %s202, 8
      %s204 = scalar_lea.vmem %s4, %s203
      %s205 = smul.u32 32, %s15
      %p206 = scmp.lt.s32.totalorder %s205, 63
      %s207 = scalar_select %p206, %s205, 63
      %s208 = smul.addr %s207, 4
      %s209 = scalar_lea.vmem %s0, %s208
      %s210 = smul.u32 32, %s15
      %s211 = smul.u32 32, %s15
      %p212 = scmp.lt.s32.totalorder %s211, 63
      %s213 = scalar_select %p212, %s211, 63
      %s214 = smul.addr %s213, 8
      %s215 = scalar_lea.vmem %s3, %s214
      %s216 = smul.u32 32, %s15
      %s217 = smul.u32 32, %s15
      %p218 = scmp.lt.s32.totalorder %s217, 63
      %s219 = scalar_select %p218, %s217, 63
      %s220 = smul.addr %s219, 8
      %s221 = scalar_lea.vmem %s4, %s220
      %s222 = smul.u32 32, %s15
      %v224 = vld [vmem:[%s209] sm:$0xf]
      %v225 = vld [vmem:[%s209 + $0x4] sm:$0xf]
      %v226 = vld [vmem:[%s209 + $0x8] sm:$0xf]
      %v227 = vld [vmem:[%s209 + $0xc] sm:$0xf]
      %v228 = vld [vmem:[%s209 + $0x10] sm:$0xf]
      %v229 = vld [vmem:[%s209 + $0x14] sm:$0xf]
      %v230 = vld [vmem:[%s209 + $0x18] sm:$0xf]
      %v231 = vld [vmem:[%s209 + $0x1c] sm:$0xf]
      %v232 = vld [vmem:[%s209 + $0x20] sm:$0xf]
      %v233 = vld [vmem:[%s209 + $0x24] sm:$0xf]
      %v234 = vld [vmem:[%s209 + $0x28] sm:$0xf]
      %v235 = vld [vmem:[%s209 + $0x2c] sm:$0xf]
      %v236 = vld [vmem:[%s209 + $0x30] sm:$0xf]
      %v237 = vld [vmem:[%s209 + $0x34] sm:$0xf]
      %v238 = vld [vmem:[%s209 + $0x38] sm:$0xf]
      %v239 = vld [vmem:[%s209 + $0x3c] sm:$0xf]
      %v240 = vld [vmem:[%s209 + $0x40] sm:$0xf]
      %v241 = vld [vmem:[%s209 + $0x44] sm:$0xf]
      %v242 = vld [vmem:[%s209 + $0x48] sm:$0xf]
      %v243 = vld [vmem:[%s209 + $0x4c] sm:$0xf]
      %v244 = vld [vmem:[%s209 + $0x50] sm:$0xf]
      %v245 = vld [vmem:[%s209 + $0x54] sm:$0xf]
      %v246 = vld [vmem:[%s209 + $0x58] sm:$0xf]
      %v247 = vld [vmem:[%s209 + $0x5c] sm:$0xf]
      %v248 = vld [vmem:[%s209 + $0x60] sm:$0xf]
      %v249 = vld [vmem:[%s209 + $0x64] sm:$0xf]
      %v250 = vld [vmem:[%s209 + $0x68] sm:$0xf]
      %v251 = vld [vmem:[%s209 + $0x6c] sm:$0xf]
      %v252 = vld [vmem:[%s209 + $0x70] sm:$0xf]
      %v253 = vld [vmem:[%s209 + $0x74] sm:$0xf]
      %v254 = vld [vmem:[%s209 + $0x78] sm:$0xf]
      %v255 = vld [vmem:[%s209 + $0x7c] sm:$0xf]
      %v256 = vld [vmem:[%s1] sm:$0xf]
      %v257 = vld [vmem:[%s1 + $0x4] sm:$0xf]
      %v258 = vld [vmem:[%s2] sm:$0x1]
      %v260 = vlaneseq
      %v261 = vshrl.u32 %v260, 7
      %v262 = vsub.s32 0, %v261
      %v263 = vrot.slane %v258, %v262
      %v297 = vunpack.c.l.b16 %v224
      %v298 = vunpack.c.l.b16 %v225
      %v299 = vunpack.c.l.b16 %v226
      %v300 = vunpack.c.l.b16 %v227
      %v301 = vunpack.c.l.b16 %v228
      %v302 = vunpack.c.l.b16 %v229
      %v303 = vunpack.c.l.b16 %v230
      %v304 = vunpack.c.l.b16 %v231
      %v305 = vunpack.c.l.b16 %v232
      %v306 = vunpack.c.l.b16 %v233
      %v307 = vunpack.c.l.b16 %v234
      %v308 = vunpack.c.l.b16 %v235
      %v309 = vunpack.c.l.b16 %v236
      %v310 = vunpack.c.l.b16 %v237
      %v311 = vunpack.c.l.b16 %v238
      %v312 = vunpack.c.l.b16 %v239
      %v313 = vunpack.c.l.b16 %v240
      %v314 = vunpack.c.l.b16 %v241
      %v315 = vunpack.c.l.b16 %v242
      %v316 = vunpack.c.l.b16 %v243
      %v317 = vunpack.c.l.b16 %v244
      %v318 = vunpack.c.l.b16 %v245
      %v319 = vunpack.c.l.b16 %v246
      %v320 = vunpack.c.l.b16 %v247
      %v321 = vunpack.c.l.b16 %v248
      %v322 = vunpack.c.l.b16 %v249
      %v323 = vunpack.c.l.b16 %v250
      %v324 = vunpack.c.l.b16 %v251
      %v325 = vunpack.c.l.b16 %v252
      %v326 = vunpack.c.l.b16 %v253
      %v327 = vunpack.c.l.b16 %v254
      %v328 = vunpack.c.l.b16 %v255
      %v329 = vpack.c.b16 %v298, %v297
      %v330 = vpack.c.b16 %v300, %v299
      %v331 = vpack.c.b16 %v302, %v301
      %v332 = vpack.c.b16 %v304, %v303
      %v333 = vpack.c.b16 %v306, %v305
      %v334 = vpack.c.b16 %v308, %v307
      %v335 = vpack.c.b16 %v310, %v309
      %v336 = vpack.c.b16 %v312, %v311
      %v337 = vpack.c.b16 %v314, %v313
      %v338 = vpack.c.b16 %v316, %v315
      %v339 = vpack.c.b16 %v318, %v317
      %v340 = vpack.c.b16 %v320, %v319
      %v341 = vpack.c.b16 %v322, %v321
      %v342 = vpack.c.b16 %v324, %v323
      %v343 = vpack.c.b16 %v326, %v325
      %v344 = vpack.c.b16 %v328, %v327
      %v347 = vunpack.c.l.b16 %v256
      %v348 = vunpack.c.l.b16 %v257
      %v349 = vpack.c.b16 %v348, %v347
      %vm351 = vcmask 130048
      %v353 = vsel %vm351, %v329, 0
      %v356 = vsel %vm351, %v330, 0
      %v359 = vsel %vm351, %v331, 0
      %v362 = vsel %vm351, %v332, 0
      %v365 = vsel %vm351, %v333, 0
      %v368 = vsel %vm351, %v334, 0
      %v371 = vsel %vm351, %v335, 0
      %v374 = vsel %vm351, %v336, 0
      %v377 = vsel %vm351, %v337, 0
      %v380 = vsel %vm351, %v338, 0
      %v383 = vsel %vm351, %v339, 0
      %v386 = vsel %vm351, %v340, 0
      %v389 = vsel %vm351, %v341, 0
      %v392 = vsel %vm351, %v342, 0
      %v395 = vsel %vm351, %v343, 0
      %v398 = vsel %vm351, %v344, 0
      %400 = vmatprep.subr.bf16.mxu0 0
      %401 = vmatpush1.bf16.msra.mxu0 %v349
      %402 = vmatprep.subr.bf16.mxu0 0
      %403 = vmatpush1.bf16.msra.mxu0 0
      %404 = vmatprep.subr.bf16.mxu0 0
      %405 = vmatpush1.bf16.msra.mxu0 0
      %406 = vmatprep.subr.bf16.mxu0 0
      %407 = vmatpush1.bf16.msra.mxu0 0
      %408 = vmatprep.subr.bf16.mxu0 0
      %409 = vmatpush1.bf16.msra.mxu0 0
      %410 = vmatprep.subr.bf16.mxu0 0
      %411 = vmatpush1.bf16.msra.mxu0 0
      %412 = vmatprep.subr.bf16.mxu0 0
      %413 = vmatpush1.bf16.msra.mxu0 0
      %414 = vmatprep.subr.bf16.mxu0 0
      %415 = vmatpush1.bf16.msra.mxu0 0
      %416 = vmatprep.subr.bf16.mxu0 0
      %417 = vmatpush1.bf16.msra.mxu0 0
      %418 = vmatprep.subr.bf16.mxu0 0
      %419 = vmatpush1.bf16.msra.mxu0 0
      %420 = vmatprep.subr.bf16.mxu0 0
      %421 = vmatpush1.bf16.msra.mxu0 0
      %422 = vmatprep.subr.bf16.mxu0 0
      %423 = vmatpush1.bf16.msra.mxu0 0
      %424 = vmatprep.subr.bf16.mxu0 0
      %425 = vmatpush1.bf16.msra.mxu0 0
      %426 = vmatprep.subr.bf16.mxu0 0
      %427 = vmatpush1.bf16.msra.mxu0 0
      %428 = vmatprep.subr.bf16.mxu0 0
      %429 = vmatpush1.bf16.msra.mxu0 0
      %430 = vmatprep.subr.bf16.mxu0 0
      %431 = vmatpush1.bf16.msra.mxu0 0
      %432 = vmatprep.mubr.bf16.mxu0 0
      %433 = vmatmul.mubr.bf16.gmra.mrb[0].mxu0 %v353
      %v434 = vpop.f32.mrb[0].mxu0
      %v435 = vadd.f32 %v263, %v434
      %v436 = vpop.f32.mrb[0].mxu0
      %v437 = vpop.f32.mrb[0].mxu0
      %v438 = vadd.f32 %v263, %v437
      %v439 = vpop.f32.mrb[0].mxu0
      %440 = vmatprep.mubr.bf16.mxu0 0
      %441 = vmatmul.mubr.bf16.gmra.mrb[0].mxu0 %v356
      %v442 = vpop.f32.mrb[0].mxu0
      %v443 = vadd.f32 %v263, %v442
      %v444 = vpop.f32.mrb[0].mxu0
      %v445 = vpop.f32.mrb[0].mxu0
      %v446 = vadd.f32 %v263, %v445
      %v447 = vpop.f32.mrb[0].mxu0
      %448 = vmatprep.mubr.bf16.mxu0 0
      %449 = vmatmul.mubr.bf16.gmra.mrb[0].mxu0 %v359
      %v450 = vpop.f32.mrb[0].mxu0
      %v451 = vadd.f32 %v263, %v450
      %v452 = vpop.f32.mrb[0].mxu0
      %v453 = vpop.f32.mrb[0].mxu0
      %v454 = vadd.f32 %v263, %v453
      %v455 = vpop.f32.mrb[0].mxu0
      %456 = vmatprep.mubr.bf16.mxu0 0
      %457 = vmatmul.mubr.bf16.gmra.mrb[0].mxu0 %v362
      %v458 = vpop.f32.mrb[0].mxu0
      %v459 = vadd.f32 %v263, %v458
      %v460 = vpop.f32.mrb[0].mxu0
      %v461 = vpop.f32.mrb[0].mxu0
      %v462 = vadd.f32 %v263, %v461
      %v463 = vpop.f32.mrb[0].mxu0
      %464 = vmatprep.mubr.bf16.mxu0 0
      %465 = vmatmul.mubr.bf16.gmra.mrb[0].mxu0 %v365
      %v466 = vpop.f32.mrb[0].mxu0
      %v467 = vadd.f32 %v263, %v466
      %v468 = vpop.f32.mrb[0].mxu0
      %v469 = vpop.f32.mrb[0].mxu0
      %v470 = vadd.f32 %v263, %v469
      %v471 = vpop.f32.mrb[0].mxu0
      %472 = vmatprep.mubr.bf16.mxu0 0
      %473 = vmatmul.mubr.bf16.gmra.mrb[0].mxu0 %v368
      %v474 = vpop.f32.mrb[0].mxu0
      %v475 = vadd.f32 %v263, %v474
      %v476 = vpop.f32.mrb[0].mxu0
      %v477 = vpop.f32.mrb[0].mxu0
      %v478 = vadd.f32 %v263, %v477
      %v479 = vpop.f32.mrb[0].mxu0
      %480 = vmatprep.mubr.bf16.mxu0 0
      %481 = vmatmul.mubr.bf16.gmra.mrb[0].mxu0 %v371
      %v482 = vpop.f32.mrb[0].mxu0
      %v483 = vadd.f32 %v263, %v482
      %v484 = vpop.f32.mrb[0].mxu0
      %v485 = vpop.f32.mrb[0].mxu0
      %v486 = vadd.f32 %v263, %v485
      %v487 = vpop.f32.mrb[0].mxu0
      %488 = vmatprep.mubr.bf16.mxu0 0
      %489 = vmatmul.mubr.bf16.gmra.mrb[0].mxu0 %v374
      %v490 = vpop.f32.mrb[0].mxu0
      %v491 = vadd.f32 %v263, %v490
      %v492 = vpop.f32.mrb[0].mxu0
      %v493 = vpop.f32.mrb[0].mxu0
      %v494 = vadd.f32 %v263, %v493
      %v495 = vpop.f32.mrb[0].mxu0
      %496 = vmatprep.mubr.bf16.mxu0 0
      %497 = vmatmul.mubr.bf16.gmra.mrb[0].mxu0 %v377
      %v498 = vpop.f32.mrb[0].mxu0
      %v499 = vadd.f32 %v263, %v498
      %v500 = vpop.f32.mrb[0].mxu0
      %v501 = vpop.f32.mrb[0].mxu0
      %v502 = vadd.f32 %v263, %v501
      %v503 = vpop.f32.mrb[0].mxu0
      %504 = vmatprep.mubr.bf16.mxu0 0
      %505 = vmatmul.mubr.bf16.gmra.mrb[0].mxu0 %v380
      %v506 = vpop.f32.mrb[0].mxu0
      %v507 = vadd.f32 %v263, %v506
      %v508 = vpop.f32.mrb[0].mxu0
      %v509 = vpop.f32.mrb[0].mxu0
      %v510 = vadd.f32 %v263, %v509
      %v511 = vpop.f32.mrb[0].mxu0
      %512 = vmatprep.mubr.bf16.mxu0 0
      %513 = vmatmul.mubr.bf16.gmra.mrb[0].mxu0 %v383
      %v514 = vpop.f32.mrb[0].mxu0
      %v515 = vadd.f32 %v263, %v514
      %v516 = vpop.f32.mrb[0].mxu0
      %v517 = vpop.f32.mrb[0].mxu0
      %v518 = vadd.f32 %v263, %v517
      %v519 = vpop.f32.mrb[0].mxu0
      %520 = vmatprep.mubr.bf16.mxu0 0
      %521 = vmatmul.mubr.bf16.gmra.mrb[0].mxu0 %v386
      %v522 = vpop.f32.mrb[0].mxu0
      %v523 = vadd.f32 %v263, %v522
      %v524 = vpop.f32.mrb[0].mxu0
      %v525 = vpop.f32.mrb[0].mxu0
      %v526 = vadd.f32 %v263, %v525
      %v527 = vpop.f32.mrb[0].mxu0
      %528 = vmatprep.mubr.bf16.mxu0 0
      %529 = vmatmul.mubr.bf16.gmra.mrb[0].mxu0 %v389
      %v530 = vpop.f32.mrb[0].mxu0
      %v531 = vadd.f32 %v263, %v530
      %v532 = vpop.f32.mrb[0].mxu0
      %v533 = vpop.f32.mrb[0].mxu0
      %v534 = vadd.f32 %v263, %v533
      %v535 = vpop.f32.mrb[0].mxu0
      %536 = vmatprep.mubr.bf16.mxu0 0
      %537 = vmatmul.mubr.bf16.gmra.mrb[0].mxu0 %v392
      %v538 = vpop.f32.mrb[0].mxu0
      %v539 = vadd.f32 %v263, %v538
      %v540 = vpop.f32.mrb[0].mxu0
      %v541 = vpop.f32.mrb[0].mxu0
      %v542 = vadd.f32 %v263, %v541
      %v543 = vpop.f32.mrb[0].mxu0
      %544 = vmatprep.mubr.bf16.mxu0 0
      %545 = vmatmul.mubr.bf16.gmra.mrb[0].mxu0 %v395
      %v546 = vpop.f32.mrb[0].mxu0
      %v547 = vadd.f32 %v263, %v546
      %v548 = vpop.f32.mrb[0].mxu0
      %v549 = vpop.f32.mrb[0].mxu0
      %v550 = vadd.f32 %v263, %v549
      %v551 = vpop.f32.mrb[0].mxu0
      %552 = vmatprep.mubr.bf16.mxu0 0
      %553 = vmatmul.mubr.bf16.gmra.mrb[0].mxu0 %v398
      %v554 = vpop.f32.mrb[0].mxu0
      %v555 = vadd.f32 %v263, %v554
      %v556 = vpop.f32.mrb[0].mxu0
      %v557 = vpop.f32.mrb[0].mxu0
      %v558 = vadd.f32 %v263, %v557
      %v559 = vpop.f32.mrb[0].mxu0
      %560 = vdwg.mxu0
      %v561 = vld [vmem:[%s215] sm:$0xff]
      %v562 = vld [vmem:[%s215 + $0x8] sm:$0xff]
      %v563 = vld [vmem:[%s215 + $0x10] sm:$0xff]
      %v564 = vld [vmem:[%s215 + $0x18] sm:$0xff]
      %v565 = vld [vmem:[%s215 + $0x20] sm:$0xff]
      %v566 = vld [vmem:[%s215 + $0x28] sm:$0xff]
      %v567 = vld [vmem:[%s215 + $0x30] sm:$0xff]
      %v568 = vld [vmem:[%s215 + $0x38] sm:$0xff]
      %v569 = vld [vmem:[%s215 + $0x40] sm:$0xff]
      %v570 = vld [vmem:[%s215 + $0x48] sm:$0xff]
      %v571 = vld [vmem:[%s215 + $0x50] sm:$0xff]
      %v572 = vld [vmem:[%s215 + $0x58] sm:$0xff]
      %v573 = vld [vmem:[%s215 + $0x60] sm:$0xff]
      %v574 = vld [vmem:[%s215 + $0x68] sm:$0xff]
      %v575 = vld [vmem:[%s215 + $0x70] sm:$0xff]
      %v576 = vld [vmem:[%s215 + $0x78] sm:$0xff]
      %v577 = vld [vmem:[%s215 + $0x80] sm:$0xff]
      %v578 = vld [vmem:[%s215 + $0x88] sm:$0xff]
      %v579 = vld [vmem:[%s215 + $0x90] sm:$0xff]
      %v580 = vld [vmem:[%s215 + $0x98] sm:$0xff]
      %v581 = vld [vmem:[%s215 + $0xa0] sm:$0xff]
      %v582 = vld [vmem:[%s215 + $0xa8] sm:$0xff]
      %v583 = vld [vmem:[%s215 + $0xb0] sm:$0xff]
      %v584 = vld [vmem:[%s215 + $0xb8] sm:$0xff]
      %v585 = vld [vmem:[%s215 + $0xc0] sm:$0xff]
      %v586 = vld [vmem:[%s215 + $0xc8] sm:$0xff]
      %v587 = vld [vmem:[%s215 + $0xd0] sm:$0xff]
      %v588 = vld [vmem:[%s215 + $0xd8] sm:$0xff]
      %v589 = vld [vmem:[%s215 + $0xe0] sm:$0xff]
      %v590 = vld [vmem:[%s215 + $0xe8] sm:$0xff]
      %v591 = vld [vmem:[%s215 + $0xf0] sm:$0xff]
      %v592 = vld [vmem:[%s215 + $0xf8] sm:$0xff]
      %v593 = vadd.f32 %v435, %v561
      %v594 = vadd.f32 %v438, %v562
      %v595 = vadd.f32 %v443, %v563
      %v596 = vadd.f32 %v446, %v564
      %v597 = vadd.f32 %v451, %v565
      %v598 = vadd.f32 %v454, %v566
      %v599 = vadd.f32 %v459, %v567
      %v600 = vadd.f32 %v462, %v568
      %v601 = vadd.f32 %v467, %v569
      %v602 = vadd.f32 %v470, %v570
      %v603 = vadd.f32 %v475, %v571
      %v604 = vadd.f32 %v478, %v572
      %v605 = vadd.f32 %v483, %v573
      %v606 = vadd.f32 %v486, %v574
      %v607 = vadd.f32 %v491, %v575
      %v608 = vadd.f32 %v494, %v576
      %v609 = vadd.f32 %v499, %v577
      %v610 = vadd.f32 %v502, %v578
      %v611 = vadd.f32 %v507, %v579
      %v612 = vadd.f32 %v510, %v580
      %v613 = vadd.f32 %v515, %v581
      %v614 = vadd.f32 %v518, %v582
      %v615 = vadd.f32 %v523, %v583
      %v616 = vadd.f32 %v526, %v584
      %v617 = vadd.f32 %v531, %v585
      %v618 = vadd.f32 %v534, %v586
      %v619 = vadd.f32 %v539, %v587
      %v620 = vadd.f32 %v542, %v588
      %v621 = vadd.f32 %v547, %v589
      %v622 = vadd.f32 %v550, %v590
      %v623 = vadd.f32 %v555, %v591
      %v624 = vadd.f32 %v558, %v592
      %vm625 = vcmask 261120
      %626 = vst.msk [vmem:[%s221] sm:$0xff] %vm625, %v593
      %627 = vst.msk [vmem:[%s221 + $0x8] sm:$0xff] %vm625, %v594
      %628 = vst.msk [vmem:[%s221 + $0x10] sm:$0xff] %vm625, %v595
      %629 = vst.msk [vmem:[%s221 + $0x18] sm:$0xff] %vm625, %v596
      %630 = vst.msk [vmem:[%s221 + $0x20] sm:$0xff] %vm625, %v597
      %631 = vst.msk [vmem:[%s221 + $0x28] sm:$0xff] %vm625, %v598
      %632 = vst.msk [vmem:[%s221 + $0x30] sm:$0xff] %vm625, %v599
      %633 = vst.msk [vmem:[%s221 + $0x38] sm:$0xff] %vm625, %v600
      %634 = vst.msk [vmem:[%s221 + $0x40] sm:$0xff] %vm625, %v601
      %635 = vst.msk [vmem:[%s221 + $0x48] sm:$0xff] %vm625, %v602
      %636 = vst.msk [vmem:[%s221 + $0x50] sm:$0xff] %vm625, %v603
      %637 = vst.msk [vmem:[%s221 + $0x58] sm:$0xff] %vm625, %v604
      %638 = vst.msk [vmem:[%s221 + $0x60] sm:$0xff] %vm625, %v605
      %639 = vst.msk [vmem:[%s221 + $0x68] sm:$0xff] %vm625, %v606
      %640 = vst.msk [vmem:[%s221 + $0x70] sm:$0xff] %vm625, %v607
      %641 = vst.msk [vmem:[%s221 + $0x78] sm:$0xff] %vm625, %v608
      %642 = vst.msk [vmem:[%s221 + $0x80] sm:$0xff] %vm625, %v609
      %643 = vst.msk [vmem:[%s221 + $0x88] sm:$0xff] %vm625, %v610
      %644 = vst.msk [vmem:[%s221 + $0x90] sm:$0xff] %vm625, %v611
      %645 = vst.msk [vmem:[%s221 + $0x98] sm:$0xff] %vm625, %v612
      %646 = vst.msk [vmem:[%s221 + $0xa0] sm:$0xff] %vm625, %v613
      %647 = vst.msk [vmem:[%s221 + $0xa8] sm:$0xff] %vm625, %v614
      %648 = vst.msk [vmem:[%s221 + $0xb0] sm:$0xff] %vm625, %v615
      %649 = vst.msk [vmem:[%s221 + $0xb8] sm:$0xff] %vm625, %v616
      %650 = vst.msk [vmem:[%s221 + $0xc0] sm:$0xff] %vm625, %v617
      %651 = vst.msk [vmem:[%s221 + $0xc8] sm:$0xff] %vm625, %v618
      %652 = vst.msk [vmem:[%s221 + $0xd0] sm:$0xff] %vm625, %v619
      %653 = vst.msk [vmem:[%s221 + $0xd8] sm:$0xff] %vm625, %v620
      %654 = vst.msk [vmem:[%s221 + $0xe0] sm:$0xff] %vm625, %v621
      %655 = vst.msk [vmem:[%s221 + $0xe8] sm:$0xff] %vm625, %v622
      %656 = vst.msk [vmem:[%s221 + $0xf0] sm:$0xff] %vm625, %v623
      %657 = vst.msk [vmem:[%s221 + $0xf8] sm:$0xff] %vm625, %v624
      %s658 = smul.u32 32, %s15
      %p659 = scmp.lt.s32.totalorder %s658, 63
      %s660 = scalar_select %p659, %s658, 63
      %s661 = smul.addr %s660, 8
      %s662 = scalar_lea.vmem %s4, %s661
      // Predicated region
      $region37: #{_forward_impl.24} parent=35 // pred_check
        %p663 = pneg %p127
      $region38: #{_forward_impl.24} parent=35 // pred_check_branch
        %665 = sbr.rel (%p663) target = $region40
      $region39: #{_forward_impl.24} parent=35 // pred_region
        %s666 = smul.u32 32, %s15
      $region40: #{_forward_impl.24} parent=35 // pred_fallthru
        _
    $region36: #{_forward_impl.24} parent=5 // pred_fallthru
      _
    %p667 = scmp.le.s32.totalorder 2, %s10
    // Predicated region
    $region41: #{_forward_impl.24} parent=5 // pred_check
      %p668 = pneg %p667
    $region42: #{_forward_impl.24} parent=5 // pred_check_branch
      %670 = sbr.rel (%p668) target = $region44
    $region43: #{_forward_impl.24} parent=5 // pred_region
      %s671 = ssub.s32 %s10, 2
      // Predicated region
      $region45: #{_forward_impl.24} parent=43 // pred_check
        %p672 = pneg %p133
      $region46: #{_forward_impl.24} parent=43 // pred_check_branch
        %674 = sbr.rel (%p672) target = $region48
      $region47: #{_forward_impl.24} parent=43 // pred_region
        %s675 = smul.u32 32, %s16
        %p676 = scmp.lt.s32.totalorder %s675, 63
        %s677 = scalar_select %p676, %s675, 63
        %s678 = smul.addr %s677, 8
        %s679 = scalar_lea.vmem %s4, %s678
      $region48: #{_forward_impl.24} parent=43 // pred_fallthru
        _
    $region44: #{_forward_impl.24} parent=5 // pred_fallthru
      _
  $region6: #{_forward_impl.24} parent=0 // loop_footer
    %s14 = sadd.s32 1, %s10
  $region7: #{_forward_impl.24} parent=0 // loop_footer_branch
    %9 = sbr.rel target = $region3
  $region8: #{_forward_impl.24} parent=0 // loop_exit
    _

// kernel: _forward_impl.23
$region0: #{_forward_impl.23}
  #allocation0 [shape = 'u32[]', space=smem, size = 0x4, offset = 0x4, fixed_abs, tag = 'smem constant byte address 0x4 - core index']
  #allocation1 [shape = 'u32[144,128]{1,0:T(1,128)}', space=vmem, size = 0x12000, scoped, tag = 'internal scratch']
  #allocation2 [shape = 'f32[1,288]{1,0:T(1,128)}', space=vmem, size = 0x600, scoped, tag = 'scratch operand']
  %s0 = inlined_call_operand.vmem [shape: f32[2,8,8,32], index: 0, kind: input, shape index: {}]
  %s1 = inlined_call_operand.vmem [shape: f32[288,32], index: 1, kind: input, shape index: {}]
  %s2 = inlined_call_operand.vmem [shape: f32[1,32], index: 2, kind: input, shape index: {}]
  %s3 = inlined_call_operand.hbm [shape: f32[2,1,32], index: 3, kind: output, shape index: {}]
  %s4 = sld [smem:[#allocation0]]
  $region45: #{_forward_impl.23} parent=0
    _
  %s6 = ssub.s32 1, %s4
  %s7 = scalar_select 0, %s6, %s4
  $region1: #{_forward_impl.23} parent=0
    #allocation3 [shape = 'u8[1024]{0}', space=vmem, size = 0x400, scoped, tag = 'output window, operand 0']
    #allocation4 [shape = 's32[2]{0}', space=sflag, size = 0x8, scoped, tag = 'scoped memory for _forward_impl.23']
    %8 = vsyncpa [#allocation4], 0
    %s9 = scalar_lea.sflag [#allocation4], 1
    %10 = vsyncpa %s9, 0
    loop: start=0, step=1, limit=4
    $region2: #{_forward_impl.23} parent=1 // loop_pre_header
      _
    $region3: #{_forward_impl.23} parent=1 // loop_header
      %s12 = sphi 0, %s16
      %p13 = scmp.ge.s32.totalorder %s12, 4
      %s22 = sphi 0, %s24
      %s25 = sphi 0, %s22
      %s26 = sphi 0, %s25
      %s42 = sphi 0, %s26
      %s46 = sphi 0, %s46
      %s48 = sphi 0, %s46
      %s49 = sphi 0, %s48
      %s63 = sphi 0, %s49
      %s67 = sphi 0, %s67
      %s69 = sphi 0, %s67
      %s70 = sphi 0, %s69
      %s84 = sphi 0, %s70
      %s90 = sphi 0, %s92
      %s93 = sphi 0, %s90
      %s94 = sphi 0, %s93
      %s110 = sphi 0, %s94
    $region4: #{_forward_impl.23} parent=1 // loop_header_branch
      %15 = sbr.rel (%p13) target = $region8
    $region5: #{_forward_impl.23} parent=1 // loop_body
      %s17 = ssub.s32 %s12, 1
      %s18 = ssub.s32 %s12, 2
      %s19 = sadd.s32 %s12, 1
      %s20 = ssub.s32 %s12, %s19
      %p21 = scmp.eq.s32.totalorder %s20, 0
      %s23 = sadd.s32 %s22, 1
      %s24 = scalar_select %p21, %s22, %s23
      %p27 = pneg %p21
      %p28 = scmp.eq.s32.totalorder %s12, 1
      %p29 = por %p27, %p28
      %p30 = scmp.ne.s32.totalorder %s22, %s25
      %p31 = scmp.eq.s32.totalorder %s12, 0
      %p32 = por %p30, %p31
      %p33 = scmp.ne.s32.totalorder %s22, %s25
      %p34 = scmp.eq.s32.totalorder %s17, 1
      %p35 = por %p33, %p34
      %p36 = scmp.ne.s32.totalorder %s25, %s26
      %p37 = scmp.eq.s32.totalorder %s17, 0
      %p38 = por %p36, %p37
      %p39 = scmp.ne.s32.totalorder %s25, %s26
      %p40 = scmp.eq.s32.totalorder %s18, 1
      %p41 = por %p39, %p40
      %p43 = scmp.ne.s32.totalorder %s26, %s42
      %p44 = scmp.eq.s32.totalorder %s18, 0
      %p45 = por %p43, %p44
      %s47 = sadd.s32 %s46, 1
      %p50 = scmp.eq.s32.totalorder %s12, 1
      %p51 = scmp.ne.s32.totalorder %s46, %s48
      %p52 = scmp.eq.s32.totalorder %s12, 0
      %p53 = por %p51, %p52
      %p54 = scmp.ne.s32.totalorder %s46, %s48
      %p55 = scmp.eq.s32.totalorder %s17, 1
      %p56 = por %p54, %p55
      %p57 = scmp.ne.s32.totalorder %s48, %s49
      %p58 = scmp.eq.s32.totalorder %s17, 0
      %p59 = por %p57, %p58
      %p60 = scmp.ne.s32.totalorder %s48, %s49
      %p61 = scmp.eq.s32.totalorder %s18, 1
      %p62 = por %p60, %p61
      %p64 = scmp.ne.s32.totalorder %s49, %s63
      %p65 = scmp.eq.s32.totalorder %s18, 0
      %p66 = por %p64, %p65
      %s68 = sadd.s32 %s67, 1
      %p71 = scmp.eq.s32.totalorder %s12, 1
      %p72 = scmp.ne.s32.totalorder %s67, %s69
      %p73 = scmp.eq.s32.totalorder %s12, 0
      %p74 = por %p72, %p73
      %p75 = scmp.ne.s32.totalorder %s67, %s69
      %p76 = scmp.eq.s32.totalorder %s17, 1
      %p77 = por %p75, %p76
      %p78 = scmp.ne.s32.totalorder %s69, %s70
      %p79 = scmp.eq.s32.totalorder %s17, 0
      %p80 = por %p78, %p79
      %p81 = scmp.ne.s32.totalorder %s69, %s70
      %p82 = scmp.eq.s32.totalorder %s18, 1
      %p83 = por %p81, %p82
      %p85 = scmp.ne.s32.totalorder %s70, %s84
      %p86 = scmp.eq.s32.totalorder %s18, 0
      %p87 = por %p85, %p86
      %s88 = ssub.s32 %s12, %s19
      %p89 = scmp.eq.s32.totalorder %s88, 0
      %s91 = sadd.s32 %s90, 1
      %s92 = scalar_select %p89, %s90, %s91
      %p95 = pneg %p89
      %p96 = scmp.eq.s32.totalorder %s12, 1
      %p97 = por %p95, %p96
      %p98 = scmp.ne.s32.totalorder %s90, %s93
      %p99 = scmp.eq.s32.totalorder %s12, 0
      %p100 = por %p98, %p99
      %p101 = scmp.ne.s32.totalorder %s90, %s93
      %p102 = scmp.eq.s32.totalorder %s17, 1
      %p103 = por %p101, %p102
      %p104 = scmp.ne.s32.totalorder %s93, %s94
      %p105 = scmp.eq.s32.totalorder %s17, 0
      %p106 = por %p104, %p105
      %p107 = scmp.ne.s32.totalorder %s93, %s94
      %p108 = scmp.eq.s32.totalorder %s18, 1
      %p109 = por %p107, %p108
      %p111 = scmp.ne.s32.totalorder %s94, %s110
      %p112 = scmp.eq.s32.totalorder %s18, 0
      %p113 = por %p111, %p112
      %p114 = scmp.le.s32.totalorder 1, %s12
      %p115 = scmp.lt.s32.totalorder %s12, 3
      %p116 = pnand %p114, %p115
      %p117 = pneg %p116
      // Predicated region
      $region9: #{_forward_impl.23} parent=5 // pred_check
        _
      $region10: #{_forward_impl.23} parent=5 // pred_check_branch
        %119 = sbr.rel (%p116) target = $region12
      $region11: #{_forward_impl.23} parent=5 // pred_region
        %s120 = ssub.s32 %s12, 1
        // Predicated region
        $region13: #{_forward_impl.23} parent=11 // pred_check
          %p121 = pneg %p59
        $region14: #{_forward_impl.23} parent=11 // pred_check_branch
          %123 = sbr.rel (%p121) target = $region16
        $region15: #{_forward_impl.23} parent=11 // pred_region
          _
        $region16: #{_forward_impl.23} parent=11 // pred_fallthru
          _
        // Predicated region
        $region17: #{_forward_impl.23} parent=11 // pred_check
          %p124 = pneg %p80
        $region18: #{_forward_impl.23} parent=11 // pred_check_branch
          %126 = sbr.rel (%p124) target = $region20
        $region19: #{_forward_impl.23} parent=11 // pred_region
          _
        $region20: #{_forward_impl.23} parent=11 // pred_fallthru
          _
      $region12: #{_forward_impl.23} parent=5 // pred_fallthru
        _
      %p127 = scmp.lt.s32.totalorder %s12, 2
      // Predicated region
      $region21: #{_forward_impl.23} parent=5 // pred_check
        %p128 = pneg %p127
      $region22: #{_forward_impl.23} parent=5 // pred_check_branch
        %130 = sbr.rel (%p128) target = $region24
      $region23: #{_forward_impl.23} parent=5 // pred_region
        // Predicated region
        $region25: #{_forward_impl.23} parent=23 // pred_check
          %p131 = pneg %p32
        $region26: #{_forward_impl.23} parent=23 // pred_check_branch
          %133 = sbr.rel (%p131) target = $region28
        $region27: #{_forward_impl.23} parent=23 // pred_region
          %p134 = scmp.lt.s32.totalorder %s12, 1
          %s135 = scalar_select %p134, %s12, 1
          %s136 = smul.addr %s135, 8
          %s137 = smul.addr %s136, 8
          %s138 = scalar_lea.vmem %s0, %s137
        $region28: #{_forward_impl.23} parent=23 // pred_fallthru
          _
      $region24: #{_forward_impl.23} parent=5 // pred_fallthru
        _
      %p139 = scmp.le.s32.totalorder 1, %s12
      %p140 = scmp.lt.s32.totalorder %s12, 3
      %p141 = pnand %p139, %p140
      %p142 = pneg %p141
      // Predicated region
      $region29: #{_forward_impl.23} parent=5 // pred_check
        _
      $region30: #{_forward_impl.23} parent=5 // pred_check_branch
        %144 = sbr.rel (%p141) target = $region32
      $region31: #{_forward_impl.23} parent=5 // pred_region
        %s145 = ssub.s32 %s12, 1
        %p146 = scmp.lt.s32.totalorder %s17, 1
        %s147 = scalar_select %p146, %s17, 1
        %s148 = smul.addr %s147, 8
        %s149 = smul.addr %s148, 8
        %s150 = scalar_lea.vmem %s0, %s149
        %p151 = pneg %p38
        %p152 = pneg %p35
        %p153 = pneg %p59
        %p154 = pneg %p56
        %p155 = pneg %p80
        %p156 = pneg %p77
        %p157 = pneg %p106
        %p158 = pneg %p103
        %s159 = sand.u32 %s93, 1
        %s160 = scalar_lea.sflag [#allocation4], %s159
        %s161 = sand.u32 %s93, 1
        %s162 = scalar_lea.vmem [#allocation3], %s161
        %p163 = scmp.lt.s32.totalorder %s17, 1
        %s164 = scalar_select %p163, %s17, 1
        %s165 = smul.addr %s164, 8
        %s166 = smul.addr %s165, 8
        %s167 = scalar_lea.vmem %s0, %s166
        %v168 = vld [vmem:[%s167] sm:$0xff]
        %v169 = vld [vmem:[%s167 + $0x8] sm:$0xff]
        %v170 = vld [vmem:[%s167 + $0x10] sm:$0xff]
        %v171 = vld [vmem:[%s167 + $0x18] sm:$0xff]
        %v172 = vld [vmem:[%s167 + $0x20] sm:$0xff]
        %v173 = vld [vmem:[%s167 + $0x28] sm:$0xff]
        %v174 = vld [vmem:[%s167 + $0x30] sm:$0xff]
        %v175 = vld [vmem:[%s167 + $0x38] sm:$0xff]
        %vm176 = vcmask 261120
        %v177 = vsel %vm176, %v168, 0.0
        %v178 = vsel %vm176, %v169, 0.0
        %v179 = vadd.f32 %v177, %v178
        %v180 = vsel %vm176, %v170, 0.0
        %v181 = vadd.f32 %v179, %v180
        %v182 = vsel %vm176, %v171, 0.0
        %v183 = vadd.f32 %v181, %v182
        %v184 = vsel %vm176, %v172, 0.0
        %v185 = vadd.f32 %v183, %v184
        %v186 = vsel %vm176, %v173, 0.0
        %v187 = vadd.f32 %v185, %v186
        %v188 = vsel %vm176, %v174, 0.0
        %v189 = vadd.f32 %v187, %v188
        %v190 = vsel %vm176, %v175, 0.0
        %v191 = vadd.f32 %v189, %v190
        %v192 = vrot.slane %v177, 4
        %v193 = vadd.f32 %v177, %v192
        %v194 = vrot.slane %v193, 2
        %v195 = vadd.f32 %v193, %v194
        %v196 = vrot.slane %v195, 1
        %v197 = vadd.f32 %v195, %v196
        %v198 = vrot.slane %v190, 4
        %v199 = vadd.f32 %v190, %v198
        %v200 = vrot.slane %v199, 2
        %v201 = vadd.f32 %v199, %v200
        %v202 = vrot.slane %v201, 1
        %v203 = vadd.f32 %v201, %v202
        %v204 = vsel %vm176, %v191, 0.0
        %v205 = vrot.slane %v204, 4
        %v206 = vadd.f32 %v204, %v205
        %v207 = vrot.slane %v206, 2
        %v208 = vadd.f32 %v206, %v207
        %v209 = vrot.slane %v208, 1
        %v210 = vadd.f32 %v208, %v209
        %v211 = vlaneseq
        %vm212 = vcmp.ge.s32.totalorder %v211, 0
        %vm213 = vcmp.lt.s32.totalorder %v211, 32
        %vm214 = vmand %vm212, %vm213
        %215 = vst.msk [vmem:[#allocation2] sm:$0x1] %vm214, %v210
        %v218 = vunpack.c.l.s4 1966171168
        %v219 = vunpack.c.0.s8 %v218
        %v220 = vlaneseq
        %v221 = vshrl.u32 %v220, 7
        %v222 = vsub.s32 %v219, %v221
        %v223 = vrot.slane %v203, %v222
        %v225 = vunpack.c.l.s4 1966171168
        %v226 = vunpack.c.0.s8 %v225
        %v227 = vlaneseq
        %v228 = vshrl.u32 %v227, 7
        %v229 = vsub.s32 %v226, %v228
        %v230 = vrot.slane %v223, %v229
        %231 = vrot.lane.b32.xlu0 %v230, 32
        %v232 = vpop.permute.xlu0 %231
        %vm234 = vcmp.ge.s32.totalorder %v211, 32
        %vm235 = vcmp.lt.s32.totalorder %v211, 64
        %vm236 = vmand %vm234, %vm235
        %237 = vst.msk [vmem:[#allocation2] sm:$0x1] %vm236, %v232
        %v240 = vunpack.c.l.s4 1966171168
        %v241 = vunpack.c.0.s8 %v240
        %v242 = vlaneseq
        %v243 = vshrl.u32 %v242, 7
        %v244 = vsub.s32 %v241, %v243
        %v245 = vrot.slane %v197, %v244
        %v247 = vunpack.c.l.s4 1966171168
        %v248 = vunpack.c.0.s8 %v247
        %v249 = vlaneseq
        %v250 = vshrl.u32 %v249, 7
        %v251 = vsub.s32 %v248, %v250
        %v252 = vrot.slane %v245, %v251
        %253 = vrot.lane.b32.xlu0 %v252, 64
        %v254 = vpop.permute.xlu0 %253
        %vm256 = vcmp.ge.s32.totalorder %v211, 64
        %vm257 = vcmp.lt.s32.totalorder %v211, 96
        %vm258 = vmand %vm256, %vm257
        %259 = vst.msk [vmem:[#allocation2] sm:$0x1] %vm258, %v254
        %v261 = vcombine.high %v191, %v191
        %v263 = vunpack.c.l.s4 1966171168
        %v264 = vunpack.c.0.s8 %v263
        %v265 = vlaneseq
        %v266 = vshrl.u32 %v265, 7
        %v267 = vsub.s32 %v264, %v266
        %v268 = vrot.slane %v261, %v267
        %v269 = vcombine.high %v268, %v268
        %v271 = vunpack.c.l.s4 1966171168
        %v272 = vunpack.c.0.s8 %v271
        %v273 = vlaneseq
        %v274 = vshrl.u32 %v273, 7
        %v275 = vsub.s32 %v272, %v274
        %v276 = vrot.slane %v269, %v275
        %v277 = vcombine.high %v276, %v276
        %278 = vrot.lane.b32.xlu0 %v277, 96
        %v279 = vpop.permute.xlu0 %278
        %vm281 = vcmp.ge.s32.totalorder %v211, 96
        %vm282 = vcmp.lt.s32.totalorder %v211, 128
        %vm283 = vmand %vm281, %vm282
        %284 = vst.msk [vmem:[#allocation2] sm:$0x1] %vm283, %v279
        %285 = vst.msk [vmem:[#allocation2 + $0x1] sm:$0x1] %vm214, %v191
        %v287 = vcombine.high %v175, %v175
        %v289 = vunpack.c.l.s4 1966171168
        %v290 = vunpack.c.0.s8 %v289
        %v291 = vlaneseq
        %v292 = vshrl.u32 %v291, 7
        %v293 = vsub.s32 %v290, %v292
        %v294 = vrot.slane %v175, %v293
        %v296 = vunpack.c.l.s4 1966171168
        %v297 = vunpack.c.0.s8 %v296
        %v298 = vlaneseq
        %v299 = vshrl.u32 %v298, 7
        %v300 = vsub.s32 %v297, %v299
        %v301 = vrot.slane %v287, %v300
        %v302 = vcombine.high %v301, %v301
        %v304 = vunpack.c.l.s4 1966171168
        %v305 = vunpack.c.0.s8 %v304
        %v306 = vlaneseq
        %v307 = vshrl.u32 %v306, 7
        %v308 = vsub.s32 %v305, %v307
        %v309 = vrot.slane %v294, %v308
        %v311 = vunpack.c.l.s4 1966171168
        %v312 = vunpack.c.0.s8 %v311
        %v313 = vlaneseq
        %v314 = vshrl.u32 %v313, 7
        %v315 = vsub.s32 %v312, %v314
        %v316 = vrot.slane %v302, %v315
        %v317 = vcombine.high %v316, %v316
        %318 = vrot.lane.b32.xlu0 %v317, 32
        %v319 = vpop.permute.xlu0 %318
        %321 = vst.msk [vmem:[#allocation2 + $0x1] sm:$0x1] %vm236, %v319
        %322 = vrot.lane.b32.xlu0 %v309, 64
        %v323 = vpop.permute.xlu0 %322
        %325 = vst.msk [vmem:[#allocation2 + $0x1] sm:$0x1] %vm258, %v323
        %v327 = vcombine.high %v168, %v168
        %v329 = vunpack.c.l.s4 1966171168
        %v330 = vunpack.c.0.s8 %v329
        %v331 = vlaneseq
        %v332 = vshrl.u32 %v331, 7
        %v333 = vsub.s32 %v330, %v332
        %v334 = vrot.slane %v327, %v333
        %v335 = vcombine.high %v334, %v334
        %v337 = vunpack.c.l.s4 1966171168
        %v338 = vunpack.c.0.s8 %v337
        %v339 = vlaneseq
        %v340 = vshrl.u32 %v339, 7
        %v341 = vsub.s32 %v338, %v340
        %v342 = vrot.slane %v335, %v341
        %v343 = vcombine.high %v342, %v342
        %344 = vrot.lane.b32.xlu0 %v343, 96
        %v345 = vpop.permute.xlu0 %344
        %347 = vst.msk [vmem:[#allocation2 + $0x1] sm:$0x1] %vm283, %v345
        %348 = vst.msk [vmem:[#allocation2 + $0x2] sm:$0x1] %vm214, %v168
        %v349 = vld [vmem:[#allocation2] sm:$0x7]
        %v350 = vld [vmem:[%s1] sm:$0xff]
        %v351 = vld [vmem:[%s1 + $0x8] sm:$0xff]
        %v352 = vld [vmem:[%s1 + $0x10] sm:$0xff]
        %v353 = vld [vmem:[%s1 + $0x18] sm:$0xff]
        %v354 = vld [vmem:[%s1 + $0x20] sm:$0xff]
        %v355 = vld [vmem:[%s1 + $0x28] sm:$0xff]
        %v356 = vld [vmem:[%s1 + $0x30] sm:$0xff]
        %v357 = vld [vmem:[%s1 + $0x38] sm:$0xff]
        %v358 = vld [vmem:[%s1 + $0x40] sm:$0xff]
        %v359 = vld [vmem:[%s1 + $0x48] sm:$0xff]
        %v360 = vld [vmem:[%s1 + $0x50] sm:$0xff]
        %v361 = vld [vmem:[%s1 + $0x58] sm:$0xff]
        %v362 = vld [vmem:[%s1 + $0x60] sm:$0xff]
        %v363 = vld [vmem:[%s1 + $0x68] sm:$0xff]
        %v364 = vld [vmem:[%s1 + $0x70] sm:$0xff]
        %v365 = vld [vmem:[%s1 + $0x78] sm:$0xff]
        %v366 = vld [vmem:[%s1 + $0x80] sm:$0xff]
        %v367 = vld [vmem:[%s1 + $0x88] sm:$0xff]
        %v368 = vld [vmem:[%s1 + $0x90] sm:$0xff]
        %v369 = vld [vmem:[%s1 + $0x98] sm:$0xff]
        %v370 = vld [vmem:[%s1 + $0xa0] sm:$0xff]
        %v371 = vld [vmem:[%s1 + $0xa8] sm:$0xff]
        %v372 = vld [vmem:[%s1 + $0xb0] sm:$0xff]
        %v373 = vld [vmem:[%s1 + $0xb8] sm:$0xff]
        %v374 = vld [vmem:[%s1 + $0xc0] sm:$0xff]
        %v375 = vld [vmem:[%s1 + $0xc8] sm:$0xff]
        %v376 = vld [vmem:[%s1 + $0xd0] sm:$0xff]
        %v377 = vld [vmem:[%s1 + $0xd8] sm:$0xff]
        %v378 = vld [vmem:[%s1 + $0xe0] sm:$0xff]
        %v379 = vld [vmem:[%s1 + $0xe8] sm:$0xff]
        %v380 = vld [vmem:[%s1 + $0xf0] sm:$0xff]
        %v381 = vld [vmem:[%s1 + $0xf8] sm:$0xff]
        %v382 = vld [vmem:[%s1 + $0x100] sm:$0xff]
        %v383 = vld [vmem:[%s1 + $0x108] sm:$0xff]
        %v384 = vld [vmem:[%s1 + $0x110] sm:$0xff]
        %v385 = vld [vmem:[%s1 + $0x118] sm:$0xff]
        %v387 = vlaneseq
        %v388 = vshrl.u32 %v387, 7
        %v389 = vsub.s32 0, %v388
        %v390 = vrot.slane %v349, %v389
        %v391 = vlaneseq
        %v392 = vshrl.u32 %v391, 7
        %v393 = vsub.s32 1, %v392
        %v394 = vrot.slane %v349, %v393
        %v395 = vlaneseq
        %v396 = vshrl.u32 %v395, 7
        %v397 = vsub.s32 2, %v396
        %v398 = vrot.slane %v349, %v397
        %v401 = vsel %vm176, %v398, 0
        %403 = vmatprep.subr.mxu0 0.0
        %404 = vmatpush1.msra.mxu0 %v350
        %405 = vmatprep.subr.mxu0 0.0
        %406 = vmatpush1.msra.mxu0 %v351
        %407 = vmatprep.subr.mxu0 0.0
        %408 = vmatpush1.msra.mxu0 %v352
        %409 = vmatprep.subr.mxu0 0.0
        %410 = vmatpush1.msra.mxu0 %v353
        %411 = vmatprep.subr.mxu0 0.0
        %412 = vmatpush1.msra.mxu0 %v354
        %413 = vmatprep.subr.mxu0 0.0
        %414 = vmatpush1.msra.mxu0 %v355
        %415 = vmatprep.subr.mxu0 0.0
        %416 = vmatpush1.msra.mxu0 %v356
        %417 = vmatprep.subr.mxu0 0.0
        %418 = vmatpush1.msra.mxu0 %v357
        %419 = vmatprep.subr.mxu0 0.0
        %420 = vmatpush1.msra.mxu0 %v358
        %421 = vmatprep.subr.mxu0 0.0
        %422 = vmatpush1.msra.mxu0 %v359
        %423 = vmatprep.subr.mxu0 0.0
        %424 = vmatpush1.msra.mxu0 %v360
        %425 = vmatprep.subr.mxu0 0.0
        %426 = vmatpush1.msra.mxu0 %v361
        %427 = vmatprep.subr.mxu0 0.0
        %428 = vmatpush1.msra.mxu0 %v362
        %429 = vmatprep.subr.mxu0 0.0
        %430 = vmatpush1.msra.mxu0 %v363
        %431 = vmatprep.subr.mxu0 0.0
        %432 = vmatpush1.msra.mxu0 %v364
        %433 = vmatprep.subr.mxu0 0.0
        %434 = vmatpush1.msra.mxu0 %v365
        %435 = vmatprep.subr.mxu0 0.0
        %436 = vmatpush1.msra.mxu0 %v366
        %437 = vmatprep.subr.mxu0 0.0
        %438 = vmatpush1.msra.mxu0 %v367
        %439 = vmatprep.subr.mxu0 0.0
        %440 = vmatpush1.msra.mxu0 %v368
        %441 = vmatprep.subr.mxu0 0.0
        %442 = vmatpush1.msra.mxu0 %v369
        %443 = vmatprep.subr.mxu0 0.0
        %444 = vmatpush1.msra.mxu0 %v370
        %445 = vmatprep.subr.mxu0 0.0
        %446 = vmatpush1.msra.mxu0 %v371
        %447 = vmatprep.subr.mxu0 0.0
        %448 = vmatpush1.msra.mxu0 %v372
        %449 = vmatprep.subr.mxu0 0.0
        %450 = vmatpush1.msra.mxu0 %v373
        %451 = vmatprep.subr.mxu0 0.0
        %452 = vmatpush1.msra.mxu0 %v374
        %453 = vmatprep.subr.mxu0 0.0
        %454 = vmatpush1.msra.mxu0 %v375
        %455 = vmatprep.subr.mxu0 0.0
        %456 = vmatpush1.msra.mxu0 %v376
        %457 = vmatprep.subr.mxu0 0.0
        %458 = vmatpush1.msra.mxu0 %v377
        %459 = vmatprep.subr.mxu0 0.0
        %460 = vmatpush1.msra.mxu0 %v378
        %461 = vmatprep.subr.mxu0 0.0
        %462 = vmatpush1.msra.mxu0 %v379
        %463 = vmatprep.subr.mxu0 0.0
        %464 = vmatpush1.msra.mxu0 %v380
        %465 = vmatprep.subr.mxu0 0.0
        %466 = vmatpush1.msra.mxu0 %v381
        %467 = vmatprep.mubr.f32.mxu0 %v394
        %468 = vmatmul.mubr.f32.gmra.mrb[0].mxu0 %v390
        %v469 = vpop.f32.mrb[0].mxu0
        %v470 = vadd.f32 0.0, %v469
        %v471 = vpop.f32.mrb[0].mxu0
        %472 = vdwg.mxu0
        %473 = vmatprep.subr.mxu0 0.0
        %474 = vmatpush1.msra.mxu0 %v382
        %475 = vmatprep.subr.mxu0 0.0
        %476 = vmatpush1.msra.mxu0 %v383
        %477 = vmatprep.subr.mxu0 0.0
        %478 = vmatpush1.msra.mxu0 %v384
        %479 = vmatprep.subr.mxu0 0.0
        %480 = vmatpush1.msra.mxu0 %v385
        %481 = vmatprep.subr.mxu0 0.0
        %482 = vmatpush1.msra.mxu0 0.0
        %483 = vmatprep.subr.mxu0 0.0
        %484 = vmatpush1.msra.mxu0 0.0
        %485 = vmatprep.subr.mxu0 0.0
        %486 = vmatpush1.msra.mxu0 0.0
        %487 = vmatprep.subr.mxu0 0.0
        %488 = vmatpush1.msra.mxu0 0.0
        %489 = vmatprep.subr.mxu0 0.0
        %490 = vmatpush1.msra.mxu0 0.0
        %491 = vmatprep.subr.mxu0 0.0
        %492 = vmatpush1.msra.mxu0 0.0
        %493 = vmatprep.subr.mxu0 0.0
        %494 = vmatpush1.msra.mxu0 0.0
        %495 = vmatprep.subr.mxu0 0.0
        %496 = vmatpush1.msra.mxu0 0.0
        %497 = vmatprep.subr.mxu0 0.0
        %498 = vmatpush1.msra.mxu0 0.0
        %499 = vmatprep.subr.mxu0 0.0
        %500 = vmatpush1.msra.mxu0 0.0
        %501 = vmatprep.subr.mxu0 0.0
        %502 = vmatpush1.msra.mxu0 0.0
        %503 = vmatprep.subr.mxu0 0.0
        %504 = vmatpush1.msra.mxu0 0.0
        %505 = vmatprep.subr.mxu0 0.0
        %506 = vmatpush1.msra.mxu0 0.0
        %507 = vmatprep.subr.mxu0 0.0
        %508 = vmatpush1.msra.mxu0 0.0
        %509 = vmatprep.subr.mxu0 0.0
        %510 = vmatpush1.msra.mxu0 0.0
        %511 = vmatprep.subr.mxu0 0.0
        %512 = vmatpush1.msra.mxu0 0.0
        %513 = vmatprep.subr.mxu0 0.0
        %514 = vmatpush1.msra.mxu0 0.0
        %515 = vmatprep.subr.mxu0 0.0
        %516 = vmatpush1.msra.mxu0 0.0
        %517 = vmatprep.subr.mxu0 0.0
        %518 = vmatpush1.msra.mxu0 0.0
        %519 = vmatprep.subr.mxu0 0.0
        %520 = vmatpush1.msra.mxu0 0.0
        %521 = vmatprep.subr.mxu0 0.0
        %522 = vmatpush1.msra.mxu0 0.0
        %523 = vmatprep.subr.mxu0 0.0
        %524 = vmatpush1.msra.mxu0 0.0
        %525 = vmatprep.subr.mxu0 0.0
        %526 = vmatpush1.msra.mxu0 0.0
        %527 = vmatprep.subr.mxu0 0.0
        %528 = vmatpush1.msra.mxu0 0.0
        %529 = vmatprep.subr.mxu0 0.0
        %530 = vmatpush1.msra.mxu0 0.0
        %531 = vmatprep.subr.mxu0 0.0
        %532 = vmatpush1.msra.mxu0 0.0
        %533 = vmatprep.subr.mxu0 0.0
        %534 = vmatpush1.msra.mxu0 0.0
        %535 = vmatprep.subr.mxu0 0.0
        %536 = vmatpush1.msra.mxu0 0.0
        %537 = vmatprep.mubr.f32.mxu0 0.0
        %538 = vmatmul.mubr.f32.gmra.mrb[0].mxu0 %v401
        %v539 = vpop.f32.mrb[0].mxu0
        %v540 = vadd.f32 %v470, %v539
        %v541 = vpop.f32.mrb[0].mxu0
        %542 = vdwg.mxu0
        %v543 = vmul.f32 %v540, 0.015625
        %v544 = vld [vmem:[%s2] sm:$0x1]
        %v545 = vadd.f32 %v543, %v544
        %vm546 = vcmask 253952
        %547 = vst.msk [vmem:[%s162] sm:$0x1] %vm546, %v545
        %s548 = sand.u32 %s93, 1
        %s549 = scalar_lea.sflag [#allocation4], %s548
        %s550 = sand.u32 %s93, 1
        %s551 = scalar_lea.vmem [#allocation3], %s550
        // Predicated region
        $region33: #{_forward_impl.23} parent=31 // pred_check
          %p552 = pneg %p103
        $region34: #{_forward_impl.23} parent=31 // pred_check_branch
          %554 = sbr.rel (%p552) target = $region36
        $region35: #{_forward_impl.23} parent=31 // pred_region
          %s556 = ssub.s32 16, 16
          %557 = vsyncadd %s549, %s556
          %s558 = smul.addr %s17, 16
          %s559 = scalar_lea.hbm %s3, %s558
          %s561 = sshll.u32 %s551, 4
          %s562 = int_to_ptr.vmem [resolvable:$true] %s561
          %564 = dma.vmem_to_hbm [thread:$0]  %s562, 16, %s559, %s549
        $region36: #{_forward_impl.23} parent=31 // pred_fallthru
          _
      $region32: #{_forward_impl.23} parent=5 // pred_fallthru
        _
      %p565 = scmp.le.s32.totalorder 2, %s12
      // Predicated region
      $region37: #{_forward_impl.23} parent=5 // pred_check
        %p566 = pneg %p565
      $region38: #{_forward_impl.23} parent=5 // pred_check_branch
        %568 = sbr.rel (%p566) target = $region40
      $region39: #{_forward_impl.23} parent=5 // pred_region
        %s569 = ssub.s32 %s12, 2
        // Predicated region
        $region41: #{_forward_impl.23} parent=39 // pred_check
          %p570 = pneg %p109
        $region42: #{_forward_impl.23} parent=39 // pred_check_branch
          %572 = sbr.rel (%p570) target = $region44
        $region43: #{_forward_impl.23} parent=39 // pred_region
          %s573 = sand.u32 %s94, 1
          %s574 = scalar_lea.sflag [#allocation4], %s573
          %s575 = sand.u32 %s94, 1
          %s576 = scalar_lea.vmem [#allocation3], %s575
          %577 = dma.done %s574, 16
        $region44: #{_forward_impl.23} parent=39 // pred_fallthru
          _
      $region40: #{_forward_impl.23} parent=5 // pred_fallthru
        _
    $region6: #{_forward_impl.23} parent=1 // loop_footer
      %s16 = sadd.s32 1, %s12
    $region7: #{_forward_impl.23} parent=1 // loop_footer_branch
      %11 = sbr.rel target = $region3
    $region8: #{_forward_impl.23} parent=1 // loop_exit
      _
    %578 = vsyncpa [#allocation4], 1
    %s579 = scalar_lea.sflag [#allocation4], 1
    %580 = vsyncpa %s579, 1

// kernel: _forward_impl.25
$region0: #{_forward_impl.25}
  #allocation0 [shape = 'u32[]', space=smem, size = 0x4, offset = 0x4, fixed_abs, tag = 'smem constant byte address 0x4 - core index']
  #allocation1 [shape = 'u32[144,128]{1,0:T(1,128)}', space=vmem, size = 0x12000, scoped, tag = 'internal scratch']
  #allocation2 [shape = 'f32[1,288]{1,0:T(1,128)}', space=vmem, size = 0x600, scoped, tag = 'scratch operand']
  %s0 = inlined_call_operand.vmem [shape: f32[2,16,16,32], index: 0, kind: input, shape index: {}]
  %s1 = inlined_call_operand.vmem [shape: f32[288,32], index: 1, kind: input, shape index: {}]
  %s2 = inlined_call_operand.vmem [shape: f32[1,32], index: 2, kind: input, shape index: {}]
  %s3 = inlined_call_operand.hbm [shape: f32[2,1,32], index: 3, kind: output, shape index: {}]
  %s4 = sld [smem:[#allocation0]]
  $region45: #{_forward_impl.25} parent=0
    _
  %s6 = ssub.s32 1, %s4
  %s7 = scalar_select 0, %s6, %s4
  $region1: #{_forward_impl.25} parent=0
    #allocation3 [shape = 'u8[1024]{0}', space=vmem, size = 0x400, scoped, tag = 'output window, operand 0']
    #allocation4 [shape = 's32[2]{0}', space=sflag, size = 0x8, scoped, tag = 'scoped memory for _forward_impl.25']
    %8 = vsyncpa [#allocation4], 0
    %s9 = scalar_lea.sflag [#allocation4], 1
    %10 = vsyncpa %s9, 0
    loop: start=0, step=1, limit=4
    $region2: #{_forward_impl.25} parent=1 // loop_pre_header
      _
    $region3: #{_forward_impl.25} parent=1 // loop_header
      %s12 = sphi 0, %s16
      %p13 = scmp.ge.s32.totalorder %s12, 4
      %s22 = sphi 0, %s24
      %s25 = sphi 0, %s22
      %s26 = sphi 0, %s25
      %s42 = sphi 0, %s26
      %s46 = sphi 0, %s46
      %s48 = sphi 0, %s46
      %s49 = sphi 0, %s48
      %s63 = sphi 0, %s49
      %s67 = sphi 0, %s67
      %s69 = sphi 0, %s67
      %s70 = sphi 0, %s69
      %s84 = sphi 0, %s70
      %s90 = sphi 0, %s92
      %s93 = sphi 0, %s90
      %s94 = sphi 0, %s93
      %s110 = sphi 0, %s94
    $region4: #{_forward_impl.25} parent=1 // loop_header_branch
      %15 = sbr.rel (%p13) target = $region8
    $region5: #{_forward_impl.25} parent=1 // loop_body
      %s17 = ssub.s32 %s12, 1
      %s18 = ssub.s32 %s12, 2
      %s19 = sadd.s32 %s12, 1
      %s20 = ssub.s32 %s12, %s19
      %p21 = scmp.eq.s32.totalorder %s20, 0
      %s23 = sadd.s32 %s22, 1
      %s24 = scalar_select %p21, %s22, %s23
      %p27 = pneg %p21
      %p28 = scmp.eq.s32.totalorder %s12, 1
      %p29 = por %p27, %p28
      %p30 = scmp.ne.s32.totalorder %s22, %s25
      %p31 = scmp.eq.s32.totalorder %s12, 0
      %p32 = por %p30, %p31
      %p33 = scmp.ne.s32.totalorder %s22, %s25
      %p34 = scmp.eq.s32.totalorder %s17, 1
      %p35 = por %p33, %p34
      %p36 = scmp.ne.s32.totalorder %s25, %s26
      %p37 = scmp.eq.s32.totalorder %s17, 0
      %p38 = por %p36, %p37
      %p39 = scmp.ne.s32.totalorder %s25, %s26
      %p40 = scmp.eq.s32.totalorder %s18, 1
      %p41 = por %p39, %p40
      %p43 = scmp.ne.s32.totalorder %s26, %s42
      %p44 = scmp.eq.s32.totalorder %s18, 0
      %p45 = por %p43, %p44
      %s47 = sadd.s32 %s46, 1
      %p50 = scmp.eq.s32.totalorder %s12, 1
      %p51 = scmp.ne.s32.totalorder %s46, %s48
      %p52 = scmp.eq.s32.totalorder %s12, 0
      %p53 = por %p51, %p52
      %p54 = scmp.ne.s32.totalorder %s46, %s48
      %p55 = scmp.eq.s32.totalorder %s17, 1
      %p56 = por %p54, %p55
      %p57 = scmp.ne.s32.totalorder %s48, %s49
      %p58 = scmp.eq.s32.totalorder %s17, 0
      %p59 = por %p57, %p58
      %p60 = scmp.ne.s32.totalorder %s48, %s49
      %p61 = scmp.eq.s32.totalorder %s18, 1
      %p62 = por %p60, %p61
      %p64 = scmp.ne.s32.totalorder %s49, %s63
      %p65 = scmp.eq.s32.totalorder %s18, 0
      %p66 = por %p64, %p65
      %s68 = sadd.s32 %s67, 1
      %p71 = scmp.eq.s32.totalorder %s12, 1
      %p72 = scmp.ne.s32.totalorder %s67, %s69
      %p73 = scmp.eq.s32.totalorder %s12, 0
      %p74 = por %p72, %p73
      %p75 = scmp.ne.s32.totalorder %s67, %s69
      %p76 = scmp.eq.s32.totalorder %s17, 1
      %p77 = por %p75, %p76
      %p78 = scmp.ne.s32.totalorder %s69, %s70
      %p79 = scmp.eq.s32.totalorder %s17, 0
      %p80 = por %p78, %p79
      %p81 = scmp.ne.s32.totalorder %s69, %s70
      %p82 = scmp.eq.s32.totalorder %s18, 1
      %p83 = por %p81, %p82
      %p85 = scmp.ne.s32.totalorder %s70, %s84
      %p86 = scmp.eq.s32.totalorder %s18, 0
      %p87 = por %p85, %p86
      %s88 = ssub.s32 %s12, %s19
      %p89 = scmp.eq.s32.totalorder %s88, 0
      %s91 = sadd.s32 %s90, 1
      %s92 = scalar_select %p89, %s90, %s91
      %p95 = pneg %p89
      %p96 = scmp.eq.s32.totalorder %s12, 1
      %p97 = por %p95, %p96
      %p98 = scmp.ne.s32.totalorder %s90, %s93
      %p99 = scmp.eq.s32.totalorder %s12, 0
      %p100 = por %p98, %p99
      %p101 = scmp.ne.s32.totalorder %s90, %s93
      %p102 = scmp.eq.s32.totalorder %s17, 1
      %p103 = por %p101, %p102
      %p104 = scmp.ne.s32.totalorder %s93, %s94
      %p105 = scmp.eq.s32.totalorder %s17, 0
      %p106 = por %p104, %p105
      %p107 = scmp.ne.s32.totalorder %s93, %s94
      %p108 = scmp.eq.s32.totalorder %s18, 1
      %p109 = por %p107, %p108
      %p111 = scmp.ne.s32.totalorder %s94, %s110
      %p112 = scmp.eq.s32.totalorder %s18, 0
      %p113 = por %p111, %p112
      %p114 = scmp.le.s32.totalorder 1, %s12
      %p115 = scmp.lt.s32.totalorder %s12, 3
      %p116 = pnand %p114, %p115
      %p117 = pneg %p116
      // Predicated region
      $region9: #{_forward_impl.25} parent=5 // pred_check
        _
      $region10: #{_forward_impl.25} parent=5 // pred_check_branch
        %119 = sbr.rel (%p116) target = $region12
      $region11: #{_forward_impl.25} parent=5 // pred_region
        %s120 = ssub.s32 %s12, 1
        // Predicated region
        $region13: #{_forward_impl.25} parent=11 // pred_check
          %p121 = pneg %p59
        $region14: #{_forward_impl.25} parent=11 // pred_check_branch
          %123 = sbr.rel (%p121) target = $region16
        $region15: #{_forward_impl.25} parent=11 // pred_region
          _
        $region16: #{_forward_impl.25} parent=11 // pred_fallthru
          _
        // Predicated region
        $region17: #{_forward_impl.25} parent=11 // pred_check
          %p124 = pneg %p80
        $region18: #{_forward_impl.25} parent=11 // pred_check_branch
          %126 = sbr.rel (%p124) target = $region20
        $region19: #{_forward_impl.25} parent=11 // pred_region
          _
        $region20: #{_forward_impl.25} parent=11 // pred_fallthru
          _
      $region12: #{_forward_impl.25} parent=5 // pred_fallthru
        _
      %p127 = scmp.lt.s32.totalorder %s12, 2
      // Predicated region
      $region21: #{_forward_impl.25} parent=5 // pred_check
        %p128 = pneg %p127
      $region22: #{_forward_impl.25} parent=5 // pred_check_branch
        %130 = sbr.rel (%p128) target = $region24
      $region23: #{_forward_impl.25} parent=5 // pred_region
        // Predicated region
        $region25: #{_forward_impl.25} parent=23 // pred_check
          %p131 = pneg %p32
        $region26: #{_forward_impl.25} parent=23 // pred_check_branch
          %133 = sbr.rel (%p131) target = $region28
        $region27: #{_forward_impl.25} parent=23 // pred_region
          %p134 = scmp.lt.s32.totalorder %s12, 1
          %s135 = scalar_select %p134, %s12, 1
          %s136 = smul.addr %s135, 32
          %s137 = smul.addr %s136, 8
          %s138 = scalar_lea.vmem %s0, %s137
        $region28: #{_forward_impl.25} parent=23 // pred_fallthru
          _
      $region24: #{_forward_impl.25} parent=5 // pred_fallthru
        _
      %p139 = scmp.le.s32.totalorder 1, %s12
      %p140 = scmp.lt.s32.totalorder %s12, 3
      %p141 = pnand %p139, %p140
      %p142 = pneg %p141
      // Predicated region
      $region29: #{_forward_impl.25} parent=5 // pred_check
        _
      $region30: #{_forward_impl.25} parent=5 // pred_check_branch
        %144 = sbr.rel (%p141) target = $region32
      $region31: #{_forward_impl.25} parent=5 // pred_region
        %s145 = ssub.s32 %s12, 1
        %p146 = scmp.lt.s32.totalorder %s17, 1
        %s147 = scalar_select %p146, %s17, 1
        %s148 = smul.addr %s147, 32
        %s149 = smul.addr %s148, 8
        %s150 = scalar_lea.vmem %s0, %s149
        %p151 = pneg %p38
        %p152 = pneg %p35
        %p153 = pneg %p59
        %p154 = pneg %p56
        %p155 = pneg %p80
        %p156 = pneg %p77
        %p157 = pneg %p106
        %p158 = pneg %p103
        %s159 = sand.u32 %s93, 1
        %s160 = scalar_lea.sflag [#allocation4], %s159
        %s161 = sand.u32 %s93, 1
        %s162 = scalar_lea.vmem [#allocation3], %s161
        %p163 = scmp.lt.s32.totalorder %s17, 1
        %s164 = scalar_select %p163, %s17, 1
        %s165 = smul.addr %s164, 32
        %s166 = smul.addr %s165, 8
        %s167 = scalar_lea.vmem %s0, %s166
        %v168 = vld [vmem:[%s167] sm:$0xff]
        %v169 = vld [vmem:[%s167 + $0x8] sm:$0xff]
        %v170 = vld [vmem:[%s167 + $0x10] sm:$0xff]
        %v171 = vld [vmem:[%s167 + $0x18] sm:$0xff]
        %v172 = vld [vmem:[%s167 + $0x20] sm:$0xff]
        %v173 = vld [vmem:[%s167 + $0x28] sm:$0xff]
        %v174 = vld [vmem:[%s167 + $0x30] sm:$0xff]
        %v175 = vld [vmem:[%s167 + $0x38] sm:$0xff]
        %v176 = vld [vmem:[%s167 + $0x40] sm:$0xff]
        %v177 = vld [vmem:[%s167 + $0x48] sm:$0xff]
        %v178 = vld [vmem:[%s167 + $0x50] sm:$0xff]
        %v179 = vld [vmem:[%s167 + $0x58] sm:$0xff]
        %v180 = vld [vmem:[%s167 + $0x60] sm:$0xff]
        %v181 = vld [vmem:[%s167 + $0x68] sm:$0xff]
        %v182 = vld [vmem:[%s167 + $0x70] sm:$0xff]
        %v183 = vld [vmem:[%s167 + $0x78] sm:$0xff]
        %v184 = vld [vmem:[%s167 + $0x80] sm:$0xff]
        %v185 = vld [vmem:[%s167 + $0x88] sm:$0xff]
        %v186 = vld [vmem:[%s167 + $0x90] sm:$0xff]
        %v187 = vld [vmem:[%s167 + $0x98] sm:$0xff]
        %v188 = vld [vmem:[%s167 + $0xa0] sm:$0xff]
        %v189 = vld [vmem:[%s167 + $0xa8] sm:$0xff]
        %v190 = vld [vmem:[%s167 + $0xb0] sm:$0xff]
        %v191 = vld [vmem:[%s167 + $0xb8] sm:$0xff]
        %v192 = vld [vmem:[%s167 + $0xc0] sm:$0xff]
        %v193 = vld [vmem:[%s167 + $0xc8] sm:$0xff]
        %v194 = vld [vmem:[%s167 + $0xd0] sm:$0xff]
        %v195 = vld [vmem:[%s167 + $0xd8] sm:$0xff]
        %v196 = vld [vmem:[%s167 + $0xe0] sm:$0xff]
        %v197 = vld [vmem:[%s167 + $0xe8] sm:$0xff]
        %v198 = vld [vmem:[%s167 + $0xf0] sm:$0xff]
        %v199 = vld [vmem:[%s167 + $0xf8] sm:$0xff]
        %vm200 = vcmask 261120
        %v201 = vsel %vm200, %v168, 0.0
        %v202 = vsel %vm200, %v170, 0.0
        %v203 = vadd.f32 %v201, %v202
        %v204 = vsel %vm200, %v172, 0.0
        %v205 = vadd.f32 %v203, %v204
        %v206 = vsel %vm200, %v174, 0.0
        %v207 = vadd.f32 %v205, %v206
        %v208 = vsel %vm200, %v176, 0.0
        %v209 = vadd.f32 %v207, %v208
        %v210 = vsel %vm200, %v178, 0.0
        %v211 = vadd.f32 %v209, %v210
        %v212 = vsel %vm200, %v180, 0.0
        %v213 = vadd.f32 %v211, %v212
        %v214 = vsel %vm200, %v182, 0.0
        %v215 = vadd.f32 %v213, %v214
        %v216 = vsel %vm200, %v184, 0.0
        %v217 = vadd.f32 %v215, %v216
        %v218 = vsel %vm200, %v186, 0.0
        %v219 = vadd.f32 %v217, %v218
        %v220 = vsel %vm200, %v188, 0.0
        %v221 = vadd.f32 %v219, %v220
        %v222 = vsel %vm200, %v190, 0.0
        %v223 = vadd.f32 %v221, %v222
        %v224 = vsel %vm200, %v192, 0.0
        %v225 = vadd.f32 %v223, %v224
        %v226 = vsel %vm200, %v194, 0.0
        %v227 = vadd.f32 %v225, %v226
        %v228 = vsel %vm200, %v196, 0.0
        %v229 = vadd.f32 %v227, %v228
        %v230 = vsel %vm200, %v198, 0.0
        %v231 = vadd.f32 %v229, %v230
        %v232 = vsel %vm200, %v169, 0.0
        %v233 = vsel %vm200, %v171, 0.0
        %v234 = vadd.f32 %v232, %v233
        %v235 = vsel %vm200, %v173, 0.0
        %v236 = vadd.f32 %v234, %v235
        %v237 = vsel %vm200, %v175, 0.0
        %v238 = vadd.f32 %v236, %v237
        %v239 = vsel %vm200, %v177, 0.0
        %v240 = vadd.f32 %v238, %v239
        %v241 = vsel %vm200, %v179, 0.0
        %v242 = vadd.f32 %v240, %v241
        %v243 = vsel %vm200, %v181, 0.0
        %v244 = vadd.f32 %v242, %v243
        %v245 = vsel %vm200, %v183, 0.0
        %v246 = vadd.f32 %v244, %v245
        %v247 = vsel %vm200, %v185, 0.0
        %v248 = vadd.f32 %v246, %v247
        %v249 = vsel %vm200, %v187, 0.0
        %v250 = vadd.f32 %v248, %v249
        %v251 = vsel %vm200, %v189, 0.0
        %v252 = vadd.f32 %v250, %v251
        %v253 = vsel %vm200, %v191, 0.0
        %v254 = vadd.f32 %v252, %v253
        %v255 = vsel %vm200, %v193, 0.0
        %v256 = vadd.f32 %v254, %v255
        %v257 = vsel %vm200, %v195, 0.0
        %v258 = vadd.f32 %v256, %v257
        %v259 = vsel %vm200, %v197, 0.0
        %v260 = vadd.f32 %v258, %v259
        %v261 = vsel %vm200, %v199, 0.0
        %v262 = vadd.f32 %v260, %v261
        %v263 = vadd.f32 %v201, %v232
        %v264 = vrot.slane %v263, 4
        %v265 = vadd.f32 %v263, %v264
        %v266 = vrot.slane %v265, 2
        %v267 = vadd.f32 %v265, %v266
        %v268 = vrot.slane %v267, 1
        %v269 = vadd.f32 %v267, %v268
        %v270 = vadd.f32 %v230, %v261
        %v271 = vrot.slane %v270, 4
        %v272 = vadd.f32 %v270, %v271
        %v273 = vrot.slane %v272, 2
        %v274 = vadd.f32 %v272, %v273
        %v275 = vrot.slane %v274, 1
        %v276 = vadd.f32 %v274, %v275
        %v277 = vsel %vm200, %v231, 0.0
        %v278 = vsel %vm200, %v262, 0.0
        %v279 = vadd.f32 %v277, %v278
        %v280 = vrot.slane %v279, 4
        %v281 = vadd.f32 %v279, %v280
        %v282 = vrot.slane %v281, 2
        %v283 = vadd.f32 %v281, %v282
        %v284 = vrot.slane %v283, 1
        %v285 = vadd.f32 %v283, %v284
        %v286 = vlaneseq
        %vm287 = vcmp.ge.s32.totalorder %v286, 0
        %vm288 = vcmp.lt.s32.totalorder %v286, 32
        %vm289 = vmand %vm287, %vm288
        %290 = vst.msk [vmem:[#allocation2] sm:$0x1] %vm289, %v285
        %v293 = vunpack.c.l.s4 1966171168
        %v294 = vunpack.c.0.s8 %v293
        %v295 = vlaneseq
        %v296 = vshrl.u32 %v295, 7
        %v297 = vsub.s32 %v294, %v296
        %v298 = vrot.slane %v276, %v297
        %v300 = vunpack.c.l.s4 1966171168
        %v301 = vunpack.c.0.s8 %v300
        %v302 = vlaneseq
        %v303 = vshrl.u32 %v302, 7
        %v304 = vsub.s32 %v301, %v303
        %v305 = vrot.slane %v298, %v304
        %306 = vrot.lane.b32.xlu0 %v305, 32
        %v307 = vpop.permute.xlu0 %306
        %vm309 = vcmp.ge.s32.totalorder %v286, 32
        %vm310 = vcmp.lt.s32.totalorder %v286, 64
        %vm311 = vmand %vm309, %vm310
        %312 = vst.msk [vmem:[#allocation2] sm:$0x1] %vm311, %v307
        %v315 = vunpack.c.l.s4 1966171168
        %v316 = vunpack.c.0.s8 %v315
        %v317 = vlaneseq
        %v318 = vshrl.u32 %v317, 7
        %v319 = vsub.s32 %v316, %v318
        %v320 = vrot.slane %v269, %v319
        %v322 = vunpack.c.l.s4 1966171168
        %v323 = vunpack.c.0.s8 %v322
        %v324 = vlaneseq
        %v325 = vshrl.u32 %v324, 7
        %v326 = vsub.s32 %v323, %v325
        %v327 = vrot.slane %v320, %v326
        %328 = vrot.lane.b32.xlu0 %v327, 64
        %v329 = vpop.permute.xlu0 %328
        %vm331 = vcmp.ge.s32.totalorder %v286, 64
        %vm332 = vcmp.lt.s32.totalorder %v286, 96
        %vm333 = vmand %vm331, %vm332
        %334 = vst.msk [vmem:[#allocation2] sm:$0x1] %vm333, %v329
        %v336 = vcombine.high %v262, %v262
        %v338 = vunpack.c.l.s4 1966171168
        %v339 = vunpack.c.0.s8 %v338
        %v340 = vlaneseq
        %v341 = vshrl.u32 %v340, 7
        %v342 = vsub.s32 %v339, %v341
        %v343 = vrot.slane %v336, %v342
        %v344 = vcombine.high %v343, %v343
        %v346 = vunpack.c.l.s4 1966171168
        %v347 = vunpack.c.0.s8 %v346
        %v348 = vlaneseq
        %v349 = vshrl.u32 %v348, 7
        %v350 = vsub.s32 %v347, %v349
        %v351 = vrot.slane %v344, %v350
        %v352 = vcombine.high %v351, %v351
        %353 = vrot.lane.b32.xlu0 %v352, 96
        %v354 = vpop.permute.xlu0 %353
        %vm356 = vcmp.ge.s32.totalorder %v286, 96
        %vm357 = vcmp.lt.s32.totalorder %v286, 128
        %vm358 = vmand %vm356, %vm357
        %359 = vst.msk [vmem:[#allocation2] sm:$0x1] %vm358, %v354
        %360 = vst.msk [vmem:[#allocation2 + $0x1] sm:$0x1] %vm289, %v231
        %v362 = vcombine.high %v199, %v199
        %v364 = vunpack.c.l.s4 1966171168
        %v365 = vunpack.c.0.s8 %v364
        %v366 = vlaneseq
        %v367 = vshrl.u32 %v366, 7
        %v368 = vsub.s32 %v365, %v367
        %v369 = vrot.slane %v362, %v368
        %v370 = vcombine.high %v369, %v369
        %v372 = vunpack.c.l.s4 1966171168
        %v373 = vunpack.c.0.s8 %v372
        %v374 = vlaneseq
        %v375 = vshrl.u32 %v374, 7
        %v376 = vsub.s32 %v373, %v375
        %v377 = vrot.slane %v370, %v376
        %v378 = vcombine.high %v377, %v377
        %379 = vrot.lane.b32.xlu0 %v378, 32
        %v380 = vpop.permute.xlu0 %379
        %382 = vst.msk [vmem:[#allocation2 + $0x1] sm:$0x1] %vm311, %v380
        %v385 = vunpack.c.l.s4 1966171168
        %v386 = vunpack.c.0.s8 %v385
        %v387 = vlaneseq
        %v388 = vshrl.u32 %v387, 7
        %v389 = vsub.s32 %v386, %v388
        %v390 = vrot.slane %v198, %v389
        %v392 = vunpack.c.l.s4 1966171168
        %v393 = vunpack.c.0.s8 %v392
        %v394 = vlaneseq
        %v395 = vshrl.u32 %v394, 7
        %v396 = vsub.s32 %v393, %v395
        %v397 = vrot.slane %v390, %v396
        %398 = vrot.lane.b32.xlu0 %v397, 64
        %v399 = vpop.permute.xlu0 %398
        %401 = vst.msk [vmem:[#allocation2 + $0x1] sm:$0x1] %vm333, %v399
        %v403 = vcombine.high %v169, %v169
        %v405 = vunpack.c.l.s4 1966171168
        %v406 = vunpack.c.0.s8 %v405
        %v407 = vlaneseq
        %v408 = vshrl.u32 %v407, 7
        %v409 = vsub.s32 %v406, %v408
        %v410 = vrot.slane %v403, %v409
        %v411 = vcombine.high %v410, %v410
        %v413 = vunpack.c.l.s4 1966171168
        %v414 = vunpack.c.0.s8 %v413
        %v415 = vlaneseq
        %v416 = vshrl.u32 %v415, 7
        %v417 = vsub.s32 %v414, %v416
        %v418 = vrot.slane %v411, %v417
        %v419 = vcombine.high %v418, %v418
        %420 = vrot.lane.b32.xlu0 %v419, 96
        %v421 = vpop.permute.xlu0 %420
        %423 = vst.msk [vmem:[#allocation2 + $0x1] sm:$0x1] %vm358, %v421
        %424 = vst.msk [vmem:[#allocation2 + $0x2] sm:$0x1] %vm289, %v168
        %v425 = vld [vmem:[#allocation2] sm:$0x7]
        %v426 = vld [vmem:[%s1] sm:$0xff]
        %v427 = vld [vmem:[%s1 + $0x8] sm:$0xff]
        %v428 = vld [vmem:[%s1 + $0x10] sm:$0xff]
        %v429 = vld [vmem:[%s1 + $0x18] sm:$0xff]
        %v430 = vld [vmem:[%s1 + $0x20] sm:$0xff]
        %v431 = vld [vmem:[%s1 + $0x28] sm:$0xff]
        %v432 = vld [vmem:[%s1 + $0x30] sm:$0xff]
        %v433 = vld [vmem:[%s1 + $0x38] sm:$0xff]
        %v434 = vld [vmem:[%s1 + $0x40] sm:$0xff]
        %v435 = vld [vmem:[%s1 + $0x48] sm:$0xff]
        %v436 = vld [vmem:[%s1 + $0x50] sm:$0xff]
        %v437 = vld [vmem:[%s1 + $0x58] sm:$0xff]
        %v438 = vld [vmem:[%s1 + $0x60] sm:$0xff]
        %v439 = vld [vmem:[%s1 + $0x68] sm:$0xff]
        %v440 = vld [vmem:[%s1 + $0x70] sm:$0xff]
        %v441 = vld [vmem:[%s1 + $0x78] sm:$0xff]
        %v442 = vld [vmem:[%s1 + $0x80] sm:$0xff]
        %v443 = vld [vmem:[%s1 + $0x88] sm:$0xff]
        %v444 = vld [vmem:[%s1 + $0x90] sm:$0xff]
        %v445 = vld [vmem:[%s1 + $0x98] sm:$0xff]
        %v446 = vld [vmem:[%s1 + $0xa0] sm:$0xff]
        %v447 = vld [vmem:[%s1 + $0xa8] sm:$0xff]
        %v448 = vld [vmem:[%s1 + $0xb0] sm:$0xff]
        %v449 = vld [vmem:[%s1 + $0xb8] sm:$0xff]
        %v450 = vld [vmem:[%s1 + $0xc0] sm:$0xff]
        %v451 = vld [vmem:[%s1 + $0xc8] sm:$0xff]
        %v452 = vld [vmem:[%s1 + $0xd0] sm:$0xff]
        %v453 = vld [vmem:[%s1 + $0xd8] sm:$0xff]
        %v454 = vld [vmem:[%s1 + $0xe0] sm:$0xff]
        %v455 = vld [vmem:[%s1 + $0xe8] sm:$0xff]
        %v456 = vld [vmem:[%s1 + $0xf0] sm:$0xff]
        %v457 = vld [vmem:[%s1 + $0xf8] sm:$0xff]
        %v458 = vld [vmem:[%s1 + $0x100] sm:$0xff]
        %v459 = vld [vmem:[%s1 + $0x108] sm:$0xff]
        %v460 = vld [vmem:[%s1 + $0x110] sm:$0xff]
        %v461 = vld [vmem:[%s1 + $0x118] sm:$0xff]
        %v463 = vlaneseq
        %v464 = vshrl.u32 %v463, 7
        %v465 = vsub.s32 0, %v464
        %v466 = vrot.slane %v425, %v465
        %v467 = vlaneseq
        %v468 = vshrl.u32 %v467, 7
        %v469 = vsub.s32 1, %v468
        %v470 = vrot.slane %v425, %v469
        %v471 = vlaneseq
        %v472 = vshrl.u32 %v471, 7
        %v473 = vsub.s32 2, %v472
        %v474 = vrot.slane %v425, %v473
        %v477 = vsel %vm200, %v474, 0
        %479 = vmatprep.subr.mxu0 0.0
        %480 = vmatpush1.msra.mxu0 %v426
        %481 = vmatprep.subr.mxu0 0.0
        %482 = vmatpush1.msra.mxu0 %v427
        %483 = vmatprep.subr.mxu0 0.0
        %484 = vmatpush1.msra.mxu0 %v428
        %485 = vmatprep.subr.mxu0 0.0
        %486 = vmatpush1.msra.mxu0 %v429
        %487 = vmatprep.subr.mxu0 0.0
        %488 = vmatpush1.msra.mxu0 %v430
        %489 = vmatprep.subr.mxu0 0.0
        %490 = vmatpush1.msra.mxu0 %v431
        %491 = vmatprep.subr.mxu0 0.0
        %492 = vmatpush1.msra.mxu0 %v432
        %493 = vmatprep.subr.mxu0 0.0
        %494 = vmatpush1.msra.mxu0 %v433
        %495 = vmatprep.subr.mxu0 0.0
        %496 = vmatpush1.msra.mxu0 %v434
        %497 = vmatprep.subr.mxu0 0.0
        %498 = vmatpush1.msra.mxu0 %v435
        %499 = vmatprep.subr.mxu0 0.0
        %500 = vmatpush1.msra.mxu0 %v436
        %501 = vmatprep.subr.mxu0 0.0
        %502 = vmatpush1.msra.mxu0 %v437
        %503 = vmatprep.subr.mxu0 0.0
        %504 = vmatpush1.msra.mxu0 %v438
        %505 = vmatprep.subr.mxu0 0.0
        %506 = vmatpush1.msra.mxu0 %v439
        %507 = vmatprep.subr.mxu0 0.0
        %508 = vmatpush1.msra.mxu0 %v440
        %509 = vmatprep.subr.mxu0 0.0
        %510 = vmatpush1.msra.mxu0 %v441
        %511 = vmatprep.subr.mxu0 0.0
        %512 = vmatpush1.msra.mxu0 %v442
        %513 = vmatprep.subr.mxu0 0.0
        %514 = vmatpush1.msra.mxu0 %v443
        %515 = vmatprep.subr.mxu0 0.0
        %516 = vmatpush1.msra.mxu0 %v444
        %517 = vmatprep.subr.mxu0 0.0
        %518 = vmatpush1.msra.mxu0 %v445
        %519 = vmatprep.subr.mxu0 0.0
        %520 = vmatpush1.msra.mxu0 %v446
        %521 = vmatprep.subr.mxu0 0.0
        %522 = vmatpush1.msra.mxu0 %v447
        %523 = vmatprep.subr.mxu0 0.0
        %524 = vmatpush1.msra.mxu0 %v448
        %525 = vmatprep.subr.mxu0 0.0
        %526 = vmatpush1.msra.mxu0 %v449
        %527 = vmatprep.subr.mxu0 0.0
        %528 = vmatpush1.msra.mxu0 %v450
        %529 = vmatprep.subr.mxu0 0.0
        %530 = vmatpush1.msra.mxu0 %v451
        %531 = vmatprep.subr.mxu0 0.0
        %532 = vmatpush1.msra.mxu0 %v452
        %533 = vmatprep.subr.mxu0 0.0
        %534 = vmatpush1.msra.mxu0 %v453
        %535 = vmatprep.subr.mxu0 0.0
        %536 = vmatpush1.msra.mxu0 %v454
        %537 = vmatprep.subr.mxu0 0.0
        %538 = vmatpush1.msra.mxu0 %v455
        %539 = vmatprep.subr.mxu0 0.0
        %540 = vmatpush1.msra.mxu0 %v456
        %541 = vmatprep.subr.mxu0 0.0
        %542 = vmatpush1.msra.mxu0 %v457
        %543 = vmatprep.mubr.f32.mxu0 %v470
        %544 = vmatmul.mubr.f32.gmra.mrb[0].mxu0 %v466
        %v545 = vpop.f32.mrb[0].mxu0
        %v546 = vadd.f32 0.0, %v545
        %v547 = vpop.f32.mrb[0].mxu0
        %548 = vdwg.mxu0
        %549 = vmatprep.subr.mxu0 0.0
        %550 = vmatpush1.msra.mxu0 %v458
        %551 = vmatprep.subr.mxu0 0.0
        %552 = vmatpush1.msra.mxu0 %v459
        %553 = vmatprep.subr.mxu0 0.0
        %554 = vmatpush1.msra.mxu0 %v460
        %555 = vmatprep.subr.mxu0 0.0
        %556 = vmatpush1.msra.mxu0 %v461
        %557 = vmatprep.subr.mxu0 0.0
        %558 = vmatpush1.msra.mxu0 0.0
        %559 = vmatprep.subr.mxu0 0.0
        %560 = vmatpush1.msra.mxu0 0.0
        %561 = vmatprep.subr.mxu0 0.0
        %562 = vmatpush1.msra.mxu0 0.0
        %563 = vmatprep.subr.mxu0 0.0
        %564 = vmatpush1.msra.mxu0 0.0
        %565 = vmatprep.subr.mxu0 0.0
        %566 = vmatpush1.msra.mxu0 0.0
        %567 = vmatprep.subr.mxu0 0.0
        %568 = vmatpush1.msra.mxu0 0.0
        %569 = vmatprep.subr.mxu0 0.0
        %570 = vmatpush1.msra.mxu0 0.0
        %571 = vmatprep.subr.mxu0 0.0
        %572 = vmatpush1.msra.mxu0 0.0
        %573 = vmatprep.subr.mxu0 0.0
        %574 = vmatpush1.msra.mxu0 0.0
        %575 = vmatprep.subr.mxu0 0.0
        %576 = vmatpush1.msra.mxu0 0.0
        %577 = vmatprep.subr.mxu0 0.0
        %578 = vmatpush1.msra.mxu0 0.0
        %579 = vmatprep.subr.mxu0 0.0
        %580 = vmatpush1.msra.mxu0 0.0
        %581 = vmatprep.subr.mxu0 0.0
        %582 = vmatpush1.msra.mxu0 0.0
        %583 = vmatprep.subr.mxu0 0.0
        %584 = vmatpush1.msra.mxu0 0.0
        %585 = vmatprep.subr.mxu0 0.0
        %586 = vmatpush1.msra.mxu0 0.0
        %587 = vmatprep.subr.mxu0 0.0
        %588 = vmatpush1.msra.mxu0 0.0
        %589 = vmatprep.subr.mxu0 0.0
        %590 = vmatpush1.msra.mxu0 0.0
        %591 = vmatprep.subr.mxu0 0.0
        %592 = vmatpush1.msra.mxu0 0.0
        %593 = vmatprep.subr.mxu0 0.0
        %594 = vmatpush1.msra.mxu0 0.0
        %595 = vmatprep.subr.mxu0 0.0
        %596 = vmatpush1.msra.mxu0 0.0
        %597 = vmatprep.subr.mxu0 0.0
        %598 = vmatpush1.msra.mxu0 0.0
        %599 = vmatprep.subr.mxu0 0.0
        %600 = vmatpush1.msra.mxu0 0.0
        %601 = vmatprep.subr.mxu0 0.0
        %602 = vmatpush1.msra.mxu0 0.0
        %603 = vmatprep.subr.mxu0 0.0
        %604 = vmatpush1.msra.mxu0 0.0
        %605 = vmatprep.subr.mxu0 0.0
        %606 = vmatpush1.msra.mxu0 0.0
        %607 = vmatprep.subr.mxu0 0.0
        %608 = vmatpush1.msra.mxu0 0.0
        %609 = vmatprep.subr.mxu0 0.0
        %610 = vmatpush1.msra.mxu0 0.0
        %611 = vmatprep.subr.mxu0 0.0
        %612 = vmatpush1.msra.mxu0 0.0
        %613 = vmatprep.mubr.f32.mxu0 0.0
        %614 = vmatmul.mubr.f32.gmra.mrb[0].mxu0 %v477
        %v615 = vpop.f32.mrb[0].mxu0
        %v616 = vadd.f32 %v546, %v615
        %v617 = vpop.f32.mrb[0].mxu0
        %618 = vdwg.mxu0
        %v619 = vmul.f32 %v616, 0.00390625
        %v620 = vld [vmem:[%s2] sm:$0x1]
        %v621 = vadd.f32 %v619, %v620
        %vm622 = vcmask 253952
        %623 = vst.msk [vmem:[%s162] sm:$0x1] %vm622, %v621
        %s624 = sand.u32 %s93, 1
        %s625 = scalar_lea.sflag [#allocation4], %s624
        %s626 = sand.u32 %s93, 1
        %s627 = scalar_lea.vmem [#allocation3], %s626
        // Predicated region
        $region33: #{_forward_impl.25} parent=31 // pred_check
          %p628 = pneg %p103
        $region34: #{_forward_impl.25} parent=31 // pred_check_branch
          %630 = sbr.rel (%p628) target = $region36
        $region35: #{_forward_impl.25} parent=31 // pred_region
          %s632 = ssub.s32 16, 16
          %633 = vsyncadd %s625, %s632
          %s634 = smul.addr %s17, 16
          %s635 = scalar_lea.hbm %s3, %s634
          %s637 = sshll.u32 %s627, 4
          %s638 = int_to_ptr.vmem [resolvable:$true] %s637
          %640 = dma.vmem_to_hbm [thread:$0]  %s638, 16, %s635, %s625
        $region36: #{_forward_impl.25} parent=31 // pred_fallthru
          _
      $region32: #{_forward_impl.25} parent=5 // pred_fallthru
        _
      %p641 = scmp.le.s32.totalorder 2, %s12
      // Predicated region
      $region37: #{_forward_impl.25} parent=5 // pred_check
        %p642 = pneg %p641
      $region38: #{_forward_impl.25} parent=5 // pred_check_branch
        %644 = sbr.rel (%p642) target = $region40
      $region39: #{_forward_impl.25} parent=5 // pred_region
        %s645 = ssub.s32 %s12, 2
        // Predicated region
        $region41: #{_forward_impl.25} parent=39 // pred_check
          %p646 = pneg %p109
        $region42: #{_forward_impl.25} parent=39 // pred_check_branch
          %648 = sbr.rel (%p646) target = $region44
        $region43: #{_forward_impl.25} parent=39 // pred_region
          %s649 = sand.u32 %s94, 1
          %s650 = scalar_lea.sflag [#allocation4], %s649
          %s651 = sand.u32 %s94, 1
          %s652 = scalar_lea.vmem [#allocation3], %s651
          %653 = dma.done %s650, 16
        $region44: #{_forward_impl.25} parent=39 // pred_fallthru
          _
      $region40: #{_forward_impl.25} parent=5 // pred_fallthru
        _
    $region6: #{_forward_impl.25} parent=1 // loop_footer
      %s16 = sadd.s32 1, %s12
    $region7: #{_forward_impl.25} parent=1 // loop_footer_branch
      %11 = sbr.rel target = $region3
    $region8: #{_forward_impl.25} parent=1 // loop_exit
      _
    %654 = vsyncpa [#allocation4], 1
    %s655 = scalar_lea.sflag [#allocation4], 1
    %656 = vsyncpa %s655, 1

// kernel: _forward_impl.21
$region0: #{_forward_impl.21}
  #allocation0 [shape = 'u32[]', space=smem, size = 0x4, offset = 0x4, fixed_abs, tag = 'smem constant byte address 0x4 - core index']
  #allocation1 [shape = 'u32[144,128]{1,0:T(1,128)}', space=vmem, size = 0x12000, scoped, tag = 'internal scratch']
  #allocation2 [shape = 'f32[1,288]{1,0:T(1,128)}', space=vmem, size = 0x600, scoped, tag = 'scratch operand']
  %s0 = inlined_call_operand.vmem [shape: f32[2,4,4,32], index: 0, kind: input, shape index: {}]
  %s1 = inlined_call_operand.vmem [shape: f32[288,32], index: 1, kind: input, shape index: {}]
  %s2 = inlined_call_operand.vmem [shape: f32[1,32], index: 2, kind: input, shape index: {}]
  %s3 = inlined_call_operand.hbm [shape: f32[2,1,32], index: 3, kind: output, shape index: {}]
  %s4 = sld [smem:[#allocation0]]
  $region45: #{_forward_impl.21} parent=0
    _
  %s6 = ssub.s32 1, %s4
  %s7 = scalar_select 0, %s6, %s4
  $region1: #{_forward_impl.21} parent=0
    #allocation3 [shape = 'u8[1024]{0}', space=vmem, size = 0x400, scoped, tag = 'output window, operand 0']
    #allocation4 [shape = 's32[2]{0}', space=sflag, size = 0x8, scoped, tag = 'scoped memory for _forward_impl.21']
    %8 = vsyncpa [#allocation4], 0
    %s9 = scalar_lea.sflag [#allocation4], 1
    %10 = vsyncpa %s9, 0
    loop: start=0, step=1, limit=4
    $region2: #{_forward_impl.21} parent=1 // loop_pre_header
      _
    $region3: #{_forward_impl.21} parent=1 // loop_header
      %s12 = sphi 0, %s16
      %p13 = scmp.ge.s32.totalorder %s12, 4
      %s22 = sphi 0, %s24
      %s25 = sphi 0, %s22
      %s26 = sphi 0, %s25
      %s42 = sphi 0, %s26
      %s46 = sphi 0, %s46
      %s48 = sphi 0, %s46
      %s49 = sphi 0, %s48
      %s63 = sphi 0, %s49
      %s67 = sphi 0, %s67
      %s69 = sphi 0, %s67
      %s70 = sphi 0, %s69
      %s84 = sphi 0, %s70
      %s90 = sphi 0, %s92
      %s93 = sphi 0, %s90
      %s94 = sphi 0, %s93
      %s110 = sphi 0, %s94
    $region4: #{_forward_impl.21} parent=1 // loop_header_branch
      %15 = sbr.rel (%p13) target = $region8
    $region5: #{_forward_impl.21} parent=1 // loop_body
      %s17 = ssub.s32 %s12, 1
      %s18 = ssub.s32 %s12, 2
      %s19 = sadd.s32 %s12, 1
      %s20 = ssub.s32 %s12, %s19
      %p21 = scmp.eq.s32.totalorder %s20, 0
      %s23 = sadd.s32 %s22, 1
      %s24 = scalar_select %p21, %s22, %s23
      %p27 = pneg %p21
      %p28 = scmp.eq.s32.totalorder %s12, 1
      %p29 = por %p27, %p28
      %p30 = scmp.ne.s32.totalorder %s22, %s25
      %p31 = scmp.eq.s32.totalorder %s12, 0
      %p32 = por %p30, %p31
      %p33 = scmp.ne.s32.totalorder %s22, %s25
      %p34 = scmp.eq.s32.totalorder %s17, 1
      %p35 = por %p33, %p34
      %p36 = scmp.ne.s32.totalorder %s25, %s26
      %p37 = scmp.eq.s32.totalorder %s17, 0
      %p38 = por %p36, %p37
      %p39 = scmp.ne.s32.totalorder %s25, %s26
      %p40 = scmp.eq.s32.totalorder %s18, 1
      %p41 = por %p39, %p40
      %p43 = scmp.ne.s32.totalorder %s26, %s42
      %p44 = scmp.eq.s32.totalorder %s18, 0
      %p45 = por %p43, %p44
      %s47 = sadd.s32 %s46, 1
      %p50 = scmp.eq.s32.totalorder %s12, 1
      %p51 = scmp.ne.s32.totalorder %s46, %s48
      %p52 = scmp.eq.s32.totalorder %s12, 0
      %p53 = por %p51, %p52
      %p54 = scmp.ne.s32.totalorder %s46, %s48
      %p55 = scmp.eq.s32.totalorder %s17, 1
      %p56 = por %p54, %p55
      %p57 = scmp.ne.s32.totalorder %s48, %s49
      %p58 = scmp.eq.s32.totalorder %s17, 0
      %p59 = por %p57, %p58
      %p60 = scmp.ne.s32.totalorder %s48, %s49
      %p61 = scmp.eq.s32.totalorder %s18, 1
      %p62 = por %p60, %p61
      %p64 = scmp.ne.s32.totalorder %s49, %s63
      %p65 = scmp.eq.s32.totalorder %s18, 0
      %p66 = por %p64, %p65
      %s68 = sadd.s32 %s67, 1
      %p71 = scmp.eq.s32.totalorder %s12, 1
      %p72 = scmp.ne.s32.totalorder %s67, %s69
      %p73 = scmp.eq.s32.totalorder %s12, 0
      %p74 = por %p72, %p73
      %p75 = scmp.ne.s32.totalorder %s67, %s69
      %p76 = scmp.eq.s32.totalorder %s17, 1
      %p77 = por %p75, %p76
      %p78 = scmp.ne.s32.totalorder %s69, %s70
      %p79 = scmp.eq.s32.totalorder %s17, 0
      %p80 = por %p78, %p79
      %p81 = scmp.ne.s32.totalorder %s69, %s70
      %p82 = scmp.eq.s32.totalorder %s18, 1
      %p83 = por %p81, %p82
      %p85 = scmp.ne.s32.totalorder %s70, %s84
      %p86 = scmp.eq.s32.totalorder %s18, 0
      %p87 = por %p85, %p86
      %s88 = ssub.s32 %s12, %s19
      %p89 = scmp.eq.s32.totalorder %s88, 0
      %s91 = sadd.s32 %s90, 1
      %s92 = scalar_select %p89, %s90, %s91
      %p95 = pneg %p89
      %p96 = scmp.eq.s32.totalorder %s12, 1
      %p97 = por %p95, %p96
      %p98 = scmp.ne.s32.totalorder %s90, %s93
      %p99 = scmp.eq.s32.totalorder %s12, 0
      %p100 = por %p98, %p99
      %p101 = scmp.ne.s32.totalorder %s90, %s93
      %p102 = scmp.eq.s32.totalorder %s17, 1
      %p103 = por %p101, %p102
      %p104 = scmp.ne.s32.totalorder %s93, %s94
      %p105 = scmp.eq.s32.totalorder %s17, 0
      %p106 = por %p104, %p105
      %p107 = scmp.ne.s32.totalorder %s93, %s94
      %p108 = scmp.eq.s32.totalorder %s18, 1
      %p109 = por %p107, %p108
      %p111 = scmp.ne.s32.totalorder %s94, %s110
      %p112 = scmp.eq.s32.totalorder %s18, 0
      %p113 = por %p111, %p112
      %p114 = scmp.le.s32.totalorder 1, %s12
      %p115 = scmp.lt.s32.totalorder %s12, 3
      %p116 = pnand %p114, %p115
      %p117 = pneg %p116
      // Predicated region
      $region9: #{_forward_impl.21} parent=5 // pred_check
        _
      $region10: #{_forward_impl.21} parent=5 // pred_check_branch
        %119 = sbr.rel (%p116) target = $region12
      $region11: #{_forward_impl.21} parent=5 // pred_region
        %s120 = ssub.s32 %s12, 1
        // Predicated region
        $region13: #{_forward_impl.21} parent=11 // pred_check
          %p121 = pneg %p59
        $region14: #{_forward_impl.21} parent=11 // pred_check_branch
          %123 = sbr.rel (%p121) target = $region16
        $region15: #{_forward_impl.21} parent=11 // pred_region
          _
        $region16: #{_forward_impl.21} parent=11 // pred_fallthru
          _
        // Predicated region
        $region17: #{_forward_impl.21} parent=11 // pred_check
          %p124 = pneg %p80
        $region18: #{_forward_impl.21} parent=11 // pred_check_branch
          %126 = sbr.rel (%p124) target = $region20
        $region19: #{_forward_impl.21} parent=11 // pred_region
          _
        $region20: #{_forward_impl.21} parent=11 // pred_fallthru
          _
      $region12: #{_forward_impl.21} parent=5 // pred_fallthru
        _
      %p127 = scmp.lt.s32.totalorder %s12, 2
      // Predicated region
      $region21: #{_forward_impl.21} parent=5 // pred_check
        %p128 = pneg %p127
      $region22: #{_forward_impl.21} parent=5 // pred_check_branch
        %130 = sbr.rel (%p128) target = $region24
      $region23: #{_forward_impl.21} parent=5 // pred_region
        // Predicated region
        $region25: #{_forward_impl.21} parent=23 // pred_check
          %p131 = pneg %p32
        $region26: #{_forward_impl.21} parent=23 // pred_check_branch
          %133 = sbr.rel (%p131) target = $region28
        $region27: #{_forward_impl.21} parent=23 // pred_region
          %p134 = scmp.lt.s32.totalorder %s12, 1
          %s135 = scalar_select %p134, %s12, 1
          %s136 = smul.addr %s135, 4
          %s137 = smul.addr %s136, 4
          %s138 = scalar_lea.vmem %s0, %s137
        $region28: #{_forward_impl.21} parent=23 // pred_fallthru
          _
      $region24: #{_forward_impl.21} parent=5 // pred_fallthru
        _
      %p139 = scmp.le.s32.totalorder 1, %s12
      %p140 = scmp.lt.s32.totalorder %s12, 3
      %p141 = pnand %p139, %p140
      %p142 = pneg %p141
      // Predicated region
      $region29: #{_forward_impl.21} parent=5 // pred_check
        _
      $region30: #{_forward_impl.21} parent=5 // pred_check_branch
        %144 = sbr.rel (%p141) target = $region32
      $region31: #{_forward_impl.21} parent=5 // pred_region
        %s145 = ssub.s32 %s12, 1
        %p146 = scmp.lt.s32.totalorder %s17, 1
        %s147 = scalar_select %p146, %s17, 1
        %s148 = smul.addr %s147, 4
        %s149 = smul.addr %s148, 4
        %s150 = scalar_lea.vmem %s0, %s149
        %p151 = pneg %p38
        %p152 = pneg %p35
        %p153 = pneg %p59
        %p154 = pneg %p56
        %p155 = pneg %p80
        %p156 = pneg %p77
        %p157 = pneg %p106
        %p158 = pneg %p103
        %s159 = sand.u32 %s93, 1
        %s160 = scalar_lea.sflag [#allocation4], %s159
        %s161 = sand.u32 %s93, 1
        %s162 = scalar_lea.vmem [#allocation3], %s161
        %p163 = scmp.lt.s32.totalorder %s17, 1
        %s164 = scalar_select %p163, %s17, 1
        %s165 = smul.addr %s164, 4
        %s166 = smul.addr %s165, 4
        %s167 = scalar_lea.vmem %s0, %s166
        %v168 = vld [vmem:[%s167] sm:$0xf]
        %v169 = vld [vmem:[%s167 + $0x4] sm:$0xf]
        %v170 = vld [vmem:[%s167 + $0x8] sm:$0xf]
        %v171 = vld [vmem:[%s167 + $0xc] sm:$0xf]
        %vm172 = vcmask 257024
        %v173 = vsel %vm172, %v168, 0.0
        %v174 = vsel %vm172, %v169, 0.0
        %v175 = vadd.f32 %v173, %v174
        %v176 = vsel %vm172, %v170, 0.0
        %v177 = vadd.f32 %v175, %v176
        %v178 = vsel %vm172, %v171, 0.0
        %v179 = vadd.f32 %v177, %v178
        %v180 = vrot.slane %v173, 4
        %v181 = vadd.f32 %v173, %v180
        %v182 = vrot.slane %v181, 2
        %v183 = vadd.f32 %v181, %v182
        %v184 = vrot.slane %v183, 1
        %v185 = vadd.f32 %v183, %v184
        %v186 = vrot.slane %v178, 4
        %v187 = vadd.f32 %v178, %v186
        %v188 = vrot.slane %v187, 2
        %v189 = vadd.f32 %v187, %v188
        %v190 = vrot.slane %v189, 1
        %v191 = vadd.f32 %v189, %v190
        %v192 = vsel %vm172, %v179, 0.0
        %v193 = vrot.slane %v192, 4
        %v194 = vadd.f32 %v192, %v193
        %v195 = vrot.slane %v194, 2
        %v196 = vadd.f32 %v194, %v195
        %v197 = vrot.slane %v196, 1
        %v198 = vadd.f32 %v196, %v197
        %v199 = vlaneseq
        %vm200 = vcmp.ge.s32.totalorder %v199, 0
        %vm201 = vcmp.lt.s32.totalorder %v199, 32
        %vm202 = vmand %vm200, %vm201
        %203 = vst.msk [vmem:[#allocation2] sm:$0x1] %vm202, %v198
        %v206 = vunpack.c.l.s4 1966171168
        %v207 = vunpack.c.0.s8 %v206
        %v208 = vlaneseq
        %v209 = vshrl.u32 %v208, 7
        %v210 = vsub.s32 %v207, %v209
        %v211 = vrot.slane %v191, %v210
        %v213 = vunpack.c.l.s4 1966171168
        %v214 = vunpack.c.0.s8 %v213
        %v215 = vlaneseq
        %v216 = vshrl.u32 %v215, 7
        %v217 = vsub.s32 %v214, %v216
        %v218 = vrot.slane %v211, %v217
        %219 = vrot.lane.b32.xlu0 %v218, 32
        %v220 = vpop.permute.xlu0 %219
        %vm222 = vcmp.ge.s32.totalorder %v199, 32
        %vm223 = vcmp.lt.s32.totalorder %v199, 64
        %vm224 = vmand %vm222, %vm223
        %225 = vst.msk [vmem:[#allocation2] sm:$0x1] %vm224, %v220
        %v228 = vunpack.c.l.s4 1966171168
        %v229 = vunpack.c.0.s8 %v228
        %v230 = vlaneseq
        %v231 = vshrl.u32 %v230, 7
        %v232 = vsub.s32 %v229, %v231
        %v233 = vrot.slane %v185, %v232
        %v235 = vunpack.c.l.s4 1966171168
        %v236 = vunpack.c.0.s8 %v235
        %v237 = vlaneseq
        %v238 = vshrl.u32 %v237, 7
        %v239 = vsub.s32 %v236, %v238
        %v240 = vrot.slane %v233, %v239
        %241 = vrot.lane.b32.xlu0 %v240, 64
        %v242 = vpop.permute.xlu0 %241
        %vm244 = vcmp.ge.s32.totalorder %v199, 64
        %vm245 = vcmp.lt.s32.totalorder %v199, 96
        %vm246 = vmand %vm244, %vm245
        %247 = vst.msk [vmem:[#allocation2] sm:$0x1] %vm246, %v242
        %v250 = vunpack.c.l.s4 1966171168
        %v251 = vunpack.c.0.s8 %v250
        %v252 = vlaneseq
        %v253 = vshrl.u32 %v252, 7
        %v254 = vsub.s32 %v251, %v253
        %v255 = vrot.slane %v179, %v254
        %v256 = vcombine.high %v255, %v255
        %v258 = vunpack.c.l.s4 1966171168
        %v259 = vunpack.c.0.s8 %v258
        %v260 = vlaneseq
        %v261 = vshrl.u32 %v260, 7
        %v262 = vsub.s32 %v259, %v261
        %v263 = vrot.slane %v256, %v262
        %v264 = vcombine.high %v263, %v263
        %265 = vrot.lane.b32.xlu0 %v264, 96
        %v266 = vpop.permute.xlu0 %265
        %vm268 = vcmp.ge.s32.totalorder %v199, 96
        %vm269 = vcmp.lt.s32.totalorder %v199, 128
        %vm270 = vmand %vm268, %vm269
        %271 = vst.msk [vmem:[#allocation2] sm:$0x1] %vm270, %v266
        %272 = vst.msk [vmem:[#allocation2 + $0x1] sm:$0x1] %vm202, %v179
        %v275 = vunpack.c.l.s4 1966171168
        %v276 = vunpack.c.0.s8 %v275
        %v277 = vlaneseq
        %v278 = vshrl.u32 %v277, 7
        %v279 = vsub.s32 %v276, %v278
        %v280 = vrot.slane %v171, %v279
        %v281 = vcombine.high %v280, %v280
        %v283 = vunpack.c.l.s4 1966171168
        %v284 = vunpack.c.0.s8 %v283
        %v285 = vlaneseq
        %v286 = vshrl.u32 %v285, 7
        %v287 = vsub.s32 %v284, %v286
        %v288 = vrot.slane %v280, %v287
        %v290 = vunpack.c.l.s4 1966171168
        %v291 = vunpack.c.0.s8 %v290
        %v292 = vlaneseq
        %v293 = vshrl.u32 %v292, 7
        %v294 = vsub.s32 %v291, %v293
        %v295 = vrot.slane %v281, %v294
        %v296 = vcombine.high %v295, %v295
        %297 = vrot.lane.b32.xlu0 %v296, 32
        %v298 = vpop.permute.xlu0 %297
        %300 = vst.msk [vmem:[#allocation2 + $0x1] sm:$0x1] %vm224, %v298
        %301 = vrot.lane.b32.xlu0 %v288, 64
        %v302 = vpop.permute.xlu0 %301
        %304 = vst.msk [vmem:[#allocation2 + $0x1] sm:$0x1] %vm246, %v302
        %v307 = vunpack.c.l.s4 1966171168
        %v308 = vunpack.c.0.s8 %v307
        %v309 = vlaneseq
        %v310 = vshrl.u32 %v309, 7
        %v311 = vsub.s32 %v308, %v310
        %v312 = vrot.slane %v168, %v311
        %v313 = vcombine.high %v312, %v312
        %v315 = vunpack.c.l.s4 1966171168
        %v316 = vunpack.c.0.s8 %v315
        %v317 = vlaneseq
        %v318 = vshrl.u32 %v317, 7
        %v319 = vsub.s32 %v316, %v318
        %v320 = vrot.slane %v313, %v319
        %v321 = vcombine.high %v320, %v320
        %322 = vrot.lane.b32.xlu0 %v321, 96
        %v323 = vpop.permute.xlu0 %322
        %325 = vst.msk [vmem:[#allocation2 + $0x1] sm:$0x1] %vm270, %v323
        %326 = vst.msk [vmem:[#allocation2 + $0x2] sm:$0x1] %vm202, %v168
        %v327 = vld [vmem:[#allocation2] sm:$0x7]
        %v328 = vld [vmem:[%s1] sm:$0xff]
        %v329 = vld [vmem:[%s1 + $0x8] sm:$0xff]
        %v330 = vld [vmem:[%s1 + $0x10] sm:$0xff]
        %v331 = vld [vmem:[%s1 + $0x18] sm:$0xff]
        %v332 = vld [vmem:[%s1 + $0x20] sm:$0xff]
        %v333 = vld [vmem:[%s1 + $0x28] sm:$0xff]
        %v334 = vld [vmem:[%s1 + $0x30] sm:$0xff]
        %v335 = vld [vmem:[%s1 + $0x38] sm:$0xff]
        %v336 = vld [vmem:[%s1 + $0x40] sm:$0xff]
        %v337 = vld [vmem:[%s1 + $0x48] sm:$0xff]
        %v338 = vld [vmem:[%s1 + $0x50] sm:$0xff]
        %v339 = vld [vmem:[%s1 + $0x58] sm:$0xff]
        %v340 = vld [vmem:[%s1 + $0x60] sm:$0xff]
        %v341 = vld [vmem:[%s1 + $0x68] sm:$0xff]
        %v342 = vld [vmem:[%s1 + $0x70] sm:$0xff]
        %v343 = vld [vmem:[%s1 + $0x78] sm:$0xff]
        %v344 = vld [vmem:[%s1 + $0x80] sm:$0xff]
        %v345 = vld [vmem:[%s1 + $0x88] sm:$0xff]
        %v346 = vld [vmem:[%s1 + $0x90] sm:$0xff]
        %v347 = vld [vmem:[%s1 + $0x98] sm:$0xff]
        %v348 = vld [vmem:[%s1 + $0xa0] sm:$0xff]
        %v349 = vld [vmem:[%s1 + $0xa8] sm:$0xff]
        %v350 = vld [vmem:[%s1 + $0xb0] sm:$0xff]
        %v351 = vld [vmem:[%s1 + $0xb8] sm:$0xff]
        %v352 = vld [vmem:[%s1 + $0xc0] sm:$0xff]
        %v353 = vld [vmem:[%s1 + $0xc8] sm:$0xff]
        %v354 = vld [vmem:[%s1 + $0xd0] sm:$0xff]
        %v355 = vld [vmem:[%s1 + $0xd8] sm:$0xff]
        %v356 = vld [vmem:[%s1 + $0xe0] sm:$0xff]
        %v357 = vld [vmem:[%s1 + $0xe8] sm:$0xff]
        %v358 = vld [vmem:[%s1 + $0xf0] sm:$0xff]
        %v359 = vld [vmem:[%s1 + $0xf8] sm:$0xff]
        %v360 = vld [vmem:[%s1 + $0x100] sm:$0xff]
        %v361 = vld [vmem:[%s1 + $0x108] sm:$0xff]
        %v362 = vld [vmem:[%s1 + $0x110] sm:$0xff]
        %v363 = vld [vmem:[%s1 + $0x118] sm:$0xff]
        %v365 = vlaneseq
        %v366 = vshrl.u32 %v365, 7
        %v367 = vsub.s32 0, %v366
        %v368 = vrot.slane %v327, %v367
        %v369 = vlaneseq
        %v370 = vshrl.u32 %v369, 7
        %v371 = vsub.s32 1, %v370
        %v372 = vrot.slane %v327, %v371
        %v373 = vlaneseq
        %v374 = vshrl.u32 %v373, 7
        %v375 = vsub.s32 2, %v374
        %v376 = vrot.slane %v327, %v375
        %vm379 = vcmask 261120
        %v380 = vsel %vm379, %v376, 0
        %382 = vmatprep.subr.mxu0 0.0
        %383 = vmatpush1.msra.mxu0 %v328
        %384 = vmatprep.subr.mxu0 0.0
        %385 = vmatpush1.msra.mxu0 %v329
        %386 = vmatprep.subr.mxu0 0.0
        %387 = vmatpush1.msra.mxu0 %v330
        %388 = vmatprep.subr.mxu0 0.0
        %389 = vmatpush1.msra.mxu0 %v331
        %390 = vmatprep.subr.mxu0 0.0
        %391 = vmatpush1.msra.mxu0 %v332
        %392 = vmatprep.subr.mxu0 0.0
        %393 = vmatpush1.msra.mxu0 %v333
        %394 = vmatprep.subr.mxu0 0.0
        %395 = vmatpush1.msra.mxu0 %v334
        %396 = vmatprep.subr.mxu0 0.0
        %397 = vmatpush1.msra.mxu0 %v335
        %398 = vmatprep.subr.mxu0 0.0
        %399 = vmatpush1.msra.mxu0 %v336
        %400 = vmatprep.subr.mxu0 0.0
        %401 = vmatpush1.msra.mxu0 %v337
        %402 = vmatprep.subr.mxu0 0.0
        %403 = vmatpush1.msra.mxu0 %v338
        %404 = vmatprep.subr.mxu0 0.0
        %405 = vmatpush1.msra.mxu0 %v339
        %406 = vmatprep.subr.mxu0 0.0
        %407 = vmatpush1.msra.mxu0 %v340
        %408 = vmatprep.subr.mxu0 0.0
        %409 = vmatpush1.msra.mxu0 %v341
        %410 = vmatprep.subr.mxu0 0.0
        %411 = vmatpush1.msra.mxu0 %v342
        %412 = vmatprep.subr.mxu0 0.0
        %413 = vmatpush1.msra.mxu0 %v343
        %414 = vmatprep.subr.mxu0 0.0
        %415 = vmatpush1.msra.mxu0 %v344
        %416 = vmatprep.subr.mxu0 0.0
        %417 = vmatpush1.msra.mxu0 %v345
        %418 = vmatprep.subr.mxu0 0.0
        %419 = vmatpush1.msra.mxu0 %v346
        %420 = vmatprep.subr.mxu0 0.0
        %421 = vmatpush1.msra.mxu0 %v347
        %422 = vmatprep.subr.mxu0 0.0
        %423 = vmatpush1.msra.mxu0 %v348
        %424 = vmatprep.subr.mxu0 0.0
        %425 = vmatpush1.msra.mxu0 %v349
        %426 = vmatprep.subr.mxu0 0.0
        %427 = vmatpush1.msra.mxu0 %v350
        %428 = vmatprep.subr.mxu0 0.0
        %429 = vmatpush1.msra.mxu0 %v351
        %430 = vmatprep.subr.mxu0 0.0
        %431 = vmatpush1.msra.mxu0 %v352
        %432 = vmatprep.subr.mxu0 0.0
        %433 = vmatpush1.msra.mxu0 %v353
        %434 = vmatprep.subr.mxu0 0.0
        %435 = vmatpush1.msra.mxu0 %v354
        %436 = vmatprep.subr.mxu0 0.0
        %437 = vmatpush1.msra.mxu0 %v355
        %438 = vmatprep.subr.mxu0 0.0
        %439 = vmatpush1.msra.mxu0 %v356
        %440 = vmatprep.subr.mxu0 0.0
        %441 = vmatpush1.msra.mxu0 %v357
        %442 = vmatprep.subr.mxu0 0.0
        %443 = vmatpush1.msra.mxu0 %v358
        %444 = vmatprep.subr.mxu0 0.0
        %445 = vmatpush1.msra.mxu0 %v359
        %446 = vmatprep.mubr.f32.mxu0 %v372
        %447 = vmatmul.mubr.f32.gmra.mrb[0].mxu0 %v368
        %v448 = vpop.f32.mrb[0].mxu0
        %v449 = vadd.f32 0.0, %v448
        %v450 = vpop.f32.mrb[0].mxu0
        %451 = vdwg.mxu0
        %452 = vmatprep.subr.mxu0 0.0
        %453 = vmatpush1.msra.mxu0 %v360
        %454 = vmatprep.subr.mxu0 0.0
        %455 = vmatpush1.msra.mxu0 %v361
        %456 = vmatprep.subr.mxu0 0.0
        %457 = vmatpush1.msra.mxu0 %v362
        %458 = vmatprep.subr.mxu0 0.0
        %459 = vmatpush1.msra.mxu0 %v363
        %460 = vmatprep.subr.mxu0 0.0
        %461 = vmatpush1.msra.mxu0 0.0
        %462 = vmatprep.subr.mxu0 0.0
        %463 = vmatpush1.msra.mxu0 0.0
        %464 = vmatprep.subr.mxu0 0.0
        %465 = vmatpush1.msra.mxu0 0.0
        %466 = vmatprep.subr.mxu0 0.0
        %467 = vmatpush1.msra.mxu0 0.0
        %468 = vmatprep.subr.mxu0 0.0
        %469 = vmatpush1.msra.mxu0 0.0
        %470 = vmatprep.subr.mxu0 0.0
        %471 = vmatpush1.msra.mxu0 0.0
        %472 = vmatprep.subr.mxu0 0.0
        %473 = vmatpush1.msra.mxu0 0.0
        %474 = vmatprep.subr.mxu0 0.0
        %475 = vmatpush1.msra.mxu0 0.0
        %476 = vmatprep.subr.mxu0 0.0
        %477 = vmatpush1.msra.mxu0 0.0
        %478 = vmatprep.subr.mxu0 0.0
        %479 = vmatpush1.msra.mxu0 0.0
        %480 = vmatprep.subr.mxu0 0.0
        %481 = vmatpush1.msra.mxu0 0.0
        %482 = vmatprep.subr.mxu0 0.0
        %483 = vmatpush1.msra.mxu0 0.0
        %484 = vmatprep.subr.mxu0 0.0
        %485 = vmatpush1.msra.mxu0 0.0
        %486 = vmatprep.subr.mxu0 0.0
        %487 = vmatpush1.msra.mxu0 0.0
        %488 = vmatprep.subr.mxu0 0.0
        %489 = vmatpush1.msra.mxu0 0.0
        %490 = vmatprep.subr.mxu0 0.0
        %491 = vmatpush1.msra.mxu0 0.0
        %492 = vmatprep.subr.mxu0 0.0
        %493 = vmatpush1.msra.mxu0 0.0
        %494 = vmatprep.subr.mxu0 0.0
        %495 = vmatpush1.msra.mxu0 0.0
        %496 = vmatprep.subr.mxu0 0.0
        %497 = vmatpush1.msra.mxu0 0.0
        %498 = vmatprep.subr.mxu0 0.0
        %499 = vmatpush1.msra.mxu0 0.0
        %500 = vmatprep.subr.mxu0 0.0
        %501 = vmatpush1.msra.mxu0 0.0
        %502 = vmatprep.subr.mxu0 0.0
        %503 = vmatpush1.msra.mxu0 0.0
        %504 = vmatprep.subr.mxu0 0.0
        %505 = vmatpush1.msra.mxu0 0.0
        %506 = vmatprep.subr.mxu0 0.0
        %507 = vmatpush1.msra.mxu0 0.0
        %508 = vmatprep.subr.mxu0 0.0
        %509 = vmatpush1.msra.mxu0 0.0
        %510 = vmatprep.subr.mxu0 0.0
        %511 = vmatpush1.msra.mxu0 0.0
        %512 = vmatprep.subr.mxu0 0.0
        %513 = vmatpush1.msra.mxu0 0.0
        %514 = vmatprep.subr.mxu0 0.0
        %515 = vmatpush1.msra.mxu0 0.0
        %516 = vmatprep.mubr.f32.mxu0 0.0
        %517 = vmatmul.mubr.f32.gmra.mrb[0].mxu0 %v380
        %v518 = vpop.f32.mrb[0].mxu0
        %v519 = vadd.f32 %v449, %v518
        %v520 = vpop.f32.mrb[0].mxu0
        %521 = vdwg.mxu0
        %v522 = vmul.f32 %v519, 0.0625
        %v523 = vld [vmem:[%s2] sm:$0x1]
        %v524 = vadd.f32 %v522, %v523
        %vm525 = vcmask 253952
        %526 = vst.msk [vmem:[%s162] sm:$0x1] %vm525, %v524
        %s527 = sand.u32 %s93, 1
        %s528 = scalar_lea.sflag [#allocation4], %s527
        %s529 = sand.u32 %s93, 1
        %s530 = scalar_lea.vmem [#allocation3], %s529
        // Predicated region
        $region33: #{_forward_impl.21} parent=31 // pred_check
          %p531 = pneg %p103
        $region34: #{_forward_impl.21} parent=31 // pred_check_branch
          %533 = sbr.rel (%p531) target = $region36
        $region35: #{_forward_impl.21} parent=31 // pred_region
          %s535 = ssub.s32 16, 16
          %536 = vsyncadd %s528, %s535
          %s537 = smul.addr %s17, 16
          %s538 = scalar_lea.hbm %s3, %s537
          %s540 = sshll.u32 %s530, 4
          %s541 = int_to_ptr.vmem [resolvable:$true] %s540
          %543 = dma.vmem_to_hbm [thread:$0]  %s541, 16, %s538, %s528
        $region36: #{_forward_impl.21} parent=31 // pred_fallthru
          _
      $region32: #{_forward_impl.21} parent=5 // pred_fallthru
        _
      %p544 = scmp.le.s32.totalorder 2, %s12
      // Predicated region
      $region37: #{_forward_impl.21} parent=5 // pred_check
        %p545 = pneg %p544
      $region38: #{_forward_impl.21} parent=5 // pred_check_branch
        %547 = sbr.rel (%p545) target = $region40
      $region39: #{_forward_impl.21} parent=5 // pred_region
        %s548 = ssub.s32 %s12, 2
        // Predicated region
        $region41: #{_forward_impl.21} parent=39 // pred_check
          %p549 = pneg %p109
        $region42: #{_forward_impl.21} parent=39 // pred_check_branch
          %551 = sbr.rel (%p549) target = $region44
        $region43: #{_forward_impl.21} parent=39 // pred_region
          %s552 = sand.u32 %s94, 1
          %s553 = scalar_lea.sflag [#allocation4], %s552
          %s554 = sand.u32 %s94, 1
          %s555 = scalar_lea.vmem [#allocation3], %s554
          %556 = dma.done %s553, 16
        $region44: #{_forward_impl.21} parent=39 // pred_fallthru
          _
      $region40: #{_forward_impl.21} parent=5 // pred_fallthru
        _
    $region6: #{_forward_impl.21} parent=1 // loop_footer
      %s16 = sadd.s32 1, %s12
    $region7: #{_forward_impl.21} parent=1 // loop_footer_branch
      %11 = sbr.rel target = $region3
    $region8: #{_forward_impl.21} parent=1 // loop_exit
      _
    %557 = vsyncpa [#allocation4], 1
    %s558 = scalar_lea.sflag [#allocation4], 1
    %559 = vsyncpa %s558, 1

// kernel: _forward_impl.19
$region0: #{_forward_impl.19}
  #allocation0 [shape = 'u32[]', space=smem, size = 0x4, offset = 0x4, fixed_abs, tag = 'smem constant byte address 0x4 - core index']
  #allocation1 [shape = 'u32[144,128]{1,0:T(1,128)}', space=vmem, size = 0x12000, scoped, tag = 'internal scratch']
  #allocation2 [shape = 'f32[1,288]{1,0:T(1,128)}', space=vmem, size = 0x600, scoped, tag = 'scratch operand']
  %s0 = inlined_call_operand.vmem [shape: f32[2,2,2,32], index: 0, kind: input, shape index: {}]
  %s1 = inlined_call_operand.vmem [shape: f32[288,32], index: 1, kind: input, shape index: {}]
  %s2 = inlined_call_operand.vmem [shape: f32[1,32], index: 2, kind: input, shape index: {}]
  %s3 = inlined_call_operand.hbm [shape: f32[2,1,32], index: 3, kind: output, shape index: {}]
  %s4 = sld [smem:[#allocation0]]
  $region45: #{_forward_impl.19} parent=0
    _
  %s6 = ssub.s32 1, %s4
  %s7 = scalar_select 0, %s6, %s4
  $region1: #{_forward_impl.19} parent=0
    #allocation3 [shape = 'u8[1024]{0}', space=vmem, size = 0x400, scoped, tag = 'output window, operand 0']
    #allocation4 [shape = 's32[2]{0}', space=sflag, size = 0x8, scoped, tag = 'scoped memory for _forward_impl.19']
    %8 = vsyncpa [#allocation4], 0
    %s9 = scalar_lea.sflag [#allocation4], 1
    %10 = vsyncpa %s9, 0
    loop: start=0, step=1, limit=4
    $region2: #{_forward_impl.19} parent=1 // loop_pre_header
      _
    $region3: #{_forward_impl.19} parent=1 // loop_header
      %s12 = sphi 0, %s16
      %p13 = scmp.ge.s32.totalorder %s12, 4
      %s22 = sphi 0, %s24
      %s25 = sphi 0, %s22
      %s26 = sphi 0, %s25
      %s42 = sphi 0, %s26
      %s46 = sphi 0, %s46
      %s48 = sphi 0, %s46
      %s49 = sphi 0, %s48
      %s63 = sphi 0, %s49
      %s67 = sphi 0, %s67
      %s69 = sphi 0, %s67
      %s70 = sphi 0, %s69
      %s84 = sphi 0, %s70
      %s90 = sphi 0, %s92
      %s93 = sphi 0, %s90
      %s94 = sphi 0, %s93
      %s110 = sphi 0, %s94
    $region4: #{_forward_impl.19} parent=1 // loop_header_branch
      %15 = sbr.rel (%p13) target = $region8
    $region5: #{_forward_impl.19} parent=1 // loop_body
      %s17 = ssub.s32 %s12, 1
      %s18 = ssub.s32 %s12, 2
      %s19 = sadd.s32 %s12, 1
      %s20 = ssub.s32 %s12, %s19
      %p21 = scmp.eq.s32.totalorder %s20, 0
      %s23 = sadd.s32 %s22, 1
      %s24 = scalar_select %p21, %s22, %s23
      %p27 = pneg %p21
      %p28 = scmp.eq.s32.totalorder %s12, 1
      %p29 = por %p27, %p28
      %p30 = scmp.ne.s32.totalorder %s22, %s25
      %p31 = scmp.eq.s32.totalorder %s12, 0
      %p32 = por %p30, %p31
      %p33 = scmp.ne.s32.totalorder %s22, %s25
      %p34 = scmp.eq.s32.totalorder %s17, 1
      %p35 = por %p33, %p34
      %p36 = scmp.ne.s32.totalorder %s25, %s26
      %p37 = scmp.eq.s32.totalorder %s17, 0
      %p38 = por %p36, %p37
      %p39 = scmp.ne.s32.totalorder %s25, %s26
      %p40 = scmp.eq.s32.totalorder %s18, 1
      %p41 = por %p39, %p40
      %p43 = scmp.ne.s32.totalorder %s26, %s42
      %p44 = scmp.eq.s32.totalorder %s18, 0
      %p45 = por %p43, %p44
      %s47 = sadd.s32 %s46, 1
      %p50 = scmp.eq.s32.totalorder %s12, 1
      %p51 = scmp.ne.s32.totalorder %s46, %s48
      %p52 = scmp.eq.s32.totalorder %s12, 0
      %p53 = por %p51, %p52
      %p54 = scmp.ne.s32.totalorder %s46, %s48
      %p55 = scmp.eq.s32.totalorder %s17, 1
      %p56 = por %p54, %p55
      %p57 = scmp.ne.s32.totalorder %s48, %s49
      %p58 = scmp.eq.s32.totalorder %s17, 0
      %p59 = por %p57, %p58
      %p60 = scmp.ne.s32.totalorder %s48, %s49
      %p61 = scmp.eq.s32.totalorder %s18, 1
      %p62 = por %p60, %p61
      %p64 = scmp.ne.s32.totalorder %s49, %s63
      %p65 = scmp.eq.s32.totalorder %s18, 0
      %p66 = por %p64, %p65
      %s68 = sadd.s32 %s67, 1
      %p71 = scmp.eq.s32.totalorder %s12, 1
      %p72 = scmp.ne.s32.totalorder %s67, %s69
      %p73 = scmp.eq.s32.totalorder %s12, 0
      %p74 = por %p72, %p73
      %p75 = scmp.ne.s32.totalorder %s67, %s69
      %p76 = scmp.eq.s32.totalorder %s17, 1
      %p77 = por %p75, %p76
      %p78 = scmp.ne.s32.totalorder %s69, %s70
      %p79 = scmp.eq.s32.totalorder %s17, 0
      %p80 = por %p78, %p79
      %p81 = scmp.ne.s32.totalorder %s69, %s70
      %p82 = scmp.eq.s32.totalorder %s18, 1
      %p83 = por %p81, %p82
      %p85 = scmp.ne.s32.totalorder %s70, %s84
      %p86 = scmp.eq.s32.totalorder %s18, 0
      %p87 = por %p85, %p86
      %s88 = ssub.s32 %s12, %s19
      %p89 = scmp.eq.s32.totalorder %s88, 0
      %s91 = sadd.s32 %s90, 1
      %s92 = scalar_select %p89, %s90, %s91
      %p95 = pneg %p89
      %p96 = scmp.eq.s32.totalorder %s12, 1
      %p97 = por %p95, %p96
      %p98 = scmp.ne.s32.totalorder %s90, %s93
      %p99 = scmp.eq.s32.totalorder %s12, 0
      %p100 = por %p98, %p99
      %p101 = scmp.ne.s32.totalorder %s90, %s93
      %p102 = scmp.eq.s32.totalorder %s17, 1
      %p103 = por %p101, %p102
      %p104 = scmp.ne.s32.totalorder %s93, %s94
      %p105 = scmp.eq.s32.totalorder %s17, 0
      %p106 = por %p104, %p105
      %p107 = scmp.ne.s32.totalorder %s93, %s94
      %p108 = scmp.eq.s32.totalorder %s18, 1
      %p109 = por %p107, %p108
      %p111 = scmp.ne.s32.totalorder %s94, %s110
      %p112 = scmp.eq.s32.totalorder %s18, 0
      %p113 = por %p111, %p112
      %p114 = scmp.le.s32.totalorder 1, %s12
      %p115 = scmp.lt.s32.totalorder %s12, 3
      %p116 = pnand %p114, %p115
      %p117 = pneg %p116
      // Predicated region
      $region9: #{_forward_impl.19} parent=5 // pred_check
        _
      $region10: #{_forward_impl.19} parent=5 // pred_check_branch
        %119 = sbr.rel (%p116) target = $region12
      $region11: #{_forward_impl.19} parent=5 // pred_region
        %s120 = ssub.s32 %s12, 1
        // Predicated region
        $region13: #{_forward_impl.19} parent=11 // pred_check
          %p121 = pneg %p59
        $region14: #{_forward_impl.19} parent=11 // pred_check_branch
          %123 = sbr.rel (%p121) target = $region16
        $region15: #{_forward_impl.19} parent=11 // pred_region
          _
        $region16: #{_forward_impl.19} parent=11 // pred_fallthru
          _
        // Predicated region
        $region17: #{_forward_impl.19} parent=11 // pred_check
          %p124 = pneg %p80
        $region18: #{_forward_impl.19} parent=11 // pred_check_branch
          %126 = sbr.rel (%p124) target = $region20
        $region19: #{_forward_impl.19} parent=11 // pred_region
          _
        $region20: #{_forward_impl.19} parent=11 // pred_fallthru
          _
      $region12: #{_forward_impl.19} parent=5 // pred_fallthru
        _
      %p127 = scmp.lt.s32.totalorder %s12, 2
      // Predicated region
      $region21: #{_forward_impl.19} parent=5 // pred_check
        %p128 = pneg %p127
      $region22: #{_forward_impl.19} parent=5 // pred_check_branch
        %130 = sbr.rel (%p128) target = $region24
      $region23: #{_forward_impl.19} parent=5 // pred_region
        // Predicated region
        $region25: #{_forward_impl.19} parent=23 // pred_check
          %p131 = pneg %p32
        $region26: #{_forward_impl.19} parent=23 // pred_check_branch
          %133 = sbr.rel (%p131) target = $region28
        $region27: #{_forward_impl.19} parent=23 // pred_region
          %p134 = scmp.lt.s32.totalorder %s12, 1
          %s135 = scalar_select %p134, %s12, 1
          %s136 = smul.addr %s135, 2
          %s137 = smul.addr %s136, 2
          %s138 = scalar_lea.vmem %s0, %s137
        $region28: #{_forward_impl.19} parent=23 // pred_fallthru
          _
      $region24: #{_forward_impl.19} parent=5 // pred_fallthru
        _
      %p139 = scmp.le.s32.totalorder 1, %s12
      %p140 = scmp.lt.s32.totalorder %s12, 3
      %p141 = pnand %p139, %p140
      %p142 = pneg %p141
      // Predicated region
      $region29: #{_forward_impl.19} parent=5 // pred_check
        _
      $region30: #{_forward_impl.19} parent=5 // pred_check_branch
        %144 = sbr.rel (%p141) target = $region32
      $region31: #{_forward_impl.19} parent=5 // pred_region
        %s145 = ssub.s32 %s12, 1
        %p146 = scmp.lt.s32.totalorder %s17, 1
        %s147 = scalar_select %p146, %s17, 1
        %s148 = smul.addr %s147, 2
        %s149 = smul.addr %s148, 2
        %s150 = scalar_lea.vmem %s0, %s149
        %p151 = pneg %p38
        %p152 = pneg %p35
        %p153 = pneg %p59
        %p154 = pneg %p56
        %p155 = pneg %p80
        %p156 = pneg %p77
        %p157 = pneg %p106
        %p158 = pneg %p103
        %s159 = sand.u32 %s93, 1
        %s160 = scalar_lea.sflag [#allocation4], %s159
        %s161 = sand.u32 %s93, 1
        %s162 = scalar_lea.vmem [#allocation3], %s161
        %p163 = scmp.lt.s32.totalorder %s17, 1
        %s164 = scalar_select %p163, %s17, 1
        %s165 = smul.addr %s164, 2
        %s166 = smul.addr %s165, 2
        %s167 = scalar_lea.vmem %s0, %s166
        %v168 = vld [vmem:[%s167] sm:$0x3]
        %v169 = vld [vmem:[%s167 + $0x2] sm:$0x3]
        %vm170 = vcmask 254976
        %v171 = vsel %vm170, %v168, 0.0
        %v172 = vsel %vm170, %v169, 0.0
        %v173 = vadd.f32 %v171, %v172
        %v174 = vrot.slane %v171, 4
        %v175 = vadd.f32 %v171, %v174
        %v176 = vrot.slane %v175, 2
        %v177 = vadd.f32 %v175, %v176
        %v178 = vrot.slane %v177, 1
        %v179 = vadd.f32 %v177, %v178
        %v180 = vrot.slane %v172, 4
        %v181 = vadd.f32 %v172, %v180
        %v182 = vrot.slane %v181, 2
        %v183 = vadd.f32 %v181, %v182
        %v184 = vrot.slane %v183, 1
        %v185 = vadd.f32 %v183, %v184
        %v186 = vsel %vm170, %v173, 0.0
        %v187 = vrot.slane %v186, 4
        %v188 = vadd.f32 %v186, %v187
        %v189 = vrot.slane %v188, 2
        %v190 = vadd.f32 %v188, %v189
        %v191 = vrot.slane %v190, 1
        %v192 = vadd.f32 %v190, %v191
        %v193 = vlaneseq
        %vm194 = vcmp.ge.s32.totalorder %v193, 0
        %vm195 = vcmp.lt.s32.totalorder %v193, 32
        %vm196 = vmand %vm194, %vm195
        %197 = vst.msk [vmem:[#allocation2] sm:$0x1] %vm196, %v192
        %v200 = vunpack.c.l.s4 1966171168
        %v201 = vunpack.c.0.s8 %v200
        %v202 = vlaneseq
        %v203 = vshrl.u32 %v202, 7
        %v204 = vsub.s32 %v201, %v203
        %v205 = vrot.slane %v185, %v204
        %v207 = vunpack.c.l.s4 1966171168
        %v208 = vunpack.c.0.s8 %v207
        %v209 = vlaneseq
        %v210 = vshrl.u32 %v209, 7
        %v211 = vsub.s32 %v208, %v210
        %v212 = vrot.slane %v205, %v211
        %213 = vrot.lane.b32.xlu0 %v212, 32
        %v214 = vpop.permute.xlu0 %213
        %vm216 = vcmp.ge.s32.totalorder %v193, 32
        %vm217 = vcmp.lt.s32.totalorder %v193, 64
        %vm218 = vmand %vm216, %vm217
        %219 = vst.msk [vmem:[#allocation2] sm:$0x1] %vm218, %v214
        %v222 = vunpack.c.l.s4 1966171168
        %v223 = vunpack.c.0.s8 %v222
        %v224 = vlaneseq
        %v225 = vshrl.u32 %v224, 7
        %v226 = vsub.s32 %v223, %v225
        %v227 = vrot.slane %v179, %v226
        %v229 = vunpack.c.l.s4 1966171168
        %v230 = vunpack.c.0.s8 %v229
        %v231 = vlaneseq
        %v232 = vshrl.u32 %v231, 7
        %v233 = vsub.s32 %v230, %v232
        %v234 = vrot.slane %v227, %v233
        %235 = vrot.lane.b32.xlu0 %v234, 64
        %v236 = vpop.permute.xlu0 %235
        %vm238 = vcmp.ge.s32.totalorder %v193, 64
        %vm239 = vcmp.lt.s32.totalorder %v193, 96
        %vm240 = vmand %vm238, %vm239
        %241 = vst.msk [vmem:[#allocation2] sm:$0x1] %vm240, %v236
        %v244 = vunpack.c.l.s4 1966171168
        %v245 = vunpack.c.0.s8 %v244
        %v246 = vlaneseq
        %v247 = vshrl.u32 %v246, 7
        %v248 = vsub.s32 %v245, %v247
        %v249 = vrot.slane %v173, %v248
        %v250 = vcombine.high %v249, %v249
        %v252 = vunpack.c.l.s4 1966171168
        %v253 = vunpack.c.0.s8 %v252
        %v254 = vlaneseq
        %v255 = vshrl.u32 %v254, 7
        %v256 = vsub.s32 %v253, %v255
        %v257 = vrot.slane %v250, %v256
        %258 = vrot.lane.b32.xlu0 %v257, 96
        %v259 = vpop.permute.xlu0 %258
        %vm261 = vcmp.ge.s32.totalorder %v193, 96
        %vm262 = vcmp.lt.s32.totalorder %v193, 128
        %vm263 = vmand %vm261, %vm262
        %264 = vst.msk [vmem:[#allocation2] sm:$0x1] %vm263, %v259
        %265 = vst.msk [vmem:[#allocation2 + $0x1] sm:$0x1] %vm196, %v173
        %v268 = vunpack.c.l.s4 1966171168
        %v269 = vunpack.c.0.s8 %v268
        %v270 = vlaneseq
        %v271 = vshrl.u32 %v270, 7
        %v272 = vsub.s32 %v269, %v271
        %v273 = vrot.slane %v169, %v272
        %v274 = vcombine.high %v273, %v273
        %v276 = vunpack.c.l.s4 1966171168
        %v277 = vunpack.c.0.s8 %v276
        %v278 = vlaneseq
        %v279 = vshrl.u32 %v278, 7
        %v280 = vsub.s32 %v277, %v279
        %v281 = vrot.slane %v273, %v280
        %v283 = vunpack.c.l.s4 1966171168
        %v284 = vunpack.c.0.s8 %v283
        %v285 = vlaneseq
        %v286 = vshrl.u32 %v285, 7
        %v287 = vsub.s32 %v284, %v286
        %v288 = vrot.slane %v274, %v287
        %289 = vrot.lane.b32.xlu0 %v288, 32
        %v290 = vpop.permute.xlu0 %289
        %292 = vst.msk [vmem:[#allocation2 + $0x1] sm:$0x1] %vm218, %v290
        %293 = vrot.lane.b32.xlu0 %v281, 64
        %v294 = vpop.permute.xlu0 %293
        %296 = vst.msk [vmem:[#allocation2 + $0x1] sm:$0x1] %vm240, %v294
        %v299 = vunpack.c.l.s4 1966171168
        %v300 = vunpack.c.0.s8 %v299
        %v301 = vlaneseq
        %v302 = vshrl.u32 %v301, 7
        %v303 = vsub.s32 %v300, %v302
        %v304 = vrot.slane %v168, %v303
        %v305 = vcombine.high %v304, %v304
        %v307 = vunpack.c.l.s4 1966171168
        %v308 = vunpack.c.0.s8 %v307
        %v309 = vlaneseq
        %v310 = vshrl.u32 %v309, 7
        %v311 = vsub.s32 %v308, %v310
        %v312 = vrot.slane %v305, %v311
        %313 = vrot.lane.b32.xlu0 %v312, 96
        %v314 = vpop.permute.xlu0 %313
        %316 = vst.msk [vmem:[#allocation2 + $0x1] sm:$0x1] %vm263, %v314
        %317 = vst.msk [vmem:[#allocation2 + $0x2] sm:$0x1] %vm196, %v168
        %v318 = vld [vmem:[#allocation2] sm:$0x7]
        %v319 = vld [vmem:[%s1] sm:$0xff]
        %v320 = vld [vmem:[%s1 + $0x8] sm:$0xff]
        %v321 = vld [vmem:[%s1 + $0x10] sm:$0xff]
        %v322 = vld [vmem:[%s1 + $0x18] sm:$0xff]
        %v323 = vld [vmem:[%s1 + $0x20] sm:$0xff]
        %v324 = vld [vmem:[%s1 + $0x28] sm:$0xff]
        %v325 = vld [vmem:[%s1 + $0x30] sm:$0xff]
        %v326 = vld [vmem:[%s1 + $0x38] sm:$0xff]
        %v327 = vld [vmem:[%s1 + $0x40] sm:$0xff]
        %v328 = vld [vmem:[%s1 + $0x48] sm:$0xff]
        %v329 = vld [vmem:[%s1 + $0x50] sm:$0xff]
        %v330 = vld [vmem:[%s1 + $0x58] sm:$0xff]
        %v331 = vld [vmem:[%s1 + $0x60] sm:$0xff]
        %v332 = vld [vmem:[%s1 + $0x68] sm:$0xff]
        %v333 = vld [vmem:[%s1 + $0x70] sm:$0xff]
        %v334 = vld [vmem:[%s1 + $0x78] sm:$0xff]
        %v335 = vld [vmem:[%s1 + $0x80] sm:$0xff]
        %v336 = vld [vmem:[%s1 + $0x88] sm:$0xff]
        %v337 = vld [vmem:[%s1 + $0x90] sm:$0xff]
        %v338 = vld [vmem:[%s1 + $0x98] sm:$0xff]
        %v339 = vld [vmem:[%s1 + $0xa0] sm:$0xff]
        %v340 = vld [vmem:[%s1 + $0xa8] sm:$0xff]
        %v341 = vld [vmem:[%s1 + $0xb0] sm:$0xff]
        %v342 = vld [vmem:[%s1 + $0xb8] sm:$0xff]
        %v343 = vld [vmem:[%s1 + $0xc0] sm:$0xff]
        %v344 = vld [vmem:[%s1 + $0xc8] sm:$0xff]
        %v345 = vld [vmem:[%s1 + $0xd0] sm:$0xff]
        %v346 = vld [vmem:[%s1 + $0xd8] sm:$0xff]
        %v347 = vld [vmem:[%s1 + $0xe0] sm:$0xff]
        %v348 = vld [vmem:[%s1 + $0xe8] sm:$0xff]
        %v349 = vld [vmem:[%s1 + $0xf0] sm:$0xff]
        %v350 = vld [vmem:[%s1 + $0xf8] sm:$0xff]
        %v351 = vld [vmem:[%s1 + $0x100] sm:$0xff]
        %v352 = vld [vmem:[%s1 + $0x108] sm:$0xff]
        %v353 = vld [vmem:[%s1 + $0x110] sm:$0xff]
        %v354 = vld [vmem:[%s1 + $0x118] sm:$0xff]
        %v356 = vlaneseq
        %v357 = vshrl.u32 %v356, 7
        %v358 = vsub.s32 0, %v357
        %v359 = vrot.slane %v318, %v358
        %v360 = vlaneseq
        %v361 = vshrl.u32 %v360, 7
        %v362 = vsub.s32 1, %v361
        %v363 = vrot.slane %v318, %v362
        %v364 = vlaneseq
        %v365 = vshrl.u32 %v364, 7
        %v366 = vsub.s32 2, %v365
        %v367 = vrot.slane %v318, %v366
        %vm370 = vcmask 261120
        %v371 = vsel %vm370, %v367, 0
        %373 = vmatprep.subr.mxu0 0.0
        %374 = vmatpush1.msra.mxu0 %v319
        %375 = vmatprep.subr.mxu0 0.0
        %376 = vmatpush1.msra.mxu0 %v320
        %377 = vmatprep.subr.mxu0 0.0
        %378 = vmatpush1.msra.mxu0 %v321
        %379 = vmatprep.subr.mxu0 0.0
        %380 = vmatpush1.msra.mxu0 %v322
        %381 = vmatprep.subr.mxu0 0.0
        %382 = vmatpush1.msra.mxu0 %v323
        %383 = vmatprep.subr.mxu0 0.0
        %384 = vmatpush1.msra.mxu0 %v324
        %385 = vmatprep.subr.mxu0 0.0
        %386 = vmatpush1.msra.mxu0 %v325
        %387 = vmatprep.subr.mxu0 0.0
        %388 = vmatpush1.msra.mxu0 %v326
        %389 = vmatprep.subr.mxu0 0.0
        %390 = vmatpush1.msra.mxu0 %v327
        %391 = vmatprep.subr.mxu0 0.0
        %392 = vmatpush1.msra.mxu0 %v328
        %393 = vmatprep.subr.mxu0 0.0
        %394 = vmatpush1.msra.mxu0 %v329
        %395 = vmatprep.subr.mxu0 0.0
        %396 = vmatpush1.msra.mxu0 %v330
        %397 = vmatprep.subr.mxu0 0.0
        %398 = vmatpush1.msra.mxu0 %v331
        %399 = vmatprep.subr.mxu0 0.0
        %400 = vmatpush1.msra.mxu0 %v332
        %401 = vmatprep.subr.mxu0 0.0
        %402 = vmatpush1.msra.mxu0 %v333
        %403 = vmatprep.subr.mxu0 0.0
        %404 = vmatpush1.msra.mxu0 %v334
        %405 = vmatprep.subr.mxu0 0.0
        %406 = vmatpush1.msra.mxu0 %v335
        %407 = vmatprep.subr.mxu0 0.0
        %408 = vmatpush1.msra.mxu0 %v336
        %409 = vmatprep.subr.mxu0 0.0
        %410 = vmatpush1.msra.mxu0 %v337
        %411 = vmatprep.subr.mxu0 0.0
        %412 = vmatpush1.msra.mxu0 %v338
        %413 = vmatprep.subr.mxu0 0.0
        %414 = vmatpush1.msra.mxu0 %v339
        %415 = vmatprep.subr.mxu0 0.0
        %416 = vmatpush1.msra.mxu0 %v340
        %417 = vmatprep.subr.mxu0 0.0
        %418 = vmatpush1.msra.mxu0 %v341
        %419 = vmatprep.subr.mxu0 0.0
        %420 = vmatpush1.msra.mxu0 %v342
        %421 = vmatprep.subr.mxu0 0.0
        %422 = vmatpush1.msra.mxu0 %v343
        %423 = vmatprep.subr.mxu0 0.0
        %424 = vmatpush1.msra.mxu0 %v344
        %425 = vmatprep.subr.mxu0 0.0
        %426 = vmatpush1.msra.mxu0 %v345
        %427 = vmatprep.subr.mxu0 0.0
        %428 = vmatpush1.msra.mxu0 %v346
        %429 = vmatprep.subr.mxu0 0.0
        %430 = vmatpush1.msra.mxu0 %v347
        %431 = vmatprep.subr.mxu0 0.0
        %432 = vmatpush1.msra.mxu0 %v348
        %433 = vmatprep.subr.mxu0 0.0
        %434 = vmatpush1.msra.mxu0 %v349
        %435 = vmatprep.subr.mxu0 0.0
        %436 = vmatpush1.msra.mxu0 %v350
        %437 = vmatprep.mubr.f32.mxu0 %v363
        %438 = vmatmul.mubr.f32.gmra.mrb[0].mxu0 %v359
        %v439 = vpop.f32.mrb[0].mxu0
        %v440 = vadd.f32 0.0, %v439
        %v441 = vpop.f32.mrb[0].mxu0
        %442 = vdwg.mxu0
        %443 = vmatprep.subr.mxu0 0.0
        %444 = vmatpush1.msra.mxu0 %v351
        %445 = vmatprep.subr.mxu0 0.0
        %446 = vmatpush1.msra.mxu0 %v352
        %447 = vmatprep.subr.mxu0 0.0
        %448 = vmatpush1.msra.mxu0 %v353
        %449 = vmatprep.subr.mxu0 0.0
        %450 = vmatpush1.msra.mxu0 %v354
        %451 = vmatprep.subr.mxu0 0.0
        %452 = vmatpush1.msra.mxu0 0.0
        %453 = vmatprep.subr.mxu0 0.0
        %454 = vmatpush1.msra.mxu0 0.0
        %455 = vmatprep.subr.mxu0 0.0
        %456 = vmatpush1.msra.mxu0 0.0
        %457 = vmatprep.subr.mxu0 0.0
        %458 = vmatpush1.msra.mxu0 0.0
        %459 = vmatprep.subr.mxu0 0.0
        %460 = vmatpush1.msra.mxu0 0.0
        %461 = vmatprep.subr.mxu0 0.0
        %462 = vmatpush1.msra.mxu0 0.0
        %463 = vmatprep.subr.mxu0 0.0
        %464 = vmatpush1.msra.mxu0 0.0
        %465 = vmatprep.subr.mxu0 0.0
        %466 = vmatpush1.msra.mxu0 0.0
        %467 = vmatprep.subr.mxu0 0.0
        %468 = vmatpush1.msra.mxu0 0.0
        %469 = vmatprep.subr.mxu0 0.0
        %470 = vmatpush1.msra.mxu0 0.0
        %471 = vmatprep.subr.mxu0 0.0
        %472 = vmatpush1.msra.mxu0 0.0
        %473 = vmatprep.subr.mxu0 0.0
        %474 = vmatpush1.msra.mxu0 0.0
        %475 = vmatprep.subr.mxu0 0.0
        %476 = vmatpush1.msra.mxu0 0.0
        %477 = vmatprep.subr.mxu0 0.0
        %478 = vmatpush1.msra.mxu0 0.0
        %479 = vmatprep.subr.mxu0 0.0
        %480 = vmatpush1.msra.mxu0 0.0
        %481 = vmatprep.subr.mxu0 0.0
        %482 = vmatpush1.msra.mxu0 0.0
        %483 = vmatprep.subr.mxu0 0.0
        %484 = vmatpush1.msra.mxu0 0.0
        %485 = vmatprep.subr.mxu0 0.0
        %486 = vmatpush1.msra.mxu0 0.0
        %487 = vmatprep.subr.mxu0 0.0
        %488 = vmatpush1.msra.mxu0 0.0
        %489 = vmatprep.subr.mxu0 0.0
        %490 = vmatpush1.msra.mxu0 0.0
        %491 = vmatprep.subr.mxu0 0.0
        %492 = vmatpush1.msra.mxu0 0.0
        %493 = vmatprep.subr.mxu0 0.0
        %494 = vmatpush1.msra.mxu0 0.0
        %495 = vmatprep.subr.mxu0 0.0
        %496 = vmatpush1.msra.mxu0 0.0
        %497 = vmatprep.subr.mxu0 0.0
        %498 = vmatpush1.msra.mxu0 0.0
        %499 = vmatprep.subr.mxu0 0.0
        %500 = vmatpush1.msra.mxu0 0.0
        %501 = vmatprep.subr.mxu0 0.0
        %502 = vmatpush1.msra.mxu0 0.0
        %503 = vmatprep.subr.mxu0 0.0
        %504 = vmatpush1.msra.mxu0 0.0
        %505 = vmatprep.subr.mxu0 0.0
        %506 = vmatpush1.msra.mxu0 0.0
        %507 = vmatprep.mubr.f32.mxu0 0.0
        %508 = vmatmul.mubr.f32.gmra.mrb[0].mxu0 %v371
        %v509 = vpop.f32.mrb[0].mxu0
        %v510 = vadd.f32 %v440, %v509
        %v511 = vpop.f32.mrb[0].mxu0
        %512 = vdwg.mxu0
        %v513 = vmul.f32 %v510, 0.25
        %v514 = vld [vmem:[%s2] sm:$0x1]
        %v515 = vadd.f32 %v513, %v514
        %vm516 = vcmask 253952
        %517 = vst.msk [vmem:[%s162] sm:$0x1] %vm516, %v515
        %s518 = sand.u32 %s93, 1
        %s519 = scalar_lea.sflag [#allocation4], %s518
        %s520 = sand.u32 %s93, 1
        %s521 = scalar_lea.vmem [#allocation3], %s520
        // Predicated region
        $region33: #{_forward_impl.19} parent=31 // pred_check
          %p522 = pneg %p103
        $region34: #{_forward_impl.19} parent=31 // pred_check_branch
          %524 = sbr.rel (%p522) target = $region36
        $region35: #{_forward_impl.19} parent=31 // pred_region
          %s526 = ssub.s32 16, 16
          %527 = vsyncadd %s519, %s526
          %s528 = smul.addr %s17, 16
          %s529 = scalar_lea.hbm %s3, %s528
          %s531 = sshll.u32 %s521, 4
          %s532 = int_to_ptr.vmem [resolvable:$true] %s531
          %534 = dma.vmem_to_hbm [thread:$0]  %s532, 16, %s529, %s519
        $region36: #{_forward_impl.19} parent=31 // pred_fallthru
          _
      $region32: #{_forward_impl.19} parent=5 // pred_fallthru
        _
      %p535 = scmp.le.s32.totalorder 2, %s12
      // Predicated region
      $region37: #{_forward_impl.19} parent=5 // pred_check
        %p536 = pneg %p535
      $region38: #{_forward_impl.19} parent=5 // pred_check_branch
        %538 = sbr.rel (%p536) target = $region40
      $region39: #{_forward_impl.19} parent=5 // pred_region
        %s539 = ssub.s32 %s12, 2
        // Predicated region
        $region41: #{_forward_impl.19} parent=39 // pred_check
          %p540 = pneg %p109
        $region42: #{_forward_impl.19} parent=39 // pred_check_branch
          %542 = sbr.rel (%p540) target = $region44
        $region43: #{_forward_impl.19} parent=39 // pred_region
          %s543 = sand.u32 %s94, 1
          %s544 = scalar_lea.sflag [#allocation4], %s543
          %s545 = sand.u32 %s94, 1
          %s546 = scalar_lea.vmem [#allocation3], %s545
          %547 = dma.done %s544, 16
        $region44: #{_forward_impl.19} parent=39 // pred_fallthru
          _
      $region40: #{_forward_impl.19} parent=5 // pred_fallthru
        _
    $region6: #{_forward_impl.19} parent=1 // loop_footer
      %s16 = sadd.s32 1, %s12
    $region7: #{_forward_impl.19} parent=1 // loop_footer_branch
      %11 = sbr.rel target = $region3
    $region8: #{_forward_impl.19} parent=1 // loop_exit
      _
    %548 = vsyncpa [#allocation4], 1
    %s549 = scalar_lea.sflag [#allocation4], 1
    %550 = vsyncpa %s549, 1

</llo_original>
